<compile_context>
chip_gen: v5e
topology: v5e:2x2
jax: 0.10.0
libtpu: 0.0.40
codegen_flags: <defaults>
</compile_context>

<pallas_src>
import jax
import jax.numpy as jnp
from jax.experimental import pallas as pl
from jax.experimental.pallas import tpu as pltpu

EPS = 1e-5


def _dot(a, w):
    """MXU matmul: bf16 x bf16 inputs, f32 accumulation."""
    return jnp.dot(a.astype(jnp.bfloat16), w.astype(jnp.bfloat16),
                   preferred_element_type=jnp.float32)


def _bn_relu(h, gamma, beta):
    """Training-mode BatchNorm1d (biased batch variance, eps=1e-5) + ReLU."""
    mean = jnp.mean(h, axis=0, keepdims=True)
    var = jnp.mean(h * h, axis=0, keepdims=True) - mean * mean
    hn = (h - mean) * jax.lax.rsqrt(var + EPS)
    return jnp.maximum(hn * gamma + beta, 0.0)


def _trunk_kernel(x_ref,
                  w1_ref, g1_ref, be1_ref,
                  w2_ref, g2_ref, be2_ref,
                  wf_ref, g3_ref, be3_ref,
                  wx_ref, g4_ref, be4_ref,
                  feat_ref, xyz_ref):
    # NOTE: the Linear biases are omitted on purpose: a per-feature constant is
    # exactly cancelled by the mean subtraction of the training-mode BatchNorm
    # that follows every Linear layer in this network.
    h = _bn_relu(_dot(x_ref[...], w1_ref[...]), g1_ref[...], be1_ref[...])
    h = _bn_relu(_dot(h, w2_ref[...]), g2_ref[...], be2_ref[...])

    # wf/g3/be3 arrive column-permuted to (length, channel)-major, so feat_ref
    # is already in the order conv2 consumes (no in-kernel transpose).  Process
    # the 4096 features in lane-dense chunks to keep vreg pressure low; BN is
    # per-feature, so column chunking is exact.
    CH = 1024
    for c0 in range(0, 64 * 64, CH):
        blk = _dot(h, wf_ref[:, c0:c0 + CH])
        feat_ref[:, c0:c0 + CH] = _bn_relu(
            blk, g3_ref[:, c0:c0 + CH], be3_ref[:, c0:c0 + CH])

    xyz_ref[...] = _bn_relu(_dot(h, wx_ref[...]), g4_ref[...], be4_ref[...])
    # TODO(synk): conv1's output is discarded by the reference forward (it is
    # immediately overwritten by conv2), so it is intentionally not computed.


def _head_kernel(feat_ref, xyz_ref, wc2_ref, rep3_ref, bc2_ref, out_ref):
    # conv2 as a channels-last 1x1 conv: rows are (batch, length) pairs.
    y = jnp.dot(feat_ref[...].astype(jnp.bfloat16), wc2_ref[...],
                preferred_element_type=jnp.float32)
    # xyz base points replicated across the point_size//64 repeats with a tiny
    # 0/1 selector matmul (numerically exact) instead of a lane-width-3
    # broadcast/relayout.
    base = jnp.dot(xyz_ref[...], rep3_ref[...],
                   preferred_element_type=jnp.float32)
    out_ref[...] = y + base + bc2_ref[...]


def pch_decoder_forward(x, params, point_size):
    B = x.shape[0]
    reps = point_size // 64
    out_ch = reps * 3
    (w1, g1, be1, w2, g2, be2, wfp, g3p, be3p, wx, g4, be4, wc2, bc2) = params

    vmem = pl.BlockSpec(memory_space=pltpu.MemorySpace.VMEM)

    feat, xyz = pl.pallas_call(
        _trunk_kernel,
        out_shape=(jax.ShapeDtypeStruct((B, 64 * 64), jnp.float32),
                   jax.ShapeDtypeStruct((B, 64 * 3), jnp.float32)),
        in_specs=[vmem] * 13,
        out_specs=(vmem, vmem),
        compiler_params=pltpu.CompilerParams(vmem_limit_bytes=24 << 20),
    )(x, w1, g1, be1, w2, g2, be2, wfp, g3p, be3p, wx, g4, be4)

    # Free row-major metadata reshapes in HBM (no data movement): rows become
    # (batch, length) pairs, exactly what the 1x1 conv2 matmul consumes.
    feat_rows = feat.reshape(B * 64, 64)
    xyz_rows = xyz.reshape(B * 64, 3)
    # [3, out_ch] selector replicating each xyz point across `reps` repeats.
    rep3 = jnp.tile(jnp.eye(3, dtype=jnp.float32), (1, reps))

    y = pl.pallas_call(
        _head_kernel,
        out_shape=jax.ShapeDtypeStruct((B * 64, out_ch), jnp.float32),
        in_specs=[vmem] * 5,
        out_specs=vmem,
    )(feat_rows, xyz_rows, wc2, rep3, bc2)

    # (B*64, reps*3) == (B, 64, reps, 3) row-major -> (B, point_size, 3): free.
    return y.reshape(B, point_size, 3)


def permute_feat_params(params):
    """Permute the feat layer's columns from (c, l)-major to (l, c)-major."""
    (w1, g1, be1, w2, g2, be2, wf, g3, be3, wx, g4, be4, wc2, bc2) = params
    perm = jnp.arange(64 * 64).reshape(64, 64).T.reshape(-1)
    return (w1, g1, be1, w2, g2, be2,
            wf[:, perm], g3[:, perm], be3[:, perm],
            wx, g4, be4, wc2, bc2)


def _reference_forward(x, params, point_size):
    """Pure-JAX mirror of the PyTorch forward (same bf16 weights / dot dtypes)."""
    (w1, g1, be1, w2, g2, be2, wf, g3, be3, wx, g4, be4, wc2, bc2) = params
    B = x.shape[0]
    reps = point_size // 64
    h = _bn_relu(_dot(x, w1), g1, be1)
    h = _bn_relu(_dot(h, w2), g2, be2)
    feat = _bn_relu(_dot(h, wf), g3, be3)          # [B, 64*64], (c, l)-major
    xyz = _bn_relu(_dot(h, wx), g4, be4)           # [B, 192]
    # conv2 (1x1) followed by swapaxes(1, 2) == channels-last matmul.
    feat_t = jnp.transpose(feat.reshape(B, 64, 64), (0, 2, 1)).reshape(B * 64, 64)
    y = jnp.dot(feat_t.astype(jnp.bfloat16), wc2,
                preferred_element_type=jnp.float32) + bc2
    out = y.reshape(B, 64, reps, 3) + xyz.reshape(B, 64, 3)[:, :, None, :]
    return out.reshape(B, point_size, 3)


def make_params(key, hidden_rep_dim, point_size):
    out_ch = (point_size // 64) * 3

    def w(k, fi, fo):
        return (jax.random.normal(k, (fi, fo), jnp.float32) * 0.05
                ).astype(jnp.bfloat16)

    def bn(k, n):
        k1, k2 = jax.random.split(k)
        g = 1.0 + 0.1 * jax.random.normal(k1, (1, n), jnp.float32)
        be = 0.1 * jax.random.normal(k2, (1, n), jnp.float32)
        return g, be

    ks = jax.random.split(key, 10)
    w1 = w(ks[0], hidden_rep_dim, 512)
    g1, be1 = bn(ks[1], 512)
    w2 = w(ks[2], 512, 512)
    g2, be2 = bn(ks[3], 512)
    wf = w(ks[4], 512, 64 * 64)
    g3, be3 = bn(ks[5], 64 * 64)
    wx = w(ks[6], 512, 64 * 3)
    g4, be4 = bn(ks[7], 64 * 3)
    # conv2: PyTorch weight [out_ch, 64, 1]; stored pre-transposed as [64, out_ch].
    wc2 = w(ks[8], 64, out_ch)
    bc2 = jax.random.normal(ks[9], (1, out_ch), jnp.float32) * 0.05
    # Linear biases b1/b2/bf/bx are not generated: they are exact no-ops in the
    # forward because each Linear is followed by training-mode BatchNorm.
    return (w1, g1, be1, w2, g2, be2, wf, g3, be3, wx, g4, be4, wc2, bc2)


if __name__ == "__main__":
    batch_size = 8            # sublane-aligned; BatchNorm needs batch > 1
    hidden_rep_dim = 32
    point_size = 256          # num_points; must be a multiple of 64

    key = jax.random.PRNGKey(0)
    kx, kp = jax.random.split(key)
    x = jax.random.normal(kx, (batch_size, hidden_rep_dim), jnp.float32)
    params = make_params(kp, hidden_rep_dim, point_size)
    kernel_params = permute_feat_params(params)

    out = pch_decoder_forward(x, kernel_params, point_size)
    out = jax.block_until_ready(out)
    assert out.shape == (batch_size, point_size, 3)

    ref = _reference_forward(x, params, point_size)
    max_err = float(jnp.max(jnp.abs(out - ref)))
    # Kernel and reference share the same bf16 weights and dot dtypes; the only
    # differences are f32 accumulation-order noise (slightly amplified by the
    # training-mode batch statistics), so 2e-3 is a comfortable yet meaningful
    # bound (a real layout/permutation bug would give O(1) errors).
    assert jnp.allclose(out, ref, atol=2e-3, rtol=2e-3), f"mismatch: {max_err}"

    print("KERNEL_OK")
</pallas_src>

<mosaic_0001>
module attributes {stable_mosaic.version = 11 : i64} {
  func.func @_trunk_kernel(%arg0: memref<8x32xf32, #tpu.memory_space<vmem>>, %arg1: memref<32x512xbf16, #tpu.memory_space<vmem>>, %arg2: memref<1x512xf32, #tpu.memory_space<vmem>>, %arg3: memref<1x512xf32, #tpu.memory_space<vmem>>, %arg4: memref<512x512xbf16, #tpu.memory_space<vmem>>, %arg5: memref<1x512xf32, #tpu.memory_space<vmem>>, %arg6: memref<1x512xf32, #tpu.memory_space<vmem>>, %arg7: memref<512x4096xbf16, #tpu.memory_space<vmem>>, %arg8: memref<1x4096xf32, #tpu.memory_space<vmem>>, %arg9: memref<1x4096xf32, #tpu.memory_space<vmem>>, %arg10: memref<512x192xbf16, #tpu.memory_space<vmem>>, %arg11: memref<1x192xf32, #tpu.memory_space<vmem>>, %arg12: memref<1x192xf32, #tpu.memory_space<vmem>>, %arg13: memref<8x4096xf32, #tpu.memory_space<vmem>>, %arg14: memref<8x192xf32, #tpu.memory_space<vmem>>) attributes {dimension_semantics = [], scalar_prefetch = 0 : i64, scratch_operands = 0 : i64, tpu.core_type = #tpu.core_type<tc>} {
    %c0 = arith.constant 0 : index
    %c0_0 = arith.constant 0 : index
    %0 = vector.load %arg0[%c0, %c0_0] : memref<8x32xf32, #tpu.memory_space<vmem>>, vector<8x32xf32>
    %c0_1 = arith.constant 0 : index
    %c0_2 = arith.constant 0 : index
    %1 = vector.load %arg1[%c0_1, %c0_2] : memref<32x512xbf16, #tpu.memory_space<vmem>>, vector<32x512xbf16>
    %2 = arith.truncf %0 : vector<8x32xf32> to vector<8x32xbf16>
    %cst = arith.constant dense<0.000000e+00> : vector<8x512xf32>
    %3 = tpu.matmul %2, %1, %cst {dimension_numbers = #tpu.dot_dimension_numbers<[1], [0], [0], [1], [0, 0, 1, 1], [], []>} : vector<8x32xbf16>, vector<32x512xbf16>, vector<8x512xf32> -> vector<8x512xf32>
    %c0_3 = arith.constant 0 : index
    %c0_4 = arith.constant 0 : index
    %4 = vector.load %arg2[%c0_3, %c0_4] : memref<1x512xf32, #tpu.memory_space<vmem>>, vector<1x512xf32>
    %c0_5 = arith.constant 0 : index
    %c0_6 = arith.constant 0 : index
    %5 = vector.load %arg3[%c0_5, %c0_6] : memref<1x512xf32, #tpu.memory_space<vmem>>, vector<1x512xf32>
    %cst_7 = arith.constant dense<0.000000e+00> : vector<512xf32>
    %6 = vector.multi_reduction <add>, %3, %cst_7 [0] : vector<8x512xf32> to vector<512xf32>
    %7 = vector.shape_cast %6 : vector<512xf32> to vector<1x512xf32>
    %cst_8 = arith.constant 8.000000e+00 : f32
    %8 = vector.broadcast %cst_8 : f32 to vector<1x512xf32>
    %9 = arith.divf %7, %8 : vector<1x512xf32>
    %10 = arith.mulf %3, %3 : vector<8x512xf32>
    %cst_9 = arith.constant dense<0.000000e+00> : vector<512xf32>
    %11 = vector.multi_reduction <add>, %10, %cst_9 [0] : vector<8x512xf32> to vector<512xf32>
    %12 = vector.shape_cast %11 : vector<512xf32> to vector<1x512xf32>
    %cst_10 = arith.constant 8.000000e+00 : f32
    %13 = vector.broadcast %cst_10 : f32 to vector<1x512xf32>
    %14 = arith.divf %12, %13 : vector<1x512xf32>
    %15 = arith.mulf %9, %9 : vector<1x512xf32>
    %16 = arith.subf %14, %15 : vector<1x512xf32>
    %17 = vector.broadcast %9 : vector<1x512xf32> to vector<8x512xf32>
    %18 = arith.subf %3, %17 : vector<8x512xf32>
    %cst_11 = arith.constant 9.99999974E-6 : f32
    %19 = vector.broadcast %cst_11 : f32 to vector<1x512xf32>
    %20 = arith.addf %16, %19 : vector<1x512xf32>
    %21 = math.rsqrt %20 : vector<1x512xf32>
    %22 = vector.broadcast %21 : vector<1x512xf32> to vector<8x512xf32>
    %23 = arith.mulf %18, %22 : vector<8x512xf32>
    %24 = vector.broadcast %4 : vector<1x512xf32> to vector<8x512xf32>
    %25 = arith.mulf %23, %24 : vector<8x512xf32>
    %26 = vector.broadcast %5 : vector<1x512xf32> to vector<8x512xf32>
    %27 = arith.addf %25, %26 : vector<8x512xf32>
    %cst_12 = arith.constant 0.000000e+00 : f32
    %28 = vector.broadcast %cst_12 : f32 to vector<8x512xf32>
    %29 = arith.maximumf %27, %28 : vector<8x512xf32>
    %c0_13 = arith.constant 0 : index
    %c0_14 = arith.constant 0 : index
    %30 = vector.load %arg4[%c0_13, %c0_14] : memref<512x512xbf16, #tpu.memory_space<vmem>>, vector<512x512xbf16>
    %31 = arith.truncf %29 : vector<8x512xf32> to vector<8x512xbf16>
    %cst_15 = arith.constant dense<0.000000e+00> : vector<8x512xf32>
    %32 = tpu.matmul %31, %30, %cst_15 {dimension_numbers = #tpu.dot_dimension_numbers<[1], [0], [0], [1], [0, 0, 1, 1], [], []>} : vector<8x512xbf16>, vector<512x512xbf16>, vector<8x512xf32> -> vector<8x512xf32>
    %c0_16 = arith.constant 0 : index
    %c0_17 = arith.constant 0 : index
    %33 = vector.load %arg5[%c0_16, %c0_17] : memref<1x512xf32, #tpu.memory_space<vmem>>, vector<1x512xf32>
    %c0_18 = arith.constant 0 : index
    %c0_19 = arith.constant 0 : index
    %34 = vector.load %arg6[%c0_18, %c0_19] : memref<1x512xf32, #tpu.memory_space<vmem>>, vector<1x512xf32>
    %cst_20 = arith.constant dense<0.000000e+00> : vector<512xf32>
    %35 = vector.multi_reduction <add>, %32, %cst_20 [0] : vector<8x512xf32> to vector<512xf32>
    %36 = vector.shape_cast %35 : vector<512xf32> to vector<1x512xf32>
    %cst_21 = arith.constant 8.000000e+00 : f32
    %37 = vector.broadcast %cst_21 : f32 to vector<1x512xf32>
    %38 = arith.divf %36, %37 : vector<1x512xf32>
    %39 = arith.mulf %32, %32 : vector<8x512xf32>
    %cst_22 = arith.constant dense<0.000000e+00> : vector<512xf32>
    %40 = vector.multi_reduction <add>, %39, %cst_22 [0] : vector<8x512xf32> to vector<512xf32>
    %41 = vector.shape_cast %40 : vector<512xf32> to vector<1x512xf32>
    %cst_23 = arith.constant 8.000000e+00 : f32
    %42 = vector.broadcast %cst_23 : f32 to vector<1x512xf32>
    %43 = arith.divf %41, %42 : vector<1x512xf32>
    %44 = arith.mulf %38, %38 : vector<1x512xf32>
    %45 = arith.subf %43, %44 : vector<1x512xf32>
    %46 = vector.broadcast %38 : vector<1x512xf32> to vector<8x512xf32>
    %47 = arith.subf %32, %46 : vector<8x512xf32>
    %cst_24 = arith.constant 9.99999974E-6 : f32
    %48 = vector.broadcast %cst_24 : f32 to vector<1x512xf32>
    %49 = arith.addf %45, %48 : vector<1x512xf32>
    %50 = math.rsqrt %49 : vector<1x512xf32>
    %51 = vector.broadcast %50 : vector<1x512xf32> to vector<8x512xf32>
    %52 = arith.mulf %47, %51 : vector<8x512xf32>
    %53 = vector.broadcast %33 : vector<1x512xf32> to vector<8x512xf32>
    %54 = arith.mulf %52, %53 : vector<8x512xf32>
    %55 = vector.broadcast %34 : vector<1x512xf32> to vector<8x512xf32>
    %56 = arith.addf %54, %55 : vector<8x512xf32>
    %cst_25 = arith.constant 0.000000e+00 : f32
    %57 = vector.broadcast %cst_25 : f32 to vector<8x512xf32>
    %58 = arith.maximumf %56, %57 : vector<8x512xf32>
    %c0_26 = arith.constant 0 : index
    %c0_27 = arith.constant 0 : index
    %59 = vector.load %arg7[%c0_26, %c0_27] : memref<512x4096xbf16, #tpu.memory_space<vmem>>, vector<512x1024xbf16>
    %60 = arith.truncf %58 : vector<8x512xf32> to vector<8x512xbf16>
    %cst_28 = arith.constant dense<0.000000e+00> : vector<8x1024xf32>
    %61 = tpu.matmul %60, %59, %cst_28 {dimension_numbers = #tpu.dot_dimension_numbers<[1], [0], [0], [1], [0, 0, 1, 1], [], []>} : vector<8x512xbf16>, vector<512x1024xbf16>, vector<8x1024xf32> -> vector<8x1024xf32>
    %c0_29 = arith.constant 0 : index
    %c0_30 = arith.constant 0 : index
    %62 = vector.load %arg8[%c0_29, %c0_30] : memref<1x4096xf32, #tpu.memory_space<vmem>>, vector<1x1024xf32>
    %c0_31 = arith.constant 0 : index
    %c0_32 = arith.constant 0 : index
    %63 = vector.load %arg9[%c0_31, %c0_32] : memref<1x4096xf32, #tpu.memory_space<vmem>>, vector<1x1024xf32>
    %cst_33 = arith.constant dense<0.000000e+00> : vector<1024xf32>
    %64 = vector.multi_reduction <add>, %61, %cst_33 [0] : vector<8x1024xf32> to vector<1024xf32>
    %65 = vector.shape_cast %64 : vector<1024xf32> to vector<1x1024xf32>
    %cst_34 = arith.constant 8.000000e+00 : f32
    %66 = vector.broadcast %cst_34 : f32 to vector<1x1024xf32>
    %67 = arith.divf %65, %66 : vector<1x1024xf32>
    %68 = arith.mulf %61, %61 : vector<8x1024xf32>
    %cst_35 = arith.constant dense<0.000000e+00> : vector<1024xf32>
    %69 = vector.multi_reduction <add>, %68, %cst_35 [0] : vector<8x1024xf32> to vector<1024xf32>
    %70 = vector.shape_cast %69 : vector<1024xf32> to vector<1x1024xf32>
    %cst_36 = arith.constant 8.000000e+00 : f32
    %71 = vector.broadcast %cst_36 : f32 to vector<1x1024xf32>
    %72 = arith.divf %70, %71 : vector<1x1024xf32>
    %73 = arith.mulf %67, %67 : vector<1x1024xf32>
    %74 = arith.subf %72, %73 : vector<1x1024xf32>
    %75 = vector.broadcast %67 : vector<1x1024xf32> to vector<8x1024xf32>
    %76 = arith.subf %61, %75 : vector<8x1024xf32>
    %cst_37 = arith.constant 9.99999974E-6 : f32
    %77 = vector.broadcast %cst_37 : f32 to vector<1x1024xf32>
    %78 = arith.addf %74, %77 : vector<1x1024xf32>
    %79 = math.rsqrt %78 : vector<1x1024xf32>
    %80 = vector.broadcast %79 : vector<1x1024xf32> to vector<8x1024xf32>
    %81 = arith.mulf %76, %80 : vector<8x1024xf32>
    %82 = vector.broadcast %62 : vector<1x1024xf32> to vector<8x1024xf32>
    %83 = arith.mulf %81, %82 : vector<8x1024xf32>
    %84 = vector.broadcast %63 : vector<1x1024xf32> to vector<8x1024xf32>
    %85 = arith.addf %83, %84 : vector<8x1024xf32>
    %cst_38 = arith.constant 0.000000e+00 : f32
    %86 = vector.broadcast %cst_38 : f32 to vector<8x1024xf32>
    %87 = arith.maximumf %85, %86 : vector<8x1024xf32>
    %c0_39 = arith.constant 0 : index
    %c0_40 = arith.constant 0 : index
    %88 = vector.load %arg13[%c0_39, %c0_40] : memref<8x4096xf32, #tpu.memory_space<vmem>>, vector<8x1024xf32>
    tpu.vector_store %arg13[%c0_39, %c0_40], %87 {strides = array<i32>} : memref<8x4096xf32, #tpu.memory_space<vmem>>, vector<8x1024xf32>,
    %c0_41 = arith.constant 0 : index
    %c1024 = arith.constant 1024 : index
    %89 = vector.load %arg7[%c0_41, %c1024] : memref<512x4096xbf16, #tpu.memory_space<vmem>>, vector<512x1024xbf16>
    %90 = arith.truncf %58 : vector<8x512xf32> to vector<8x512xbf16>
    %cst_42 = arith.constant dense<0.000000e+00> : vector<8x1024xf32>
    %91 = tpu.matmul %90, %89, %cst_42 {dimension_numbers = #tpu.dot_dimension_numbers<[1], [0], [0], [1], [0, 0, 1, 1], [], []>} : vector<8x512xbf16>, vector<512x1024xbf16>, vector<8x1024xf32> -> vector<8x1024xf32>
    %c0_43 = arith.constant 0 : index
    %c1024_44 = arith.constant 1024 : index
    %92 = vector.load %arg8[%c0_43, %c1024_44] : memref<1x4096xf32, #tpu.memory_space<vmem>>, vector<1x1024xf32>
    %c0_45 = arith.constant 0 : index
    %c1024_46 = arith.constant 1024 : index
    %93 = vector.load %arg9[%c0_45, %c1024_46] : memref<1x4096xf32, #tpu.memory_space<vmem>>, vector<1x1024xf32>
    %cst_47 = arith.constant dense<0.000000e+00> : vector<1024xf32>
    %94 = vector.multi_reduction <add>, %91, %cst_47 [0] : vector<8x1024xf32> to vector<1024xf32>
    %95 = vector.shape_cast %94 : vector<1024xf32> to vector<1x1024xf32>
    %cst_48 = arith.constant 8.000000e+00 : f32
    %96 = vector.broadcast %cst_48 : f32 to vector<1x1024xf32>
    %97 = arith.divf %95, %96 : vector<1x1024xf32>
    %98 = arith.mulf %91, %91 : vector<8x1024xf32>
    %cst_49 = arith.constant dense<0.000000e+00> : vector<1024xf32>
    %99 = vector.multi_reduction <add>, %98, %cst_49 [0] : vector<8x1024xf32> to vector<1024xf32>
    %100 = vector.shape_cast %99 : vector<1024xf32> to vector<1x1024xf32>
    %cst_50 = arith.constant 8.000000e+00 : f32
    %101 = vector.broadcast %cst_50 : f32 to vector<1x1024xf32>
    %102 = arith.divf %100, %101 : vector<1x1024xf32>
    %103 = arith.mulf %97, %97 : vector<1x1024xf32>
    %104 = arith.subf %102, %103 : vector<1x1024xf32>
    %105 = vector.broadcast %97 : vector<1x1024xf32> to vector<8x1024xf32>
    %106 = arith.subf %91, %105 : vector<8x1024xf32>
    %cst_51 = arith.constant 9.99999974E-6 : f32
    %107 = vector.broadcast %cst_51 : f32 to vector<1x1024xf32>
    %108 = arith.addf %104, %107 : vector<1x1024xf32>
    %109 = math.rsqrt %108 : vector<1x1024xf32>
    %110 = vector.broadcast %109 : vector<1x1024xf32> to vector<8x1024xf32>
    %111 = arith.mulf %106, %110 : vector<8x1024xf32>
    %112 = vector.broadcast %92 : vector<1x1024xf32> to vector<8x1024xf32>
    %113 = arith.mulf %111, %112 : vector<8x1024xf32>
    %114 = vector.broadcast %93 : vector<1x1024xf32> to vector<8x1024xf32>
    %115 = arith.addf %113, %114 : vector<8x1024xf32>
    %cst_52 = arith.constant 0.000000e+00 : f32
    %116 = vector.broadcast %cst_52 : f32 to vector<8x1024xf32>
    %117 = arith.maximumf %115, %116 : vector<8x1024xf32>
    %c0_53 = arith.constant 0 : index
    %c1024_54 = arith.constant 1024 : index
    %118 = vector.load %arg13[%c0_53, %c1024_54] : memref<8x4096xf32, #tpu.memory_space<vmem>>, vector<8x1024xf32>
    tpu.vector_store %arg13[%c0_53, %c1024_54], %117 {strides = array<i32>} : memref<8x4096xf32, #tpu.memory_space<vmem>>, vector<8x1024xf32>,
    %c0_55 = arith.constant 0 : index
    %c2048 = arith.constant 2048 : index
    %119 = vector.load %arg7[%c0_55, %c2048] : memref<512x4096xbf16, #tpu.memory_space<vmem>>, vector<512x1024xbf16>
    %120 = arith.truncf %58 : vector<8x512xf32> to vector<8x512xbf16>
    %cst_56 = arith.constant dense<0.000000e+00> : vector<8x1024xf32>
    %121 = tpu.matmul %120, %119, %cst_56 {dimension_numbers = #tpu.dot_dimension_numbers<[1], [0], [0], [1], [0, 0, 1, 1], [], []>} : vector<8x512xbf16>, vector<512x1024xbf16>, vector<8x1024xf32> -> vector<8x1024xf32>
    %c0_57 = arith.constant 0 : index
    %c2048_58 = arith.constant 2048 : index
    %122 = vector.load %arg8[%c0_57, %c2048_58] : memref<1x4096xf32, #tpu.memory_space<vmem>>, vector<1x1024xf32>
    %c0_59 = arith.constant 0 : index
    %c2048_60 = arith.constant 2048 : index
    %123 = vector.load %arg9[%c0_59, %c2048_60] : memref<1x4096xf32, #tpu.memory_space<vmem>>, vector<1x1024xf32>
    %cst_61 = arith.constant dense<0.000000e+00> : vector<1024xf32>
    %124 = vector.multi_reduction <add>, %121, %cst_61 [0] : vector<8x1024xf32> to vector<1024xf32>
    %125 = vector.shape_cast %124 : vector<1024xf32> to vector<1x1024xf32>
    %cst_62 = arith.constant 8.000000e+00 : f32
    %126 = vector.broadcast %cst_62 : f32 to vector<1x1024xf32>
    %127 = arith.divf %125, %126 : vector<1x1024xf32>
    %128 = arith.mulf %121, %121 : vector<8x1024xf32>
    %cst_63 = arith.constant dense<0.000000e+00> : vector<1024xf32>
    %129 = vector.multi_reduction <add>, %128, %cst_63 [0] : vector<8x1024xf32> to vector<1024xf32>
    %130 = vector.shape_cast %129 : vector<1024xf32> to vector<1x1024xf32>
    %cst_64 = arith.constant 8.000000e+00 : f32
    %131 = vector.broadcast %cst_64 : f32 to vector<1x1024xf32>
    %132 = arith.divf %130, %131 : vector<1x1024xf32>
    %133 = arith.mulf %127, %127 : vector<1x1024xf32>
    %134 = arith.subf %132, %133 : vector<1x1024xf32>
    %135 = vector.broadcast %127 : vector<1x1024xf32> to vector<8x1024xf32>
    %136 = arith.subf %121, %135 : vector<8x1024xf32>
    %cst_65 = arith.constant 9.99999974E-6 : f32
    %137 = vector.broadcast %cst_65 : f32 to vector<1x1024xf32>
    %138 = arith.addf %134, %137 : vector<1x1024xf32>
    %139 = math.rsqrt %138 : vector<1x1024xf32>
    %140 = vector.broadcast %139 : vector<1x1024xf32> to vector<8x1024xf32>
    %141 = arith.mulf %136, %140 : vector<8x1024xf32>
    %142 = vector.broadcast %122 : vector<1x1024xf32> to vector<8x1024xf32>
    %143 = arith.mulf %141, %142 : vector<8x1024xf32>
    %144 = vector.broadcast %123 : vector<1x1024xf32> to vector<8x1024xf32>
    %145 = arith.addf %143, %144 : vector<8x1024xf32>
    %cst_66 = arith.constant 0.000000e+00 : f32
    %146 = vector.broadcast %cst_66 : f32 to vector<8x1024xf32>
    %147 = arith.maximumf %145, %146 : vector<8x1024xf32>
    %c0_67 = arith.constant 0 : index
    %c2048_68 = arith.constant 2048 : index
    %148 = vector.load %arg13[%c0_67, %c2048_68] : memref<8x4096xf32, #tpu.memory_space<vmem>>, vector<8x1024xf32>
    tpu.vector_store %arg13[%c0_67, %c2048_68], %147 {strides = array<i32>} : memref<8x4096xf32, #tpu.memory_space<vmem>>, vector<8x1024xf32>,
    %c0_69 = arith.constant 0 : index
    %c3072 = arith.constant 3072 : index
    %149 = vector.load %arg7[%c0_69, %c3072] : memref<512x4096xbf16, #tpu.memory_space<vmem>>, vector<512x1024xbf16>
    %150 = arith.truncf %58 : vector<8x512xf32> to vector<8x512xbf16>
    %cst_70 = arith.constant dense<0.000000e+00> : vector<8x1024xf32>
    %151 = tpu.matmul %150, %149, %cst_70 {dimension_numbers = #tpu.dot_dimension_numbers<[1], [0], [0], [1], [0, 0, 1, 1], [], []>} : vector<8x512xbf16>, vector<512x1024xbf16>, vector<8x1024xf32> -> vector<8x1024xf32>
    %c0_71 = arith.constant 0 : index
    %c3072_72 = arith.constant 3072 : index
    %152 = vector.load %arg8[%c0_71, %c3072_72] : memref<1x4096xf32, #tpu.memory_space<vmem>>, vector<1x1024xf32>
    %c0_73 = arith.constant 0 : index
    %c3072_74 = arith.constant 3072 : index
    %153 = vector.load %arg9[%c0_73, %c3072_74] : memref<1x4096xf32, #tpu.memory_space<vmem>>, vector<1x1024xf32>
    %cst_75 = arith.constant dense<0.000000e+00> : vector<1024xf32>
    %154 = vector.multi_reduction <add>, %151, %cst_75 [0] : vector<8x1024xf32> to vector<1024xf32>
    %155 = vector.shape_cast %154 : vector<1024xf32> to vector<1x1024xf32>
    %cst_76 = arith.constant 8.000000e+00 : f32
    %156 = vector.broadcast %cst_76 : f32 to vector<1x1024xf32>
    %157 = arith.divf %155, %156 : vector<1x1024xf32>
    %158 = arith.mulf %151, %151 : vector<8x1024xf32>
    %cst_77 = arith.constant dense<0.000000e+00> : vector<1024xf32>
    %159 = vector.multi_reduction <add>, %158, %cst_77 [0] : vector<8x1024xf32> to vector<1024xf32>
    %160 = vector.shape_cast %159 : vector<1024xf32> to vector<1x1024xf32>
    %cst_78 = arith.constant 8.000000e+00 : f32
    %161 = vector.broadcast %cst_78 : f32 to vector<1x1024xf32>
    %162 = arith.divf %160, %161 : vector<1x1024xf32>
    %163 = arith.mulf %157, %157 : vector<1x1024xf32>
    %164 = arith.subf %162, %163 : vector<1x1024xf32>
    %165 = vector.broadcast %157 : vector<1x1024xf32> to vector<8x1024xf32>
    %166 = arith.subf %151, %165 : vector<8x1024xf32>
    %cst_79 = arith.constant 9.99999974E-6 : f32
    %167 = vector.broadcast %cst_79 : f32 to vector<1x1024xf32>
    %168 = arith.addf %164, %167 : vector<1x1024xf32>
    %169 = math.rsqrt %168 : vector<1x1024xf32>
    %170 = vector.broadcast %169 : vector<1x1024xf32> to vector<8x1024xf32>
    %171 = arith.mulf %166, %170 : vector<8x1024xf32>
    %172 = vector.broadcast %152 : vector<1x1024xf32> to vector<8x1024xf32>
    %173 = arith.mulf %171, %172 : vector<8x1024xf32>
    %174 = vector.broadcast %153 : vector<1x1024xf32> to vector<8x1024xf32>
    %175 = arith.addf %173, %174 : vector<8x1024xf32>
    %cst_80 = arith.constant 0.000000e+00 : f32
    %176 = vector.broadcast %cst_80 : f32 to vector<8x1024xf32>
    %177 = arith.maximumf %175, %176 : vector<8x1024xf32>
    %c0_81 = arith.constant 0 : index
    %c3072_82 = arith.constant 3072 : index
    %178 = vector.load %arg13[%c0_81, %c3072_82] : memref<8x4096xf32, #tpu.memory_space<vmem>>, vector<8x1024xf32>
    tpu.vector_store %arg13[%c0_81, %c3072_82], %177 {strides = array<i32>} : memref<8x4096xf32, #tpu.memory_space<vmem>>, vector<8x1024xf32>,
    %c0_83 = arith.constant 0 : index
    %c0_84 = arith.constant 0 : index
    %179 = vector.load %arg10[%c0_83, %c0_84] : memref<512x192xbf16, #tpu.memory_space<vmem>>, vector<512x192xbf16>
    %180 = arith.truncf %58 : vector<8x512xf32> to vector<8x512xbf16>
    %cst_85 = arith.constant dense<0.000000e+00> : vector<8x192xf32>
    %181 = tpu.matmul %180, %179, %cst_85 {dimension_numbers = #tpu.dot_dimension_numbers<[1], [0], [0], [1], [0, 0, 1, 1], [], []>} : vector<8x512xbf16>, vector<512x192xbf16>, vector<8x192xf32> -> vector<8x192xf32>
    %c0_86 = arith.constant 0 : index
    %c0_87 = arith.constant 0 : index
    %182 = vector.load %arg11[%c0_86, %c0_87] : memref<1x192xf32, #tpu.memory_space<vmem>>, vector<1x192xf32>
    %c0_88 = arith.constant 0 : index
    %c0_89 = arith.constant 0 : index
    %183 = vector.load %arg12[%c0_88, %c0_89] : memref<1x192xf32, #tpu.memory_space<vmem>>, vector<1x192xf32>
    %cst_90 = arith.constant dense<0.000000e+00> : vector<192xf32>
    %184 = vector.multi_reduction <add>, %181, %cst_90 [0] : vector<8x192xf32> to vector<192xf32>
    %185 = vector.shape_cast %184 : vector<192xf32> to vector<1x192xf32>
    %cst_91 = arith.constant 8.000000e+00 : f32
    %186 = vector.broadcast %cst_91 : f32 to vector<1x192xf32>
    %187 = arith.divf %185, %186 : vector<1x192xf32>
    %188 = arith.mulf %181, %181 : vector<8x192xf32>
    %cst_92 = arith.constant dense<0.000000e+00> : vector<192xf32>
    %189 = vector.multi_reduction <add>, %188, %cst_92 [0] : vector<8x192xf32> to vector<192xf32>
    %190 = vector.shape_cast %189 : vector<192xf32> to vector<1x192xf32>
    %cst_93 = arith.constant 8.000000e+00 : f32
    %191 = vector.broadcast %cst_93 : f32 to vector<1x192xf32>
    %192 = arith.divf %190, %191 : vector<1x192xf32>
    %193 = arith.mulf %187, %187 : vector<1x192xf32>
    %194 = arith.subf %192, %193 : vector<1x192xf32>
    %195 = vector.broadcast %187 : vector<1x192xf32> to vector<8x192xf32>
    %196 = arith.subf %181, %195 : vector<8x192xf32>
    %cst_94 = arith.constant 9.99999974E-6 : f32
    %197 = vector.broadcast %cst_94 : f32 to vector<1x192xf32>
    %198 = arith.addf %194, %197 : vector<1x192xf32>
    %199 = math.rsqrt %198 : vector<1x192xf32>
    %200 = vector.broadcast %199 : vector<1x192xf32> to vector<8x192xf32>
    %201 = arith.mulf %196, %200 : vector<8x192xf32>
    %202 = vector.broadcast %182 : vector<1x192xf32> to vector<8x192xf32>
    %203 = arith.mulf %201, %202 : vector<8x192xf32>
    %204 = vector.broadcast %183 : vector<1x192xf32> to vector<8x192xf32>
    %205 = arith.addf %203, %204 : vector<8x192xf32>
    %cst_95 = arith.constant 0.000000e+00 : f32
    %206 = vector.broadcast %cst_95 : f32 to vector<8x192xf32>
    %207 = arith.maximumf %205, %206 : vector<8x192xf32>
    %c0_96 = arith.constant 0 : index
    %c0_97 = arith.constant 0 : index
    %208 = vector.load %arg14[%c0_96, %c0_97] : memref<8x192xf32, #tpu.memory_space<vmem>>, vector<8x192xf32>
    tpu.vector_store %arg14[%c0_96, %c0_97], %207 {strides = array<i32>} : memref<8x192xf32, #tpu.memory_space<vmem>>, vector<8x192xf32>,
    return
  }
}

</mosaic_0001>

<llo_original>
// kernel: tpu_custom_call.1
$region0: #{tpu_custom_call.1}
  #allocation0 [shape = 'u32[]', space=smem, size = 0x4, offset = 0x4, fixed_abs, tag = 'smem constant byte address 0x4 - core index']
  #allocation1 [shape = 'u32[72,128]{1,0:T(1,128)}', space=vmem, size = 0x9000, scoped, tag = 'internal scratch']
  %s0 = inlined_call_operand.hbm [shape: f32[8,32], index: 0, kind: input, shape index: {}]
  %s1 = inlined_call_operand.hbm [shape: bf16[32,512], index: 1, kind: input, shape index: {}]
  %s2 = inlined_call_operand.hbm [shape: f32[1,512], index: 2, kind: input, shape index: {}]
  %s3 = inlined_call_operand.hbm [shape: f32[1,512], index: 3, kind: input, shape index: {}]
  %s4 = inlined_call_operand.hbm [shape: bf16[512,512], index: 4, kind: input, shape index: {}]
  %s5 = inlined_call_operand.hbm [shape: f32[1,512], index: 5, kind: input, shape index: {}]
  %s6 = inlined_call_operand.hbm [shape: f32[1,512], index: 6, kind: input, shape index: {}]
  %s7 = inlined_call_operand.hbm [shape: bf16[512,4096], index: 7, kind: input, shape index: {}]
  %s8 = inlined_call_operand.hbm [shape: f32[1,4096], index: 8, kind: input, shape index: {}]
  %s9 = inlined_call_operand.hbm [shape: f32[1,4096], index: 9, kind: input, shape index: {}]
  %s10 = inlined_call_operand.vmem [shape: bf16[512,192], index: 10, kind: input, shape index: {}]
  %s11 = inlined_call_operand.hbm [shape: f32[1,192], index: 11, kind: input, shape index: {}]
  %s12 = inlined_call_operand.hbm [shape: f32[1,192], index: 12, kind: input, shape index: {}]
  %s13 = inlined_call_operand.hbm [shape: f32[8,4096], index: 13, kind: output, shape index: {0}]
  %s14 = inlined_call_operand.hbm [shape: f32[8,192], index: 14, kind: output, shape index: {1}]
  %15 = xla_tuple %s13, %s14
  %s16 = sld [smem:[#allocation0]]
  $region118: #{tpu_custom_call.1} parent=0
    _
  %s18 = ssub.s32 1, %s16
  %s19 = scalar_select 0, %s18, %s16
  $region1: #{tpu_custom_call.1} parent=0
    #allocation2 [shape = 'u8[4096]{0}', space=vmem, size = 0x1000, scoped, tag = 'input window, operand 0, single buffered']
    #allocation3 [shape = 's32[1]{0}', space=sflag, size = 0x4, scoped, tag = 'scoped memory for tpu_custom_call.1']
    #allocation4 [shape = 's32[1]{0}', space=sflag, size = 0x4, scoped, tag = 'scoped memory for tpu_custom_call.1']
    #allocation5 [shape = 'u8[32768]{0}', space=vmem, size = 0x8000, scoped, tag = 'input window, operand 1, single buffered']
    #allocation6 [shape = 's32[1]{0}', space=sflag, size = 0x4, scoped, tag = 'scoped memory for tpu_custom_call.1']
    #allocation7 [shape = 'u8[2048]{0}', space=vmem, size = 0x800, scoped, tag = 'input window, operand 2, single buffered']
    #allocation8 [shape = 'u8[2048]{0}', space=vmem, size = 0x800, scoped, tag = 'input window, operand 3, single buffered']
    #allocation9 [shape = 's32[1]{0}', space=sflag, size = 0x4, scoped, tag = 'scoped memory for tpu_custom_call.1']
    #allocation10 [shape = 'u8[524288]{0}', space=vmem, size = 0x80000, scoped, tag = 'input window, operand 4, single buffered']
    #allocation11 [shape = 'u8[2048]{0}', space=vmem, size = 0x800, scoped, tag = 'input window, operand 5, single buffered']
    #allocation12 [shape = 's32[1]{0}', space=sflag, size = 0x4, scoped, tag = 'scoped memory for tpu_custom_call.1']
    #allocation13 [shape = 'u8[2048]{0}', space=vmem, size = 0x800, scoped, tag = 'input window, operand 6, single buffered']
    #allocation14 [shape = 'u8[4194304]{0}', space=vmem, size = 0x400000, scoped, tag = 'input window, operand 7, single buffered']
    #allocation15 [shape = 's32[1]{0}', space=sflag, size = 0x4, scoped, tag = 'scoped memory for tpu_custom_call.1']
    #allocation16 [shape = 'u8[16384]{0}', space=vmem, size = 0x4000, scoped, tag = 'input window, operand 8, single buffered']
    #allocation17 [shape = 'u8[16384]{0}', space=vmem, size = 0x4000, scoped, tag = 'input window, operand 9, single buffered']
    #allocation18 [shape = 's32[1]{0}', space=sflag, size = 0x4, scoped, tag = 'scoped memory for tpu_custom_call.1']
    #allocation19 [shape = 'u8[1024]{0}', space=vmem, size = 0x400, scoped, tag = 'input window, operand 11, single buffered']
    #allocation20 [shape = 'u8[1024]{0}', space=vmem, size = 0x400, scoped, tag = 'input window, operand 12, single buffered']
    #allocation21 [shape = 's32[1]{0}', space=sflag, size = 0x4, scoped, tag = 'scoped memory for tpu_custom_call.1']
    #allocation22 [shape = 'u8[131072]{0}', space=vmem, size = 0x20000, scoped, tag = 'output window, operand 0, single buffered']
    #allocation23 [shape = 'u8[8192]{0}', space=vmem, size = 0x2000, scoped, tag = 'output window, operand 1, single buffered']
    #allocation24 [shape = 's32[1]{0}', space=sflag, size = 0x4, scoped, tag = 'scoped memory for tpu_custom_call.1']
    %20 = vsyncpa [#allocation3], 0
    %21 = vsyncpa [#allocation6], 0
    %22 = vsyncpa [#allocation9], 0
    %23 = vsyncpa [#allocation12], 0
    %24 = vsyncpa [#allocation15], 0
    %25 = vsyncpa [#allocation18], 0
    %26 = vsyncpa [#allocation21], 0
    %27 = vsyncpa [#allocation4], 0
    %28 = vsyncpa [#allocation24], 0
    // Predicated region
    $region2: #{tpu_custom_call.1} parent=1 // pred_check
      _
    $region3: #{tpu_custom_call.1} parent=1 // pred_check_branch
      %30 = sbr.rel (0) target = $region5
    $region4: #{tpu_custom_call.1} parent=1 // pred_region
      %32 = vsyncadd [#allocation3], 0
      %s34 = sshll.u32 %s0, 4
      %s35 = int_to_ptr.hbm [resolvable:$true] %s34
      %s36 = sshll.u32 [#allocation2], 4
      %s37 = int_to_ptr.vmem [resolvable:$true] %s36
      %39 = dma.hbm_to_vmem [thread:$0]  %s35, 128, %s37, [#allocation3]
    $region5: #{tpu_custom_call.1} parent=1 // pred_fallthru
      _
    // Predicated region
    $region6: #{tpu_custom_call.1} parent=1 // pred_check
      _
    $region7: #{tpu_custom_call.1} parent=1 // pred_check_branch
      %41 = sbr.rel (0) target = $region9
    $region8: #{tpu_custom_call.1} parent=1 // pred_region
      %43 = vsyncadd [#allocation6], 0
      %s44 = sshll.u32 %s1, 4
      %s45 = int_to_ptr.hbm [resolvable:$true] %s44
      %s46 = sshll.u32 [#allocation5], 4
      %s47 = int_to_ptr.vmem [resolvable:$true] %s46
      %52 = dma.hbm_to_vmem [thread:$0]  %s45, 1024, %s47, [#allocation6], 256, 256, 16
    $region9: #{tpu_custom_call.1} parent=1 // pred_fallthru
      _
    // Predicated region
    $region10: #{tpu_custom_call.1} parent=1 // pred_check
      _
    $region11: #{tpu_custom_call.1} parent=1 // pred_check_branch
      %54 = sbr.rel (0) target = $region13
    $region12: #{tpu_custom_call.1} parent=1 // pred_region
      %56 = vsyncadd [#allocation6], 0
      %s58 = sshll.u32 %s2, 4
      %s59 = int_to_ptr.hbm [resolvable:$true] %s58
      %s60 = sshll.u32 [#allocation7], 4
      %s61 = int_to_ptr.vmem [resolvable:$true] %s60
      %63 = dma.hbm_to_vmem [thread:$0]  %s59, 64, %s61, [#allocation6]
    $region13: #{tpu_custom_call.1} parent=1 // pred_fallthru
      _
    // Predicated region
    $region14: #{tpu_custom_call.1} parent=1 // pred_check
      _
    $region15: #{tpu_custom_call.1} parent=1 // pred_check_branch
      %65 = sbr.rel (0) target = $region17
    $region16: #{tpu_custom_call.1} parent=1 // pred_region
      %67 = vsyncadd [#allocation9], 0
      %s69 = sshll.u32 %s3, 4
      %s70 = int_to_ptr.hbm [resolvable:$true] %s69
      %s71 = sshll.u32 [#allocation8], 4
      %s72 = int_to_ptr.vmem [resolvable:$true] %s71
      %74 = dma.hbm_to_vmem [thread:$0]  %s70, 64, %s72, [#allocation9]
    $region17: #{tpu_custom_call.1} parent=1 // pred_fallthru
      _
    // Predicated region
    $region18: #{tpu_custom_call.1} parent=1 // pred_check
      _
    $region19: #{tpu_custom_call.1} parent=1 // pred_check_branch
      %76 = sbr.rel (0) target = $region21
    $region20: #{tpu_custom_call.1} parent=1 // pred_region
      %78 = vsyncadd [#allocation9], 0
      %s79 = sshll.u32 %s4, 4
      %s80 = int_to_ptr.hbm [resolvable:$true] %s79
      %s81 = sshll.u32 [#allocation10], 4
      %s82 = int_to_ptr.vmem [resolvable:$true] %s81
      %87 = dma.hbm_to_vmem [thread:$0]  %s80, 16384, %s82, [#allocation9], 256, 256, 16
    $region21: #{tpu_custom_call.1} parent=1 // pred_fallthru
      _
    // Predicated region
    $region22: #{tpu_custom_call.1} parent=1 // pred_check
      _
    $region23: #{tpu_custom_call.1} parent=1 // pred_check_branch
      %89 = sbr.rel (0) target = $region25
    $region24: #{tpu_custom_call.1} parent=1 // pred_region
      %91 = vsyncadd [#allocation12], 0
      %s93 = sshll.u32 %s5, 4
      %s94 = int_to_ptr.hbm [resolvable:$true] %s93
      %s95 = sshll.u32 [#allocation11], 4
      %s96 = int_to_ptr.vmem [resolvable:$true] %s95
      %98 = dma.hbm_to_vmem [thread:$0]  %s94, 64, %s96, [#allocation12]
    $region25: #{tpu_custom_call.1} parent=1 // pred_fallthru
      _
    // Predicated region
    $region26: #{tpu_custom_call.1} parent=1 // pred_check
      _
    $region27: #{tpu_custom_call.1} parent=1 // pred_check_branch
      %100 = sbr.rel (0) target = $region29
    $region28: #{tpu_custom_call.1} parent=1 // pred_region
      %102 = vsyncadd [#allocation12], 0
      %s104 = sshll.u32 %s6, 4
      %s105 = int_to_ptr.hbm [resolvable:$true] %s104
      %s106 = sshll.u32 [#allocation13], 4
      %s107 = int_to_ptr.vmem [resolvable:$true] %s106
      %109 = dma.hbm_to_vmem [thread:$0]  %s105, 64, %s107, [#allocation12]
    $region29: #{tpu_custom_call.1} parent=1 // pred_fallthru
      _
    // Predicated region
    $region30: #{tpu_custom_call.1} parent=1 // pred_check
      _
    $region31: #{tpu_custom_call.1} parent=1 // pred_check_branch
      %111 = sbr.rel (0) target = $region33
    $region32: #{tpu_custom_call.1} parent=1 // pred_region
      %113 = vsyncadd [#allocation15], 0
      %s114 = sshll.u32 %s7, 4
      %s115 = int_to_ptr.hbm [resolvable:$true] %s114
      %s116 = sshll.u32 [#allocation14], 4
      %s117 = int_to_ptr.vmem [resolvable:$true] %s116
      %122 = dma.hbm_to_vmem [thread:$0]  %s115, 131072, %s117, [#allocation15], 2048, 2048, 128
    $region33: #{tpu_custom_call.1} parent=1 // pred_fallthru
      _
    // Predicated region
    $region34: #{tpu_custom_call.1} parent=1 // pred_check
      _
    $region35: #{tpu_custom_call.1} parent=1 // pred_check_branch
      %124 = sbr.rel (0) target = $region37
    $region36: #{tpu_custom_call.1} parent=1 // pred_region
      %126 = vsyncadd [#allocation15], 0
      %s128 = sshll.u32 %s8, 4
      %s129 = int_to_ptr.hbm [resolvable:$true] %s128
      %s130 = sshll.u32 [#allocation16], 4
      %s131 = int_to_ptr.vmem [resolvable:$true] %s130
      %133 = dma.hbm_to_vmem [thread:$0]  %s129, 512, %s131, [#allocation15]
    $region37: #{tpu_custom_call.1} parent=1 // pred_fallthru
      _
    // Predicated region
    $region38: #{tpu_custom_call.1} parent=1 // pred_check
      _
    $region39: #{tpu_custom_call.1} parent=1 // pred_check_branch
      %135 = sbr.rel (0) target = $region41
    $region40: #{tpu_custom_call.1} parent=1 // pred_region
      %137 = vsyncadd [#allocation18], 0
      %s139 = sshll.u32 %s9, 4
      %s140 = int_to_ptr.hbm [resolvable:$true] %s139
      %s141 = sshll.u32 [#allocation17], 4
      %s142 = int_to_ptr.vmem [resolvable:$true] %s141
      %144 = dma.hbm_to_vmem [thread:$0]  %s140, 512, %s142, [#allocation18]
    $region41: #{tpu_custom_call.1} parent=1 // pred_fallthru
      _
    // Predicated region
    $region42: #{tpu_custom_call.1} parent=1 // pred_check
      _
    $region43: #{tpu_custom_call.1} parent=1 // pred_check_branch
      %146 = sbr.rel (0) target = $region45
    $region44: #{tpu_custom_call.1} parent=1 // pred_region
      _
    $region45: #{tpu_custom_call.1} parent=1 // pred_fallthru
      _
    // Predicated region
    $region46: #{tpu_custom_call.1} parent=1 // pred_check
      _
    $region47: #{tpu_custom_call.1} parent=1 // pred_check_branch
      %148 = sbr.rel (0) target = $region49
    $region48: #{tpu_custom_call.1} parent=1 // pred_region
      %150 = vsyncadd [#allocation18], 0
      %s152 = sshll.u32 %s11, 4
      %s153 = int_to_ptr.hbm [resolvable:$true] %s152
      %s154 = sshll.u32 [#allocation19], 4
      %s155 = int_to_ptr.vmem [resolvable:$true] %s154
      %157 = dma.hbm_to_vmem [thread:$0]  %s153, 32, %s155, [#allocation18]
    $region49: #{tpu_custom_call.1} parent=1 // pred_fallthru
      _
    // Predicated region
    $region50: #{tpu_custom_call.1} parent=1 // pred_check
      _
    $region51: #{tpu_custom_call.1} parent=1 // pred_check_branch
      %159 = sbr.rel (0) target = $region53
    $region52: #{tpu_custom_call.1} parent=1 // pred_region
      %161 = vsyncadd [#allocation21], 0
      %s163 = sshll.u32 %s12, 4
      %s164 = int_to_ptr.hbm [resolvable:$true] %s163
      %s165 = sshll.u32 [#allocation20], 4
      %s166 = int_to_ptr.vmem [resolvable:$true] %s165
      %168 = dma.hbm_to_vmem [thread:$0]  %s164, 32, %s166, [#allocation21]
    $region53: #{tpu_custom_call.1} parent=1 // pred_fallthru
      _
    // Predicated region
    $region54: #{tpu_custom_call.1} parent=1 // pred_check
      _
    $region55: #{tpu_custom_call.1} parent=1 // pred_check_branch
      %170 = sbr.rel (0) target = $region57
    $region56: #{tpu_custom_call.1} parent=1 // pred_region
      %172 = dma.done [#allocation3], 128
    $region57: #{tpu_custom_call.1} parent=1 // pred_fallthru
      _
    // Predicated region
    $region58: #{tpu_custom_call.1} parent=1 // pred_check
      _
    $region59: #{tpu_custom_call.1} parent=1 // pred_check_branch
      %174 = sbr.rel (0) target = $region61
    $region60: #{tpu_custom_call.1} parent=1 // pred_region
      %176 = dma.done [#allocation6], 1024
    $region61: #{tpu_custom_call.1} parent=1 // pred_fallthru
      _
    // Predicated region
    $region62: #{tpu_custom_call.1} parent=1 // pred_check
      _
    $region63: #{tpu_custom_call.1} parent=1 // pred_check_branch
      %178 = sbr.rel (0) target = $region65
    $region64: #{tpu_custom_call.1} parent=1 // pred_region
      %180 = dma.done [#allocation6], 64
    $region65: #{tpu_custom_call.1} parent=1 // pred_fallthru
      _
    // Predicated region
    $region66: #{tpu_custom_call.1} parent=1 // pred_check
      _
    $region67: #{tpu_custom_call.1} parent=1 // pred_check_branch
      %182 = sbr.rel (0) target = $region69
    $region68: #{tpu_custom_call.1} parent=1 // pred_region
      %184 = dma.done [#allocation9], 64
    $region69: #{tpu_custom_call.1} parent=1 // pred_fallthru
      _
    // Predicated region
    $region70: #{tpu_custom_call.1} parent=1 // pred_check
      _
    $region71: #{tpu_custom_call.1} parent=1 // pred_check_branch
      %186 = sbr.rel (0) target = $region73
    $region72: #{tpu_custom_call.1} parent=1 // pred_region
      %188 = dma.done [#allocation9], 16384
    $region73: #{tpu_custom_call.1} parent=1 // pred_fallthru
      _
    // Predicated region
    $region74: #{tpu_custom_call.1} parent=1 // pred_check
      _
    $region75: #{tpu_custom_call.1} parent=1 // pred_check_branch
      %190 = sbr.rel (0) target = $region77
    $region76: #{tpu_custom_call.1} parent=1 // pred_region
      %192 = dma.done [#allocation12], 64
    $region77: #{tpu_custom_call.1} parent=1 // pred_fallthru
      _
    // Predicated region
    $region78: #{tpu_custom_call.1} parent=1 // pred_check
      _
    $region79: #{tpu_custom_call.1} parent=1 // pred_check_branch
      %194 = sbr.rel (0) target = $region81
    $region80: #{tpu_custom_call.1} parent=1 // pred_region
      %196 = dma.done [#allocation12], 64
    $region81: #{tpu_custom_call.1} parent=1 // pred_fallthru
      _
    // Predicated region
    $region82: #{tpu_custom_call.1} parent=1 // pred_check
      _
    $region83: #{tpu_custom_call.1} parent=1 // pred_check_branch
      %198 = sbr.rel (0) target = $region85
    $region84: #{tpu_custom_call.1} parent=1 // pred_region
      %200 = dma.done [#allocation15], 131072
    $region85: #{tpu_custom_call.1} parent=1 // pred_fallthru
      _
    // Predicated region
    $region86: #{tpu_custom_call.1} parent=1 // pred_check
      _
    $region87: #{tpu_custom_call.1} parent=1 // pred_check_branch
      %202 = sbr.rel (0) target = $region89
    $region88: #{tpu_custom_call.1} parent=1 // pred_region
      %204 = dma.done [#allocation15], 512
    $region89: #{tpu_custom_call.1} parent=1 // pred_fallthru
      _
    // Predicated region
    $region90: #{tpu_custom_call.1} parent=1 // pred_check
      _
    $region91: #{tpu_custom_call.1} parent=1 // pred_check_branch
      %206 = sbr.rel (0) target = $region93
    $region92: #{tpu_custom_call.1} parent=1 // pred_region
      %208 = dma.done [#allocation18], 512
    $region93: #{tpu_custom_call.1} parent=1 // pred_fallthru
      _
    // Predicated region
    $region94: #{tpu_custom_call.1} parent=1 // pred_check
      _
    $region95: #{tpu_custom_call.1} parent=1 // pred_check_branch
      %210 = sbr.rel (0) target = $region97
    $region96: #{tpu_custom_call.1} parent=1 // pred_region
      %212 = dma.done [#allocation18], 32
    $region97: #{tpu_custom_call.1} parent=1 // pred_fallthru
      _
    // Predicated region
    $region98: #{tpu_custom_call.1} parent=1 // pred_check
      _
    $region99: #{tpu_custom_call.1} parent=1 // pred_check_branch
      %214 = sbr.rel (0) target = $region101
    $region100: #{tpu_custom_call.1} parent=1 // pred_region
      %216 = dma.done [#allocation21], 32
    $region101: #{tpu_custom_call.1} parent=1 // pred_fallthru
      _
    %v218 = vld [vmem:[#allocation2] sm:$0xff]
    %v219 = vld [vmem:[#allocation5] sm:$0xff]
    %v220 = vld [vmem:[#allocation5 + $0x8] sm:$0xff]
    %v221 = vld [vmem:[#allocation5 + $0x10] sm:$0xff]
    %v222 = vld [vmem:[#allocation5 + $0x18] sm:$0xff]
    %v223 = vld [vmem:[#allocation5 + $0x20] sm:$0xff]
    %v224 = vld [vmem:[#allocation5 + $0x28] sm:$0xff]
    %v225 = vld [vmem:[#allocation5 + $0x30] sm:$0xff]
    %v226 = vld [vmem:[#allocation5 + $0x38] sm:$0xff]
    %v227 = vpack.c.bf16 %v218, %v218
    %v236 = vunpack.c.l.b16 %v219
    %v237 = vunpack.c.h.b16 %v219
    %v238 = vunpack.c.l.b16 %v220
    %v239 = vunpack.c.h.b16 %v220
    %v240 = vunpack.c.l.b16 %v221
    %v241 = vunpack.c.h.b16 %v221
    %v242 = vunpack.c.l.b16 %v222
    %v243 = vunpack.c.h.b16 %v222
    %v244 = vunpack.c.l.b16 %v223
    %v245 = vunpack.c.h.b16 %v223
    %v246 = vunpack.c.l.b16 %v224
    %v247 = vunpack.c.h.b16 %v224
    %v248 = vunpack.c.l.b16 %v225
    %v249 = vunpack.c.h.b16 %v225
    %v250 = vunpack.c.l.b16 %v226
    %v251 = vunpack.c.h.b16 %v226
    %v252 = vpack.c.b16 %v240, %v236
    %v253 = vpack.c.b16 %v241, %v237
    %v254 = vpack.c.b16 %v242, %v238
    %v255 = vpack.c.b16 %v243, %v239
    %v256 = vpack.c.b16 %v248, %v244
    %v257 = vpack.c.b16 %v249, %v245
    %v258 = vpack.c.b16 %v250, %v246
    %v259 = vpack.c.b16 %v251, %v247
    %vm268 = vcmask 261120
    %v270 = vsel %vm268, %v227, 0
    %272 = vmatpush.bf16.msra.mxu0 0
    %273 = vmatpush.bf16.msra.mxu0 0
    %274 = vmatpush.bf16.msra.mxu0 0
    %275 = vmatpush.bf16.msra.mxu0 0
    %276 = vmatpush.bf16.msra.mxu0 0
    %277 = vmatpush.bf16.msra.mxu0 0
    %278 = vmatpush.bf16.msra.mxu0 %v256
    %279 = vmatpush.bf16.msra.mxu0 %v252
    %280 = vmatmul.bf16.gmra.mxu0 %v270
    %v281 = vpop.f32.mrf.mxu0
    %v282 = vadd.f32 0.0, %v281
    %v283 = vpop.f32.mrf.mxu0
    %284 = vdwg.mxu0
    %285 = vmatpush.bf16.msra.mxu0 0
    %286 = vmatpush.bf16.msra.mxu0 0
    %287 = vmatpush.bf16.msra.mxu0 0
    %288 = vmatpush.bf16.msra.mxu0 0
    %289 = vmatpush.bf16.msra.mxu0 0
    %290 = vmatpush.bf16.msra.mxu0 0
    %291 = vmatpush.bf16.msra.mxu0 %v257
    %292 = vmatpush.bf16.msra.mxu0 %v253
    %293 = vmatmul.bf16.gmra.mxu0 %v270
    %v294 = vpop.f32.mrf.mxu0
    %v295 = vadd.f32 0.0, %v294
    %v296 = vpop.f32.mrf.mxu0
    %297 = vdwg.mxu0
    %298 = vmatpush.bf16.msra.mxu0 0
    %299 = vmatpush.bf16.msra.mxu0 0
    %300 = vmatpush.bf16.msra.mxu0 0
    %301 = vmatpush.bf16.msra.mxu0 0
    %302 = vmatpush.bf16.msra.mxu0 0
    %303 = vmatpush.bf16.msra.mxu0 0
    %304 = vmatpush.bf16.msra.mxu0 %v258
    %305 = vmatpush.bf16.msra.mxu0 %v254
    %306 = vmatmul.bf16.gmra.mxu0 %v270
    %v307 = vpop.f32.mrf.mxu0
    %v308 = vadd.f32 0.0, %v307
    %v309 = vpop.f32.mrf.mxu0
    %310 = vdwg.mxu0
    %311 = vmatpush.bf16.msra.mxu0 0
    %312 = vmatpush.bf16.msra.mxu0 0
    %313 = vmatpush.bf16.msra.mxu0 0
    %314 = vmatpush.bf16.msra.mxu0 0
    %315 = vmatpush.bf16.msra.mxu0 0
    %316 = vmatpush.bf16.msra.mxu0 0
    %317 = vmatpush.bf16.msra.mxu0 %v259
    %318 = vmatpush.bf16.msra.mxu0 %v255
    %319 = vmatmul.bf16.gmra.mxu0 %v270
    %v320 = vpop.f32.mrf.mxu0
    %v321 = vadd.f32 0.0, %v320
    %v322 = vpop.f32.mrf.mxu0
    %323 = vdwg.mxu0
    %v324 = vld [vmem:[#allocation7] sm:$0xf]
    %v325 = vld [vmem:[#allocation8] sm:$0xf]
    %v326 = vrot.slane %v282, 4
    %v327 = vadd.f32 %v282, %v326
    %v328 = vrot.slane %v327, 2
    %v329 = vadd.f32 %v327, %v328
    %v330 = vrot.slane %v329, 1
    %v331 = vadd.f32 %v329, %v330
    %v332 = vrot.slane %v295, 4
    %v333 = vadd.f32 %v295, %v332
    %v334 = vrot.slane %v333, 2
    %v335 = vadd.f32 %v333, %v334
    %v336 = vrot.slane %v335, 1
    %v337 = vadd.f32 %v335, %v336
    %v338 = vrot.slane %v308, 4
    %v339 = vadd.f32 %v308, %v338
    %v340 = vrot.slane %v339, 2
    %v341 = vadd.f32 %v339, %v340
    %v342 = vrot.slane %v341, 1
    %v343 = vadd.f32 %v341, %v342
    %v344 = vrot.slane %v321, 4
    %v345 = vadd.f32 %v321, %v344
    %v346 = vrot.slane %v345, 2
    %v347 = vadd.f32 %v345, %v346
    %v348 = vrot.slane %v347, 1
    %v349 = vadd.f32 %v347, %v348
    %v350 = vrcp.pop 8.0
    %v351 = vmul.f32 8.0, %v350
    %v352 = vsub.f32 1.0, %v351
    %v353 = vmul.f32 %v350, %v352
    %v354 = vadd.f32 %v350, %v353
    %vm355 = vweird.f32 %v350
    %v356 = vsel %vm355, %v350, %v354
    %v357 = vmul.f32 %v331, %v356
    %v358 = vmul.f32 %v337, %v356
    %v359 = vmul.f32 %v343, %v356
    %v360 = vmul.f32 %v349, %v356
    %v361 = vmul.f32 %v282, %v282
    %v362 = vmul.f32 %v295, %v295
    %v363 = vmul.f32 %v308, %v308
    %v364 = vmul.f32 %v321, %v321
    %v365 = vrot.slane %v361, 4
    %v366 = vadd.f32 %v361, %v365
    %v367 = vrot.slane %v366, 2
    %v368 = vadd.f32 %v366, %v367
    %v369 = vrot.slane %v368, 1
    %v370 = vadd.f32 %v368, %v369
    %v371 = vrot.slane %v362, 4
    %v372 = vadd.f32 %v362, %v371
    %v373 = vrot.slane %v372, 2
    %v374 = vadd.f32 %v372, %v373
    %v375 = vrot.slane %v374, 1
    %v376 = vadd.f32 %v374, %v375
    %v377 = vrot.slane %v363, 4
    %v378 = vadd.f32 %v363, %v377
    %v379 = vrot.slane %v378, 2
    %v380 = vadd.f32 %v378, %v379
    %v381 = vrot.slane %v380, 1
    %v382 = vadd.f32 %v380, %v381
    %v383 = vrot.slane %v364, 4
    %v384 = vadd.f32 %v364, %v383
    %v385 = vrot.slane %v384, 2
    %v386 = vadd.f32 %v384, %v385
    %v387 = vrot.slane %v386, 1
    %v388 = vadd.f32 %v386, %v387
    %v389 = vmul.f32 %v370, %v356
    %v390 = vmul.f32 %v376, %v356
    %v391 = vmul.f32 %v382, %v356
    %v392 = vmul.f32 %v388, %v356
    %v393 = vmul.f32 %v357, %v357
    %v394 = vmul.f32 %v358, %v358
    %v395 = vmul.f32 %v359, %v359
    %v396 = vmul.f32 %v360, %v360
    %v397 = vsub.f32 %v389, %v393
    %v398 = vsub.f32 %v390, %v394
    %v399 = vsub.f32 %v391, %v395
    %v400 = vsub.f32 %v392, %v396
    %v401 = vsub.f32 %v282, %v357
    %v402 = vsub.f32 %v295, %v358
    %v403 = vsub.f32 %v308, %v359
    %v404 = vsub.f32 %v321, %v360
    %v405 = vadd.f32 %v397, 1e-05
    %v406 = vadd.f32 %v398, 1e-05
    %v407 = vadd.f32 %v399, 1e-05
    %v408 = vadd.f32 %v400, 1e-05
    %v409 = vrsqrt.pop %v405
    %v410 = vmul.f32 %v409, %v405
    %v411 = vmul.f32 %v410, %v409
    %v412 = vmul.f32 0.5, %v411
    %v413 = vsub.f32 1.5, %v412
    %v414 = vmul.f32 %v409, %v413
    %vm415 = vweird.f32 %v405
    %vm416 = vweird.f32 %v409
    %vm417 = vmor %vm415, %vm416
    %v418 = vsel %vm417, %v409, %v414
    %v419 = vrsqrt.pop %v406
    %v420 = vmul.f32 %v419, %v406
    %v421 = vmul.f32 %v420, %v419
    %v422 = vmul.f32 0.5, %v421
    %v423 = vsub.f32 1.5, %v422
    %v424 = vmul.f32 %v419, %v423
    %vm425 = vweird.f32 %v406
    %vm426 = vweird.f32 %v419
    %vm427 = vmor %vm425, %vm426
    %v428 = vsel %vm427, %v419, %v424
    %v429 = vrsqrt.pop %v407
    %v430 = vmul.f32 %v429, %v407
    %v431 = vmul.f32 %v430, %v429
    %v432 = vmul.f32 0.5, %v431
    %v433 = vsub.f32 1.5, %v432
    %v434 = vmul.f32 %v429, %v433
    %vm435 = vweird.f32 %v407
    %vm436 = vweird.f32 %v429
    %vm437 = vmor %vm435, %vm436
    %v438 = vsel %vm437, %v429, %v434
    %v439 = vrsqrt.pop %v408
    %v440 = vmul.f32 %v439, %v408
    %v441 = vmul.f32 %v440, %v439
    %v442 = vmul.f32 0.5, %v441
    %v443 = vsub.f32 1.5, %v442
    %v444 = vmul.f32 %v439, %v443
    %vm445 = vweird.f32 %v408
    %vm446 = vweird.f32 %v439
    %vm447 = vmor %vm445, %vm446
    %v448 = vsel %vm447, %v439, %v444
    %v449 = vmul.f32 %v401, %v418
    %v450 = vmul.f32 %v402, %v428
    %v451 = vmul.f32 %v403, %v438
    %v452 = vmul.f32 %v404, %v448
    %v454 = vperm.slane %v324, 0
    %v455 = vperm.slane %v324, 1
    %v456 = vperm.slane %v324, 2
    %v457 = vperm.slane %v324, 3
    %v462 = vmul.f32 %v449, %v454
    %v463 = vmul.f32 %v450, %v455
    %v464 = vmul.f32 %v451, %v456
    %v465 = vmul.f32 %v452, %v457
    %v467 = vperm.slane %v325, 0
    %v468 = vperm.slane %v325, 1
    %v469 = vperm.slane %v325, 2
    %v470 = vperm.slane %v325, 3
    %v475 = vadd.f32 %v462, %v467
    %v476 = vadd.f32 %v463, %v468
    %v477 = vadd.f32 %v464, %v469
    %v478 = vadd.f32 %v465, %v470
    %v479 = vmax.f32 %v475, 0.0
    %v480 = vmax.f32 %v476, 0.0
    %v481 = vmax.f32 %v477, 0.0
    %v482 = vmax.f32 %v478, 0.0
    %v483 = vld [vmem:[#allocation10] sm:$0xff]
    %v484 = vld [vmem:[#allocation10 + $0x8] sm:$0xff]
    %v485 = vld [vmem:[#allocation10 + $0x10] sm:$0xff]
    %v486 = vld [vmem:[#allocation10 + $0x18] sm:$0xff]
    %v487 = vld [vmem:[#allocation10 + $0x20] sm:$0xff]
    %v488 = vld [vmem:[#allocation10 + $0x28] sm:$0xff]
    %v489 = vld [vmem:[#allocation10 + $0x30] sm:$0xff]
    %v490 = vld [vmem:[#allocation10 + $0x38] sm:$0xff]
    %v491 = vld [vmem:[#allocation10 + $0x40] sm:$0xff]
    %v492 = vld [vmem:[#allocation10 + $0x48] sm:$0xff]
    %v493 = vld [vmem:[#allocation10 + $0x50] sm:$0xff]
    %v494 = vld [vmem:[#allocation10 + $0x58] sm:$0xff]
    %v495 = vld [vmem:[#allocation10 + $0x60] sm:$0xff]
    %v496 = vld [vmem:[#allocation10 + $0x68] sm:$0xff]
    %v497 = vld [vmem:[#allocation10 + $0x70] sm:$0xff]
    %v498 = vld [vmem:[#allocation10 + $0x78] sm:$0xff]
    %v499 = vld [vmem:[#allocation10 + $0x80] sm:$0xff]
    %v500 = vld [vmem:[#allocation10 + $0x88] sm:$0xff]
    %v501 = vld [vmem:[#allocation10 + $0x90] sm:$0xff]
    %v502 = vld [vmem:[#allocation10 + $0x98] sm:$0xff]
    %v503 = vld [vmem:[#allocation10 + $0xa0] sm:$0xff]
    %v504 = vld [vmem:[#allocation10 + $0xa8] sm:$0xff]
    %v505 = vld [vmem:[#allocation10 + $0xb0] sm:$0xff]
    %v506 = vld [vmem:[#allocation10 + $0xb8] sm:$0xff]
    %v507 = vld [vmem:[#allocation10 + $0xc0] sm:$0xff]
    %v508 = vld [vmem:[#allocation10 + $0xc8] sm:$0xff]
    %v509 = vld [vmem:[#allocation10 + $0xd0] sm:$0xff]
    %v510 = vld [vmem:[#allocation10 + $0xd8] sm:$0xff]
    %v511 = vld [vmem:[#allocation10 + $0xe0] sm:$0xff]
    %v512 = vld [vmem:[#allocation10 + $0xe8] sm:$0xff]
    %v513 = vld [vmem:[#allocation10 + $0xf0] sm:$0xff]
    %v514 = vld [vmem:[#allocation10 + $0xf8] sm:$0xff]
    %v515 = vld [vmem:[#allocation10 + $0x100] sm:$0xff]
    %v516 = vld [vmem:[#allocation10 + $0x108] sm:$0xff]
    %v517 = vld [vmem:[#allocation10 + $0x110] sm:$0xff]
    %v518 = vld [vmem:[#allocation10 + $0x118] sm:$0xff]
    %v519 = vld [vmem:[#allocation10 + $0x120] sm:$0xff]
    %v520 = vld [vmem:[#allocation10 + $0x128] sm:$0xff]
    %v521 = vld [vmem:[#allocation10 + $0x130] sm:$0xff]
    %v522 = vld [vmem:[#allocation10 + $0x138] sm:$0xff]
    %v523 = vld [vmem:[#allocation10 + $0x140] sm:$0xff]
    %v524 = vld [vmem:[#allocation10 + $0x148] sm:$0xff]
    %v525 = vld [vmem:[#allocation10 + $0x150] sm:$0xff]
    %v526 = vld [vmem:[#allocation10 + $0x158] sm:$0xff]
    %v527 = vld [vmem:[#allocation10 + $0x160] sm:$0xff]
    %v528 = vld [vmem:[#allocation10 + $0x168] sm:$0xff]
    %v529 = vld [vmem:[#allocation10 + $0x170] sm:$0xff]
    %v530 = vld [vmem:[#allocation10 + $0x178] sm:$0xff]
    %v531 = vld [vmem:[#allocation10 + $0x180] sm:$0xff]
    %v532 = vld [vmem:[#allocation10 + $0x188] sm:$0xff]
    %v533 = vld [vmem:[#allocation10 + $0x190] sm:$0xff]
    %v534 = vld [vmem:[#allocation10 + $0x198] sm:$0xff]
    %v535 = vld [vmem:[#allocation10 + $0x1a0] sm:$0xff]
    %v536 = vld [vmem:[#allocation10 + $0x1a8] sm:$0xff]
    %v537 = vld [vmem:[#allocation10 + $0x1b0] sm:$0xff]
    %v538 = vld [vmem:[#allocation10 + $0x1b8] sm:$0xff]
    %v539 = vld [vmem:[#allocation10 + $0x1c0] sm:$0xff]
    %v540 = vld [vmem:[#allocation10 + $0x1c8] sm:$0xff]
    %v541 = vld [vmem:[#allocation10 + $0x1d0] sm:$0xff]
    %v542 = vld [vmem:[#allocation10 + $0x1d8] sm:$0xff]
    %v543 = vld [vmem:[#allocation10 + $0x1e0] sm:$0xff]
    %v544 = vld [vmem:[#allocation10 + $0x1e8] sm:$0xff]
    %v545 = vld [vmem:[#allocation10 + $0x1f0] sm:$0xff]
    %v546 = vld [vmem:[#allocation10 + $0x1f8] sm:$0xff]
    %v547 = vld [vmem:[#allocation10 + $0x200] sm:$0xff]
    %v548 = vld [vmem:[#allocation10 + $0x208] sm:$0xff]
    %v549 = vld [vmem:[#allocation10 + $0x210] sm:$0xff]
    %v550 = vld [vmem:[#allocation10 + $0x218] sm:$0xff]
    %v551 = vld [vmem:[#allocation10 + $0x220] sm:$0xff]
    %v552 = vld [vmem:[#allocation10 + $0x228] sm:$0xff]
    %v553 = vld [vmem:[#allocation10 + $0x230] sm:$0xff]
    %v554 = vld [vmem:[#allocation10 + $0x238] sm:$0xff]
    %v555 = vld [vmem:[#allocation10 + $0x240] sm:$0xff]
    %v556 = vld [vmem:[#allocation10 + $0x248] sm:$0xff]
    %v557 = vld [vmem:[#allocation10 + $0x250] sm:$0xff]
    %v558 = vld [vmem:[#allocation10 + $0x258] sm:$0xff]
    %v559 = vld [vmem:[#allocation10 + $0x260] sm:$0xff]
    %v560 = vld [vmem:[#allocation10 + $0x268] sm:$0xff]
    %v561 = vld [vmem:[#allocation10 + $0x270] sm:$0xff]
    %v562 = vld [vmem:[#allocation10 + $0x278] sm:$0xff]
    %v563 = vld [vmem:[#allocation10 + $0x280] sm:$0xff]
    %v564 = vld [vmem:[#allocation10 + $0x288] sm:$0xff]
    %v565 = vld [vmem:[#allocation10 + $0x290] sm:$0xff]
    %v566 = vld [vmem:[#allocation10 + $0x298] sm:$0xff]
    %v567 = vld [vmem:[#allocation10 + $0x2a0] sm:$0xff]
    %v568 = vld [vmem:[#allocation10 + $0x2a8] sm:$0xff]
    %v569 = vld [vmem:[#allocation10 + $0x2b0] sm:$0xff]
    %v570 = vld [vmem:[#allocation10 + $0x2b8] sm:$0xff]
    %v571 = vld [vmem:[#allocation10 + $0x2c0] sm:$0xff]
    %v572 = vld [vmem:[#allocation10 + $0x2c8] sm:$0xff]
    %v573 = vld [vmem:[#allocation10 + $0x2d0] sm:$0xff]
    %v574 = vld [vmem:[#allocation10 + $0x2d8] sm:$0xff]
    %v575 = vld [vmem:[#allocation10 + $0x2e0] sm:$0xff]
    %v576 = vld [vmem:[#allocation10 + $0x2e8] sm:$0xff]
    %v577 = vld [vmem:[#allocation10 + $0x2f0] sm:$0xff]
    %v578 = vld [vmem:[#allocation10 + $0x2f8] sm:$0xff]
    %v579 = vld [vmem:[#allocation10 + $0x300] sm:$0xff]
    %v580 = vld [vmem:[#allocation10 + $0x308] sm:$0xff]
    %v581 = vld [vmem:[#allocation10 + $0x310] sm:$0xff]
    %v582 = vld [vmem:[#allocation10 + $0x318] sm:$0xff]
    %v583 = vld [vmem:[#allocation10 + $0x320] sm:$0xff]
    %v584 = vld [vmem:[#allocation10 + $0x328] sm:$0xff]
    %v585 = vld [vmem:[#allocation10 + $0x330] sm:$0xff]
    %v586 = vld [vmem:[#allocation10 + $0x338] sm:$0xff]
    %v587 = vld [vmem:[#allocation10 + $0x340] sm:$0xff]
    %v588 = vld [vmem:[#allocation10 + $0x348] sm:$0xff]
    %v589 = vld [vmem:[#allocation10 + $0x350] sm:$0xff]
    %v590 = vld [vmem:[#allocation10 + $0x358] sm:$0xff]
    %v591 = vld [vmem:[#allocation10 + $0x360] sm:$0xff]
    %v592 = vld [vmem:[#allocation10 + $0x368] sm:$0xff]
    %v593 = vld [vmem:[#allocation10 + $0x370] sm:$0xff]
    %v594 = vld [vmem:[#allocation10 + $0x378] sm:$0xff]
    %v595 = vld [vmem:[#allocation10 + $0x380] sm:$0xff]
    %v596 = vld [vmem:[#allocation10 + $0x388] sm:$0xff]
    %v597 = vld [vmem:[#allocation10 + $0x390] sm:$0xff]
    %v598 = vld [vmem:[#allocation10 + $0x398] sm:$0xff]
    %v599 = vld [vmem:[#allocation10 + $0x3a0] sm:$0xff]
    %v600 = vld [vmem:[#allocation10 + $0x3a8] sm:$0xff]
    %v601 = vld [vmem:[#allocation10 + $0x3b0] sm:$0xff]
    %v602 = vld [vmem:[#allocation10 + $0x3b8] sm:$0xff]
    %v603 = vld [vmem:[#allocation10 + $0x3c0] sm:$0xff]
    %v604 = vld [vmem:[#allocation10 + $0x3c8] sm:$0xff]
    %v605 = vld [vmem:[#allocation10 + $0x3d0] sm:$0xff]
    %v606 = vld [vmem:[#allocation10 + $0x3d8] sm:$0xff]
    %v607 = vld [vmem:[#allocation10 + $0x3e0] sm:$0xff]
    %v608 = vld [vmem:[#allocation10 + $0x3e8] sm:$0xff]
    %v609 = vld [vmem:[#allocation10 + $0x3f0] sm:$0xff]
    %v610 = vld [vmem:[#allocation10 + $0x3f8] sm:$0xff]
    %v611 = vpack.c.bf16 %v479, %v479
    %v612 = vpack.c.bf16 %v480, %v480
    %v613 = vpack.c.bf16 %v481, %v481
    %v614 = vpack.c.bf16 %v482, %v482
    %v743 = vunpack.c.l.b16 %v483
    %v744 = vunpack.c.h.b16 %v483
    %v745 = vunpack.c.l.b16 %v484
    %v746 = vunpack.c.h.b16 %v484
    %v747 = vunpack.c.l.b16 %v485
    %v748 = vunpack.c.h.b16 %v485
    %v749 = vunpack.c.l.b16 %v486
    %v750 = vunpack.c.h.b16 %v486
    %v751 = vunpack.c.l.b16 %v487
    %v752 = vunpack.c.h.b16 %v487
    %v753 = vunpack.c.l.b16 %v488
    %v754 = vunpack.c.h.b16 %v488
    %v755 = vunpack.c.l.b16 %v489
    %v756 = vunpack.c.h.b16 %v489
    %v757 = vunpack.c.l.b16 %v490
    %v758 = vunpack.c.h.b16 %v490
    %v759 = vunpack.c.l.b16 %v491
    %v760 = vunpack.c.h.b16 %v491
    %v761 = vunpack.c.l.b16 %v492
    %v762 = vunpack.c.h.b16 %v492
    %v763 = vunpack.c.l.b16 %v493
    %v764 = vunpack.c.h.b16 %v493
    %v765 = vunpack.c.l.b16 %v494
    %v766 = vunpack.c.h.b16 %v494
    %v767 = vunpack.c.l.b16 %v495
    %v768 = vunpack.c.h.b16 %v495
    %v769 = vunpack.c.l.b16 %v496
    %v770 = vunpack.c.h.b16 %v496
    %v771 = vunpack.c.l.b16 %v497
    %v772 = vunpack.c.h.b16 %v497
    %v773 = vunpack.c.l.b16 %v498
    %v774 = vunpack.c.h.b16 %v498
    %v775 = vunpack.c.l.b16 %v499
    %v776 = vunpack.c.h.b16 %v499
    %v777 = vunpack.c.l.b16 %v500
    %v778 = vunpack.c.h.b16 %v500
    %v779 = vunpack.c.l.b16 %v501
    %v780 = vunpack.c.h.b16 %v501
    %v781 = vunpack.c.l.b16 %v502
    %v782 = vunpack.c.h.b16 %v502
    %v783 = vunpack.c.l.b16 %v503
    %v784 = vunpack.c.h.b16 %v503
    %v785 = vunpack.c.l.b16 %v504
    %v786 = vunpack.c.h.b16 %v504
    %v787 = vunpack.c.l.b16 %v505
    %v788 = vunpack.c.h.b16 %v505
    %v789 = vunpack.c.l.b16 %v506
    %v790 = vunpack.c.h.b16 %v506
    %v791 = vunpack.c.l.b16 %v507
    %v792 = vunpack.c.h.b16 %v507
    %v793 = vunpack.c.l.b16 %v508
    %v794 = vunpack.c.h.b16 %v508
    %v795 = vunpack.c.l.b16 %v509
    %v796 = vunpack.c.h.b16 %v509
    %v797 = vunpack.c.l.b16 %v510
    %v798 = vunpack.c.h.b16 %v510
    %v799 = vunpack.c.l.b16 %v511
    %v800 = vunpack.c.h.b16 %v511
    %v801 = vunpack.c.l.b16 %v512
    %v802 = vunpack.c.h.b16 %v512
    %v803 = vunpack.c.l.b16 %v513
    %v804 = vunpack.c.h.b16 %v513
    %v805 = vunpack.c.l.b16 %v514
    %v806 = vunpack.c.h.b16 %v514
    %v807 = vunpack.c.l.b16 %v515
    %v808 = vunpack.c.h.b16 %v515
    %v809 = vunpack.c.l.b16 %v516
    %v810 = vunpack.c.h.b16 %v516
    %v811 = vunpack.c.l.b16 %v517
    %v812 = vunpack.c.h.b16 %v517
    %v813 = vunpack.c.l.b16 %v518
    %v814 = vunpack.c.h.b16 %v518
    %v815 = vunpack.c.l.b16 %v519
    %v816 = vunpack.c.h.b16 %v519
    %v817 = vunpack.c.l.b16 %v520
    %v818 = vunpack.c.h.b16 %v520
    %v819 = vunpack.c.l.b16 %v521
    %v820 = vunpack.c.h.b16 %v521
    %v821 = vunpack.c.l.b16 %v522
    %v822 = vunpack.c.h.b16 %v522
    %v823 = vunpack.c.l.b16 %v523
    %v824 = vunpack.c.h.b16 %v523
    %v825 = vunpack.c.l.b16 %v524
    %v826 = vunpack.c.h.b16 %v524
    %v827 = vunpack.c.l.b16 %v525
    %v828 = vunpack.c.h.b16 %v525
    %v829 = vunpack.c.l.b16 %v526
    %v830 = vunpack.c.h.b16 %v526
    %v831 = vunpack.c.l.b16 %v527
    %v832 = vunpack.c.h.b16 %v527
    %v833 = vunpack.c.l.b16 %v528
    %v834 = vunpack.c.h.b16 %v528
    %v835 = vunpack.c.l.b16 %v529
    %v836 = vunpack.c.h.b16 %v529
    %v837 = vunpack.c.l.b16 %v530
    %v838 = vunpack.c.h.b16 %v530
    %v839 = vunpack.c.l.b16 %v531
    %v840 = vunpack.c.h.b16 %v531
    %v841 = vunpack.c.l.b16 %v532
    %v842 = vunpack.c.h.b16 %v532
    %v843 = vunpack.c.l.b16 %v533
    %v844 = vunpack.c.h.b16 %v533
    %v845 = vunpack.c.l.b16 %v534
    %v846 = vunpack.c.h.b16 %v534
    %v847 = vunpack.c.l.b16 %v535
    %v848 = vunpack.c.h.b16 %v535
    %v849 = vunpack.c.l.b16 %v536
    %v850 = vunpack.c.h.b16 %v536
    %v851 = vunpack.c.l.b16 %v537
    %v852 = vunpack.c.h.b16 %v537
    %v853 = vunpack.c.l.b16 %v538
    %v854 = vunpack.c.h.b16 %v538
    %v855 = vunpack.c.l.b16 %v539
    %v856 = vunpack.c.h.b16 %v539
    %v857 = vunpack.c.l.b16 %v540
    %v858 = vunpack.c.h.b16 %v540
    %v859 = vunpack.c.l.b16 %v541
    %v860 = vunpack.c.h.b16 %v541
    %v861 = vunpack.c.l.b16 %v542
    %v862 = vunpack.c.h.b16 %v542
    %v863 = vunpack.c.l.b16 %v543
    %v864 = vunpack.c.h.b16 %v543
    %v865 = vunpack.c.l.b16 %v544
    %v866 = vunpack.c.h.b16 %v544
    %v867 = vunpack.c.l.b16 %v545
    %v868 = vunpack.c.h.b16 %v545
    %v869 = vunpack.c.l.b16 %v546
    %v870 = vunpack.c.h.b16 %v546
    %v871 = vunpack.c.l.b16 %v547
    %v872 = vunpack.c.h.b16 %v547
    %v873 = vunpack.c.l.b16 %v548
    %v874 = vunpack.c.h.b16 %v548
    %v875 = vunpack.c.l.b16 %v549
    %v876 = vunpack.c.h.b16 %v549
    %v877 = vunpack.c.l.b16 %v550
    %v878 = vunpack.c.h.b16 %v550
    %v879 = vunpack.c.l.b16 %v551
    %v880 = vunpack.c.h.b16 %v551
    %v881 = vunpack.c.l.b16 %v552
    %v882 = vunpack.c.h.b16 %v552
    %v883 = vunpack.c.l.b16 %v553
    %v884 = vunpack.c.h.b16 %v553
    %v885 = vunpack.c.l.b16 %v554
    %v886 = vunpack.c.h.b16 %v554
    %v887 = vunpack.c.l.b16 %v555
    %v888 = vunpack.c.h.b16 %v555
    %v889 = vunpack.c.l.b16 %v556
    %v890 = vunpack.c.h.b16 %v556
    %v891 = vunpack.c.l.b16 %v557
    %v892 = vunpack.c.h.b16 %v557
    %v893 = vunpack.c.l.b16 %v558
    %v894 = vunpack.c.h.b16 %v558
    %v895 = vunpack.c.l.b16 %v559
    %v896 = vunpack.c.h.b16 %v559
    %v897 = vunpack.c.l.b16 %v560
    %v898 = vunpack.c.h.b16 %v560
    %v899 = vunpack.c.l.b16 %v561
    %v900 = vunpack.c.h.b16 %v561
    %v901 = vunpack.c.l.b16 %v562
    %v902 = vunpack.c.h.b16 %v562
    %v903 = vunpack.c.l.b16 %v563
    %v904 = vunpack.c.h.b16 %v563
    %v905 = vunpack.c.l.b16 %v564
    %v906 = vunpack.c.h.b16 %v564
    %v907 = vunpack.c.l.b16 %v565
    %v908 = vunpack.c.h.b16 %v565
    %v909 = vunpack.c.l.b16 %v566
    %v910 = vunpack.c.h.b16 %v566
    %v911 = vunpack.c.l.b16 %v567
    %v912 = vunpack.c.h.b16 %v567
    %v913 = vunpack.c.l.b16 %v568
    %v914 = vunpack.c.h.b16 %v568
    %v915 = vunpack.c.l.b16 %v569
    %v916 = vunpack.c.h.b16 %v569
    %v917 = vunpack.c.l.b16 %v570
    %v918 = vunpack.c.h.b16 %v570
    %v919 = vunpack.c.l.b16 %v571
    %v920 = vunpack.c.h.b16 %v571
    %v921 = vunpack.c.l.b16 %v572
    %v922 = vunpack.c.h.b16 %v572
    %v923 = vunpack.c.l.b16 %v573
    %v924 = vunpack.c.h.b16 %v573
    %v925 = vunpack.c.l.b16 %v574
    %v926 = vunpack.c.h.b16 %v574
    %v927 = vunpack.c.l.b16 %v575
    %v928 = vunpack.c.h.b16 %v575
    %v929 = vunpack.c.l.b16 %v576
    %v930 = vunpack.c.h.b16 %v576
    %v931 = vunpack.c.l.b16 %v577
    %v932 = vunpack.c.h.b16 %v577
    %v933 = vunpack.c.l.b16 %v578
    %v934 = vunpack.c.h.b16 %v578
    %v935 = vunpack.c.l.b16 %v579
    %v936 = vunpack.c.h.b16 %v579
    %v937 = vunpack.c.l.b16 %v580
    %v938 = vunpack.c.h.b16 %v580
    %v939 = vunpack.c.l.b16 %v581
    %v940 = vunpack.c.h.b16 %v581
    %v941 = vunpack.c.l.b16 %v582
    %v942 = vunpack.c.h.b16 %v582
    %v943 = vunpack.c.l.b16 %v583
    %v944 = vunpack.c.h.b16 %v583
    %v945 = vunpack.c.l.b16 %v584
    %v946 = vunpack.c.h.b16 %v584
    %v947 = vunpack.c.l.b16 %v585
    %v948 = vunpack.c.h.b16 %v585
    %v949 = vunpack.c.l.b16 %v586
    %v950 = vunpack.c.h.b16 %v586
    %v951 = vunpack.c.l.b16 %v587
    %v952 = vunpack.c.h.b16 %v587
    %v953 = vunpack.c.l.b16 %v588
    %v954 = vunpack.c.h.b16 %v588
    %v955 = vunpack.c.l.b16 %v589
    %v956 = vunpack.c.h.b16 %v589
    %v957 = vunpack.c.l.b16 %v590
    %v958 = vunpack.c.h.b16 %v590
    %v959 = vunpack.c.l.b16 %v591
    %v960 = vunpack.c.h.b16 %v591
    %v961 = vunpack.c.l.b16 %v592
    %v962 = vunpack.c.h.b16 %v592
    %v963 = vunpack.c.l.b16 %v593
    %v964 = vunpack.c.h.b16 %v593
    %v965 = vunpack.c.l.b16 %v594
    %v966 = vunpack.c.h.b16 %v594
    %v967 = vunpack.c.l.b16 %v595
    %v968 = vunpack.c.h.b16 %v595
    %v969 = vunpack.c.l.b16 %v596
    %v970 = vunpack.c.h.b16 %v596
    %v971 = vunpack.c.l.b16 %v597
    %v972 = vunpack.c.h.b16 %v597
    %v973 = vunpack.c.l.b16 %v598
    %v974 = vunpack.c.h.b16 %v598
    %v975 = vunpack.c.l.b16 %v599
    %v976 = vunpack.c.h.b16 %v599
    %v977 = vunpack.c.l.b16 %v600
    %v978 = vunpack.c.h.b16 %v600
    %v979 = vunpack.c.l.b16 %v601
    %v980 = vunpack.c.h.b16 %v601
    %v981 = vunpack.c.l.b16 %v602
    %v982 = vunpack.c.h.b16 %v602
    %v983 = vunpack.c.l.b16 %v603
    %v984 = vunpack.c.h.b16 %v603
    %v985 = vunpack.c.l.b16 %v604
    %v986 = vunpack.c.h.b16 %v604
    %v987 = vunpack.c.l.b16 %v605
    %v988 = vunpack.c.h.b16 %v605
    %v989 = vunpack.c.l.b16 %v606
    %v990 = vunpack.c.h.b16 %v606
    %v991 = vunpack.c.l.b16 %v607
    %v992 = vunpack.c.h.b16 %v607
    %v993 = vunpack.c.l.b16 %v608
    %v994 = vunpack.c.h.b16 %v608
    %v995 = vunpack.c.l.b16 %v609
    %v996 = vunpack.c.h.b16 %v609
    %v997 = vunpack.c.l.b16 %v610
    %v998 = vunpack.c.h.b16 %v610
    %v999 = vpack.c.b16 %v747, %v743
    %v1000 = vpack.c.b16 %v748, %v744
    %v1001 = vpack.c.b16 %v749, %v745
    %v1002 = vpack.c.b16 %v750, %v746
    %v1003 = vpack.c.b16 %v755, %v751
    %v1004 = vpack.c.b16 %v756, %v752
    %v1005 = vpack.c.b16 %v757, %v753
    %v1006 = vpack.c.b16 %v758, %v754
    %v1007 = vpack.c.b16 %v763, %v759
    %v1008 = vpack.c.b16 %v764, %v760
    %v1009 = vpack.c.b16 %v765, %v761
    %v1010 = vpack.c.b16 %v766, %v762
    %v1011 = vpack.c.b16 %v771, %v767
    %v1012 = vpack.c.b16 %v772, %v768
    %v1013 = vpack.c.b16 %v773, %v769
    %v1014 = vpack.c.b16 %v774, %v770
    %v1015 = vpack.c.b16 %v779, %v775
    %v1016 = vpack.c.b16 %v780, %v776
    %v1017 = vpack.c.b16 %v781, %v777
    %v1018 = vpack.c.b16 %v782, %v778
    %v1019 = vpack.c.b16 %v787, %v783
    %v1020 = vpack.c.b16 %v788, %v784
    %v1021 = vpack.c.b16 %v789, %v785
    %v1022 = vpack.c.b16 %v790, %v786
    %v1023 = vpack.c.b16 %v795, %v791
    %v1024 = vpack.c.b16 %v796, %v792
    %v1025 = vpack.c.b16 %v797, %v793
    %v1026 = vpack.c.b16 %v798, %v794
    %v1027 = vpack.c.b16 %v803, %v799
    %v1028 = vpack.c.b16 %v804, %v800
    %v1029 = vpack.c.b16 %v805, %v801
    %v1030 = vpack.c.b16 %v806, %v802
    %v1031 = vpack.c.b16 %v811, %v807
    %v1032 = vpack.c.b16 %v812, %v808
    %v1033 = vpack.c.b16 %v813, %v809
    %v1034 = vpack.c.b16 %v814, %v810
    %v1035 = vpack.c.b16 %v819, %v815
    %v1036 = vpack.c.b16 %v820, %v816
    %v1037 = vpack.c.b16 %v821, %v817
    %v1038 = vpack.c.b16 %v822, %v818
    %v1039 = vpack.c.b16 %v827, %v823
    %v1040 = vpack.c.b16 %v828, %v824
    %v1041 = vpack.c.b16 %v829, %v825
    %v1042 = vpack.c.b16 %v830, %v826
    %v1043 = vpack.c.b16 %v835, %v831
    %v1044 = vpack.c.b16 %v836, %v832
    %v1045 = vpack.c.b16 %v837, %v833
    %v1046 = vpack.c.b16 %v838, %v834
    %v1047 = vpack.c.b16 %v843, %v839
    %v1048 = vpack.c.b16 %v844, %v840
    %v1049 = vpack.c.b16 %v845, %v841
    %v1050 = vpack.c.b16 %v846, %v842
    %v1051 = vpack.c.b16 %v851, %v847
    %v1052 = vpack.c.b16 %v852, %v848
    %v1053 = vpack.c.b16 %v853, %v849
    %v1054 = vpack.c.b16 %v854, %v850
    %v1055 = vpack.c.b16 %v859, %v855
    %v1056 = vpack.c.b16 %v860, %v856
    %v1057 = vpack.c.b16 %v861, %v857
    %v1058 = vpack.c.b16 %v862, %v858
    %v1059 = vpack.c.b16 %v867, %v863
    %v1060 = vpack.c.b16 %v868, %v864
    %v1061 = vpack.c.b16 %v869, %v865
    %v1062 = vpack.c.b16 %v870, %v866
    %v1063 = vpack.c.b16 %v875, %v871
    %v1064 = vpack.c.b16 %v876, %v872
    %v1065 = vpack.c.b16 %v877, %v873
    %v1066 = vpack.c.b16 %v878, %v874
    %v1067 = vpack.c.b16 %v883, %v879
    %v1068 = vpack.c.b16 %v884, %v880
    %v1069 = vpack.c.b16 %v885, %v881
    %v1070 = vpack.c.b16 %v886, %v882
    %v1071 = vpack.c.b16 %v891, %v887
    %v1072 = vpack.c.b16 %v892, %v888
    %v1073 = vpack.c.b16 %v893, %v889
    %v1074 = vpack.c.b16 %v894, %v890
    %v1075 = vpack.c.b16 %v899, %v895
    %v1076 = vpack.c.b16 %v900, %v896
    %v1077 = vpack.c.b16 %v901, %v897
    %v1078 = vpack.c.b16 %v902, %v898
    %v1079 = vpack.c.b16 %v907, %v903
    %v1080 = vpack.c.b16 %v908, %v904
    %v1081 = vpack.c.b16 %v909, %v905
    %v1082 = vpack.c.b16 %v910, %v906
    %v1083 = vpack.c.b16 %v915, %v911
    %v1084 = vpack.c.b16 %v916, %v912
    %v1085 = vpack.c.b16 %v917, %v913
    %v1086 = vpack.c.b16 %v918, %v914
    %v1087 = vpack.c.b16 %v923, %v919
    %v1088 = vpack.c.b16 %v924, %v920
    %v1089 = vpack.c.b16 %v925, %v921
    %v1090 = vpack.c.b16 %v926, %v922
    %v1091 = vpack.c.b16 %v931, %v927
    %v1092 = vpack.c.b16 %v932, %v928
    %v1093 = vpack.c.b16 %v933, %v929
    %v1094 = vpack.c.b16 %v934, %v930
    %v1095 = vpack.c.b16 %v939, %v935
    %v1096 = vpack.c.b16 %v940, %v936
    %v1097 = vpack.c.b16 %v941, %v937
    %v1098 = vpack.c.b16 %v942, %v938
    %v1099 = vpack.c.b16 %v947, %v943
    %v1100 = vpack.c.b16 %v948, %v944
    %v1101 = vpack.c.b16 %v949, %v945
    %v1102 = vpack.c.b16 %v950, %v946
    %v1103 = vpack.c.b16 %v955, %v951
    %v1104 = vpack.c.b16 %v956, %v952
    %v1105 = vpack.c.b16 %v957, %v953
    %v1106 = vpack.c.b16 %v958, %v954
    %v1107 = vpack.c.b16 %v963, %v959
    %v1108 = vpack.c.b16 %v964, %v960
    %v1109 = vpack.c.b16 %v965, %v961
    %v1110 = vpack.c.b16 %v966, %v962
    %v1111 = vpack.c.b16 %v971, %v967
    %v1112 = vpack.c.b16 %v972, %v968
    %v1113 = vpack.c.b16 %v973, %v969
    %v1114 = vpack.c.b16 %v974, %v970
    %v1115 = vpack.c.b16 %v979, %v975
    %v1116 = vpack.c.b16 %v980, %v976
    %v1117 = vpack.c.b16 %v981, %v977
    %v1118 = vpack.c.b16 %v982, %v978
    %v1119 = vpack.c.b16 %v987, %v983
    %v1120 = vpack.c.b16 %v988, %v984
    %v1121 = vpack.c.b16 %v989, %v985
    %v1122 = vpack.c.b16 %v990, %v986
    %v1123 = vpack.c.b16 %v995, %v991
    %v1124 = vpack.c.b16 %v996, %v992
    %v1125 = vpack.c.b16 %v997, %v993
    %v1126 = vpack.c.b16 %v998, %v994
    %1255 = vmatpush.bf16.msra.mxu0 %v1027
    %1256 = vmatpush.bf16.msra.mxu0 %v1023
    %1257 = vmatpush.bf16.msra.mxu0 %v1019
    %1258 = vmatpush.bf16.msra.mxu0 %v1015
    %1259 = vmatpush.bf16.msra.mxu0 %v1011
    %1260 = vmatpush.bf16.msra.mxu0 %v1007
    %1261 = vmatpush.bf16.msra.mxu0 %v1003
    %1262 = vmatpush.bf16.msra.mxu0 %v999
    %1263 = vmatmul.bf16.gmra.mxu0 %v611
    %v1264 = vpop.f32.mrf.mxu0
    %v1265 = vadd.f32 0.0, %v1264
    %v1266 = vpop.f32.mrf.mxu0
    %1267 = vdwg.mxu0
    %1268 = vmatpush.bf16.msra.mxu0 %v1059
    %1269 = vmatpush.bf16.msra.mxu0 %v1055
    %1270 = vmatpush.bf16.msra.mxu0 %v1051
    %1271 = vmatpush.bf16.msra.mxu0 %v1047
    %1272 = vmatpush.bf16.msra.mxu0 %v1043
    %1273 = vmatpush.bf16.msra.mxu0 %v1039
    %1274 = vmatpush.bf16.msra.mxu0 %v1035
    %1275 = vmatpush.bf16.msra.mxu0 %v1031
    %1276 = vmatmul.bf16.gmra.mxu0 %v612
    %v1277 = vpop.f32.mrf.mxu0
    %v1278 = vadd.f32 %v1265, %v1277
    %v1279 = vpop.f32.mrf.mxu0
    %1280 = vdwg.mxu0
    %1281 = vmatpush.bf16.msra.mxu0 %v1091
    %1282 = vmatpush.bf16.msra.mxu0 %v1087
    %1283 = vmatpush.bf16.msra.mxu0 %v1083
    %1284 = vmatpush.bf16.msra.mxu0 %v1079
    %1285 = vmatpush.bf16.msra.mxu0 %v1075
    %1286 = vmatpush.bf16.msra.mxu0 %v1071
    %1287 = vmatpush.bf16.msra.mxu0 %v1067
    %1288 = vmatpush.bf16.msra.mxu0 %v1063
    %1289 = vmatmul.bf16.gmra.mxu0 %v613
    %v1290 = vpop.f32.mrf.mxu0
    %v1291 = vadd.f32 %v1278, %v1290
    %v1292 = vpop.f32.mrf.mxu0
    %1293 = vdwg.mxu0
    %1294 = vmatpush.bf16.msra.mxu0 %v1123
    %1295 = vmatpush.bf16.msra.mxu0 %v1119
    %1296 = vmatpush.bf16.msra.mxu0 %v1115
    %1297 = vmatpush.bf16.msra.mxu0 %v1111
    %1298 = vmatpush.bf16.msra.mxu0 %v1107
    %1299 = vmatpush.bf16.msra.mxu0 %v1103
    %1300 = vmatpush.bf16.msra.mxu0 %v1099
    %1301 = vmatpush.bf16.msra.mxu0 %v1095
    %1302 = vmatmul.bf16.gmra.mxu0 %v614
    %v1303 = vpop.f32.mrf.mxu0
    %v1304 = vadd.f32 %v1291, %v1303
    %v1305 = vpop.f32.mrf.mxu0
    %1306 = vdwg.mxu0
    %1307 = vmatpush.bf16.msra.mxu0 %v1028
    %1308 = vmatpush.bf16.msra.mxu0 %v1024
    %1309 = vmatpush.bf16.msra.mxu0 %v1020
    %1310 = vmatpush.bf16.msra.mxu0 %v1016
    %1311 = vmatpush.bf16.msra.mxu0 %v1012
    %1312 = vmatpush.bf16.msra.mxu0 %v1008
    %1313 = vmatpush.bf16.msra.mxu0 %v1004
    %1314 = vmatpush.bf16.msra.mxu0 %v1000
    %1315 = vmatmul.bf16.gmra.mxu0 %v611
    %v1316 = vpop.f32.mrf.mxu0
    %v1317 = vadd.f32 0.0, %v1316
    %v1318 = vpop.f32.mrf.mxu0
    %1319 = vdwg.mxu0
    %1320 = vmatpush.bf16.msra.mxu0 %v1060
    %1321 = vmatpush.bf16.msra.mxu0 %v1056
    %1322 = vmatpush.bf16.msra.mxu0 %v1052
    %1323 = vmatpush.bf16.msra.mxu0 %v1048
    %1324 = vmatpush.bf16.msra.mxu0 %v1044
    %1325 = vmatpush.bf16.msra.mxu0 %v1040
    %1326 = vmatpush.bf16.msra.mxu0 %v1036
    %1327 = vmatpush.bf16.msra.mxu0 %v1032
    %1328 = vmatmul.bf16.gmra.mxu0 %v612
    %v1329 = vpop.f32.mrf.mxu0
    %v1330 = vadd.f32 %v1317, %v1329
    %v1331 = vpop.f32.mrf.mxu0
    %1332 = vdwg.mxu0
    %1333 = vmatpush.bf16.msra.mxu0 %v1092
    %1334 = vmatpush.bf16.msra.mxu0 %v1088
    %1335 = vmatpush.bf16.msra.mxu0 %v1084
    %1336 = vmatpush.bf16.msra.mxu0 %v1080
    %1337 = vmatpush.bf16.msra.mxu0 %v1076
    %1338 = vmatpush.bf16.msra.mxu0 %v1072
    %1339 = vmatpush.bf16.msra.mxu0 %v1068
    %1340 = vmatpush.bf16.msra.mxu0 %v1064
    %1341 = vmatmul.bf16.gmra.mxu0 %v613
    %v1342 = vpop.f32.mrf.mxu0
    %v1343 = vadd.f32 %v1330, %v1342
    %v1344 = vpop.f32.mrf.mxu0
    %1345 = vdwg.mxu0
    %1346 = vmatpush.bf16.msra.mxu0 %v1124
    %1347 = vmatpush.bf16.msra.mxu0 %v1120
    %1348 = vmatpush.bf16.msra.mxu0 %v1116
    %1349 = vmatpush.bf16.msra.mxu0 %v1112
    %1350 = vmatpush.bf16.msra.mxu0 %v1108
    %1351 = vmatpush.bf16.msra.mxu0 %v1104
    %1352 = vmatpush.bf16.msra.mxu0 %v1100
    %1353 = vmatpush.bf16.msra.mxu0 %v1096
    %1354 = vmatmul.bf16.gmra.mxu0 %v614
    %v1355 = vpop.f32.mrf.mxu0
    %v1356 = vadd.f32 %v1343, %v1355
    %v1357 = vpop.f32.mrf.mxu0
    %1358 = vdwg.mxu0
    %1359 = vmatpush.bf16.msra.mxu0 %v1029
    %1360 = vmatpush.bf16.msra.mxu0 %v1025
    %1361 = vmatpush.bf16.msra.mxu0 %v1021
    %1362 = vmatpush.bf16.msra.mxu0 %v1017
    %1363 = vmatpush.bf16.msra.mxu0 %v1013
    %1364 = vmatpush.bf16.msra.mxu0 %v1009
    %1365 = vmatpush.bf16.msra.mxu0 %v1005
    %1366 = vmatpush.bf16.msra.mxu0 %v1001
    %1367 = vmatmul.bf16.gmra.mxu0 %v611
    %v1368 = vpop.f32.mrf.mxu0
    %v1369 = vadd.f32 0.0, %v1368
    %v1370 = vpop.f32.mrf.mxu0
    %1371 = vdwg.mxu0
    %1372 = vmatpush.bf16.msra.mxu0 %v1061
    %1373 = vmatpush.bf16.msra.mxu0 %v1057
    %1374 = vmatpush.bf16.msra.mxu0 %v1053
    %1375 = vmatpush.bf16.msra.mxu0 %v1049
    %1376 = vmatpush.bf16.msra.mxu0 %v1045
    %1377 = vmatpush.bf16.msra.mxu0 %v1041
    %1378 = vmatpush.bf16.msra.mxu0 %v1037
    %1379 = vmatpush.bf16.msra.mxu0 %v1033
    %1380 = vmatmul.bf16.gmra.mxu0 %v612
    %v1381 = vpop.f32.mrf.mxu0
    %v1382 = vadd.f32 %v1369, %v1381
    %v1383 = vpop.f32.mrf.mxu0
    %1384 = vdwg.mxu0
    %1385 = vmatpush.bf16.msra.mxu0 %v1093
    %1386 = vmatpush.bf16.msra.mxu0 %v1089
    %1387 = vmatpush.bf16.msra.mxu0 %v1085
    %1388 = vmatpush.bf16.msra.mxu0 %v1081
    %1389 = vmatpush.bf16.msra.mxu0 %v1077
    %1390 = vmatpush.bf16.msra.mxu0 %v1073
    %1391 = vmatpush.bf16.msra.mxu0 %v1069
    %1392 = vmatpush.bf16.msra.mxu0 %v1065
    %1393 = vmatmul.bf16.gmra.mxu0 %v613
    %v1394 = vpop.f32.mrf.mxu0
    %v1395 = vadd.f32 %v1382, %v1394
    %v1396 = vpop.f32.mrf.mxu0
    %1397 = vdwg.mxu0
    %1398 = vmatpush.bf16.msra.mxu0 %v1125
    %1399 = vmatpush.bf16.msra.mxu0 %v1121
    %1400 = vmatpush.bf16.msra.mxu0 %v1117
    %1401 = vmatpush.bf16.msra.mxu0 %v1113
    %1402 = vmatpush.bf16.msra.mxu0 %v1109
    %1403 = vmatpush.bf16.msra.mxu0 %v1105
    %1404 = vmatpush.bf16.msra.mxu0 %v1101
    %1405 = vmatpush.bf16.msra.mxu0 %v1097
    %1406 = vmatmul.bf16.gmra.mxu0 %v614
    %v1407 = vpop.f32.mrf.mxu0
    %v1408 = vadd.f32 %v1395, %v1407
    %v1409 = vpop.f32.mrf.mxu0
    %1410 = vdwg.mxu0
    %1411 = vmatpush.bf16.msra.mxu0 %v1030
    %1412 = vmatpush.bf16.msra.mxu0 %v1026
    %1413 = vmatpush.bf16.msra.mxu0 %v1022
    %1414 = vmatpush.bf16.msra.mxu0 %v1018
    %1415 = vmatpush.bf16.msra.mxu0 %v1014
    %1416 = vmatpush.bf16.msra.mxu0 %v1010
    %1417 = vmatpush.bf16.msra.mxu0 %v1006
    %1418 = vmatpush.bf16.msra.mxu0 %v1002
    %1419 = vmatmul.bf16.gmra.mxu0 %v611
    %v1420 = vpop.f32.mrf.mxu0
    %v1421 = vadd.f32 0.0, %v1420
    %v1422 = vpop.f32.mrf.mxu0
    %1423 = vdwg.mxu0
    %1424 = vmatpush.bf16.msra.mxu0 %v1062
    %1425 = vmatpush.bf16.msra.mxu0 %v1058
    %1426 = vmatpush.bf16.msra.mxu0 %v1054
    %1427 = vmatpush.bf16.msra.mxu0 %v1050
    %1428 = vmatpush.bf16.msra.mxu0 %v1046
    %1429 = vmatpush.bf16.msra.mxu0 %v1042
    %1430 = vmatpush.bf16.msra.mxu0 %v1038
    %1431 = vmatpush.bf16.msra.mxu0 %v1034
    %1432 = vmatmul.bf16.gmra.mxu0 %v612
    %v1433 = vpop.f32.mrf.mxu0
    %v1434 = vadd.f32 %v1421, %v1433
    %v1435 = vpop.f32.mrf.mxu0
    %1436 = vdwg.mxu0
    %1437 = vmatpush.bf16.msra.mxu0 %v1094
    %1438 = vmatpush.bf16.msra.mxu0 %v1090
    %1439 = vmatpush.bf16.msra.mxu0 %v1086
    %1440 = vmatpush.bf16.msra.mxu0 %v1082
    %1441 = vmatpush.bf16.msra.mxu0 %v1078
    %1442 = vmatpush.bf16.msra.mxu0 %v1074
    %1443 = vmatpush.bf16.msra.mxu0 %v1070
    %1444 = vmatpush.bf16.msra.mxu0 %v1066
    %1445 = vmatmul.bf16.gmra.mxu0 %v613
    %v1446 = vpop.f32.mrf.mxu0
    %v1447 = vadd.f32 %v1434, %v1446
    %v1448 = vpop.f32.mrf.mxu0
    %1449 = vdwg.mxu0
    %1450 = vmatpush.bf16.msra.mxu0 %v1126
    %1451 = vmatpush.bf16.msra.mxu0 %v1122
    %1452 = vmatpush.bf16.msra.mxu0 %v1118
    %1453 = vmatpush.bf16.msra.mxu0 %v1114
    %1454 = vmatpush.bf16.msra.mxu0 %v1110
    %1455 = vmatpush.bf16.msra.mxu0 %v1106
    %1456 = vmatpush.bf16.msra.mxu0 %v1102
    %1457 = vmatpush.bf16.msra.mxu0 %v1098
    %1458 = vmatmul.bf16.gmra.mxu0 %v614
    %v1459 = vpop.f32.mrf.mxu0
    %v1460 = vadd.f32 %v1447, %v1459
    %v1461 = vpop.f32.mrf.mxu0
    %1462 = vdwg.mxu0
    %v1463 = vld [vmem:[#allocation11] sm:$0xf]
    %v1464 = vld [vmem:[#allocation13] sm:$0xf]
    %v1465 = vrot.slane %v1304, 4
    %v1466 = vadd.f32 %v1304, %v1465
    %v1467 = vrot.slane %v1466, 2
    %v1468 = vadd.f32 %v1466, %v1467
    %v1469 = vrot.slane %v1468, 1
    %v1470 = vadd.f32 %v1468, %v1469
    %v1471 = vrot.slane %v1356, 4
    %v1472 = vadd.f32 %v1356, %v1471
    %v1473 = vrot.slane %v1472, 2
    %v1474 = vadd.f32 %v1472, %v1473
    %v1475 = vrot.slane %v1474, 1
    %v1476 = vadd.f32 %v1474, %v1475
    %v1477 = vrot.slane %v1408, 4
    %v1478 = vadd.f32 %v1408, %v1477
    %v1479 = vrot.slane %v1478, 2
    %v1480 = vadd.f32 %v1478, %v1479
    %v1481 = vrot.slane %v1480, 1
    %v1482 = vadd.f32 %v1480, %v1481
    %v1483 = vrot.slane %v1460, 4
    %v1484 = vadd.f32 %v1460, %v1483
    %v1485 = vrot.slane %v1484, 2
    %v1486 = vadd.f32 %v1484, %v1485
    %v1487 = vrot.slane %v1486, 1
    %v1488 = vadd.f32 %v1486, %v1487
    %v1489 = vmul.f32 %v1470, %v356
    %v1490 = vmul.f32 %v1476, %v356
    %v1491 = vmul.f32 %v1482, %v356
    %v1492 = vmul.f32 %v1488, %v356
    %v1493 = vmul.f32 %v1304, %v1304
    %v1494 = vmul.f32 %v1356, %v1356
    %v1495 = vmul.f32 %v1408, %v1408
    %v1496 = vmul.f32 %v1460, %v1460
    %v1497 = vrot.slane %v1493, 4
    %v1498 = vadd.f32 %v1493, %v1497
    %v1499 = vrot.slane %v1498, 2
    %v1500 = vadd.f32 %v1498, %v1499
    %v1501 = vrot.slane %v1500, 1
    %v1502 = vadd.f32 %v1500, %v1501
    %v1503 = vrot.slane %v1494, 4
    %v1504 = vadd.f32 %v1494, %v1503
    %v1505 = vrot.slane %v1504, 2
    %v1506 = vadd.f32 %v1504, %v1505
    %v1507 = vrot.slane %v1506, 1
    %v1508 = vadd.f32 %v1506, %v1507
    %v1509 = vrot.slane %v1495, 4
    %v1510 = vadd.f32 %v1495, %v1509
    %v1511 = vrot.slane %v1510, 2
    %v1512 = vadd.f32 %v1510, %v1511
    %v1513 = vrot.slane %v1512, 1
    %v1514 = vadd.f32 %v1512, %v1513
    %v1515 = vrot.slane %v1496, 4
    %v1516 = vadd.f32 %v1496, %v1515
    %v1517 = vrot.slane %v1516, 2
    %v1518 = vadd.f32 %v1516, %v1517
    %v1519 = vrot.slane %v1518, 1
    %v1520 = vadd.f32 %v1518, %v1519
    %v1521 = vmul.f32 %v1502, %v356
    %v1522 = vmul.f32 %v1508, %v356
    %v1523 = vmul.f32 %v1514, %v356
    %v1524 = vmul.f32 %v1520, %v356
    %v1525 = vmul.f32 %v1489, %v1489
    %v1526 = vmul.f32 %v1490, %v1490
    %v1527 = vmul.f32 %v1491, %v1491
    %v1528 = vmul.f32 %v1492, %v1492
    %v1529 = vsub.f32 %v1521, %v1525
    %v1530 = vsub.f32 %v1522, %v1526
    %v1531 = vsub.f32 %v1523, %v1527
    %v1532 = vsub.f32 %v1524, %v1528
    %v1533 = vsub.f32 %v1304, %v1489
    %v1534 = vsub.f32 %v1356, %v1490
    %v1535 = vsub.f32 %v1408, %v1491
    %v1536 = vsub.f32 %v1460, %v1492
    %v1537 = vadd.f32 %v1529, 1e-05
    %v1538 = vadd.f32 %v1530, 1e-05
    %v1539 = vadd.f32 %v1531, 1e-05
    %v1540 = vadd.f32 %v1532, 1e-05
    %v1541 = vrsqrt.pop %v1537
    %v1542 = vmul.f32 %v1541, %v1537
    %v1543 = vmul.f32 %v1542, %v1541
    %v1544 = vmul.f32 0.5, %v1543
    %v1545 = vsub.f32 1.5, %v1544
    %v1546 = vmul.f32 %v1541, %v1545
    %vm1547 = vweird.f32 %v1537
    %vm1548 = vweird.f32 %v1541
    %vm1549 = vmor %vm1547, %vm1548
    %v1550 = vsel %vm1549, %v1541, %v1546
    %v1551 = vrsqrt.pop %v1538
    %v1552 = vmul.f32 %v1551, %v1538
    %v1553 = vmul.f32 %v1552, %v1551
    %v1554 = vmul.f32 0.5, %v1553
    %v1555 = vsub.f32 1.5, %v1554
    %v1556 = vmul.f32 %v1551, %v1555
    %vm1557 = vweird.f32 %v1538
    %vm1558 = vweird.f32 %v1551
    %vm1559 = vmor %vm1557, %vm1558
    %v1560 = vsel %vm1559, %v1551, %v1556
    %v1561 = vrsqrt.pop %v1539
    %v1562 = vmul.f32 %v1561, %v1539
    %v1563 = vmul.f32 %v1562, %v1561
    %v1564 = vmul.f32 0.5, %v1563
    %v1565 = vsub.f32 1.5, %v1564
    %v1566 = vmul.f32 %v1561, %v1565
    %vm1567 = vweird.f32 %v1539
    %vm1568 = vweird.f32 %v1561
    %vm1569 = vmor %vm1567, %vm1568
    %v1570 = vsel %vm1569, %v1561, %v1566
    %v1571 = vrsqrt.pop %v1540
    %v1572 = vmul.f32 %v1571, %v1540
    %v1573 = vmul.f32 %v1572, %v1571
    %v1574 = vmul.f32 0.5, %v1573
    %v1575 = vsub.f32 1.5, %v1574
    %v1576 = vmul.f32 %v1571, %v1575
    %vm1577 = vweird.f32 %v1540
    %vm1578 = vweird.f32 %v1571
    %vm1579 = vmor %vm1577, %vm1578
    %v1580 = vsel %vm1579, %v1571, %v1576
    %v1581 = vmul.f32 %v1533, %v1550
    %v1582 = vmul.f32 %v1534, %v1560
    %v1583 = vmul.f32 %v1535, %v1570
    %v1584 = vmul.f32 %v1536, %v1580
    %v1586 = vperm.slane %v1463, 0
    %v1587 = vperm.slane %v1463, 1
    %v1588 = vperm.slane %v1463, 2
    %v1589 = vperm.slane %v1463, 3
    %v1594 = vmul.f32 %v1581, %v1586
    %v1595 = vmul.f32 %v1582, %v1587
    %v1596 = vmul.f32 %v1583, %v1588
    %v1597 = vmul.f32 %v1584, %v1589
    %v1599 = vperm.slane %v1464, 0
    %v1600 = vperm.slane %v1464, 1
    %v1601 = vperm.slane %v1464, 2
    %v1602 = vperm.slane %v1464, 3
    %v1607 = vadd.f32 %v1594, %v1599
    %v1608 = vadd.f32 %v1595, %v1600
    %v1609 = vadd.f32 %v1596, %v1601
    %v1610 = vadd.f32 %v1597, %v1602
    %v1611 = vmax.f32 %v1607, 0.0
    %v1612 = vmax.f32 %v1608, 0.0
    %v1613 = vmax.f32 %v1609, 0.0
    %v1614 = vmax.f32 %v1610, 0.0
    %v1615 = vld [vmem:[#allocation14] sm:$0xff]
    %v1616 = vld [vmem:[#allocation14 + $0x8] sm:$0xff]
    %v1617 = vld [vmem:[#allocation14 + $0x10] sm:$0xff]
    %v1618 = vld [vmem:[#allocation14 + $0x18] sm:$0xff]
    %v1619 = vld [vmem:[#allocation14 + $0x80] sm:$0xff]
    %v1620 = vld [vmem:[#allocation14 + $0x88] sm:$0xff]
    %v1621 = vld [vmem:[#allocation14 + $0x90] sm:$0xff]
    %v1622 = vld [vmem:[#allocation14 + $0x98] sm:$0xff]
    %v1623 = vld [vmem:[#allocation14 + $0x100] sm:$0xff]
    %v1624 = vld [vmem:[#allocation14 + $0x108] sm:$0xff]
    %v1625 = vld [vmem:[#allocation14 + $0x110] sm:$0xff]
    %v1626 = vld [vmem:[#allocation14 + $0x118] sm:$0xff]
    %v1627 = vld [vmem:[#allocation14 + $0x180] sm:$0xff]
    %v1628 = vld [vmem:[#allocation14 + $0x188] sm:$0xff]
    %v1629 = vld [vmem:[#allocation14 + $0x190] sm:$0xff]
    %v1630 = vld [vmem:[#allocation14 + $0x198] sm:$0xff]
    %v1631 = vld [vmem:[#allocation14 + $0x200] sm:$0xff]
    %v1632 = vld [vmem:[#allocation14 + $0x208] sm:$0xff]
    %v1633 = vld [vmem:[#allocation14 + $0x210] sm:$0xff]
    %v1634 = vld [vmem:[#allocation14 + $0x218] sm:$0xff]
    %v1635 = vld [vmem:[#allocation14 + $0x280] sm:$0xff]
    %v1636 = vld [vmem:[#allocation14 + $0x288] sm:$0xff]
    %v1637 = vld [vmem:[#allocation14 + $0x290] sm:$0xff]
    %v1638 = vld [vmem:[#allocation14 + $0x298] sm:$0xff]
    %v1639 = vld [vmem:[#allocation14 + $0x300] sm:$0xff]
    %v1640 = vld [vmem:[#allocation14 + $0x308] sm:$0xff]
    %v1641 = vld [vmem:[#allocation14 + $0x310] sm:$0xff]
    %v1642 = vld [vmem:[#allocation14 + $0x318] sm:$0xff]
    %v1643 = vld [vmem:[#allocation14 + $0x380] sm:$0xff]
    %v1644 = vld [vmem:[#allocation14 + $0x388] sm:$0xff]
    %v1645 = vld [vmem:[#allocation14 + $0x390] sm:$0xff]
    %v1646 = vld [vmem:[#allocation14 + $0x398] sm:$0xff]
    %v1647 = vld [vmem:[#allocation14 + $0x400] sm:$0xff]
    %v1648 = vld [vmem:[#allocation14 + $0x408] sm:$0xff]
    %v1649 = vld [vmem:[#allocation14 + $0x410] sm:$0xff]
    %v1650 = vld [vmem:[#allocation14 + $0x418] sm:$0xff]
    %v1651 = vld [vmem:[#allocation14 + $0x480] sm:$0xff]
    %v1652 = vld [vmem:[#allocation14 + $0x488] sm:$0xff]
    %v1653 = vld [vmem:[#allocation14 + $0x490] sm:$0xff]
    %v1654 = vld [vmem:[#allocation14 + $0x498] sm:$0xff]
    %v1655 = vld [vmem:[#allocation14 + $0x500] sm:$0xff]
    %v1656 = vld [vmem:[#allocation14 + $0x508] sm:$0xff]
    %v1657 = vld [vmem:[#allocation14 + $0x510] sm:$0xff]
    %v1658 = vld [vmem:[#allocation14 + $0x518] sm:$0xff]
    %v1659 = vld [vmem:[#allocation14 + $0x580] sm:$0xff]
    %v1660 = vld [vmem:[#allocation14 + $0x588] sm:$0xff]
    %v1661 = vld [vmem:[#allocation14 + $0x590] sm:$0xff]
    %v1662 = vld [vmem:[#allocation14 + $0x598] sm:$0xff]
    %v1663 = vld [vmem:[#allocation14 + $0x600] sm:$0xff]
    %v1664 = vld [vmem:[#allocation14 + $0x608] sm:$0xff]
    %v1665 = vld [vmem:[#allocation14 + $0x610] sm:$0xff]
    %v1666 = vld [vmem:[#allocation14 + $0x618] sm:$0xff]
    %v1667 = vld [vmem:[#allocation14 + $0x680] sm:$0xff]
    %v1668 = vld [vmem:[#allocation14 + $0x688] sm:$0xff]
    %v1669 = vld [vmem:[#allocation14 + $0x690] sm:$0xff]
    %v1670 = vld [vmem:[#allocation14 + $0x698] sm:$0xff]
    %v1671 = vld [vmem:[#allocation14 + $0x700] sm:$0xff]
    %v1672 = vld [vmem:[#allocation14 + $0x708] sm:$0xff]
    %v1673 = vld [vmem:[#allocation14 + $0x710] sm:$0xff]
    %v1674 = vld [vmem:[#allocation14 + $0x718] sm:$0xff]
    %v1675 = vld [vmem:[#allocation14 + $0x780] sm:$0xff]
    %v1676 = vld [vmem:[#allocation14 + $0x788] sm:$0xff]
    %v1677 = vld [vmem:[#allocation14 + $0x790] sm:$0xff]
    %v1678 = vld [vmem:[#allocation14 + $0x798] sm:$0xff]
    %v1679 = vld [vmem:[#allocation14 + $0x800] sm:$0xff]
    %v1680 = vld [vmem:[#allocation14 + $0x808] sm:$0xff]
    %v1681 = vld [vmem:[#allocation14 + $0x810] sm:$0xff]
    %v1682 = vld [vmem:[#allocation14 + $0x818] sm:$0xff]
    %v1683 = vld [vmem:[#allocation14 + $0x880] sm:$0xff]
    %v1684 = vld [vmem:[#allocation14 + $0x888] sm:$0xff]
    %v1685 = vld [vmem:[#allocation14 + $0x890] sm:$0xff]
    %v1686 = vld [vmem:[#allocation14 + $0x898] sm:$0xff]
    %v1687 = vld [vmem:[#allocation14 + $0x900] sm:$0xff]
    %v1688 = vld [vmem:[#allocation14 + $0x908] sm:$0xff]
    %v1689 = vld [vmem:[#allocation14 + $0x910] sm:$0xff]
    %v1690 = vld [vmem:[#allocation14 + $0x918] sm:$0xff]
    %v1691 = vld [vmem:[#allocation14 + $0x980] sm:$0xff]
    %v1692 = vld [vmem:[#allocation14 + $0x988] sm:$0xff]
    %v1693 = vld [vmem:[#allocation14 + $0x990] sm:$0xff]
    %v1694 = vld [vmem:[#allocation14 + $0x998] sm:$0xff]
    %v1695 = vld [vmem:[#allocation14 + $0xa00] sm:$0xff]
    %v1696 = vld [vmem:[#allocation14 + $0xa08] sm:$0xff]
    %v1697 = vld [vmem:[#allocation14 + $0xa10] sm:$0xff]
    %v1698 = vld [vmem:[#allocation14 + $0xa18] sm:$0xff]
    %v1699 = vld [vmem:[#allocation14 + $0xa80] sm:$0xff]
    %v1700 = vld [vmem:[#allocation14 + $0xa88] sm:$0xff]
    %v1701 = vld [vmem:[#allocation14 + $0xa90] sm:$0xff]
    %v1702 = vld [vmem:[#allocation14 + $0xa98] sm:$0xff]
    %v1703 = vld [vmem:[#allocation14 + $0xb00] sm:$0xff]
    %v1704 = vld [vmem:[#allocation14 + $0xb08] sm:$0xff]
    %v1705 = vld [vmem:[#allocation14 + $0xb10] sm:$0xff]
    %v1706 = vld [vmem:[#allocation14 + $0xb18] sm:$0xff]
    %v1707 = vld [vmem:[#allocation14 + $0xb80] sm:$0xff]
    %v1708 = vld [vmem:[#allocation14 + $0xb88] sm:$0xff]
    %v1709 = vld [vmem:[#allocation14 + $0xb90] sm:$0xff]
    %v1710 = vld [vmem:[#allocation14 + $0xb98] sm:$0xff]
    %v1711 = vld [vmem:[#allocation14 + $0xc00] sm:$0xff]
    %v1712 = vld [vmem:[#allocation14 + $0xc08] sm:$0xff]
    %v1713 = vld [vmem:[#allocation14 + $0xc10] sm:$0xff]
    %v1714 = vld [vmem:[#allocation14 + $0xc18] sm:$0xff]
    %v1715 = vld [vmem:[#allocation14 + $0xc80] sm:$0xff]
    %v1716 = vld [vmem:[#allocation14 + $0xc88] sm:$0xff]
    %v1717 = vld [vmem:[#allocation14 + $0xc90] sm:$0xff]
    %v1718 = vld [vmem:[#allocation14 + $0xc98] sm:$0xff]
    %v1719 = vld [vmem:[#allocation14 + $0xd00] sm:$0xff]
    %v1720 = vld [vmem:[#allocation14 + $0xd08] sm:$0xff]
    %v1721 = vld [vmem:[#allocation14 + $0xd10] sm:$0xff]
    %v1722 = vld [vmem:[#allocation14 + $0xd18] sm:$0xff]
    %v1723 = vld [vmem:[#allocation14 + $0xd80] sm:$0xff]
    %v1724 = vld [vmem:[#allocation14 + $0xd88] sm:$0xff]
    %v1725 = vld [vmem:[#allocation14 + $0xd90] sm:$0xff]
    %v1726 = vld [vmem:[#allocation14 + $0xd98] sm:$0xff]
    %v1727 = vld [vmem:[#allocation14 + $0xe00] sm:$0xff]
    %v1728 = vld [vmem:[#allocation14 + $0xe08] sm:$0xff]
    %v1729 = vld [vmem:[#allocation14 + $0xe10] sm:$0xff]
    %v1730 = vld [vmem:[#allocation14 + $0xe18] sm:$0xff]
    %v1731 = vld [vmem:[#allocation14 + $0xe80] sm:$0xff]
    %v1732 = vld [vmem:[#allocation14 + $0xe88] sm:$0xff]
    %v1733 = vld [vmem:[#allocation14 + $0xe90] sm:$0xff]
    %v1734 = vld [vmem:[#allocation14 + $0xe98] sm:$0xff]
    %v1735 = vld [vmem:[#allocation14 + $0xf00] sm:$0xff]
    %v1736 = vld [vmem:[#allocation14 + $0xf08] sm:$0xff]
    %v1737 = vld [vmem:[#allocation14 + $0xf10] sm:$0xff]
    %v1738 = vld [vmem:[#allocation14 + $0xf18] sm:$0xff]
    %v1739 = vld [vmem:[#allocation14 + $0xf80] sm:$0xff]
    %v1740 = vld [vmem:[#allocation14 + $0xf88] sm:$0xff]
    %v1741 = vld [vmem:[#allocation14 + $0xf90] sm:$0xff]
    %v1742 = vld [vmem:[#allocation14 + $0xf98] sm:$0xff]
    %v1743 = vld [vmem:[#allocation14 + $0x1000] sm:$0xff]
    %v1744 = vld [vmem:[#allocation14 + $0x1008] sm:$0xff]
    %v1745 = vld [vmem:[#allocation14 + $0x1010] sm:$0xff]
    %v1746 = vld [vmem:[#allocation14 + $0x1018] sm:$0xff]
    %v1747 = vld [vmem:[#allocation14 + $0x1080] sm:$0xff]
    %v1748 = vld [vmem:[#allocation14 + $0x1088] sm:$0xff]
    %v1749 = vld [vmem:[#allocation14 + $0x1090] sm:$0xff]
    %v1750 = vld [vmem:[#allocation14 + $0x1098] sm:$0xff]
    %v1751 = vld [vmem:[#allocation14 + $0x1100] sm:$0xff]
    %v1752 = vld [vmem:[#allocation14 + $0x1108] sm:$0xff]
    %v1753 = vld [vmem:[#allocation14 + $0x1110] sm:$0xff]
    %v1754 = vld [vmem:[#allocation14 + $0x1118] sm:$0xff]
    %v1755 = vld [vmem:[#allocation14 + $0x1180] sm:$0xff]
    %v1756 = vld [vmem:[#allocation14 + $0x1188] sm:$0xff]
    %v1757 = vld [vmem:[#allocation14 + $0x1190] sm:$0xff]
    %v1758 = vld [vmem:[#allocation14 + $0x1198] sm:$0xff]
    %v1759 = vld [vmem:[#allocation14 + $0x1200] sm:$0xff]
    %v1760 = vld [vmem:[#allocation14 + $0x1208] sm:$0xff]
    %v1761 = vld [vmem:[#allocation14 + $0x1210] sm:$0xff]
    %v1762 = vld [vmem:[#allocation14 + $0x1218] sm:$0xff]
    %v1763 = vld [vmem:[#allocation14 + $0x1280] sm:$0xff]
    %v1764 = vld [vmem:[#allocation14 + $0x1288] sm:$0xff]
    %v1765 = vld [vmem:[#allocation14 + $0x1290] sm:$0xff]
    %v1766 = vld [vmem:[#allocation14 + $0x1298] sm:$0xff]
    %v1767 = vld [vmem:[#allocation14 + $0x1300] sm:$0xff]
    %v1768 = vld [vmem:[#allocation14 + $0x1308] sm:$0xff]
    %v1769 = vld [vmem:[#allocation14 + $0x1310] sm:$0xff]
    %v1770 = vld [vmem:[#allocation14 + $0x1318] sm:$0xff]
    %v1771 = vld [vmem:[#allocation14 + $0x1380] sm:$0xff]
    %v1772 = vld [vmem:[#allocation14 + $0x1388] sm:$0xff]
    %v1773 = vld [vmem:[#allocation14 + $0x1390] sm:$0xff]
    %v1774 = vld [vmem:[#allocation14 + $0x1398] sm:$0xff]
    %v1775 = vld [vmem:[#allocation14 + $0x1400] sm:$0xff]
    %v1776 = vld [vmem:[#allocation14 + $0x1408] sm:$0xff]
    %v1777 = vld [vmem:[#allocation14 + $0x1410] sm:$0xff]
    %v1778 = vld [vmem:[#allocation14 + $0x1418] sm:$0xff]
    %v1779 = vld [vmem:[#allocation14 + $0x1480] sm:$0xff]
    %v1780 = vld [vmem:[#allocation14 + $0x1488] sm:$0xff]
    %v1781 = vld [vmem:[#allocation14 + $0x1490] sm:$0xff]
    %v1782 = vld [vmem:[#allocation14 + $0x1498] sm:$0xff]
    %v1783 = vld [vmem:[#allocation14 + $0x1500] sm:$0xff]
    %v1784 = vld [vmem:[#allocation14 + $0x1508] sm:$0xff]
    %v1785 = vld [vmem:[#allocation14 + $0x1510] sm:$0xff]
    %v1786 = vld [vmem:[#allocation14 + $0x1518] sm:$0xff]
    %v1787 = vld [vmem:[#allocation14 + $0x1580] sm:$0xff]
    %v1788 = vld [vmem:[#allocation14 + $0x1588] sm:$0xff]
    %v1789 = vld [vmem:[#allocation14 + $0x1590] sm:$0xff]
    %v1790 = vld [vmem:[#allocation14 + $0x1598] sm:$0xff]
    %v1791 = vld [vmem:[#allocation14 + $0x1600] sm:$0xff]
    %v1792 = vld [vmem:[#allocation14 + $0x1608] sm:$0xff]
    %v1793 = vld [vmem:[#allocation14 + $0x1610] sm:$0xff]
    %v1794 = vld [vmem:[#allocation14 + $0x1618] sm:$0xff]
    %v1795 = vld [vmem:[#allocation14 + $0x1680] sm:$0xff]
    %v1796 = vld [vmem:[#allocation14 + $0x1688] sm:$0xff]
    %v1797 = vld [vmem:[#allocation14 + $0x1690] sm:$0xff]
    %v1798 = vld [vmem:[#allocation14 + $0x1698] sm:$0xff]
    %v1799 = vld [vmem:[#allocation14 + $0x1700] sm:$0xff]
    %v1800 = vld [vmem:[#allocation14 + $0x1708] sm:$0xff]
    %v1801 = vld [vmem:[#allocation14 + $0x1710] sm:$0xff]
    %v1802 = vld [vmem:[#allocation14 + $0x1718] sm:$0xff]
    %v1803 = vld [vmem:[#allocation14 + $0x1780] sm:$0xff]
    %v1804 = vld [vmem:[#allocation14 + $0x1788] sm:$0xff]
    %v1805 = vld [vmem:[#allocation14 + $0x1790] sm:$0xff]
    %v1806 = vld [vmem:[#allocation14 + $0x1798] sm:$0xff]
    %v1807 = vld [vmem:[#allocation14 + $0x1800] sm:$0xff]
    %v1808 = vld [vmem:[#allocation14 + $0x1808] sm:$0xff]
    %v1809 = vld [vmem:[#allocation14 + $0x1810] sm:$0xff]
    %v1810 = vld [vmem:[#allocation14 + $0x1818] sm:$0xff]
    %v1811 = vld [vmem:[#allocation14 + $0x1880] sm:$0xff]
    %v1812 = vld [vmem:[#allocation14 + $0x1888] sm:$0xff]
    %v1813 = vld [vmem:[#allocation14 + $0x1890] sm:$0xff]
    %v1814 = vld [vmem:[#allocation14 + $0x1898] sm:$0xff]
    %v1815 = vld [vmem:[#allocation14 + $0x1900] sm:$0xff]
    %v1816 = vld [vmem:[#allocation14 + $0x1908] sm:$0xff]
    %v1817 = vld [vmem:[#allocation14 + $0x1910] sm:$0xff]
    %v1818 = vld [vmem:[#allocation14 + $0x1918] sm:$0xff]
    %v1819 = vld [vmem:[#allocation14 + $0x1980] sm:$0xff]
    %v1820 = vld [vmem:[#allocation14 + $0x1988] sm:$0xff]
    %v1821 = vld [vmem:[#allocation14 + $0x1990] sm:$0xff]
    %v1822 = vld [vmem:[#allocation14 + $0x1998] sm:$0xff]
    %v1823 = vld [vmem:[#allocation14 + $0x1a00] sm:$0xff]
    %v1824 = vld [vmem:[#allocation14 + $0x1a08] sm:$0xff]
    %v1825 = vld [vmem:[#allocation14 + $0x1a10] sm:$0xff]
    %v1826 = vld [vmem:[#allocation14 + $0x1a18] sm:$0xff]
    %v1827 = vld [vmem:[#allocation14 + $0x1a80] sm:$0xff]
    %v1828 = vld [vmem:[#allocation14 + $0x1a88] sm:$0xff]
    %v1829 = vld [vmem:[#allocation14 + $0x1a90] sm:$0xff]
    %v1830 = vld [vmem:[#allocation14 + $0x1a98] sm:$0xff]
    %v1831 = vld [vmem:[#allocation14 + $0x1b00] sm:$0xff]
    %v1832 = vld [vmem:[#allocation14 + $0x1b08] sm:$0xff]
    %v1833 = vld [vmem:[#allocation14 + $0x1b10] sm:$0xff]
    %v1834 = vld [vmem:[#allocation14 + $0x1b18] sm:$0xff]
    %v1835 = vld [vmem:[#allocation14 + $0x1b80] sm:$0xff]
    %v1836 = vld [vmem:[#allocation14 + $0x1b88] sm:$0xff]
    %v1837 = vld [vmem:[#allocation14 + $0x1b90] sm:$0xff]
    %v1838 = vld [vmem:[#allocation14 + $0x1b98] sm:$0xff]
    %v1839 = vld [vmem:[#allocation14 + $0x1c00] sm:$0xff]
    %v1840 = vld [vmem:[#allocation14 + $0x1c08] sm:$0xff]
    %v1841 = vld [vmem:[#allocation14 + $0x1c10] sm:$0xff]
    %v1842 = vld [vmem:[#allocation14 + $0x1c18] sm:$0xff]
    %v1843 = vld [vmem:[#allocation14 + $0x1c80] sm:$0xff]
    %v1844 = vld [vmem:[#allocation14 + $0x1c88] sm:$0xff]
    %v1845 = vld [vmem:[#allocation14 + $0x1c90] sm:$0xff]
    %v1846 = vld [vmem:[#allocation14 + $0x1c98] sm:$0xff]
    %v1847 = vld [vmem:[#allocation14 + $0x1d00] sm:$0xff]
    %v1848 = vld [vmem:[#allocation14 + $0x1d08] sm:$0xff]
    %v1849 = vld [vmem:[#allocation14 + $0x1d10] sm:$0xff]
    %v1850 = vld [vmem:[#allocation14 + $0x1d18] sm:$0xff]
    %v1851 = vld [vmem:[#allocation14 + $0x1d80] sm:$0xff]
    %v1852 = vld [vmem:[#allocation14 + $0x1d88] sm:$0xff]
    %v1853 = vld [vmem:[#allocation14 + $0x1d90] sm:$0xff]
    %v1854 = vld [vmem:[#allocation14 + $0x1d98] sm:$0xff]
    %v1855 = vld [vmem:[#allocation14 + $0x1e00] sm:$0xff]
    %v1856 = vld [vmem:[#allocation14 + $0x1e08] sm:$0xff]
    %v1857 = vld [vmem:[#allocation14 + $0x1e10] sm:$0xff]
    %v1858 = vld [vmem:[#allocation14 + $0x1e18] sm:$0xff]
    %v1859 = vld [vmem:[#allocation14 + $0x1e80] sm:$0xff]
    %v1860 = vld [vmem:[#allocation14 + $0x1e88] sm:$0xff]
    %v1861 = vld [vmem:[#allocation14 + $0x1e90] sm:$0xff]
    %v1862 = vld [vmem:[#allocation14 + $0x1e98] sm:$0xff]
    %v1863 = vld [vmem:[#allocation14 + $0x1f00] sm:$0xff]
    %v1864 = vld [vmem:[#allocation14 + $0x1f08] sm:$0xff]
    %v1865 = vld [vmem:[#allocation14 + $0x1f10] sm:$0xff]
    %v1866 = vld [vmem:[#allocation14 + $0x1f18] sm:$0xff]
    %v1867 = vld [vmem:[#allocation14 + $0x1f80] sm:$0xff]
    %v1868 = vld [vmem:[#allocation14 + $0x1f88] sm:$0xff]
    %v1869 = vld [vmem:[#allocation14 + $0x1f90] sm:$0xff]
    %v1870 = vld [vmem:[#allocation14 + $0x1f98] sm:$0xff]
    %v1871 = vpack.c.bf16 %v1611, %v1611
    %v1872 = vpack.c.bf16 %v1612, %v1612
    %v1873 = vpack.c.bf16 %v1613, %v1613
    %v1874 = vpack.c.bf16 %v1614, %v1614
    %v2131 = vunpack.c.l.b16 %v1615
    %v2132 = vunpack.c.h.b16 %v1615
    %v2133 = vunpack.c.l.b16 %v1616
    %v2134 = vunpack.c.h.b16 %v1616
    %v2135 = vunpack.c.l.b16 %v1617
    %v2136 = vunpack.c.h.b16 %v1617
    %v2137 = vunpack.c.l.b16 %v1618
    %v2138 = vunpack.c.h.b16 %v1618
    %v2139 = vunpack.c.l.b16 %v1619
    %v2140 = vunpack.c.h.b16 %v1619
    %v2141 = vunpack.c.l.b16 %v1620
    %v2142 = vunpack.c.h.b16 %v1620
    %v2143 = vunpack.c.l.b16 %v1621
    %v2144 = vunpack.c.h.b16 %v1621
    %v2145 = vunpack.c.l.b16 %v1622
    %v2146 = vunpack.c.h.b16 %v1622
    %v2147 = vunpack.c.l.b16 %v1623
    %v2148 = vunpack.c.h.b16 %v1623
    %v2149 = vunpack.c.l.b16 %v1624
    %v2150 = vunpack.c.h.b16 %v1624
    %v2151 = vunpack.c.l.b16 %v1625
    %v2152 = vunpack.c.h.b16 %v1625
    %v2153 = vunpack.c.l.b16 %v1626
    %v2154 = vunpack.c.h.b16 %v1626
    %v2155 = vunpack.c.l.b16 %v1627
    %v2156 = vunpack.c.h.b16 %v1627
    %v2157 = vunpack.c.l.b16 %v1628
    %v2158 = vunpack.c.h.b16 %v1628
    %v2159 = vunpack.c.l.b16 %v1629
    %v2160 = vunpack.c.h.b16 %v1629
    %v2161 = vunpack.c.l.b16 %v1630
    %v2162 = vunpack.c.h.b16 %v1630
    %v2163 = vunpack.c.l.b16 %v1631
    %v2164 = vunpack.c.h.b16 %v1631
    %v2165 = vunpack.c.l.b16 %v1632
    %v2166 = vunpack.c.h.b16 %v1632
    %v2167 = vunpack.c.l.b16 %v1633
    %v2168 = vunpack.c.h.b16 %v1633
    %v2169 = vunpack.c.l.b16 %v1634
    %v2170 = vunpack.c.h.b16 %v1634
    %v2171 = vunpack.c.l.b16 %v1635
    %v2172 = vunpack.c.h.b16 %v1635
    %v2173 = vunpack.c.l.b16 %v1636
    %v2174 = vunpack.c.h.b16 %v1636
    %v2175 = vunpack.c.l.b16 %v1637
    %v2176 = vunpack.c.h.b16 %v1637
    %v2177 = vunpack.c.l.b16 %v1638
    %v2178 = vunpack.c.h.b16 %v1638
    %v2179 = vunpack.c.l.b16 %v1639
    %v2180 = vunpack.c.h.b16 %v1639
    %v2181 = vunpack.c.l.b16 %v1640
    %v2182 = vunpack.c.h.b16 %v1640
    %v2183 = vunpack.c.l.b16 %v1641
    %v2184 = vunpack.c.h.b16 %v1641
    %v2185 = vunpack.c.l.b16 %v1642
    %v2186 = vunpack.c.h.b16 %v1642
    %v2187 = vunpack.c.l.b16 %v1643
    %v2188 = vunpack.c.h.b16 %v1643
    %v2189 = vunpack.c.l.b16 %v1644
    %v2190 = vunpack.c.h.b16 %v1644
    %v2191 = vunpack.c.l.b16 %v1645
    %v2192 = vunpack.c.h.b16 %v1645
    %v2193 = vunpack.c.l.b16 %v1646
    %v2194 = vunpack.c.h.b16 %v1646
    %v2195 = vunpack.c.l.b16 %v1647
    %v2196 = vunpack.c.h.b16 %v1647
    %v2197 = vunpack.c.l.b16 %v1648
    %v2198 = vunpack.c.h.b16 %v1648
    %v2199 = vunpack.c.l.b16 %v1649
    %v2200 = vunpack.c.h.b16 %v1649
    %v2201 = vunpack.c.l.b16 %v1650
    %v2202 = vunpack.c.h.b16 %v1650
    %v2203 = vunpack.c.l.b16 %v1651
    %v2204 = vunpack.c.h.b16 %v1651
    %v2205 = vunpack.c.l.b16 %v1652
    %v2206 = vunpack.c.h.b16 %v1652
    %v2207 = vunpack.c.l.b16 %v1653
    %v2208 = vunpack.c.h.b16 %v1653
    %v2209 = vunpack.c.l.b16 %v1654
    %v2210 = vunpack.c.h.b16 %v1654
    %v2211 = vunpack.c.l.b16 %v1655
    %v2212 = vunpack.c.h.b16 %v1655
    %v2213 = vunpack.c.l.b16 %v1656
    %v2214 = vunpack.c.h.b16 %v1656
    %v2215 = vunpack.c.l.b16 %v1657
    %v2216 = vunpack.c.h.b16 %v1657
    %v2217 = vunpack.c.l.b16 %v1658
    %v2218 = vunpack.c.h.b16 %v1658
    %v2219 = vunpack.c.l.b16 %v1659
    %v2220 = vunpack.c.h.b16 %v1659
    %v2221 = vunpack.c.l.b16 %v1660
    %v2222 = vunpack.c.h.b16 %v1660
    %v2223 = vunpack.c.l.b16 %v1661
    %v2224 = vunpack.c.h.b16 %v1661
    %v2225 = vunpack.c.l.b16 %v1662
    %v2226 = vunpack.c.h.b16 %v1662
    %v2227 = vunpack.c.l.b16 %v1663
    %v2228 = vunpack.c.h.b16 %v1663
    %v2229 = vunpack.c.l.b16 %v1664
    %v2230 = vunpack.c.h.b16 %v1664
    %v2231 = vunpack.c.l.b16 %v1665
    %v2232 = vunpack.c.h.b16 %v1665
    %v2233 = vunpack.c.l.b16 %v1666
    %v2234 = vunpack.c.h.b16 %v1666
    %v2235 = vunpack.c.l.b16 %v1667
    %v2236 = vunpack.c.h.b16 %v1667
    %v2237 = vunpack.c.l.b16 %v1668
    %v2238 = vunpack.c.h.b16 %v1668
    %v2239 = vunpack.c.l.b16 %v1669
    %v2240 = vunpack.c.h.b16 %v1669
    %v2241 = vunpack.c.l.b16 %v1670
    %v2242 = vunpack.c.h.b16 %v1670
    %v2243 = vunpack.c.l.b16 %v1671
    %v2244 = vunpack.c.h.b16 %v1671
    %v2245 = vunpack.c.l.b16 %v1672
    %v2246 = vunpack.c.h.b16 %v1672
    %v2247 = vunpack.c.l.b16 %v1673
    %v2248 = vunpack.c.h.b16 %v1673
    %v2249 = vunpack.c.l.b16 %v1674
    %v2250 = vunpack.c.h.b16 %v1674
    %v2251 = vunpack.c.l.b16 %v1675
    %v2252 = vunpack.c.h.b16 %v1675
    %v2253 = vunpack.c.l.b16 %v1676
    %v2254 = vunpack.c.h.b16 %v1676
    %v2255 = vunpack.c.l.b16 %v1677
    %v2256 = vunpack.c.h.b16 %v1677
    %v2257 = vunpack.c.l.b16 %v1678
    %v2258 = vunpack.c.h.b16 %v1678
    %v2259 = vunpack.c.l.b16 %v1679
    %v2260 = vunpack.c.h.b16 %v1679
    %v2261 = vunpack.c.l.b16 %v1680
    %v2262 = vunpack.c.h.b16 %v1680
    %v2263 = vunpack.c.l.b16 %v1681
    %v2264 = vunpack.c.h.b16 %v1681
    %v2265 = vunpack.c.l.b16 %v1682
    %v2266 = vunpack.c.h.b16 %v1682
    %v2267 = vunpack.c.l.b16 %v1683
    %v2268 = vunpack.c.h.b16 %v1683
    %v2269 = vunpack.c.l.b16 %v1684
    %v2270 = vunpack.c.h.b16 %v1684
    %v2271 = vunpack.c.l.b16 %v1685
    %v2272 = vunpack.c.h.b16 %v1685
    %v2273 = vunpack.c.l.b16 %v1686
    %v2274 = vunpack.c.h.b16 %v1686
    %v2275 = vunpack.c.l.b16 %v1687
    %v2276 = vunpack.c.h.b16 %v1687
    %v2277 = vunpack.c.l.b16 %v1688
    %v2278 = vunpack.c.h.b16 %v1688
    %v2279 = vunpack.c.l.b16 %v1689
    %v2280 = vunpack.c.h.b16 %v1689
    %v2281 = vunpack.c.l.b16 %v1690
    %v2282 = vunpack.c.h.b16 %v1690
    %v2283 = vunpack.c.l.b16 %v1691
    %v2284 = vunpack.c.h.b16 %v1691
    %v2285 = vunpack.c.l.b16 %v1692
    %v2286 = vunpack.c.h.b16 %v1692
    %v2287 = vunpack.c.l.b16 %v1693
    %v2288 = vunpack.c.h.b16 %v1693
    %v2289 = vunpack.c.l.b16 %v1694
    %v2290 = vunpack.c.h.b16 %v1694
    %v2291 = vunpack.c.l.b16 %v1695
    %v2292 = vunpack.c.h.b16 %v1695
    %v2293 = vunpack.c.l.b16 %v1696
    %v2294 = vunpack.c.h.b16 %v1696
    %v2295 = vunpack.c.l.b16 %v1697
    %v2296 = vunpack.c.h.b16 %v1697
    %v2297 = vunpack.c.l.b16 %v1698
    %v2298 = vunpack.c.h.b16 %v1698
    %v2299 = vunpack.c.l.b16 %v1699
    %v2300 = vunpack.c.h.b16 %v1699
    %v2301 = vunpack.c.l.b16 %v1700
    %v2302 = vunpack.c.h.b16 %v1700
    %v2303 = vunpack.c.l.b16 %v1701
    %v2304 = vunpack.c.h.b16 %v1701
    %v2305 = vunpack.c.l.b16 %v1702
    %v2306 = vunpack.c.h.b16 %v1702
    %v2307 = vunpack.c.l.b16 %v1703
    %v2308 = vunpack.c.h.b16 %v1703
    %v2309 = vunpack.c.l.b16 %v1704
    %v2310 = vunpack.c.h.b16 %v1704
    %v2311 = vunpack.c.l.b16 %v1705
    %v2312 = vunpack.c.h.b16 %v1705
    %v2313 = vunpack.c.l.b16 %v1706
    %v2314 = vunpack.c.h.b16 %v1706
    %v2315 = vunpack.c.l.b16 %v1707
    %v2316 = vunpack.c.h.b16 %v1707
    %v2317 = vunpack.c.l.b16 %v1708
    %v2318 = vunpack.c.h.b16 %v1708
    %v2319 = vunpack.c.l.b16 %v1709
    %v2320 = vunpack.c.h.b16 %v1709
    %v2321 = vunpack.c.l.b16 %v1710
    %v2322 = vunpack.c.h.b16 %v1710
    %v2323 = vunpack.c.l.b16 %v1711
    %v2324 = vunpack.c.h.b16 %v1711
    %v2325 = vunpack.c.l.b16 %v1712
    %v2326 = vunpack.c.h.b16 %v1712
    %v2327 = vunpack.c.l.b16 %v1713
    %v2328 = vunpack.c.h.b16 %v1713
    %v2329 = vunpack.c.l.b16 %v1714
    %v2330 = vunpack.c.h.b16 %v1714
    %v2331 = vunpack.c.l.b16 %v1715
    %v2332 = vunpack.c.h.b16 %v1715
    %v2333 = vunpack.c.l.b16 %v1716
    %v2334 = vunpack.c.h.b16 %v1716
    %v2335 = vunpack.c.l.b16 %v1717
    %v2336 = vunpack.c.h.b16 %v1717
    %v2337 = vunpack.c.l.b16 %v1718
    %v2338 = vunpack.c.h.b16 %v1718
    %v2339 = vunpack.c.l.b16 %v1719
    %v2340 = vunpack.c.h.b16 %v1719
    %v2341 = vunpack.c.l.b16 %v1720
    %v2342 = vunpack.c.h.b16 %v1720
    %v2343 = vunpack.c.l.b16 %v1721
    %v2344 = vunpack.c.h.b16 %v1721
    %v2345 = vunpack.c.l.b16 %v1722
    %v2346 = vunpack.c.h.b16 %v1722
    %v2347 = vunpack.c.l.b16 %v1723
    %v2348 = vunpack.c.h.b16 %v1723
    %v2349 = vunpack.c.l.b16 %v1724
    %v2350 = vunpack.c.h.b16 %v1724
    %v2351 = vunpack.c.l.b16 %v1725
    %v2352 = vunpack.c.h.b16 %v1725
    %v2353 = vunpack.c.l.b16 %v1726
    %v2354 = vunpack.c.h.b16 %v1726
    %v2355 = vunpack.c.l.b16 %v1727
    %v2356 = vunpack.c.h.b16 %v1727
    %v2357 = vunpack.c.l.b16 %v1728
    %v2358 = vunpack.c.h.b16 %v1728
    %v2359 = vunpack.c.l.b16 %v1729
    %v2360 = vunpack.c.h.b16 %v1729
    %v2361 = vunpack.c.l.b16 %v1730
    %v2362 = vunpack.c.h.b16 %v1730
    %v2363 = vunpack.c.l.b16 %v1731
    %v2364 = vunpack.c.h.b16 %v1731
    %v2365 = vunpack.c.l.b16 %v1732
    %v2366 = vunpack.c.h.b16 %v1732
    %v2367 = vunpack.c.l.b16 %v1733
    %v2368 = vunpack.c.h.b16 %v1733
    %v2369 = vunpack.c.l.b16 %v1734
    %v2370 = vunpack.c.h.b16 %v1734
    %v2371 = vunpack.c.l.b16 %v1735
    %v2372 = vunpack.c.h.b16 %v1735
    %v2373 = vunpack.c.l.b16 %v1736
    %v2374 = vunpack.c.h.b16 %v1736
    %v2375 = vunpack.c.l.b16 %v1737
    %v2376 = vunpack.c.h.b16 %v1737
    %v2377 = vunpack.c.l.b16 %v1738
    %v2378 = vunpack.c.h.b16 %v1738
    %v2379 = vunpack.c.l.b16 %v1739
    %v2380 = vunpack.c.h.b16 %v1739
    %v2381 = vunpack.c.l.b16 %v1740
    %v2382 = vunpack.c.h.b16 %v1740
    %v2383 = vunpack.c.l.b16 %v1741
    %v2384 = vunpack.c.h.b16 %v1741
    %v2385 = vunpack.c.l.b16 %v1742
    %v2386 = vunpack.c.h.b16 %v1742
    %v2387 = vunpack.c.l.b16 %v1743
    %v2388 = vunpack.c.h.b16 %v1743
    %v2389 = vunpack.c.l.b16 %v1744
    %v2390 = vunpack.c.h.b16 %v1744
    %v2391 = vunpack.c.l.b16 %v1745
    %v2392 = vunpack.c.h.b16 %v1745
    %v2393 = vunpack.c.l.b16 %v1746
    %v2394 = vunpack.c.h.b16 %v1746
    %v2395 = vunpack.c.l.b16 %v1747
    %v2396 = vunpack.c.h.b16 %v1747
    %v2397 = vunpack.c.l.b16 %v1748
    %v2398 = vunpack.c.h.b16 %v1748
    %v2399 = vunpack.c.l.b16 %v1749
    %v2400 = vunpack.c.h.b16 %v1749
    %v2401 = vunpack.c.l.b16 %v1750
    %v2402 = vunpack.c.h.b16 %v1750
    %v2403 = vunpack.c.l.b16 %v1751
    %v2404 = vunpack.c.h.b16 %v1751
    %v2405 = vunpack.c.l.b16 %v1752
    %v2406 = vunpack.c.h.b16 %v1752
    %v2407 = vunpack.c.l.b16 %v1753
    %v2408 = vunpack.c.h.b16 %v1753
    %v2409 = vunpack.c.l.b16 %v1754
    %v2410 = vunpack.c.h.b16 %v1754
    %v2411 = vunpack.c.l.b16 %v1755
    %v2412 = vunpack.c.h.b16 %v1755
    %v2413 = vunpack.c.l.b16 %v1756
    %v2414 = vunpack.c.h.b16 %v1756
    %v2415 = vunpack.c.l.b16 %v1757
    %v2416 = vunpack.c.h.b16 %v1757
    %v2417 = vunpack.c.l.b16 %v1758
    %v2418 = vunpack.c.h.b16 %v1758
    %v2419 = vunpack.c.l.b16 %v1759
    %v2420 = vunpack.c.h.b16 %v1759
    %v2421 = vunpack.c.l.b16 %v1760
    %v2422 = vunpack.c.h.b16 %v1760
    %v2423 = vunpack.c.l.b16 %v1761
    %v2424 = vunpack.c.h.b16 %v1761
    %v2425 = vunpack.c.l.b16 %v1762
    %v2426 = vunpack.c.h.b16 %v1762
    %v2427 = vunpack.c.l.b16 %v1763
    %v2428 = vunpack.c.h.b16 %v1763
    %v2429 = vunpack.c.l.b16 %v1764
    %v2430 = vunpack.c.h.b16 %v1764
    %v2431 = vunpack.c.l.b16 %v1765
    %v2432 = vunpack.c.h.b16 %v1765
    %v2433 = vunpack.c.l.b16 %v1766
    %v2434 = vunpack.c.h.b16 %v1766
    %v2435 = vunpack.c.l.b16 %v1767
    %v2436 = vunpack.c.h.b16 %v1767
    %v2437 = vunpack.c.l.b16 %v1768
    %v2438 = vunpack.c.h.b16 %v1768
    %v2439 = vunpack.c.l.b16 %v1769
    %v2440 = vunpack.c.h.b16 %v1769
    %v2441 = vunpack.c.l.b16 %v1770
    %v2442 = vunpack.c.h.b16 %v1770
    %v2443 = vunpack.c.l.b16 %v1771
    %v2444 = vunpack.c.h.b16 %v1771
    %v2445 = vunpack.c.l.b16 %v1772
    %v2446 = vunpack.c.h.b16 %v1772
    %v2447 = vunpack.c.l.b16 %v1773
    %v2448 = vunpack.c.h.b16 %v1773
    %v2449 = vunpack.c.l.b16 %v1774
    %v2450 = vunpack.c.h.b16 %v1774
    %v2451 = vunpack.c.l.b16 %v1775
    %v2452 = vunpack.c.h.b16 %v1775
    %v2453 = vunpack.c.l.b16 %v1776
    %v2454 = vunpack.c.h.b16 %v1776
    %v2455 = vunpack.c.l.b16 %v1777
    %v2456 = vunpack.c.h.b16 %v1777
    %v2457 = vunpack.c.l.b16 %v1778
    %v2458 = vunpack.c.h.b16 %v1778
    %v2459 = vunpack.c.l.b16 %v1779
    %v2460 = vunpack.c.h.b16 %v1779
    %v2461 = vunpack.c.l.b16 %v1780
    %v2462 = vunpack.c.h.b16 %v1780
    %v2463 = vunpack.c.l.b16 %v1781
    %v2464 = vunpack.c.h.b16 %v1781
    %v2465 = vunpack.c.l.b16 %v1782
    %v2466 = vunpack.c.h.b16 %v1782
    %v2467 = vunpack.c.l.b16 %v1783
    %v2468 = vunpack.c.h.b16 %v1783
    %v2469 = vunpack.c.l.b16 %v1784
    %v2470 = vunpack.c.h.b16 %v1784
    %v2471 = vunpack.c.l.b16 %v1785
    %v2472 = vunpack.c.h.b16 %v1785
    %v2473 = vunpack.c.l.b16 %v1786
    %v2474 = vunpack.c.h.b16 %v1786
    %v2475 = vunpack.c.l.b16 %v1787
    %v2476 = vunpack.c.h.b16 %v1787
    %v2477 = vunpack.c.l.b16 %v1788
    %v2478 = vunpack.c.h.b16 %v1788
    %v2479 = vunpack.c.l.b16 %v1789
    %v2480 = vunpack.c.h.b16 %v1789
    %v2481 = vunpack.c.l.b16 %v1790
    %v2482 = vunpack.c.h.b16 %v1790
    %v2483 = vunpack.c.l.b16 %v1791
    %v2484 = vunpack.c.h.b16 %v1791
    %v2485 = vunpack.c.l.b16 %v1792
    %v2486 = vunpack.c.h.b16 %v1792
    %v2487 = vunpack.c.l.b16 %v1793
    %v2488 = vunpack.c.h.b16 %v1793
    %v2489 = vunpack.c.l.b16 %v1794
    %v2490 = vunpack.c.h.b16 %v1794
    %v2491 = vunpack.c.l.b16 %v1795
    %v2492 = vunpack.c.h.b16 %v1795
    %v2493 = vunpack.c.l.b16 %v1796
    %v2494 = vunpack.c.h.b16 %v1796
    %v2495 = vunpack.c.l.b16 %v1797
    %v2496 = vunpack.c.h.b16 %v1797
    %v2497 = vunpack.c.l.b16 %v1798
    %v2498 = vunpack.c.h.b16 %v1798
    %v2499 = vunpack.c.l.b16 %v1799
    %v2500 = vunpack.c.h.b16 %v1799
    %v2501 = vunpack.c.l.b16 %v1800
    %v2502 = vunpack.c.h.b16 %v1800
    %v2503 = vunpack.c.l.b16 %v1801
    %v2504 = vunpack.c.h.b16 %v1801
    %v2505 = vunpack.c.l.b16 %v1802
    %v2506 = vunpack.c.h.b16 %v1802
    %v2507 = vunpack.c.l.b16 %v1803
    %v2508 = vunpack.c.h.b16 %v1803
    %v2509 = vunpack.c.l.b16 %v1804
    %v2510 = vunpack.c.h.b16 %v1804
    %v2511 = vunpack.c.l.b16 %v1805
    %v2512 = vunpack.c.h.b16 %v1805
    %v2513 = vunpack.c.l.b16 %v1806
    %v2514 = vunpack.c.h.b16 %v1806
    %v2515 = vunpack.c.l.b16 %v1807
    %v2516 = vunpack.c.h.b16 %v1807
    %v2517 = vunpack.c.l.b16 %v1808
    %v2518 = vunpack.c.h.b16 %v1808
    %v2519 = vunpack.c.l.b16 %v1809
    %v2520 = vunpack.c.h.b16 %v1809
    %v2521 = vunpack.c.l.b16 %v1810
    %v2522 = vunpack.c.h.b16 %v1810
    %v2523 = vunpack.c.l.b16 %v1811
    %v2524 = vunpack.c.h.b16 %v1811
    %v2525 = vunpack.c.l.b16 %v1812
    %v2526 = vunpack.c.h.b16 %v1812
    %v2527 = vunpack.c.l.b16 %v1813
    %v2528 = vunpack.c.h.b16 %v1813
    %v2529 = vunpack.c.l.b16 %v1814
    %v2530 = vunpack.c.h.b16 %v1814
    %v2531 = vunpack.c.l.b16 %v1815
    %v2532 = vunpack.c.h.b16 %v1815
    %v2533 = vunpack.c.l.b16 %v1816
    %v2534 = vunpack.c.h.b16 %v1816
    %v2535 = vunpack.c.l.b16 %v1817
    %v2536 = vunpack.c.h.b16 %v1817
    %v2537 = vunpack.c.l.b16 %v1818
    %v2538 = vunpack.c.h.b16 %v1818
    %v2539 = vunpack.c.l.b16 %v1819
    %v2540 = vunpack.c.h.b16 %v1819
    %v2541 = vunpack.c.l.b16 %v1820
    %v2542 = vunpack.c.h.b16 %v1820
    %v2543 = vunpack.c.l.b16 %v1821
    %v2544 = vunpack.c.h.b16 %v1821
    %v2545 = vunpack.c.l.b16 %v1822
    %v2546 = vunpack.c.h.b16 %v1822
    %v2547 = vunpack.c.l.b16 %v1823
    %v2548 = vunpack.c.h.b16 %v1823
    %v2549 = vunpack.c.l.b16 %v1824
    %v2550 = vunpack.c.h.b16 %v1824
    %v2551 = vunpack.c.l.b16 %v1825
    %v2552 = vunpack.c.h.b16 %v1825
    %v2553 = vunpack.c.l.b16 %v1826
    %v2554 = vunpack.c.h.b16 %v1826
    %v2555 = vunpack.c.l.b16 %v1827
    %v2556 = vunpack.c.h.b16 %v1827
    %v2557 = vunpack.c.l.b16 %v1828
    %v2558 = vunpack.c.h.b16 %v1828
    %v2559 = vunpack.c.l.b16 %v1829
    %v2560 = vunpack.c.h.b16 %v1829
    %v2561 = vunpack.c.l.b16 %v1830
    %v2562 = vunpack.c.h.b16 %v1830
    %v2563 = vunpack.c.l.b16 %v1831
    %v2564 = vunpack.c.h.b16 %v1831
    %v2565 = vunpack.c.l.b16 %v1832
    %v2566 = vunpack.c.h.b16 %v1832
    %v2567 = vunpack.c.l.b16 %v1833
    %v2568 = vunpack.c.h.b16 %v1833
    %v2569 = vunpack.c.l.b16 %v1834
    %v2570 = vunpack.c.h.b16 %v1834
    %v2571 = vunpack.c.l.b16 %v1835
    %v2572 = vunpack.c.h.b16 %v1835
    %v2573 = vunpack.c.l.b16 %v1836
    %v2574 = vunpack.c.h.b16 %v1836
    %v2575 = vunpack.c.l.b16 %v1837
    %v2576 = vunpack.c.h.b16 %v1837
    %v2577 = vunpack.c.l.b16 %v1838
    %v2578 = vunpack.c.h.b16 %v1838
    %v2579 = vunpack.c.l.b16 %v1839
    %v2580 = vunpack.c.h.b16 %v1839
    %v2581 = vunpack.c.l.b16 %v1840
    %v2582 = vunpack.c.h.b16 %v1840
    %v2583 = vunpack.c.l.b16 %v1841
    %v2584 = vunpack.c.h.b16 %v1841
    %v2585 = vunpack.c.l.b16 %v1842
    %v2586 = vunpack.c.h.b16 %v1842
    %v2587 = vunpack.c.l.b16 %v1843
    %v2588 = vunpack.c.h.b16 %v1843
    %v2589 = vunpack.c.l.b16 %v1844
    %v2590 = vunpack.c.h.b16 %v1844
    %v2591 = vunpack.c.l.b16 %v1845
    %v2592 = vunpack.c.h.b16 %v1845
    %v2593 = vunpack.c.l.b16 %v1846
    %v2594 = vunpack.c.h.b16 %v1846
    %v2595 = vunpack.c.l.b16 %v1847
    %v2596 = vunpack.c.h.b16 %v1847
    %v2597 = vunpack.c.l.b16 %v1848
    %v2598 = vunpack.c.h.b16 %v1848
    %v2599 = vunpack.c.l.b16 %v1849
    %v2600 = vunpack.c.h.b16 %v1849
    %v2601 = vunpack.c.l.b16 %v1850
    %v2602 = vunpack.c.h.b16 %v1850
    %v2603 = vunpack.c.l.b16 %v1851
    %v2604 = vunpack.c.h.b16 %v1851
    %v2605 = vunpack.c.l.b16 %v1852
    %v2606 = vunpack.c.h.b16 %v1852
    %v2607 = vunpack.c.l.b16 %v1853
    %v2608 = vunpack.c.h.b16 %v1853
    %v2609 = vunpack.c.l.b16 %v1854
    %v2610 = vunpack.c.h.b16 %v1854
    %v2611 = vunpack.c.l.b16 %v1855
    %v2612 = vunpack.c.h.b16 %v1855
    %v2613 = vunpack.c.l.b16 %v1856
    %v2614 = vunpack.c.h.b16 %v1856
    %v2615 = vunpack.c.l.b16 %v1857
    %v2616 = vunpack.c.h.b16 %v1857
    %v2617 = vunpack.c.l.b16 %v1858
    %v2618 = vunpack.c.h.b16 %v1858
    %v2619 = vunpack.c.l.b16 %v1859
    %v2620 = vunpack.c.h.b16 %v1859
    %v2621 = vunpack.c.l.b16 %v1860
    %v2622 = vunpack.c.h.b16 %v1860
    %v2623 = vunpack.c.l.b16 %v1861
    %v2624 = vunpack.c.h.b16 %v1861
    %v2625 = vunpack.c.l.b16 %v1862
    %v2626 = vunpack.c.h.b16 %v1862
    %v2627 = vunpack.c.l.b16 %v1863
    %v2628 = vunpack.c.h.b16 %v1863
    %v2629 = vunpack.c.l.b16 %v1864
    %v2630 = vunpack.c.h.b16 %v1864
    %v2631 = vunpack.c.l.b16 %v1865
    %v2632 = vunpack.c.h.b16 %v1865
    %v2633 = vunpack.c.l.b16 %v1866
    %v2634 = vunpack.c.h.b16 %v1866
    %v2635 = vunpack.c.l.b16 %v1867
    %v2636 = vunpack.c.h.b16 %v1867
    %v2637 = vunpack.c.l.b16 %v1868
    %v2638 = vunpack.c.h.b16 %v1868
    %v2639 = vunpack.c.l.b16 %v1869
    %v2640 = vunpack.c.h.b16 %v1869
    %v2641 = vunpack.c.l.b16 %v1870
    %v2642 = vunpack.c.h.b16 %v1870
    %v2643 = vpack.c.b16 %v2139, %v2131
    %v2644 = vpack.c.b16 %v2140, %v2132
    %v2645 = vpack.c.b16 %v2141, %v2133
    %v2646 = vpack.c.b16 %v2142, %v2134
    %v2647 = vpack.c.b16 %v2143, %v2135
    %v2648 = vpack.c.b16 %v2144, %v2136
    %v2649 = vpack.c.b16 %v2145, %v2137
    %v2650 = vpack.c.b16 %v2146, %v2138
    %v2651 = vpack.c.b16 %v2155, %v2147
    %v2652 = vpack.c.b16 %v2156, %v2148
    %v2653 = vpack.c.b16 %v2157, %v2149
    %v2654 = vpack.c.b16 %v2158, %v2150
    %v2655 = vpack.c.b16 %v2159, %v2151
    %v2656 = vpack.c.b16 %v2160, %v2152
    %v2657 = vpack.c.b16 %v2161, %v2153
    %v2658 = vpack.c.b16 %v2162, %v2154
    %v2659 = vpack.c.b16 %v2171, %v2163
    %v2660 = vpack.c.b16 %v2172, %v2164
    %v2661 = vpack.c.b16 %v2173, %v2165
    %v2662 = vpack.c.b16 %v2174, %v2166
    %v2663 = vpack.c.b16 %v2175, %v2167
    %v2664 = vpack.c.b16 %v2176, %v2168
    %v2665 = vpack.c.b16 %v2177, %v2169
    %v2666 = vpack.c.b16 %v2178, %v2170
    %v2667 = vpack.c.b16 %v2187, %v2179
    %v2668 = vpack.c.b16 %v2188, %v2180
    %v2669 = vpack.c.b16 %v2189, %v2181
    %v2670 = vpack.c.b16 %v2190, %v2182
    %v2671 = vpack.c.b16 %v2191, %v2183
    %v2672 = vpack.c.b16 %v2192, %v2184
    %v2673 = vpack.c.b16 %v2193, %v2185
    %v2674 = vpack.c.b16 %v2194, %v2186
    %v2675 = vpack.c.b16 %v2203, %v2195
    %v2676 = vpack.c.b16 %v2204, %v2196
    %v2677 = vpack.c.b16 %v2205, %v2197
    %v2678 = vpack.c.b16 %v2206, %v2198
    %v2679 = vpack.c.b16 %v2207, %v2199
    %v2680 = vpack.c.b16 %v2208, %v2200
    %v2681 = vpack.c.b16 %v2209, %v2201
    %v2682 = vpack.c.b16 %v2210, %v2202
    %v2683 = vpack.c.b16 %v2219, %v2211
    %v2684 = vpack.c.b16 %v2220, %v2212
    %v2685 = vpack.c.b16 %v2221, %v2213
    %v2686 = vpack.c.b16 %v2222, %v2214
    %v2687 = vpack.c.b16 %v2223, %v2215
    %v2688 = vpack.c.b16 %v2224, %v2216
    %v2689 = vpack.c.b16 %v2225, %v2217
    %v2690 = vpack.c.b16 %v2226, %v2218
    %v2691 = vpack.c.b16 %v2235, %v2227
    %v2692 = vpack.c.b16 %v2236, %v2228
    %v2693 = vpack.c.b16 %v2237, %v2229
    %v2694 = vpack.c.b16 %v2238, %v2230
    %v2695 = vpack.c.b16 %v2239, %v2231
    %v2696 = vpack.c.b16 %v2240, %v2232
    %v2697 = vpack.c.b16 %v2241, %v2233
    %v2698 = vpack.c.b16 %v2242, %v2234
    %v2699 = vpack.c.b16 %v2251, %v2243
    %v2700 = vpack.c.b16 %v2252, %v2244
    %v2701 = vpack.c.b16 %v2253, %v2245
    %v2702 = vpack.c.b16 %v2254, %v2246
    %v2703 = vpack.c.b16 %v2255, %v2247
    %v2704 = vpack.c.b16 %v2256, %v2248
    %v2705 = vpack.c.b16 %v2257, %v2249
    %v2706 = vpack.c.b16 %v2258, %v2250
    %v2707 = vpack.c.b16 %v2267, %v2259
    %v2708 = vpack.c.b16 %v2268, %v2260
    %v2709 = vpack.c.b16 %v2269, %v2261
    %v2710 = vpack.c.b16 %v2270, %v2262
    %v2711 = vpack.c.b16 %v2271, %v2263
    %v2712 = vpack.c.b16 %v2272, %v2264
    %v2713 = vpack.c.b16 %v2273, %v2265
    %v2714 = vpack.c.b16 %v2274, %v2266
    %v2715 = vpack.c.b16 %v2283, %v2275
    %v2716 = vpack.c.b16 %v2284, %v2276
    %v2717 = vpack.c.b16 %v2285, %v2277
    %v2718 = vpack.c.b16 %v2286, %v2278
    %v2719 = vpack.c.b16 %v2287, %v2279
    %v2720 = vpack.c.b16 %v2288, %v2280
    %v2721 = vpack.c.b16 %v2289, %v2281
    %v2722 = vpack.c.b16 %v2290, %v2282
    %v2723 = vpack.c.b16 %v2299, %v2291
    %v2724 = vpack.c.b16 %v2300, %v2292
    %v2725 = vpack.c.b16 %v2301, %v2293
    %v2726 = vpack.c.b16 %v2302, %v2294
    %v2727 = vpack.c.b16 %v2303, %v2295
    %v2728 = vpack.c.b16 %v2304, %v2296
    %v2729 = vpack.c.b16 %v2305, %v2297
    %v2730 = vpack.c.b16 %v2306, %v2298
    %v2731 = vpack.c.b16 %v2315, %v2307
    %v2732 = vpack.c.b16 %v2316, %v2308
    %v2733 = vpack.c.b16 %v2317, %v2309
    %v2734 = vpack.c.b16 %v2318, %v2310
    %v2735 = vpack.c.b16 %v2319, %v2311
    %v2736 = vpack.c.b16 %v2320, %v2312
    %v2737 = vpack.c.b16 %v2321, %v2313
    %v2738 = vpack.c.b16 %v2322, %v2314
    %v2739 = vpack.c.b16 %v2331, %v2323
    %v2740 = vpack.c.b16 %v2332, %v2324
    %v2741 = vpack.c.b16 %v2333, %v2325
    %v2742 = vpack.c.b16 %v2334, %v2326
    %v2743 = vpack.c.b16 %v2335, %v2327
    %v2744 = vpack.c.b16 %v2336, %v2328
    %v2745 = vpack.c.b16 %v2337, %v2329
    %v2746 = vpack.c.b16 %v2338, %v2330
    %v2747 = vpack.c.b16 %v2347, %v2339
    %v2748 = vpack.c.b16 %v2348, %v2340
    %v2749 = vpack.c.b16 %v2349, %v2341
    %v2750 = vpack.c.b16 %v2350, %v2342
    %v2751 = vpack.c.b16 %v2351, %v2343
    %v2752 = vpack.c.b16 %v2352, %v2344
    %v2753 = vpack.c.b16 %v2353, %v2345
    %v2754 = vpack.c.b16 %v2354, %v2346
    %v2755 = vpack.c.b16 %v2363, %v2355
    %v2756 = vpack.c.b16 %v2364, %v2356
    %v2757 = vpack.c.b16 %v2365, %v2357
    %v2758 = vpack.c.b16 %v2366, %v2358
    %v2759 = vpack.c.b16 %v2367, %v2359
    %v2760 = vpack.c.b16 %v2368, %v2360
    %v2761 = vpack.c.b16 %v2369, %v2361
    %v2762 = vpack.c.b16 %v2370, %v2362
    %v2763 = vpack.c.b16 %v2379, %v2371
    %v2764 = vpack.c.b16 %v2380, %v2372
    %v2765 = vpack.c.b16 %v2381, %v2373
    %v2766 = vpack.c.b16 %v2382, %v2374
    %v2767 = vpack.c.b16 %v2383, %v2375
    %v2768 = vpack.c.b16 %v2384, %v2376
    %v2769 = vpack.c.b16 %v2385, %v2377
    %v2770 = vpack.c.b16 %v2386, %v2378
    %v2771 = vpack.c.b16 %v2395, %v2387
    %v2772 = vpack.c.b16 %v2396, %v2388
    %v2773 = vpack.c.b16 %v2397, %v2389
    %v2774 = vpack.c.b16 %v2398, %v2390
    %v2775 = vpack.c.b16 %v2399, %v2391
    %v2776 = vpack.c.b16 %v2400, %v2392
    %v2777 = vpack.c.b16 %v2401, %v2393
    %v2778 = vpack.c.b16 %v2402, %v2394
    %v2779 = vpack.c.b16 %v2411, %v2403
    %v2780 = vpack.c.b16 %v2412, %v2404
    %v2781 = vpack.c.b16 %v2413, %v2405
    %v2782 = vpack.c.b16 %v2414, %v2406
    %v2783 = vpack.c.b16 %v2415, %v2407
    %v2784 = vpack.c.b16 %v2416, %v2408
    %v2785 = vpack.c.b16 %v2417, %v2409
    %v2786 = vpack.c.b16 %v2418, %v2410
    %v2787 = vpack.c.b16 %v2427, %v2419
    %v2788 = vpack.c.b16 %v2428, %v2420
    %v2789 = vpack.c.b16 %v2429, %v2421
    %v2790 = vpack.c.b16 %v2430, %v2422
    %v2791 = vpack.c.b16 %v2431, %v2423
    %v2792 = vpack.c.b16 %v2432, %v2424
    %v2793 = vpack.c.b16 %v2433, %v2425
    %v2794 = vpack.c.b16 %v2434, %v2426
    %v2795 = vpack.c.b16 %v2443, %v2435
    %v2796 = vpack.c.b16 %v2444, %v2436
    %v2797 = vpack.c.b16 %v2445, %v2437
    %v2798 = vpack.c.b16 %v2446, %v2438
    %v2799 = vpack.c.b16 %v2447, %v2439
    %v2800 = vpack.c.b16 %v2448, %v2440
    %v2801 = vpack.c.b16 %v2449, %v2441
    %v2802 = vpack.c.b16 %v2450, %v2442
    %v2803 = vpack.c.b16 %v2459, %v2451
    %v2804 = vpack.c.b16 %v2460, %v2452
    %v2805 = vpack.c.b16 %v2461, %v2453
    %v2806 = vpack.c.b16 %v2462, %v2454
    %v2807 = vpack.c.b16 %v2463, %v2455
    %v2808 = vpack.c.b16 %v2464, %v2456
    %v2809 = vpack.c.b16 %v2465, %v2457
    %v2810 = vpack.c.b16 %v2466, %v2458
    %v2811 = vpack.c.b16 %v2475, %v2467
    %v2812 = vpack.c.b16 %v2476, %v2468
    %v2813 = vpack.c.b16 %v2477, %v2469
    %v2814 = vpack.c.b16 %v2478, %v2470
    %v2815 = vpack.c.b16 %v2479, %v2471
    %v2816 = vpack.c.b16 %v2480, %v2472
    %v2817 = vpack.c.b16 %v2481, %v2473
    %v2818 = vpack.c.b16 %v2482, %v2474
    %v2819 = vpack.c.b16 %v2491, %v2483
    %v2820 = vpack.c.b16 %v2492, %v2484
    %v2821 = vpack.c.b16 %v2493, %v2485
    %v2822 = vpack.c.b16 %v2494, %v2486
    %v2823 = vpack.c.b16 %v2495, %v2487
    %v2824 = vpack.c.b16 %v2496, %v2488
    %v2825 = vpack.c.b16 %v2497, %v2489
    %v2826 = vpack.c.b16 %v2498, %v2490
    %v2827 = vpack.c.b16 %v2507, %v2499
    %v2828 = vpack.c.b16 %v2508, %v2500
    %v2829 = vpack.c.b16 %v2509, %v2501
    %v2830 = vpack.c.b16 %v2510, %v2502
    %v2831 = vpack.c.b16 %v2511, %v2503
    %v2832 = vpack.c.b16 %v2512, %v2504
    %v2833 = vpack.c.b16 %v2513, %v2505
    %v2834 = vpack.c.b16 %v2514, %v2506
    %v2835 = vpack.c.b16 %v2523, %v2515
    %v2836 = vpack.c.b16 %v2524, %v2516
    %v2837 = vpack.c.b16 %v2525, %v2517
    %v2838 = vpack.c.b16 %v2526, %v2518
    %v2839 = vpack.c.b16 %v2527, %v2519
    %v2840 = vpack.c.b16 %v2528, %v2520
    %v2841 = vpack.c.b16 %v2529, %v2521
    %v2842 = vpack.c.b16 %v2530, %v2522
    %v2843 = vpack.c.b16 %v2539, %v2531
    %v2844 = vpack.c.b16 %v2540, %v2532
    %v2845 = vpack.c.b16 %v2541, %v2533
    %v2846 = vpack.c.b16 %v2542, %v2534
    %v2847 = vpack.c.b16 %v2543, %v2535
    %v2848 = vpack.c.b16 %v2544, %v2536
    %v2849 = vpack.c.b16 %v2545, %v2537
    %v2850 = vpack.c.b16 %v2546, %v2538
    %v2851 = vpack.c.b16 %v2555, %v2547
    %v2852 = vpack.c.b16 %v2556, %v2548
    %v2853 = vpack.c.b16 %v2557, %v2549
    %v2854 = vpack.c.b16 %v2558, %v2550
    %v2855 = vpack.c.b16 %v2559, %v2551
    %v2856 = vpack.c.b16 %v2560, %v2552
    %v2857 = vpack.c.b16 %v2561, %v2553
    %v2858 = vpack.c.b16 %v2562, %v2554
    %v2859 = vpack.c.b16 %v2571, %v2563
    %v2860 = vpack.c.b16 %v2572, %v2564
    %v2861 = vpack.c.b16 %v2573, %v2565
    %v2862 = vpack.c.b16 %v2574, %v2566
    %v2863 = vpack.c.b16 %v2575, %v2567
    %v2864 = vpack.c.b16 %v2576, %v2568
    %v2865 = vpack.c.b16 %v2577, %v2569
    %v2866 = vpack.c.b16 %v2578, %v2570
    %v2867 = vpack.c.b16 %v2587, %v2579
    %v2868 = vpack.c.b16 %v2588, %v2580
    %v2869 = vpack.c.b16 %v2589, %v2581
    %v2870 = vpack.c.b16 %v2590, %v2582
    %v2871 = vpack.c.b16 %v2591, %v2583
    %v2872 = vpack.c.b16 %v2592, %v2584
    %v2873 = vpack.c.b16 %v2593, %v2585
    %v2874 = vpack.c.b16 %v2594, %v2586
    %v2875 = vpack.c.b16 %v2603, %v2595
    %v2876 = vpack.c.b16 %v2604, %v2596
    %v2877 = vpack.c.b16 %v2605, %v2597
    %v2878 = vpack.c.b16 %v2606, %v2598
    %v2879 = vpack.c.b16 %v2607, %v2599
    %v2880 = vpack.c.b16 %v2608, %v2600
    %v2881 = vpack.c.b16 %v2609, %v2601
    %v2882 = vpack.c.b16 %v2610, %v2602
    %v2883 = vpack.c.b16 %v2619, %v2611
    %v2884 = vpack.c.b16 %v2620, %v2612
    %v2885 = vpack.c.b16 %v2621, %v2613
    %v2886 = vpack.c.b16 %v2622, %v2614
    %v2887 = vpack.c.b16 %v2623, %v2615
    %v2888 = vpack.c.b16 %v2624, %v2616
    %v2889 = vpack.c.b16 %v2625, %v2617
    %v2890 = vpack.c.b16 %v2626, %v2618
    %v2891 = vpack.c.b16 %v2635, %v2627
    %v2892 = vpack.c.b16 %v2636, %v2628
    %v2893 = vpack.c.b16 %v2637, %v2629
    %v2894 = vpack.c.b16 %v2638, %v2630
    %v2895 = vpack.c.b16 %v2639, %v2631
    %v2896 = vpack.c.b16 %v2640, %v2632
    %v2897 = vpack.c.b16 %v2641, %v2633
    %v2898 = vpack.c.b16 %v2642, %v2634
    %3155 = vmatpush.bf16.msra.mxu0 %v2699
    %3156 = vmatpush.bf16.msra.mxu0 %v2691
    %3157 = vmatpush.bf16.msra.mxu0 %v2683
    %3158 = vmatpush.bf16.msra.mxu0 %v2675
    %3159 = vmatpush.bf16.msra.mxu0 %v2667
    %3160 = vmatpush.bf16.msra.mxu0 %v2659
    %3161 = vmatpush.bf16.msra.mxu0 %v2651
    %3162 = vmatpush.bf16.msra.mxu0 %v2643
    %3163 = vmatmul.bf16.gmra.mxu0 %v1871
    %v3164 = vpop.f32.mrf.mxu0
    %v3165 = vadd.f32 0.0, %v3164
    %v3166 = vpop.f32.mrf.mxu0
    %3167 = vdwg.mxu0
    %3168 = vmatpush.bf16.msra.mxu0 %v2763
    %3169 = vmatpush.bf16.msra.mxu0 %v2755
    %3170 = vmatpush.bf16.msra.mxu0 %v2747
    %3171 = vmatpush.bf16.msra.mxu0 %v2739
    %3172 = vmatpush.bf16.msra.mxu0 %v2731
    %3173 = vmatpush.bf16.msra.mxu0 %v2723
    %3174 = vmatpush.bf16.msra.mxu0 %v2715
    %3175 = vmatpush.bf16.msra.mxu0 %v2707
    %3176 = vmatmul.bf16.gmra.mxu0 %v1872
    %v3177 = vpop.f32.mrf.mxu0
    %v3178 = vadd.f32 %v3165, %v3177
    %v3179 = vpop.f32.mrf.mxu0
    %3180 = vdwg.mxu0
    %3181 = vmatpush.bf16.msra.mxu0 %v2827
    %3182 = vmatpush.bf16.msra.mxu0 %v2819
    %3183 = vmatpush.bf16.msra.mxu0 %v2811
    %3184 = vmatpush.bf16.msra.mxu0 %v2803
    %3185 = vmatpush.bf16.msra.mxu0 %v2795
    %3186 = vmatpush.bf16.msra.mxu0 %v2787
    %3187 = vmatpush.bf16.msra.mxu0 %v2779
    %3188 = vmatpush.bf16.msra.mxu0 %v2771
    %3189 = vmatmul.bf16.gmra.mxu0 %v1873
    %v3190 = vpop.f32.mrf.mxu0
    %v3191 = vadd.f32 %v3178, %v3190
    %v3192 = vpop.f32.mrf.mxu0
    %3193 = vdwg.mxu0
    %3194 = vmatpush.bf16.msra.mxu0 %v2891
    %3195 = vmatpush.bf16.msra.mxu0 %v2883
    %3196 = vmatpush.bf16.msra.mxu0 %v2875
    %3197 = vmatpush.bf16.msra.mxu0 %v2867
    %3198 = vmatpush.bf16.msra.mxu0 %v2859
    %3199 = vmatpush.bf16.msra.mxu0 %v2851
    %3200 = vmatpush.bf16.msra.mxu0 %v2843
    %3201 = vmatpush.bf16.msra.mxu0 %v2835
    %3202 = vmatmul.bf16.gmra.mxu0 %v1874
    %v3203 = vpop.f32.mrf.mxu0
    %v3204 = vadd.f32 %v3191, %v3203
    %v3205 = vpop.f32.mrf.mxu0
    %3206 = vdwg.mxu0
    %3207 = vmatpush.bf16.msra.mxu0 %v2700
    %3208 = vmatpush.bf16.msra.mxu0 %v2692
    %3209 = vmatpush.bf16.msra.mxu0 %v2684
    %3210 = vmatpush.bf16.msra.mxu0 %v2676
    %3211 = vmatpush.bf16.msra.mxu0 %v2668
    %3212 = vmatpush.bf16.msra.mxu0 %v2660
    %3213 = vmatpush.bf16.msra.mxu0 %v2652
    %3214 = vmatpush.bf16.msra.mxu0 %v2644
    %3215 = vmatmul.bf16.gmra.mxu0 %v1871
    %v3216 = vpop.f32.mrf.mxu0
    %v3217 = vadd.f32 0.0, %v3216
    %v3218 = vpop.f32.mrf.mxu0
    %3219 = vdwg.mxu0
    %3220 = vmatpush.bf16.msra.mxu0 %v2764
    %3221 = vmatpush.bf16.msra.mxu0 %v2756
    %3222 = vmatpush.bf16.msra.mxu0 %v2748
    %3223 = vmatpush.bf16.msra.mxu0 %v2740
    %3224 = vmatpush.bf16.msra.mxu0 %v2732
    %3225 = vmatpush.bf16.msra.mxu0 %v2724
    %3226 = vmatpush.bf16.msra.mxu0 %v2716
    %3227 = vmatpush.bf16.msra.mxu0 %v2708
    %3228 = vmatmul.bf16.gmra.mxu0 %v1872
    %v3229 = vpop.f32.mrf.mxu0
    %v3230 = vadd.f32 %v3217, %v3229
    %v3231 = vpop.f32.mrf.mxu0
    %3232 = vdwg.mxu0
    %3233 = vmatpush.bf16.msra.mxu0 %v2828
    %3234 = vmatpush.bf16.msra.mxu0 %v2820
    %3235 = vmatpush.bf16.msra.mxu0 %v2812
    %3236 = vmatpush.bf16.msra.mxu0 %v2804
    %3237 = vmatpush.bf16.msra.mxu0 %v2796
    %3238 = vmatpush.bf16.msra.mxu0 %v2788
    %3239 = vmatpush.bf16.msra.mxu0 %v2780
    %3240 = vmatpush.bf16.msra.mxu0 %v2772
    %3241 = vmatmul.bf16.gmra.mxu0 %v1873
    %v3242 = vpop.f32.mrf.mxu0
    %v3243 = vadd.f32 %v3230, %v3242
    %v3244 = vpop.f32.mrf.mxu0
    %3245 = vdwg.mxu0
    %3246 = vmatpush.bf16.msra.mxu0 %v2892
    %3247 = vmatpush.bf16.msra.mxu0 %v2884
    %3248 = vmatpush.bf16.msra.mxu0 %v2876
    %3249 = vmatpush.bf16.msra.mxu0 %v2868
    %3250 = vmatpush.bf16.msra.mxu0 %v2860
    %3251 = vmatpush.bf16.msra.mxu0 %v2852
    %3252 = vmatpush.bf16.msra.mxu0 %v2844
    %3253 = vmatpush.bf16.msra.mxu0 %v2836
    %3254 = vmatmul.bf16.gmra.mxu0 %v1874
    %v3255 = vpop.f32.mrf.mxu0
    %v3256 = vadd.f32 %v3243, %v3255
    %v3257 = vpop.f32.mrf.mxu0
    %3258 = vdwg.mxu0
    %3259 = vmatpush.bf16.msra.mxu0 %v2701
    %3260 = vmatpush.bf16.msra.mxu0 %v2693
    %3261 = vmatpush.bf16.msra.mxu0 %v2685
    %3262 = vmatpush.bf16.msra.mxu0 %v2677
    %3263 = vmatpush.bf16.msra.mxu0 %v2669
    %3264 = vmatpush.bf16.msra.mxu0 %v2661
    %3265 = vmatpush.bf16.msra.mxu0 %v2653
    %3266 = vmatpush.bf16.msra.mxu0 %v2645
    %3267 = vmatmul.bf16.gmra.mxu0 %v1871
    %v3268 = vpop.f32.mrf.mxu0
    %v3269 = vadd.f32 0.0, %v3268
    %v3270 = vpop.f32.mrf.mxu0
    %3271 = vdwg.mxu0
    %3272 = vmatpush.bf16.msra.mxu0 %v2765
    %3273 = vmatpush.bf16.msra.mxu0 %v2757
    %3274 = vmatpush.bf16.msra.mxu0 %v2749
    %3275 = vmatpush.bf16.msra.mxu0 %v2741
    %3276 = vmatpush.bf16.msra.mxu0 %v2733
    %3277 = vmatpush.bf16.msra.mxu0 %v2725
    %3278 = vmatpush.bf16.msra.mxu0 %v2717
    %3279 = vmatpush.bf16.msra.mxu0 %v2709
    %3280 = vmatmul.bf16.gmra.mxu0 %v1872
    %v3281 = vpop.f32.mrf.mxu0
    %v3282 = vadd.f32 %v3269, %v3281
    %v3283 = vpop.f32.mrf.mxu0
    %3284 = vdwg.mxu0
    %3285 = vmatpush.bf16.msra.mxu0 %v2829
    %3286 = vmatpush.bf16.msra.mxu0 %v2821
    %3287 = vmatpush.bf16.msra.mxu0 %v2813
    %3288 = vmatpush.bf16.msra.mxu0 %v2805
    %3289 = vmatpush.bf16.msra.mxu0 %v2797
    %3290 = vmatpush.bf16.msra.mxu0 %v2789
    %3291 = vmatpush.bf16.msra.mxu0 %v2781
    %3292 = vmatpush.bf16.msra.mxu0 %v2773
    %3293 = vmatmul.bf16.gmra.mxu0 %v1873
    %v3294 = vpop.f32.mrf.mxu0
    %v3295 = vadd.f32 %v3282, %v3294
    %v3296 = vpop.f32.mrf.mxu0
    %3297 = vdwg.mxu0
    %3298 = vmatpush.bf16.msra.mxu0 %v2893
    %3299 = vmatpush.bf16.msra.mxu0 %v2885
    %3300 = vmatpush.bf16.msra.mxu0 %v2877
    %3301 = vmatpush.bf16.msra.mxu0 %v2869
    %3302 = vmatpush.bf16.msra.mxu0 %v2861
    %3303 = vmatpush.bf16.msra.mxu0 %v2853
    %3304 = vmatpush.bf16.msra.mxu0 %v2845
    %3305 = vmatpush.bf16.msra.mxu0 %v2837
    %3306 = vmatmul.bf16.gmra.mxu0 %v1874
    %v3307 = vpop.f32.mrf.mxu0
    %v3308 = vadd.f32 %v3295, %v3307
    %v3309 = vpop.f32.mrf.mxu0
    %3310 = vdwg.mxu0
    %3311 = vmatpush.bf16.msra.mxu0 %v2702
    %3312 = vmatpush.bf16.msra.mxu0 %v2694
    %3313 = vmatpush.bf16.msra.mxu0 %v2686
    %3314 = vmatpush.bf16.msra.mxu0 %v2678
    %3315 = vmatpush.bf16.msra.mxu0 %v2670
    %3316 = vmatpush.bf16.msra.mxu0 %v2662
    %3317 = vmatpush.bf16.msra.mxu0 %v2654
    %3318 = vmatpush.bf16.msra.mxu0 %v2646
    %3319 = vmatmul.bf16.gmra.mxu0 %v1871
    %v3320 = vpop.f32.mrf.mxu0
    %v3321 = vadd.f32 0.0, %v3320
    %v3322 = vpop.f32.mrf.mxu0
    %3323 = vdwg.mxu0
    %3324 = vmatpush.bf16.msra.mxu0 %v2766
    %3325 = vmatpush.bf16.msra.mxu0 %v2758
    %3326 = vmatpush.bf16.msra.mxu0 %v2750
    %3327 = vmatpush.bf16.msra.mxu0 %v2742
    %3328 = vmatpush.bf16.msra.mxu0 %v2734
    %3329 = vmatpush.bf16.msra.mxu0 %v2726
    %3330 = vmatpush.bf16.msra.mxu0 %v2718
    %3331 = vmatpush.bf16.msra.mxu0 %v2710
    %3332 = vmatmul.bf16.gmra.mxu0 %v1872
    %v3333 = vpop.f32.mrf.mxu0
    %v3334 = vadd.f32 %v3321, %v3333
    %v3335 = vpop.f32.mrf.mxu0
    %3336 = vdwg.mxu0
    %3337 = vmatpush.bf16.msra.mxu0 %v2830
    %3338 = vmatpush.bf16.msra.mxu0 %v2822
    %3339 = vmatpush.bf16.msra.mxu0 %v2814
    %3340 = vmatpush.bf16.msra.mxu0 %v2806
    %3341 = vmatpush.bf16.msra.mxu0 %v2798
    %3342 = vmatpush.bf16.msra.mxu0 %v2790
    %3343 = vmatpush.bf16.msra.mxu0 %v2782
    %3344 = vmatpush.bf16.msra.mxu0 %v2774
    %3345 = vmatmul.bf16.gmra.mxu0 %v1873
    %v3346 = vpop.f32.mrf.mxu0
    %v3347 = vadd.f32 %v3334, %v3346
    %v3348 = vpop.f32.mrf.mxu0
    %3349 = vdwg.mxu0
    %3350 = vmatpush.bf16.msra.mxu0 %v2894
    %3351 = vmatpush.bf16.msra.mxu0 %v2886
    %3352 = vmatpush.bf16.msra.mxu0 %v2878
    %3353 = vmatpush.bf16.msra.mxu0 %v2870
    %3354 = vmatpush.bf16.msra.mxu0 %v2862
    %3355 = vmatpush.bf16.msra.mxu0 %v2854
    %3356 = vmatpush.bf16.msra.mxu0 %v2846
    %3357 = vmatpush.bf16.msra.mxu0 %v2838
    %3358 = vmatmul.bf16.gmra.mxu0 %v1874
    %v3359 = vpop.f32.mrf.mxu0
    %v3360 = vadd.f32 %v3347, %v3359
    %v3361 = vpop.f32.mrf.mxu0
    %3362 = vdwg.mxu0
    %3363 = vmatpush.bf16.msra.mxu0 %v2703
    %3364 = vmatpush.bf16.msra.mxu0 %v2695
    %3365 = vmatpush.bf16.msra.mxu0 %v2687
    %3366 = vmatpush.bf16.msra.mxu0 %v2679
    %3367 = vmatpush.bf16.msra.mxu0 %v2671
    %3368 = vmatpush.bf16.msra.mxu0 %v2663
    %3369 = vmatpush.bf16.msra.mxu0 %v2655
    %3370 = vmatpush.bf16.msra.mxu0 %v2647
    %3371 = vmatmul.bf16.gmra.mxu0 %v1871
    %v3372 = vpop.f32.mrf.mxu0
    %v3373 = vadd.f32 0.0, %v3372
    %v3374 = vpop.f32.mrf.mxu0
    %3375 = vdwg.mxu0
    %3376 = vmatpush.bf16.msra.mxu0 %v2767
    %3377 = vmatpush.bf16.msra.mxu0 %v2759
    %3378 = vmatpush.bf16.msra.mxu0 %v2751
    %3379 = vmatpush.bf16.msra.mxu0 %v2743
    %3380 = vmatpush.bf16.msra.mxu0 %v2735
    %3381 = vmatpush.bf16.msra.mxu0 %v2727
    %3382 = vmatpush.bf16.msra.mxu0 %v2719
    %3383 = vmatpush.bf16.msra.mxu0 %v2711
    %3384 = vmatmul.bf16.gmra.mxu0 %v1872
    %v3385 = vpop.f32.mrf.mxu0
    %v3386 = vadd.f32 %v3373, %v3385
    %v3387 = vpop.f32.mrf.mxu0
    %3388 = vdwg.mxu0
    %3389 = vmatpush.bf16.msra.mxu0 %v2831
    %3390 = vmatpush.bf16.msra.mxu0 %v2823
    %3391 = vmatpush.bf16.msra.mxu0 %v2815
    %3392 = vmatpush.bf16.msra.mxu0 %v2807
    %3393 = vmatpush.bf16.msra.mxu0 %v2799
    %3394 = vmatpush.bf16.msra.mxu0 %v2791
    %3395 = vmatpush.bf16.msra.mxu0 %v2783
    %3396 = vmatpush.bf16.msra.mxu0 %v2775
    %3397 = vmatmul.bf16.gmra.mxu0 %v1873
    %v3398 = vpop.f32.mrf.mxu0
    %v3399 = vadd.f32 %v3386, %v3398
    %v3400 = vpop.f32.mrf.mxu0
    %3401 = vdwg.mxu0
    %3402 = vmatpush.bf16.msra.mxu0 %v2895
    %3403 = vmatpush.bf16.msra.mxu0 %v2887
    %3404 = vmatpush.bf16.msra.mxu0 %v2879
    %3405 = vmatpush.bf16.msra.mxu0 %v2871
    %3406 = vmatpush.bf16.msra.mxu0 %v2863
    %3407 = vmatpush.bf16.msra.mxu0 %v2855
    %3408 = vmatpush.bf16.msra.mxu0 %v2847
    %3409 = vmatpush.bf16.msra.mxu0 %v2839
    %3410 = vmatmul.bf16.gmra.mxu0 %v1874
    %v3411 = vpop.f32.mrf.mxu0
    %v3412 = vadd.f32 %v3399, %v3411
    %v3413 = vpop.f32.mrf.mxu0
    %3414 = vdwg.mxu0
    %3415 = vmatpush.bf16.msra.mxu0 %v2704
    %3416 = vmatpush.bf16.msra.mxu0 %v2696
    %3417 = vmatpush.bf16.msra.mxu0 %v2688
    %3418 = vmatpush.bf16.msra.mxu0 %v2680
    %3419 = vmatpush.bf16.msra.mxu0 %v2672
    %3420 = vmatpush.bf16.msra.mxu0 %v2664
    %3421 = vmatpush.bf16.msra.mxu0 %v2656
    %3422 = vmatpush.bf16.msra.mxu0 %v2648
    %3423 = vmatmul.bf16.gmra.mxu0 %v1871
    %v3424 = vpop.f32.mrf.mxu0
    %v3425 = vadd.f32 0.0, %v3424
    %v3426 = vpop.f32.mrf.mxu0
    %3427 = vdwg.mxu0
    %3428 = vmatpush.bf16.msra.mxu0 %v2768
    %3429 = vmatpush.bf16.msra.mxu0 %v2760
    %3430 = vmatpush.bf16.msra.mxu0 %v2752
    %3431 = vmatpush.bf16.msra.mxu0 %v2744
    %3432 = vmatpush.bf16.msra.mxu0 %v2736
    %3433 = vmatpush.bf16.msra.mxu0 %v2728
    %3434 = vmatpush.bf16.msra.mxu0 %v2720
    %3435 = vmatpush.bf16.msra.mxu0 %v2712
    %3436 = vmatmul.bf16.gmra.mxu0 %v1872
    %v3437 = vpop.f32.mrf.mxu0
    %v3438 = vadd.f32 %v3425, %v3437
    %v3439 = vpop.f32.mrf.mxu0
    %3440 = vdwg.mxu0
    %3441 = vmatpush.bf16.msra.mxu0 %v2832
    %3442 = vmatpush.bf16.msra.mxu0 %v2824
    %3443 = vmatpush.bf16.msra.mxu0 %v2816
    %3444 = vmatpush.bf16.msra.mxu0 %v2808
    %3445 = vmatpush.bf16.msra.mxu0 %v2800
    %3446 = vmatpush.bf16.msra.mxu0 %v2792
    %3447 = vmatpush.bf16.msra.mxu0 %v2784
    %3448 = vmatpush.bf16.msra.mxu0 %v2776
    %3449 = vmatmul.bf16.gmra.mxu0 %v1873
    %v3450 = vpop.f32.mrf.mxu0
    %v3451 = vadd.f32 %v3438, %v3450
    %v3452 = vpop.f32.mrf.mxu0
    %3453 = vdwg.mxu0
    %3454 = vmatpush.bf16.msra.mxu0 %v2896
    %3455 = vmatpush.bf16.msra.mxu0 %v2888
    %3456 = vmatpush.bf16.msra.mxu0 %v2880
    %3457 = vmatpush.bf16.msra.mxu0 %v2872
    %3458 = vmatpush.bf16.msra.mxu0 %v2864
    %3459 = vmatpush.bf16.msra.mxu0 %v2856
    %3460 = vmatpush.bf16.msra.mxu0 %v2848
    %3461 = vmatpush.bf16.msra.mxu0 %v2840
    %3462 = vmatmul.bf16.gmra.mxu0 %v1874
    %v3463 = vpop.f32.mrf.mxu0
    %v3464 = vadd.f32 %v3451, %v3463
    %v3465 = vpop.f32.mrf.mxu0
    %3466 = vdwg.mxu0
    %3467 = vmatpush.bf16.msra.mxu0 %v2705
    %3468 = vmatpush.bf16.msra.mxu0 %v2697
    %3469 = vmatpush.bf16.msra.mxu0 %v2689
    %3470 = vmatpush.bf16.msra.mxu0 %v2681
    %3471 = vmatpush.bf16.msra.mxu0 %v2673
    %3472 = vmatpush.bf16.msra.mxu0 %v2665
    %3473 = vmatpush.bf16.msra.mxu0 %v2657
    %3474 = vmatpush.bf16.msra.mxu0 %v2649
    %3475 = vmatmul.bf16.gmra.mxu0 %v1871
    %v3476 = vpop.f32.mrf.mxu0
    %v3477 = vadd.f32 0.0, %v3476
    %v3478 = vpop.f32.mrf.mxu0
    %3479 = vdwg.mxu0
    %3480 = vmatpush.bf16.msra.mxu0 %v2769
    %3481 = vmatpush.bf16.msra.mxu0 %v2761
    %3482 = vmatpush.bf16.msra.mxu0 %v2753
    %3483 = vmatpush.bf16.msra.mxu0 %v2745
    %3484 = vmatpush.bf16.msra.mxu0 %v2737
    %3485 = vmatpush.bf16.msra.mxu0 %v2729
    %3486 = vmatpush.bf16.msra.mxu0 %v2721
    %3487 = vmatpush.bf16.msra.mxu0 %v2713
    %3488 = vmatmul.bf16.gmra.mxu0 %v1872
    %v3489 = vpop.f32.mrf.mxu0
    %v3490 = vadd.f32 %v3477, %v3489
    %v3491 = vpop.f32.mrf.mxu0
    %3492 = vdwg.mxu0
    %3493 = vmatpush.bf16.msra.mxu0 %v2833
    %3494 = vmatpush.bf16.msra.mxu0 %v2825
    %3495 = vmatpush.bf16.msra.mxu0 %v2817
    %3496 = vmatpush.bf16.msra.mxu0 %v2809
    %3497 = vmatpush.bf16.msra.mxu0 %v2801
    %3498 = vmatpush.bf16.msra.mxu0 %v2793
    %3499 = vmatpush.bf16.msra.mxu0 %v2785
    %3500 = vmatpush.bf16.msra.mxu0 %v2777
    %3501 = vmatmul.bf16.gmra.mxu0 %v1873
    %v3502 = vpop.f32.mrf.mxu0
    %v3503 = vadd.f32 %v3490, %v3502
    %v3504 = vpop.f32.mrf.mxu0
    %3505 = vdwg.mxu0
    %3506 = vmatpush.bf16.msra.mxu0 %v2897
    %3507 = vmatpush.bf16.msra.mxu0 %v2889
    %3508 = vmatpush.bf16.msra.mxu0 %v2881
    %3509 = vmatpush.bf16.msra.mxu0 %v2873
    %3510 = vmatpush.bf16.msra.mxu0 %v2865
    %3511 = vmatpush.bf16.msra.mxu0 %v2857
    %3512 = vmatpush.bf16.msra.mxu0 %v2849
    %3513 = vmatpush.bf16.msra.mxu0 %v2841
    %3514 = vmatmul.bf16.gmra.mxu0 %v1874
    %v3515 = vpop.f32.mrf.mxu0
    %v3516 = vadd.f32 %v3503, %v3515
    %v3517 = vpop.f32.mrf.mxu0
    %3518 = vdwg.mxu0
    %3519 = vmatpush.bf16.msra.mxu0 %v2706
    %3520 = vmatpush.bf16.msra.mxu0 %v2698
    %3521 = vmatpush.bf16.msra.mxu0 %v2690
    %3522 = vmatpush.bf16.msra.mxu0 %v2682
    %3523 = vmatpush.bf16.msra.mxu0 %v2674
    %3524 = vmatpush.bf16.msra.mxu0 %v2666
    %3525 = vmatpush.bf16.msra.mxu0 %v2658
    %3526 = vmatpush.bf16.msra.mxu0 %v2650
    %3527 = vmatmul.bf16.gmra.mxu0 %v1871
    %v3528 = vpop.f32.mrf.mxu0
    %v3529 = vadd.f32 0.0, %v3528
    %v3530 = vpop.f32.mrf.mxu0
    %3531 = vdwg.mxu0
    %3532 = vmatpush.bf16.msra.mxu0 %v2770
    %3533 = vmatpush.bf16.msra.mxu0 %v2762
    %3534 = vmatpush.bf16.msra.mxu0 %v2754
    %3535 = vmatpush.bf16.msra.mxu0 %v2746
    %3536 = vmatpush.bf16.msra.mxu0 %v2738
    %3537 = vmatpush.bf16.msra.mxu0 %v2730
    %3538 = vmatpush.bf16.msra.mxu0 %v2722
    %3539 = vmatpush.bf16.msra.mxu0 %v2714
    %3540 = vmatmul.bf16.gmra.mxu0 %v1872
    %v3541 = vpop.f32.mrf.mxu0
    %v3542 = vadd.f32 %v3529, %v3541
    %v3543 = vpop.f32.mrf.mxu0
    %3544 = vdwg.mxu0
    %3545 = vmatpush.bf16.msra.mxu0 %v2834
    %3546 = vmatpush.bf16.msra.mxu0 %v2826
    %3547 = vmatpush.bf16.msra.mxu0 %v2818
    %3548 = vmatpush.bf16.msra.mxu0 %v2810
    %3549 = vmatpush.bf16.msra.mxu0 %v2802
    %3550 = vmatpush.bf16.msra.mxu0 %v2794
    %3551 = vmatpush.bf16.msra.mxu0 %v2786
    %3552 = vmatpush.bf16.msra.mxu0 %v2778
    %3553 = vmatmul.bf16.gmra.mxu0 %v1873
    %v3554 = vpop.f32.mrf.mxu0
    %v3555 = vadd.f32 %v3542, %v3554
    %v3556 = vpop.f32.mrf.mxu0
    %3557 = vdwg.mxu0
    %3558 = vmatpush.bf16.msra.mxu0 %v2898
    %3559 = vmatpush.bf16.msra.mxu0 %v2890
    %3560 = vmatpush.bf16.msra.mxu0 %v2882
    %3561 = vmatpush.bf16.msra.mxu0 %v2874
    %3562 = vmatpush.bf16.msra.mxu0 %v2866
    %3563 = vmatpush.bf16.msra.mxu0 %v2858
    %3564 = vmatpush.bf16.msra.mxu0 %v2850
    %3565 = vmatpush.bf16.msra.mxu0 %v2842
    %3566 = vmatmul.bf16.gmra.mxu0 %v1874
    %v3567 = vpop.f32.mrf.mxu0
    %v3568 = vadd.f32 %v3555, %v3567
    %v3569 = vpop.f32.mrf.mxu0
    %3570 = vdwg.mxu0
    %v3571 = vld [vmem:[#allocation16] sm:$0xff]
    %v3572 = vld [vmem:[#allocation17] sm:$0xff]
    %v3573 = vrot.slane %v3204, 4
    %v3574 = vadd.f32 %v3204, %v3573
    %v3575 = vrot.slane %v3574, 2
    %v3576 = vadd.f32 %v3574, %v3575
    %v3577 = vrot.slane %v3576, 1
    %v3578 = vadd.f32 %v3576, %v3577
    %v3579 = vrot.slane %v3256, 4
    %v3580 = vadd.f32 %v3256, %v3579
    %v3581 = vrot.slane %v3580, 2
    %v3582 = vadd.f32 %v3580, %v3581
    %v3583 = vrot.slane %v3582, 1
    %v3584 = vadd.f32 %v3582, %v3583
    %v3585 = vrot.slane %v3308, 4
    %v3586 = vadd.f32 %v3308, %v3585
    %v3587 = vrot.slane %v3586, 2
    %v3588 = vadd.f32 %v3586, %v3587
    %v3589 = vrot.slane %v3588, 1
    %v3590 = vadd.f32 %v3588, %v3589
    %v3591 = vrot.slane %v3360, 4
    %v3592 = vadd.f32 %v3360, %v3591
    %v3593 = vrot.slane %v3592, 2
    %v3594 = vadd.f32 %v3592, %v3593
    %v3595 = vrot.slane %v3594, 1
    %v3596 = vadd.f32 %v3594, %v3595
    %v3597 = vrot.slane %v3412, 4
    %v3598 = vadd.f32 %v3412, %v3597
    %v3599 = vrot.slane %v3598, 2
    %v3600 = vadd.f32 %v3598, %v3599
    %v3601 = vrot.slane %v3600, 1
    %v3602 = vadd.f32 %v3600, %v3601
    %v3603 = vrot.slane %v3464, 4
    %v3604 = vadd.f32 %v3464, %v3603
    %v3605 = vrot.slane %v3604, 2
    %v3606 = vadd.f32 %v3604, %v3605
    %v3607 = vrot.slane %v3606, 1
    %v3608 = vadd.f32 %v3606, %v3607
    %v3609 = vrot.slane %v3516, 4
    %v3610 = vadd.f32 %v3516, %v3609
    %v3611 = vrot.slane %v3610, 2
    %v3612 = vadd.f32 %v3610, %v3611
    %v3613 = vrot.slane %v3612, 1
    %v3614 = vadd.f32 %v3612, %v3613
    %v3615 = vrot.slane %v3568, 4
    %v3616 = vadd.f32 %v3568, %v3615
    %v3617 = vrot.slane %v3616, 2
    %v3618 = vadd.f32 %v3616, %v3617
    %v3619 = vrot.slane %v3618, 1
    %v3620 = vadd.f32 %v3618, %v3619
    %v3621 = vmul.f32 %v3578, %v356
    %v3622 = vmul.f32 %v3584, %v356
    %v3623 = vmul.f32 %v3590, %v356
    %v3624 = vmul.f32 %v3596, %v356
    %v3625 = vmul.f32 %v3602, %v356
    %v3626 = vmul.f32 %v3608, %v356
    %v3627 = vmul.f32 %v3614, %v356
    %v3628 = vmul.f32 %v3620, %v356
    %v3629 = vmul.f32 %v3204, %v3204
    %v3630 = vmul.f32 %v3256, %v3256
    %v3631 = vmul.f32 %v3308, %v3308
    %v3632 = vmul.f32 %v3360, %v3360
    %v3633 = vmul.f32 %v3412, %v3412
    %v3634 = vmul.f32 %v3464, %v3464
    %v3635 = vmul.f32 %v3516, %v3516
    %v3636 = vmul.f32 %v3568, %v3568
    %v3637 = vrot.slane %v3629, 4
    %v3638 = vadd.f32 %v3629, %v3637
    %v3639 = vrot.slane %v3638, 2
    %v3640 = vadd.f32 %v3638, %v3639
    %v3641 = vrot.slane %v3640, 1
    %v3642 = vadd.f32 %v3640, %v3641
    %v3643 = vrot.slane %v3630, 4
    %v3644 = vadd.f32 %v3630, %v3643
    %v3645 = vrot.slane %v3644, 2
    %v3646 = vadd.f32 %v3644, %v3645
    %v3647 = vrot.slane %v3646, 1
    %v3648 = vadd.f32 %v3646, %v3647
    %v3649 = vrot.slane %v3631, 4
    %v3650 = vadd.f32 %v3631, %v3649
    %v3651 = vrot.slane %v3650, 2
    %v3652 = vadd.f32 %v3650, %v3651
    %v3653 = vrot.slane %v3652, 1
    %v3654 = vadd.f32 %v3652, %v3653
    %v3655 = vrot.slane %v3632, 4
    %v3656 = vadd.f32 %v3632, %v3655
    %v3657 = vrot.slane %v3656, 2
    %v3658 = vadd.f32 %v3656, %v3657
    %v3659 = vrot.slane %v3658, 1
    %v3660 = vadd.f32 %v3658, %v3659
    %v3661 = vrot.slane %v3633, 4
    %v3662 = vadd.f32 %v3633, %v3661
    %v3663 = vrot.slane %v3662, 2
    %v3664 = vadd.f32 %v3662, %v3663
    %v3665 = vrot.slane %v3664, 1
    %v3666 = vadd.f32 %v3664, %v3665
    %v3667 = vrot.slane %v3634, 4
    %v3668 = vadd.f32 %v3634, %v3667
    %v3669 = vrot.slane %v3668, 2
    %v3670 = vadd.f32 %v3668, %v3669
    %v3671 = vrot.slane %v3670, 1
    %v3672 = vadd.f32 %v3670, %v3671
    %v3673 = vrot.slane %v3635, 4
    %v3674 = vadd.f32 %v3635, %v3673
    %v3675 = vrot.slane %v3674, 2
    %v3676 = vadd.f32 %v3674, %v3675
    %v3677 = vrot.slane %v3676, 1
    %v3678 = vadd.f32 %v3676, %v3677
    %v3679 = vrot.slane %v3636, 4
    %v3680 = vadd.f32 %v3636, %v3679
    %v3681 = vrot.slane %v3680, 2
    %v3682 = vadd.f32 %v3680, %v3681
    %v3683 = vrot.slane %v3682, 1
    %v3684 = vadd.f32 %v3682, %v3683
    %v3685 = vmul.f32 %v3642, %v356
    %v3686 = vmul.f32 %v3648, %v356
    %v3687 = vmul.f32 %v3654, %v356
    %v3688 = vmul.f32 %v3660, %v356
    %v3689 = vmul.f32 %v3666, %v356
    %v3690 = vmul.f32 %v3672, %v356
    %v3691 = vmul.f32 %v3678, %v356
    %v3692 = vmul.f32 %v3684, %v356
    %v3693 = vmul.f32 %v3621, %v3621
    %v3694 = vmul.f32 %v3622, %v3622
    %v3695 = vmul.f32 %v3623, %v3623
    %v3696 = vmul.f32 %v3624, %v3624
    %v3697 = vmul.f32 %v3625, %v3625
    %v3698 = vmul.f32 %v3626, %v3626
    %v3699 = vmul.f32 %v3627, %v3627
    %v3700 = vmul.f32 %v3628, %v3628
    %v3701 = vsub.f32 %v3685, %v3693
    %v3702 = vsub.f32 %v3686, %v3694
    %v3703 = vsub.f32 %v3687, %v3695
    %v3704 = vsub.f32 %v3688, %v3696
    %v3705 = vsub.f32 %v3689, %v3697
    %v3706 = vsub.f32 %v3690, %v3698
    %v3707 = vsub.f32 %v3691, %v3699
    %v3708 = vsub.f32 %v3692, %v3700
    %v3709 = vsub.f32 %v3204, %v3621
    %v3710 = vsub.f32 %v3256, %v3622
    %v3711 = vsub.f32 %v3308, %v3623
    %v3712 = vsub.f32 %v3360, %v3624
    %v3713 = vsub.f32 %v3412, %v3625
    %v3714 = vsub.f32 %v3464, %v3626
    %v3715 = vsub.f32 %v3516, %v3627
    %v3716 = vsub.f32 %v3568, %v3628
    %v3717 = vadd.f32 %v3701, 1e-05
    %v3718 = vadd.f32 %v3702, 1e-05
    %v3719 = vadd.f32 %v3703, 1e-05
    %v3720 = vadd.f32 %v3704, 1e-05
    %v3721 = vadd.f32 %v3705, 1e-05
    %v3722 = vadd.f32 %v3706, 1e-05
    %v3723 = vadd.f32 %v3707, 1e-05
    %v3724 = vadd.f32 %v3708, 1e-05
    %v3725 = vrsqrt.pop %v3717
    %v3726 = vmul.f32 %v3725, %v3717
    %v3727 = vmul.f32 %v3726, %v3725
    %v3728 = vmul.f32 0.5, %v3727
    %v3729 = vsub.f32 1.5, %v3728
    %v3730 = vmul.f32 %v3725, %v3729
    %vm3731 = vweird.f32 %v3717
    %vm3732 = vweird.f32 %v3725
    %vm3733 = vmor %vm3731, %vm3732
    %v3734 = vsel %vm3733, %v3725, %v3730
    %v3735 = vrsqrt.pop %v3718
    %v3736 = vmul.f32 %v3735, %v3718
    %v3737 = vmul.f32 %v3736, %v3735
    %v3738 = vmul.f32 0.5, %v3737
    %v3739 = vsub.f32 1.5, %v3738
    %v3740 = vmul.f32 %v3735, %v3739
    %vm3741 = vweird.f32 %v3718
    %vm3742 = vweird.f32 %v3735
    %vm3743 = vmor %vm3741, %vm3742
    %v3744 = vsel %vm3743, %v3735, %v3740
    %v3745 = vrsqrt.pop %v3719
    %v3746 = vmul.f32 %v3745, %v3719
    %v3747 = vmul.f32 %v3746, %v3745
    %v3748 = vmul.f32 0.5, %v3747
    %v3749 = vsub.f32 1.5, %v3748
    %v3750 = vmul.f32 %v3745, %v3749
    %vm3751 = vweird.f32 %v3719
    %vm3752 = vweird.f32 %v3745
    %vm3753 = vmor %vm3751, %vm3752
    %v3754 = vsel %vm3753, %v3745, %v3750
    %v3755 = vrsqrt.pop %v3720
    %v3756 = vmul.f32 %v3755, %v3720
    %v3757 = vmul.f32 %v3756, %v3755
    %v3758 = vmul.f32 0.5, %v3757
    %v3759 = vsub.f32 1.5, %v3758
    %v3760 = vmul.f32 %v3755, %v3759
    %vm3761 = vweird.f32 %v3720
    %vm3762 = vweird.f32 %v3755
    %vm3763 = vmor %vm3761, %vm3762
    %v3764 = vsel %vm3763, %v3755, %v3760
    %v3765 = vrsqrt.pop %v3721
    %v3766 = vmul.f32 %v3765, %v3721
    %v3767 = vmul.f32 %v3766, %v3765
    %v3768 = vmul.f32 0.5, %v3767
    %v3769 = vsub.f32 1.5, %v3768
    %v3770 = vmul.f32 %v3765, %v3769
    %vm3771 = vweird.f32 %v3721
    %vm3772 = vweird.f32 %v3765
    %vm3773 = vmor %vm3771, %vm3772
    %v3774 = vsel %vm3773, %v3765, %v3770
    %v3775 = vrsqrt.pop %v3722
    %v3776 = vmul.f32 %v3775, %v3722
    %v3777 = vmul.f32 %v3776, %v3775
    %v3778 = vmul.f32 0.5, %v3777
    %v3779 = vsub.f32 1.5, %v3778
    %v3780 = vmul.f32 %v3775, %v3779
    %vm3781 = vweird.f32 %v3722
    %vm3782 = vweird.f32 %v3775
    %vm3783 = vmor %vm3781, %vm3782
    %v3784 = vsel %vm3783, %v3775, %v3780
    %v3785 = vrsqrt.pop %v3723
    %v3786 = vmul.f32 %v3785, %v3723
    %v3787 = vmul.f32 %v3786, %v3785
    %v3788 = vmul.f32 0.5, %v3787
    %v3789 = vsub.f32 1.5, %v3788
    %v3790 = vmul.f32 %v3785, %v3789
    %vm3791 = vweird.f32 %v3723
    %vm3792 = vweird.f32 %v3785
    %vm3793 = vmor %vm3791, %vm3792
    %v3794 = vsel %vm3793, %v3785, %v3790
    %v3795 = vrsqrt.pop %v3724
    %v3796 = vmul.f32 %v3795, %v3724
    %v3797 = vmul.f32 %v3796, %v3795
    %v3798 = vmul.f32 0.5, %v3797
    %v3799 = vsub.f32 1.5, %v3798
    %v3800 = vmul.f32 %v3795, %v3799
    %vm3801 = vweird.f32 %v3724
    %vm3802 = vweird.f32 %v3795
    %vm3803 = vmor %vm3801, %vm3802
    %v3804 = vsel %vm3803, %v3795, %v3800
    %v3805 = vmul.f32 %v3709, %v3734
    %v3806 = vmul.f32 %v3710, %v3744
    %v3807 = vmul.f32 %v3711, %v3754
    %v3808 = vmul.f32 %v3712, %v3764
    %v3809 = vmul.f32 %v3713, %v3774
    %v3810 = vmul.f32 %v3714, %v3784
    %v3811 = vmul.f32 %v3715, %v3794
    %v3812 = vmul.f32 %v3716, %v3804
    %v3814 = vperm.slane %v3571, 0
    %v3815 = vperm.slane %v3571, 1
    %v3816 = vperm.slane %v3571, 2
    %v3817 = vperm.slane %v3571, 3
    %v3818 = vperm.slane %v3571, 4
    %v3819 = vperm.slane %v3571, 5
    %v3820 = vperm.slane %v3571, 6
    %v3821 = vperm.slane %v3571, 7
    %v3830 = vmul.f32 %v3805, %v3814
    %v3831 = vmul.f32 %v3806, %v3815
    %v3832 = vmul.f32 %v3807, %v3816
    %v3833 = vmul.f32 %v3808, %v3817
    %v3834 = vmul.f32 %v3809, %v3818
    %v3835 = vmul.f32 %v3810, %v3819
    %v3836 = vmul.f32 %v3811, %v3820
    %v3837 = vmul.f32 %v3812, %v3821
    %v3839 = vperm.slane %v3572, 0
    %v3840 = vperm.slane %v3572, 1
    %v3841 = vperm.slane %v3572, 2
    %v3842 = vperm.slane %v3572, 3
    %v3843 = vperm.slane %v3572, 4
    %v3844 = vperm.slane %v3572, 5
    %v3845 = vperm.slane %v3572, 6
    %v3846 = vperm.slane %v3572, 7
    %v3855 = vadd.f32 %v3830, %v3839
    %v3856 = vadd.f32 %v3831, %v3840
    %v3857 = vadd.f32 %v3832, %v3841
    %v3858 = vadd.f32 %v3833, %v3842
    %v3859 = vadd.f32 %v3834, %v3843
    %v3860 = vadd.f32 %v3835, %v3844
    %v3861 = vadd.f32 %v3836, %v3845
    %v3862 = vadd.f32 %v3837, %v3846
    %v3863 = vmax.f32 %v3855, 0.0
    %v3864 = vmax.f32 %v3856, 0.0
    %v3865 = vmax.f32 %v3857, 0.0
    %v3866 = vmax.f32 %v3858, 0.0
    %v3867 = vmax.f32 %v3859, 0.0
    %v3868 = vmax.f32 %v3860, 0.0
    %v3869 = vmax.f32 %v3861, 0.0
    %v3870 = vmax.f32 %v3862, 0.0
    %3871 = vst [vmem:[#allocation22] sm:$0xff] %v3863
    %3872 = vst [vmem:[#allocation22 + $0x8] sm:$0xff] %v3864
    %3873 = vst [vmem:[#allocation22 + $0x10] sm:$0xff] %v3865
    %3874 = vst [vmem:[#allocation22 + $0x18] sm:$0xff] %v3866
    %3875 = vst [vmem:[#allocation22 + $0x20] sm:$0xff] %v3867
    %3876 = vst [vmem:[#allocation22 + $0x28] sm:$0xff] %v3868
    %3877 = vst [vmem:[#allocation22 + $0x30] sm:$0xff] %v3869
    %3878 = vst [vmem:[#allocation22 + $0x38] sm:$0xff] %v3870
    %v3879 = vld [vmem:[#allocation14 + $0x20] sm:$0xff]
    %v3880 = vld [vmem:[#allocation14 + $0x28] sm:$0xff]
    %v3881 = vld [vmem:[#allocation14 + $0x30] sm:$0xff]
    %v3882 = vld [vmem:[#allocation14 + $0x38] sm:$0xff]
    %v3883 = vld [vmem:[#allocation14 + $0xa0] sm:$0xff]
    %v3884 = vld [vmem:[#allocation14 + $0xa8] sm:$0xff]
    %v3885 = vld [vmem:[#allocation14 + $0xb0] sm:$0xff]
    %v3886 = vld [vmem:[#allocation14 + $0xb8] sm:$0xff]
    %v3887 = vld [vmem:[#allocation14 + $0x120] sm:$0xff]
    %v3888 = vld [vmem:[#allocation14 + $0x128] sm:$0xff]
    %v3889 = vld [vmem:[#allocation14 + $0x130] sm:$0xff]
    %v3890 = vld [vmem:[#allocation14 + $0x138] sm:$0xff]
    %v3891 = vld [vmem:[#allocation14 + $0x1a0] sm:$0xff]
    %v3892 = vld [vmem:[#allocation14 + $0x1a8] sm:$0xff]
    %v3893 = vld [vmem:[#allocation14 + $0x1b0] sm:$0xff]
    %v3894 = vld [vmem:[#allocation14 + $0x1b8] sm:$0xff]
    %v3895 = vld [vmem:[#allocation14 + $0x220] sm:$0xff]
    %v3896 = vld [vmem:[#allocation14 + $0x228] sm:$0xff]
    %v3897 = vld [vmem:[#allocation14 + $0x230] sm:$0xff]
    %v3898 = vld [vmem:[#allocation14 + $0x238] sm:$0xff]
    %v3899 = vld [vmem:[#allocation14 + $0x2a0] sm:$0xff]
    %v3900 = vld [vmem:[#allocation14 + $0x2a8] sm:$0xff]
    %v3901 = vld [vmem:[#allocation14 + $0x2b0] sm:$0xff]
    %v3902 = vld [vmem:[#allocation14 + $0x2b8] sm:$0xff]
    %v3903 = vld [vmem:[#allocation14 + $0x320] sm:$0xff]
    %v3904 = vld [vmem:[#allocation14 + $0x328] sm:$0xff]
    %v3905 = vld [vmem:[#allocation14 + $0x330] sm:$0xff]
    %v3906 = vld [vmem:[#allocation14 + $0x338] sm:$0xff]
    %v3907 = vld [vmem:[#allocation14 + $0x3a0] sm:$0xff]
    %v3908 = vld [vmem:[#allocation14 + $0x3a8] sm:$0xff]
    %v3909 = vld [vmem:[#allocation14 + $0x3b0] sm:$0xff]
    %v3910 = vld [vmem:[#allocation14 + $0x3b8] sm:$0xff]
    %v3911 = vld [vmem:[#allocation14 + $0x420] sm:$0xff]
    %v3912 = vld [vmem:[#allocation14 + $0x428] sm:$0xff]
    %v3913 = vld [vmem:[#allocation14 + $0x430] sm:$0xff]
    %v3914 = vld [vmem:[#allocation14 + $0x438] sm:$0xff]
    %v3915 = vld [vmem:[#allocation14 + $0x4a0] sm:$0xff]
    %v3916 = vld [vmem:[#allocation14 + $0x4a8] sm:$0xff]
    %v3917 = vld [vmem:[#allocation14 + $0x4b0] sm:$0xff]
    %v3918 = vld [vmem:[#allocation14 + $0x4b8] sm:$0xff]
    %v3919 = vld [vmem:[#allocation14 + $0x520] sm:$0xff]
    %v3920 = vld [vmem:[#allocation14 + $0x528] sm:$0xff]
    %v3921 = vld [vmem:[#allocation14 + $0x530] sm:$0xff]
    %v3922 = vld [vmem:[#allocation14 + $0x538] sm:$0xff]
    %v3923 = vld [vmem:[#allocation14 + $0x5a0] sm:$0xff]
    %v3924 = vld [vmem:[#allocation14 + $0x5a8] sm:$0xff]
    %v3925 = vld [vmem:[#allocation14 + $0x5b0] sm:$0xff]
    %v3926 = vld [vmem:[#allocation14 + $0x5b8] sm:$0xff]
    %v3927 = vld [vmem:[#allocation14 + $0x620] sm:$0xff]
    %v3928 = vld [vmem:[#allocation14 + $0x628] sm:$0xff]
    %v3929 = vld [vmem:[#allocation14 + $0x630] sm:$0xff]
    %v3930 = vld [vmem:[#allocation14 + $0x638] sm:$0xff]
    %v3931 = vld [vmem:[#allocation14 + $0x6a0] sm:$0xff]
    %v3932 = vld [vmem:[#allocation14 + $0x6a8] sm:$0xff]
    %v3933 = vld [vmem:[#allocation14 + $0x6b0] sm:$0xff]
    %v3934 = vld [vmem:[#allocation14 + $0x6b8] sm:$0xff]
    %v3935 = vld [vmem:[#allocation14 + $0x720] sm:$0xff]
    %v3936 = vld [vmem:[#allocation14 + $0x728] sm:$0xff]
    %v3937 = vld [vmem:[#allocation14 + $0x730] sm:$0xff]
    %v3938 = vld [vmem:[#allocation14 + $0x738] sm:$0xff]
    %v3939 = vld [vmem:[#allocation14 + $0x7a0] sm:$0xff]
    %v3940 = vld [vmem:[#allocation14 + $0x7a8] sm:$0xff]
    %v3941 = vld [vmem:[#allocation14 + $0x7b0] sm:$0xff]
    %v3942 = vld [vmem:[#allocation14 + $0x7b8] sm:$0xff]
    %v3943 = vld [vmem:[#allocation14 + $0x820] sm:$0xff]
    %v3944 = vld [vmem:[#allocation14 + $0x828] sm:$0xff]
    %v3945 = vld [vmem:[#allocation14 + $0x830] sm:$0xff]
    %v3946 = vld [vmem:[#allocation14 + $0x838] sm:$0xff]
    %v3947 = vld [vmem:[#allocation14 + $0x8a0] sm:$0xff]
    %v3948 = vld [vmem:[#allocation14 + $0x8a8] sm:$0xff]
    %v3949 = vld [vmem:[#allocation14 + $0x8b0] sm:$0xff]
    %v3950 = vld [vmem:[#allocation14 + $0x8b8] sm:$0xff]
    %v3951 = vld [vmem:[#allocation14 + $0x920] sm:$0xff]
    %v3952 = vld [vmem:[#allocation14 + $0x928] sm:$0xff]
    %v3953 = vld [vmem:[#allocation14 + $0x930] sm:$0xff]
    %v3954 = vld [vmem:[#allocation14 + $0x938] sm:$0xff]
    %v3955 = vld [vmem:[#allocation14 + $0x9a0] sm:$0xff]
    %v3956 = vld [vmem:[#allocation14 + $0x9a8] sm:$0xff]
    %v3957 = vld [vmem:[#allocation14 + $0x9b0] sm:$0xff]
    %v3958 = vld [vmem:[#allocation14 + $0x9b8] sm:$0xff]
    %v3959 = vld [vmem:[#allocation14 + $0xa20] sm:$0xff]
    %v3960 = vld [vmem:[#allocation14 + $0xa28] sm:$0xff]
    %v3961 = vld [vmem:[#allocation14 + $0xa30] sm:$0xff]
    %v3962 = vld [vmem:[#allocation14 + $0xa38] sm:$0xff]
    %v3963 = vld [vmem:[#allocation14 + $0xaa0] sm:$0xff]
    %v3964 = vld [vmem:[#allocation14 + $0xaa8] sm:$0xff]
    %v3965 = vld [vmem:[#allocation14 + $0xab0] sm:$0xff]
    %v3966 = vld [vmem:[#allocation14 + $0xab8] sm:$0xff]
    %v3967 = vld [vmem:[#allocation14 + $0xb20] sm:$0xff]
    %v3968 = vld [vmem:[#allocation14 + $0xb28] sm:$0xff]
    %v3969 = vld [vmem:[#allocation14 + $0xb30] sm:$0xff]
    %v3970 = vld [vmem:[#allocation14 + $0xb38] sm:$0xff]
    %v3971 = vld [vmem:[#allocation14 + $0xba0] sm:$0xff]
    %v3972 = vld [vmem:[#allocation14 + $0xba8] sm:$0xff]
    %v3973 = vld [vmem:[#allocation14 + $0xbb0] sm:$0xff]
    %v3974 = vld [vmem:[#allocation14 + $0xbb8] sm:$0xff]
    %v3975 = vld [vmem:[#allocation14 + $0xc20] sm:$0xff]
    %v3976 = vld [vmem:[#allocation14 + $0xc28] sm:$0xff]
    %v3977 = vld [vmem:[#allocation14 + $0xc30] sm:$0xff]
    %v3978 = vld [vmem:[#allocation14 + $0xc38] sm:$0xff]
    %v3979 = vld [vmem:[#allocation14 + $0xca0] sm:$0xff]
    %v3980 = vld [vmem:[#allocation14 + $0xca8] sm:$0xff]
    %v3981 = vld [vmem:[#allocation14 + $0xcb0] sm:$0xff]
    %v3982 = vld [vmem:[#allocation14 + $0xcb8] sm:$0xff]
    %v3983 = vld [vmem:[#allocation14 + $0xd20] sm:$0xff]
    %v3984 = vld [vmem:[#allocation14 + $0xd28] sm:$0xff]
    %v3985 = vld [vmem:[#allocation14 + $0xd30] sm:$0xff]
    %v3986 = vld [vmem:[#allocation14 + $0xd38] sm:$0xff]
    %v3987 = vld [vmem:[#allocation14 + $0xda0] sm:$0xff]
    %v3988 = vld [vmem:[#allocation14 + $0xda8] sm:$0xff]
    %v3989 = vld [vmem:[#allocation14 + $0xdb0] sm:$0xff]
    %v3990 = vld [vmem:[#allocation14 + $0xdb8] sm:$0xff]
    %v3991 = vld [vmem:[#allocation14 + $0xe20] sm:$0xff]
    %v3992 = vld [vmem:[#allocation14 + $0xe28] sm:$0xff]
    %v3993 = vld [vmem:[#allocation14 + $0xe30] sm:$0xff]
    %v3994 = vld [vmem:[#allocation14 + $0xe38] sm:$0xff]
    %v3995 = vld [vmem:[#allocation14 + $0xea0] sm:$0xff]
    %v3996 = vld [vmem:[#allocation14 + $0xea8] sm:$0xff]
    %v3997 = vld [vmem:[#allocation14 + $0xeb0] sm:$0xff]
    %v3998 = vld [vmem:[#allocation14 + $0xeb8] sm:$0xff]
    %v3999 = vld [vmem:[#allocation14 + $0xf20] sm:$0xff]
    %v4000 = vld [vmem:[#allocation14 + $0xf28] sm:$0xff]
    %v4001 = vld [vmem:[#allocation14 + $0xf30] sm:$0xff]
    %v4002 = vld [vmem:[#allocation14 + $0xf38] sm:$0xff]
    %v4003 = vld [vmem:[#allocation14 + $0xfa0] sm:$0xff]
    %v4004 = vld [vmem:[#allocation14 + $0xfa8] sm:$0xff]
    %v4005 = vld [vmem:[#allocation14 + $0xfb0] sm:$0xff]
    %v4006 = vld [vmem:[#allocation14 + $0xfb8] sm:$0xff]
    %v4007 = vld [vmem:[#allocation14 + $0x1020] sm:$0xff]
    %v4008 = vld [vmem:[#allocation14 + $0x1028] sm:$0xff]
    %v4009 = vld [vmem:[#allocation14 + $0x1030] sm:$0xff]
    %v4010 = vld [vmem:[#allocation14 + $0x1038] sm:$0xff]
    %v4011 = vld [vmem:[#allocation14 + $0x10a0] sm:$0xff]
    %v4012 = vld [vmem:[#allocation14 + $0x10a8] sm:$0xff]
    %v4013 = vld [vmem:[#allocation14 + $0x10b0] sm:$0xff]
    %v4014 = vld [vmem:[#allocation14 + $0x10b8] sm:$0xff]
    %v4015 = vld [vmem:[#allocation14 + $0x1120] sm:$0xff]
    %v4016 = vld [vmem:[#allocation14 + $0x1128] sm:$0xff]
    %v4017 = vld [vmem:[#allocation14 + $0x1130] sm:$0xff]
    %v4018 = vld [vmem:[#allocation14 + $0x1138] sm:$0xff]
    %v4019 = vld [vmem:[#allocation14 + $0x11a0] sm:$0xff]
    %v4020 = vld [vmem:[#allocation14 + $0x11a8] sm:$0xff]
    %v4021 = vld [vmem:[#allocation14 + $0x11b0] sm:$0xff]
    %v4022 = vld [vmem:[#allocation14 + $0x11b8] sm:$0xff]
    %v4023 = vld [vmem:[#allocation14 + $0x1220] sm:$0xff]
    %v4024 = vld [vmem:[#allocation14 + $0x1228] sm:$0xff]
    %v4025 = vld [vmem:[#allocation14 + $0x1230] sm:$0xff]
    %v4026 = vld [vmem:[#allocation14 + $0x1238] sm:$0xff]
    %v4027 = vld [vmem:[#allocation14 + $0x12a0] sm:$0xff]
    %v4028 = vld [vmem:[#allocation14 + $0x12a8] sm:$0xff]
    %v4029 = vld [vmem:[#allocation14 + $0x12b0] sm:$0xff]
    %v4030 = vld [vmem:[#allocation14 + $0x12b8] sm:$0xff]
    %v4031 = vld [vmem:[#allocation14 + $0x1320] sm:$0xff]
    %v4032 = vld [vmem:[#allocation14 + $0x1328] sm:$0xff]
    %v4033 = vld [vmem:[#allocation14 + $0x1330] sm:$0xff]
    %v4034 = vld [vmem:[#allocation14 + $0x1338] sm:$0xff]
    %v4035 = vld [vmem:[#allocation14 + $0x13a0] sm:$0xff]
    %v4036 = vld [vmem:[#allocation14 + $0x13a8] sm:$0xff]
    %v4037 = vld [vmem:[#allocation14 + $0x13b0] sm:$0xff]
    %v4038 = vld [vmem:[#allocation14 + $0x13b8] sm:$0xff]
    %v4039 = vld [vmem:[#allocation14 + $0x1420] sm:$0xff]
    %v4040 = vld [vmem:[#allocation14 + $0x1428] sm:$0xff]
    %v4041 = vld [vmem:[#allocation14 + $0x1430] sm:$0xff]
    %v4042 = vld [vmem:[#allocation14 + $0x1438] sm:$0xff]
    %v4043 = vld [vmem:[#allocation14 + $0x14a0] sm:$0xff]
    %v4044 = vld [vmem:[#allocation14 + $0x14a8] sm:$0xff]
    %v4045 = vld [vmem:[#allocation14 + $0x14b0] sm:$0xff]
    %v4046 = vld [vmem:[#allocation14 + $0x14b8] sm:$0xff]
    %v4047 = vld [vmem:[#allocation14 + $0x1520] sm:$0xff]
    %v4048 = vld [vmem:[#allocation14 + $0x1528] sm:$0xff]
    %v4049 = vld [vmem:[#allocation14 + $0x1530] sm:$0xff]
    %v4050 = vld [vmem:[#allocation14 + $0x1538] sm:$0xff]
    %v4051 = vld [vmem:[#allocation14 + $0x15a0] sm:$0xff]
    %v4052 = vld [vmem:[#allocation14 + $0x15a8] sm:$0xff]
    %v4053 = vld [vmem:[#allocation14 + $0x15b0] sm:$0xff]
    %v4054 = vld [vmem:[#allocation14 + $0x15b8] sm:$0xff]
    %v4055 = vld [vmem:[#allocation14 + $0x1620] sm:$0xff]
    %v4056 = vld [vmem:[#allocation14 + $0x1628] sm:$0xff]
    %v4057 = vld [vmem:[#allocation14 + $0x1630] sm:$0xff]
    %v4058 = vld [vmem:[#allocation14 + $0x1638] sm:$0xff]
    %v4059 = vld [vmem:[#allocation14 + $0x16a0] sm:$0xff]
    %v4060 = vld [vmem:[#allocation14 + $0x16a8] sm:$0xff]
    %v4061 = vld [vmem:[#allocation14 + $0x16b0] sm:$0xff]
    %v4062 = vld [vmem:[#allocation14 + $0x16b8] sm:$0xff]
    %v4063 = vld [vmem:[#allocation14 + $0x1720] sm:$0xff]
    %v4064 = vld [vmem:[#allocation14 + $0x1728] sm:$0xff]
    %v4065 = vld [vmem:[#allocation14 + $0x1730] sm:$0xff]
    %v4066 = vld [vmem:[#allocation14 + $0x1738] sm:$0xff]
    %v4067 = vld [vmem:[#allocation14 + $0x17a0] sm:$0xff]
    %v4068 = vld [vmem:[#allocation14 + $0x17a8] sm:$0xff]
    %v4069 = vld [vmem:[#allocation14 + $0x17b0] sm:$0xff]
    %v4070 = vld [vmem:[#allocation14 + $0x17b8] sm:$0xff]
    %v4071 = vld [vmem:[#allocation14 + $0x1820] sm:$0xff]
    %v4072 = vld [vmem:[#allocation14 + $0x1828] sm:$0xff]
    %v4073 = vld [vmem:[#allocation14 + $0x1830] sm:$0xff]
    %v4074 = vld [vmem:[#allocation14 + $0x1838] sm:$0xff]
    %v4075 = vld [vmem:[#allocation14 + $0x18a0] sm:$0xff]
    %v4076 = vld [vmem:[#allocation14 + $0x18a8] sm:$0xff]
    %v4077 = vld [vmem:[#allocation14 + $0x18b0] sm:$0xff]
    %v4078 = vld [vmem:[#allocation14 + $0x18b8] sm:$0xff]
    %v4079 = vld [vmem:[#allocation14 + $0x1920] sm:$0xff]
    %v4080 = vld [vmem:[#allocation14 + $0x1928] sm:$0xff]
    %v4081 = vld [vmem:[#allocation14 + $0x1930] sm:$0xff]
    %v4082 = vld [vmem:[#allocation14 + $0x1938] sm:$0xff]
    %v4083 = vld [vmem:[#allocation14 + $0x19a0] sm:$0xff]
    %v4084 = vld [vmem:[#allocation14 + $0x19a8] sm:$0xff]
    %v4085 = vld [vmem:[#allocation14 + $0x19b0] sm:$0xff]
    %v4086 = vld [vmem:[#allocation14 + $0x19b8] sm:$0xff]
    %v4087 = vld [vmem:[#allocation14 + $0x1a20] sm:$0xff]
    %v4088 = vld [vmem:[#allocation14 + $0x1a28] sm:$0xff]
    %v4089 = vld [vmem:[#allocation14 + $0x1a30] sm:$0xff]
    %v4090 = vld [vmem:[#allocation14 + $0x1a38] sm:$0xff]
    %v4091 = vld [vmem:[#allocation14 + $0x1aa0] sm:$0xff]
    %v4092 = vld [vmem:[#allocation14 + $0x1aa8] sm:$0xff]
    %v4093 = vld [vmem:[#allocation14 + $0x1ab0] sm:$0xff]
    %v4094 = vld [vmem:[#allocation14 + $0x1ab8] sm:$0xff]
    %v4095 = vld [vmem:[#allocation14 + $0x1b20] sm:$0xff]
    %v4096 = vld [vmem:[#allocation14 + $0x1b28] sm:$0xff]
    %v4097 = vld [vmem:[#allocation14 + $0x1b30] sm:$0xff]
    %v4098 = vld [vmem:[#allocation14 + $0x1b38] sm:$0xff]
    %v4099 = vld [vmem:[#allocation14 + $0x1ba0] sm:$0xff]
    %v4100 = vld [vmem:[#allocation14 + $0x1ba8] sm:$0xff]
    %v4101 = vld [vmem:[#allocation14 + $0x1bb0] sm:$0xff]
    %v4102 = vld [vmem:[#allocation14 + $0x1bb8] sm:$0xff]
    %v4103 = vld [vmem:[#allocation14 + $0x1c20] sm:$0xff]
    %v4104 = vld [vmem:[#allocation14 + $0x1c28] sm:$0xff]
    %v4105 = vld [vmem:[#allocation14 + $0x1c30] sm:$0xff]
    %v4106 = vld [vmem:[#allocation14 + $0x1c38] sm:$0xff]
    %v4107 = vld [vmem:[#allocation14 + $0x1ca0] sm:$0xff]
    %v4108 = vld [vmem:[#allocation14 + $0x1ca8] sm:$0xff]
    %v4109 = vld [vmem:[#allocation14 + $0x1cb0] sm:$0xff]
    %v4110 = vld [vmem:[#allocation14 + $0x1cb8] sm:$0xff]
    %v4111 = vld [vmem:[#allocation14 + $0x1d20] sm:$0xff]
    %v4112 = vld [vmem:[#allocation14 + $0x1d28] sm:$0xff]
    %v4113 = vld [vmem:[#allocation14 + $0x1d30] sm:$0xff]
    %v4114 = vld [vmem:[#allocation14 + $0x1d38] sm:$0xff]
    %v4115 = vld [vmem:[#allocation14 + $0x1da0] sm:$0xff]
    %v4116 = vld [vmem:[#allocation14 + $0x1da8] sm:$0xff]
    %v4117 = vld [vmem:[#allocation14 + $0x1db0] sm:$0xff]
    %v4118 = vld [vmem:[#allocation14 + $0x1db8] sm:$0xff]
    %v4119 = vld [vmem:[#allocation14 + $0x1e20] sm:$0xff]
    %v4120 = vld [vmem:[#allocation14 + $0x1e28] sm:$0xff]
    %v4121 = vld [vmem:[#allocation14 + $0x1e30] sm:$0xff]
    %v4122 = vld [vmem:[#allocation14 + $0x1e38] sm:$0xff]
    %v4123 = vld [vmem:[#allocation14 + $0x1ea0] sm:$0xff]
    %v4124 = vld [vmem:[#allocation14 + $0x1ea8] sm:$0xff]
    %v4125 = vld [vmem:[#allocation14 + $0x1eb0] sm:$0xff]
    %v4126 = vld [vmem:[#allocation14 + $0x1eb8] sm:$0xff]
    %v4127 = vld [vmem:[#allocation14 + $0x1f20] sm:$0xff]
    %v4128 = vld [vmem:[#allocation14 + $0x1f28] sm:$0xff]
    %v4129 = vld [vmem:[#allocation14 + $0x1f30] sm:$0xff]
    %v4130 = vld [vmem:[#allocation14 + $0x1f38] sm:$0xff]
    %v4131 = vld [vmem:[#allocation14 + $0x1fa0] sm:$0xff]
    %v4132 = vld [vmem:[#allocation14 + $0x1fa8] sm:$0xff]
    %v4133 = vld [vmem:[#allocation14 + $0x1fb0] sm:$0xff]
    %v4134 = vld [vmem:[#allocation14 + $0x1fb8] sm:$0xff]
    %v4391 = vunpack.c.l.b16 %v3879
    %v4392 = vunpack.c.h.b16 %v3879
    %v4393 = vunpack.c.l.b16 %v3880
    %v4394 = vunpack.c.h.b16 %v3880
    %v4395 = vunpack.c.l.b16 %v3881
    %v4396 = vunpack.c.h.b16 %v3881
    %v4397 = vunpack.c.l.b16 %v3882
    %v4398 = vunpack.c.h.b16 %v3882
    %v4399 = vunpack.c.l.b16 %v3883
    %v4400 = vunpack.c.h.b16 %v3883
    %v4401 = vunpack.c.l.b16 %v3884
    %v4402 = vunpack.c.h.b16 %v3884
    %v4403 = vunpack.c.l.b16 %v3885
    %v4404 = vunpack.c.h.b16 %v3885
    %v4405 = vunpack.c.l.b16 %v3886
    %v4406 = vunpack.c.h.b16 %v3886
    %v4407 = vunpack.c.l.b16 %v3887
    %v4408 = vunpack.c.h.b16 %v3887
    %v4409 = vunpack.c.l.b16 %v3888
    %v4410 = vunpack.c.h.b16 %v3888
    %v4411 = vunpack.c.l.b16 %v3889
    %v4412 = vunpack.c.h.b16 %v3889
    %v4413 = vunpack.c.l.b16 %v3890
    %v4414 = vunpack.c.h.b16 %v3890
    %v4415 = vunpack.c.l.b16 %v3891
    %v4416 = vunpack.c.h.b16 %v3891
    %v4417 = vunpack.c.l.b16 %v3892
    %v4418 = vunpack.c.h.b16 %v3892
    %v4419 = vunpack.c.l.b16 %v3893
    %v4420 = vunpack.c.h.b16 %v3893
    %v4421 = vunpack.c.l.b16 %v3894
    %v4422 = vunpack.c.h.b16 %v3894
    %v4423 = vunpack.c.l.b16 %v3895
    %v4424 = vunpack.c.h.b16 %v3895
    %v4425 = vunpack.c.l.b16 %v3896
    %v4426 = vunpack.c.h.b16 %v3896
    %v4427 = vunpack.c.l.b16 %v3897
    %v4428 = vunpack.c.h.b16 %v3897
    %v4429 = vunpack.c.l.b16 %v3898
    %v4430 = vunpack.c.h.b16 %v3898
    %v4431 = vunpack.c.l.b16 %v3899
    %v4432 = vunpack.c.h.b16 %v3899
    %v4433 = vunpack.c.l.b16 %v3900
    %v4434 = vunpack.c.h.b16 %v3900
    %v4435 = vunpack.c.l.b16 %v3901
    %v4436 = vunpack.c.h.b16 %v3901
    %v4437 = vunpack.c.l.b16 %v3902
    %v4438 = vunpack.c.h.b16 %v3902
    %v4439 = vunpack.c.l.b16 %v3903
    %v4440 = vunpack.c.h.b16 %v3903
    %v4441 = vunpack.c.l.b16 %v3904
    %v4442 = vunpack.c.h.b16 %v3904
    %v4443 = vunpack.c.l.b16 %v3905
    %v4444 = vunpack.c.h.b16 %v3905
    %v4445 = vunpack.c.l.b16 %v3906
    %v4446 = vunpack.c.h.b16 %v3906
    %v4447 = vunpack.c.l.b16 %v3907
    %v4448 = vunpack.c.h.b16 %v3907
    %v4449 = vunpack.c.l.b16 %v3908
    %v4450 = vunpack.c.h.b16 %v3908
    %v4451 = vunpack.c.l.b16 %v3909
    %v4452 = vunpack.c.h.b16 %v3909
    %v4453 = vunpack.c.l.b16 %v3910
    %v4454 = vunpack.c.h.b16 %v3910
    %v4455 = vunpack.c.l.b16 %v3911
    %v4456 = vunpack.c.h.b16 %v3911
    %v4457 = vunpack.c.l.b16 %v3912
    %v4458 = vunpack.c.h.b16 %v3912
    %v4459 = vunpack.c.l.b16 %v3913
    %v4460 = vunpack.c.h.b16 %v3913
    %v4461 = vunpack.c.l.b16 %v3914
    %v4462 = vunpack.c.h.b16 %v3914
    %v4463 = vunpack.c.l.b16 %v3915
    %v4464 = vunpack.c.h.b16 %v3915
    %v4465 = vunpack.c.l.b16 %v3916
    %v4466 = vunpack.c.h.b16 %v3916
    %v4467 = vunpack.c.l.b16 %v3917
    %v4468 = vunpack.c.h.b16 %v3917
    %v4469 = vunpack.c.l.b16 %v3918
    %v4470 = vunpack.c.h.b16 %v3918
    %v4471 = vunpack.c.l.b16 %v3919
    %v4472 = vunpack.c.h.b16 %v3919
    %v4473 = vunpack.c.l.b16 %v3920
    %v4474 = vunpack.c.h.b16 %v3920
    %v4475 = vunpack.c.l.b16 %v3921
    %v4476 = vunpack.c.h.b16 %v3921
    %v4477 = vunpack.c.l.b16 %v3922
    %v4478 = vunpack.c.h.b16 %v3922
    %v4479 = vunpack.c.l.b16 %v3923
    %v4480 = vunpack.c.h.b16 %v3923
    %v4481 = vunpack.c.l.b16 %v3924
    %v4482 = vunpack.c.h.b16 %v3924
    %v4483 = vunpack.c.l.b16 %v3925
    %v4484 = vunpack.c.h.b16 %v3925
    %v4485 = vunpack.c.l.b16 %v3926
    %v4486 = vunpack.c.h.b16 %v3926
    %v4487 = vunpack.c.l.b16 %v3927
    %v4488 = vunpack.c.h.b16 %v3927
    %v4489 = vunpack.c.l.b16 %v3928
    %v4490 = vunpack.c.h.b16 %v3928
    %v4491 = vunpack.c.l.b16 %v3929
    %v4492 = vunpack.c.h.b16 %v3929
    %v4493 = vunpack.c.l.b16 %v3930
    %v4494 = vunpack.c.h.b16 %v3930
    %v4495 = vunpack.c.l.b16 %v3931
    %v4496 = vunpack.c.h.b16 %v3931
    %v4497 = vunpack.c.l.b16 %v3932
    %v4498 = vunpack.c.h.b16 %v3932
    %v4499 = vunpack.c.l.b16 %v3933
    %v4500 = vunpack.c.h.b16 %v3933
    %v4501 = vunpack.c.l.b16 %v3934
    %v4502 = vunpack.c.h.b16 %v3934
    %v4503 = vunpack.c.l.b16 %v3935
    %v4504 = vunpack.c.h.b16 %v3935
    %v4505 = vunpack.c.l.b16 %v3936
    %v4506 = vunpack.c.h.b16 %v3936
    %v4507 = vunpack.c.l.b16 %v3937
    %v4508 = vunpack.c.h.b16 %v3937
    %v4509 = vunpack.c.l.b16 %v3938
    %v4510 = vunpack.c.h.b16 %v3938
    %v4511 = vunpack.c.l.b16 %v3939
    %v4512 = vunpack.c.h.b16 %v3939
    %v4513 = vunpack.c.l.b16 %v3940
    %v4514 = vunpack.c.h.b16 %v3940
    %v4515 = vunpack.c.l.b16 %v3941
    %v4516 = vunpack.c.h.b16 %v3941
    %v4517 = vunpack.c.l.b16 %v3942
    %v4518 = vunpack.c.h.b16 %v3942
    %v4519 = vunpack.c.l.b16 %v3943
    %v4520 = vunpack.c.h.b16 %v3943
    %v4521 = vunpack.c.l.b16 %v3944
    %v4522 = vunpack.c.h.b16 %v3944
    %v4523 = vunpack.c.l.b16 %v3945
    %v4524 = vunpack.c.h.b16 %v3945
    %v4525 = vunpack.c.l.b16 %v3946
    %v4526 = vunpack.c.h.b16 %v3946
    %v4527 = vunpack.c.l.b16 %v3947
    %v4528 = vunpack.c.h.b16 %v3947
    %v4529 = vunpack.c.l.b16 %v3948
    %v4530 = vunpack.c.h.b16 %v3948
    %v4531 = vunpack.c.l.b16 %v3949
    %v4532 = vunpack.c.h.b16 %v3949
    %v4533 = vunpack.c.l.b16 %v3950
    %v4534 = vunpack.c.h.b16 %v3950
    %v4535 = vunpack.c.l.b16 %v3951
    %v4536 = vunpack.c.h.b16 %v3951
    %v4537 = vunpack.c.l.b16 %v3952
    %v4538 = vunpack.c.h.b16 %v3952
    %v4539 = vunpack.c.l.b16 %v3953
    %v4540 = vunpack.c.h.b16 %v3953
    %v4541 = vunpack.c.l.b16 %v3954
    %v4542 = vunpack.c.h.b16 %v3954
    %v4543 = vunpack.c.l.b16 %v3955
    %v4544 = vunpack.c.h.b16 %v3955
    %v4545 = vunpack.c.l.b16 %v3956
    %v4546 = vunpack.c.h.b16 %v3956
    %v4547 = vunpack.c.l.b16 %v3957
    %v4548 = vunpack.c.h.b16 %v3957
    %v4549 = vunpack.c.l.b16 %v3958
    %v4550 = vunpack.c.h.b16 %v3958
    %v4551 = vunpack.c.l.b16 %v3959
    %v4552 = vunpack.c.h.b16 %v3959
    %v4553 = vunpack.c.l.b16 %v3960
    %v4554 = vunpack.c.h.b16 %v3960
    %v4555 = vunpack.c.l.b16 %v3961
    %v4556 = vunpack.c.h.b16 %v3961
    %v4557 = vunpack.c.l.b16 %v3962
    %v4558 = vunpack.c.h.b16 %v3962
    %v4559 = vunpack.c.l.b16 %v3963
    %v4560 = vunpack.c.h.b16 %v3963
    %v4561 = vunpack.c.l.b16 %v3964
    %v4562 = vunpack.c.h.b16 %v3964
    %v4563 = vunpack.c.l.b16 %v3965
    %v4564 = vunpack.c.h.b16 %v3965
    %v4565 = vunpack.c.l.b16 %v3966
    %v4566 = vunpack.c.h.b16 %v3966
    %v4567 = vunpack.c.l.b16 %v3967
    %v4568 = vunpack.c.h.b16 %v3967
    %v4569 = vunpack.c.l.b16 %v3968
    %v4570 = vunpack.c.h.b16 %v3968
    %v4571 = vunpack.c.l.b16 %v3969
    %v4572 = vunpack.c.h.b16 %v3969
    %v4573 = vunpack.c.l.b16 %v3970
    %v4574 = vunpack.c.h.b16 %v3970
    %v4575 = vunpack.c.l.b16 %v3971
    %v4576 = vunpack.c.h.b16 %v3971
    %v4577 = vunpack.c.l.b16 %v3972
    %v4578 = vunpack.c.h.b16 %v3972
    %v4579 = vunpack.c.l.b16 %v3973
    %v4580 = vunpack.c.h.b16 %v3973
    %v4581 = vunpack.c.l.b16 %v3974
    %v4582 = vunpack.c.h.b16 %v3974
    %v4583 = vunpack.c.l.b16 %v3975
    %v4584 = vunpack.c.h.b16 %v3975
    %v4585 = vunpack.c.l.b16 %v3976
    %v4586 = vunpack.c.h.b16 %v3976
    %v4587 = vunpack.c.l.b16 %v3977
    %v4588 = vunpack.c.h.b16 %v3977
    %v4589 = vunpack.c.l.b16 %v3978
    %v4590 = vunpack.c.h.b16 %v3978
    %v4591 = vunpack.c.l.b16 %v3979
    %v4592 = vunpack.c.h.b16 %v3979
    %v4593 = vunpack.c.l.b16 %v3980
    %v4594 = vunpack.c.h.b16 %v3980
    %v4595 = vunpack.c.l.b16 %v3981
    %v4596 = vunpack.c.h.b16 %v3981
    %v4597 = vunpack.c.l.b16 %v3982
    %v4598 = vunpack.c.h.b16 %v3982
    %v4599 = vunpack.c.l.b16 %v3983
    %v4600 = vunpack.c.h.b16 %v3983
    %v4601 = vunpack.c.l.b16 %v3984
    %v4602 = vunpack.c.h.b16 %v3984
    %v4603 = vunpack.c.l.b16 %v3985
    %v4604 = vunpack.c.h.b16 %v3985
    %v4605 = vunpack.c.l.b16 %v3986
    %v4606 = vunpack.c.h.b16 %v3986
    %v4607 = vunpack.c.l.b16 %v3987
    %v4608 = vunpack.c.h.b16 %v3987
    %v4609 = vunpack.c.l.b16 %v3988
    %v4610 = vunpack.c.h.b16 %v3988
    %v4611 = vunpack.c.l.b16 %v3989
    %v4612 = vunpack.c.h.b16 %v3989
    %v4613 = vunpack.c.l.b16 %v3990
    %v4614 = vunpack.c.h.b16 %v3990
    %v4615 = vunpack.c.l.b16 %v3991
    %v4616 = vunpack.c.h.b16 %v3991
    %v4617 = vunpack.c.l.b16 %v3992
    %v4618 = vunpack.c.h.b16 %v3992
    %v4619 = vunpack.c.l.b16 %v3993
    %v4620 = vunpack.c.h.b16 %v3993
    %v4621 = vunpack.c.l.b16 %v3994
    %v4622 = vunpack.c.h.b16 %v3994
    %v4623 = vunpack.c.l.b16 %v3995
    %v4624 = vunpack.c.h.b16 %v3995
    %v4625 = vunpack.c.l.b16 %v3996
    %v4626 = vunpack.c.h.b16 %v3996
    %v4627 = vunpack.c.l.b16 %v3997
    %v4628 = vunpack.c.h.b16 %v3997
    %v4629 = vunpack.c.l.b16 %v3998
    %v4630 = vunpack.c.h.b16 %v3998
    %v4631 = vunpack.c.l.b16 %v3999
    %v4632 = vunpack.c.h.b16 %v3999
    %v4633 = vunpack.c.l.b16 %v4000
    %v4634 = vunpack.c.h.b16 %v4000
    %v4635 = vunpack.c.l.b16 %v4001
    %v4636 = vunpack.c.h.b16 %v4001
    %v4637 = vunpack.c.l.b16 %v4002
    %v4638 = vunpack.c.h.b16 %v4002
    %v4639 = vunpack.c.l.b16 %v4003
    %v4640 = vunpack.c.h.b16 %v4003
    %v4641 = vunpack.c.l.b16 %v4004
    %v4642 = vunpack.c.h.b16 %v4004
    %v4643 = vunpack.c.l.b16 %v4005
    %v4644 = vunpack.c.h.b16 %v4005
    %v4645 = vunpack.c.l.b16 %v4006
    %v4646 = vunpack.c.h.b16 %v4006
    %v4647 = vunpack.c.l.b16 %v4007
    %v4648 = vunpack.c.h.b16 %v4007
    %v4649 = vunpack.c.l.b16 %v4008
    %v4650 = vunpack.c.h.b16 %v4008
    %v4651 = vunpack.c.l.b16 %v4009
    %v4652 = vunpack.c.h.b16 %v4009
    %v4653 = vunpack.c.l.b16 %v4010
    %v4654 = vunpack.c.h.b16 %v4010
    %v4655 = vunpack.c.l.b16 %v4011
    %v4656 = vunpack.c.h.b16 %v4011
    %v4657 = vunpack.c.l.b16 %v4012
    %v4658 = vunpack.c.h.b16 %v4012
    %v4659 = vunpack.c.l.b16 %v4013
    %v4660 = vunpack.c.h.b16 %v4013
    %v4661 = vunpack.c.l.b16 %v4014
    %v4662 = vunpack.c.h.b16 %v4014
    %v4663 = vunpack.c.l.b16 %v4015
    %v4664 = vunpack.c.h.b16 %v4015
    %v4665 = vunpack.c.l.b16 %v4016
    %v4666 = vunpack.c.h.b16 %v4016
    %v4667 = vunpack.c.l.b16 %v4017
    %v4668 = vunpack.c.h.b16 %v4017
    %v4669 = vunpack.c.l.b16 %v4018
    %v4670 = vunpack.c.h.b16 %v4018
    %v4671 = vunpack.c.l.b16 %v4019
    %v4672 = vunpack.c.h.b16 %v4019
    %v4673 = vunpack.c.l.b16 %v4020
    %v4674 = vunpack.c.h.b16 %v4020
    %v4675 = vunpack.c.l.b16 %v4021
    %v4676 = vunpack.c.h.b16 %v4021
    %v4677 = vunpack.c.l.b16 %v4022
    %v4678 = vunpack.c.h.b16 %v4022
    %v4679 = vunpack.c.l.b16 %v4023
    %v4680 = vunpack.c.h.b16 %v4023
    %v4681 = vunpack.c.l.b16 %v4024
    %v4682 = vunpack.c.h.b16 %v4024
    %v4683 = vunpack.c.l.b16 %v4025
    %v4684 = vunpack.c.h.b16 %v4025
    %v4685 = vunpack.c.l.b16 %v4026
    %v4686 = vunpack.c.h.b16 %v4026
    %v4687 = vunpack.c.l.b16 %v4027
    %v4688 = vunpack.c.h.b16 %v4027
    %v4689 = vunpack.c.l.b16 %v4028
    %v4690 = vunpack.c.h.b16 %v4028
    %v4691 = vunpack.c.l.b16 %v4029
    %v4692 = vunpack.c.h.b16 %v4029
    %v4693 = vunpack.c.l.b16 %v4030
    %v4694 = vunpack.c.h.b16 %v4030
    %v4695 = vunpack.c.l.b16 %v4031
    %v4696 = vunpack.c.h.b16 %v4031
    %v4697 = vunpack.c.l.b16 %v4032
    %v4698 = vunpack.c.h.b16 %v4032
    %v4699 = vunpack.c.l.b16 %v4033
    %v4700 = vunpack.c.h.b16 %v4033
    %v4701 = vunpack.c.l.b16 %v4034
    %v4702 = vunpack.c.h.b16 %v4034
    %v4703 = vunpack.c.l.b16 %v4035
    %v4704 = vunpack.c.h.b16 %v4035
    %v4705 = vunpack.c.l.b16 %v4036
    %v4706 = vunpack.c.h.b16 %v4036
    %v4707 = vunpack.c.l.b16 %v4037
    %v4708 = vunpack.c.h.b16 %v4037
    %v4709 = vunpack.c.l.b16 %v4038
    %v4710 = vunpack.c.h.b16 %v4038
    %v4711 = vunpack.c.l.b16 %v4039
    %v4712 = vunpack.c.h.b16 %v4039
    %v4713 = vunpack.c.l.b16 %v4040
    %v4714 = vunpack.c.h.b16 %v4040
    %v4715 = vunpack.c.l.b16 %v4041
    %v4716 = vunpack.c.h.b16 %v4041
    %v4717 = vunpack.c.l.b16 %v4042
    %v4718 = vunpack.c.h.b16 %v4042
    %v4719 = vunpack.c.l.b16 %v4043
    %v4720 = vunpack.c.h.b16 %v4043
    %v4721 = vunpack.c.l.b16 %v4044
    %v4722 = vunpack.c.h.b16 %v4044
    %v4723 = vunpack.c.l.b16 %v4045
    %v4724 = vunpack.c.h.b16 %v4045
    %v4725 = vunpack.c.l.b16 %v4046
    %v4726 = vunpack.c.h.b16 %v4046
    %v4727 = vunpack.c.l.b16 %v4047
    %v4728 = vunpack.c.h.b16 %v4047
    %v4729 = vunpack.c.l.b16 %v4048
    %v4730 = vunpack.c.h.b16 %v4048
    %v4731 = vunpack.c.l.b16 %v4049
    %v4732 = vunpack.c.h.b16 %v4049
    %v4733 = vunpack.c.l.b16 %v4050
    %v4734 = vunpack.c.h.b16 %v4050
    %v4735 = vunpack.c.l.b16 %v4051
    %v4736 = vunpack.c.h.b16 %v4051
    %v4737 = vunpack.c.l.b16 %v4052
    %v4738 = vunpack.c.h.b16 %v4052
    %v4739 = vunpack.c.l.b16 %v4053
    %v4740 = vunpack.c.h.b16 %v4053
    %v4741 = vunpack.c.l.b16 %v4054
    %v4742 = vunpack.c.h.b16 %v4054
    %v4743 = vunpack.c.l.b16 %v4055
    %v4744 = vunpack.c.h.b16 %v4055
    %v4745 = vunpack.c.l.b16 %v4056
    %v4746 = vunpack.c.h.b16 %v4056
    %v4747 = vunpack.c.l.b16 %v4057
    %v4748 = vunpack.c.h.b16 %v4057
    %v4749 = vunpack.c.l.b16 %v4058
    %v4750 = vunpack.c.h.b16 %v4058
    %v4751 = vunpack.c.l.b16 %v4059
    %v4752 = vunpack.c.h.b16 %v4059
    %v4753 = vunpack.c.l.b16 %v4060
    %v4754 = vunpack.c.h.b16 %v4060
    %v4755 = vunpack.c.l.b16 %v4061
    %v4756 = vunpack.c.h.b16 %v4061
    %v4757 = vunpack.c.l.b16 %v4062
    %v4758 = vunpack.c.h.b16 %v4062
    %v4759 = vunpack.c.l.b16 %v4063
    %v4760 = vunpack.c.h.b16 %v4063
    %v4761 = vunpack.c.l.b16 %v4064
    %v4762 = vunpack.c.h.b16 %v4064
    %v4763 = vunpack.c.l.b16 %v4065
    %v4764 = vunpack.c.h.b16 %v4065
    %v4765 = vunpack.c.l.b16 %v4066
    %v4766 = vunpack.c.h.b16 %v4066
    %v4767 = vunpack.c.l.b16 %v4067
    %v4768 = vunpack.c.h.b16 %v4067
    %v4769 = vunpack.c.l.b16 %v4068
    %v4770 = vunpack.c.h.b16 %v4068
    %v4771 = vunpack.c.l.b16 %v4069
    %v4772 = vunpack.c.h.b16 %v4069
    %v4773 = vunpack.c.l.b16 %v4070
    %v4774 = vunpack.c.h.b16 %v4070
    %v4775 = vunpack.c.l.b16 %v4071
    %v4776 = vunpack.c.h.b16 %v4071
    %v4777 = vunpack.c.l.b16 %v4072
    %v4778 = vunpack.c.h.b16 %v4072
    %v4779 = vunpack.c.l.b16 %v4073
    %v4780 = vunpack.c.h.b16 %v4073
    %v4781 = vunpack.c.l.b16 %v4074
    %v4782 = vunpack.c.h.b16 %v4074
    %v4783 = vunpack.c.l.b16 %v4075
    %v4784 = vunpack.c.h.b16 %v4075
    %v4785 = vunpack.c.l.b16 %v4076
    %v4786 = vunpack.c.h.b16 %v4076
    %v4787 = vunpack.c.l.b16 %v4077
    %v4788 = vunpack.c.h.b16 %v4077
    %v4789 = vunpack.c.l.b16 %v4078
    %v4790 = vunpack.c.h.b16 %v4078
    %v4791 = vunpack.c.l.b16 %v4079
    %v4792 = vunpack.c.h.b16 %v4079
    %v4793 = vunpack.c.l.b16 %v4080
    %v4794 = vunpack.c.h.b16 %v4080
    %v4795 = vunpack.c.l.b16 %v4081
    %v4796 = vunpack.c.h.b16 %v4081
    %v4797 = vunpack.c.l.b16 %v4082
    %v4798 = vunpack.c.h.b16 %v4082
    %v4799 = vunpack.c.l.b16 %v4083
    %v4800 = vunpack.c.h.b16 %v4083
    %v4801 = vunpack.c.l.b16 %v4084
    %v4802 = vunpack.c.h.b16 %v4084
    %v4803 = vunpack.c.l.b16 %v4085
    %v4804 = vunpack.c.h.b16 %v4085
    %v4805 = vunpack.c.l.b16 %v4086
    %v4806 = vunpack.c.h.b16 %v4086
    %v4807 = vunpack.c.l.b16 %v4087
    %v4808 = vunpack.c.h.b16 %v4087
    %v4809 = vunpack.c.l.b16 %v4088
    %v4810 = vunpack.c.h.b16 %v4088
    %v4811 = vunpack.c.l.b16 %v4089
    %v4812 = vunpack.c.h.b16 %v4089
    %v4813 = vunpack.c.l.b16 %v4090
    %v4814 = vunpack.c.h.b16 %v4090
    %v4815 = vunpack.c.l.b16 %v4091
    %v4816 = vunpack.c.h.b16 %v4091
    %v4817 = vunpack.c.l.b16 %v4092
    %v4818 = vunpack.c.h.b16 %v4092
    %v4819 = vunpack.c.l.b16 %v4093
    %v4820 = vunpack.c.h.b16 %v4093
    %v4821 = vunpack.c.l.b16 %v4094
    %v4822 = vunpack.c.h.b16 %v4094
    %v4823 = vunpack.c.l.b16 %v4095
    %v4824 = vunpack.c.h.b16 %v4095
    %v4825 = vunpack.c.l.b16 %v4096
    %v4826 = vunpack.c.h.b16 %v4096
    %v4827 = vunpack.c.l.b16 %v4097
    %v4828 = vunpack.c.h.b16 %v4097
    %v4829 = vunpack.c.l.b16 %v4098
    %v4830 = vunpack.c.h.b16 %v4098
    %v4831 = vunpack.c.l.b16 %v4099
    %v4832 = vunpack.c.h.b16 %v4099
    %v4833 = vunpack.c.l.b16 %v4100
    %v4834 = vunpack.c.h.b16 %v4100
    %v4835 = vunpack.c.l.b16 %v4101
    %v4836 = vunpack.c.h.b16 %v4101
    %v4837 = vunpack.c.l.b16 %v4102
    %v4838 = vunpack.c.h.b16 %v4102
    %v4839 = vunpack.c.l.b16 %v4103
    %v4840 = vunpack.c.h.b16 %v4103
    %v4841 = vunpack.c.l.b16 %v4104
    %v4842 = vunpack.c.h.b16 %v4104
    %v4843 = vunpack.c.l.b16 %v4105
    %v4844 = vunpack.c.h.b16 %v4105
    %v4845 = vunpack.c.l.b16 %v4106
    %v4846 = vunpack.c.h.b16 %v4106
    %v4847 = vunpack.c.l.b16 %v4107
    %v4848 = vunpack.c.h.b16 %v4107
    %v4849 = vunpack.c.l.b16 %v4108
    %v4850 = vunpack.c.h.b16 %v4108
    %v4851 = vunpack.c.l.b16 %v4109
    %v4852 = vunpack.c.h.b16 %v4109
    %v4853 = vunpack.c.l.b16 %v4110
    %v4854 = vunpack.c.h.b16 %v4110
    %v4855 = vunpack.c.l.b16 %v4111
    %v4856 = vunpack.c.h.b16 %v4111
    %v4857 = vunpack.c.l.b16 %v4112
    %v4858 = vunpack.c.h.b16 %v4112
    %v4859 = vunpack.c.l.b16 %v4113
    %v4860 = vunpack.c.h.b16 %v4113
    %v4861 = vunpack.c.l.b16 %v4114
    %v4862 = vunpack.c.h.b16 %v4114
    %v4863 = vunpack.c.l.b16 %v4115
    %v4864 = vunpack.c.h.b16 %v4115
    %v4865 = vunpack.c.l.b16 %v4116
    %v4866 = vunpack.c.h.b16 %v4116
    %v4867 = vunpack.c.l.b16 %v4117
    %v4868 = vunpack.c.h.b16 %v4117
    %v4869 = vunpack.c.l.b16 %v4118
    %v4870 = vunpack.c.h.b16 %v4118
    %v4871 = vunpack.c.l.b16 %v4119
    %v4872 = vunpack.c.h.b16 %v4119
    %v4873 = vunpack.c.l.b16 %v4120
    %v4874 = vunpack.c.h.b16 %v4120
    %v4875 = vunpack.c.l.b16 %v4121
    %v4876 = vunpack.c.h.b16 %v4121
    %v4877 = vunpack.c.l.b16 %v4122
    %v4878 = vunpack.c.h.b16 %v4122
    %v4879 = vunpack.c.l.b16 %v4123
    %v4880 = vunpack.c.h.b16 %v4123
    %v4881 = vunpack.c.l.b16 %v4124
    %v4882 = vunpack.c.h.b16 %v4124
    %v4883 = vunpack.c.l.b16 %v4125
    %v4884 = vunpack.c.h.b16 %v4125
    %v4885 = vunpack.c.l.b16 %v4126
    %v4886 = vunpack.c.h.b16 %v4126
    %v4887 = vunpack.c.l.b16 %v4127
    %v4888 = vunpack.c.h.b16 %v4127
    %v4889 = vunpack.c.l.b16 %v4128
    %v4890 = vunpack.c.h.b16 %v4128
    %v4891 = vunpack.c.l.b16 %v4129
    %v4892 = vunpack.c.h.b16 %v4129
    %v4893 = vunpack.c.l.b16 %v4130
    %v4894 = vunpack.c.h.b16 %v4130
    %v4895 = vunpack.c.l.b16 %v4131
    %v4896 = vunpack.c.h.b16 %v4131
    %v4897 = vunpack.c.l.b16 %v4132
    %v4898 = vunpack.c.h.b16 %v4132
    %v4899 = vunpack.c.l.b16 %v4133
    %v4900 = vunpack.c.h.b16 %v4133
    %v4901 = vunpack.c.l.b16 %v4134
    %v4902 = vunpack.c.h.b16 %v4134
    %v4903 = vpack.c.b16 %v4399, %v4391
    %v4904 = vpack.c.b16 %v4400, %v4392
    %v4905 = vpack.c.b16 %v4401, %v4393
    %v4906 = vpack.c.b16 %v4402, %v4394
    %v4907 = vpack.c.b16 %v4403, %v4395
    %v4908 = vpack.c.b16 %v4404, %v4396
    %v4909 = vpack.c.b16 %v4405, %v4397
    %v4910 = vpack.c.b16 %v4406, %v4398
    %v4911 = vpack.c.b16 %v4415, %v4407
    %v4912 = vpack.c.b16 %v4416, %v4408
    %v4913 = vpack.c.b16 %v4417, %v4409
    %v4914 = vpack.c.b16 %v4418, %v4410
    %v4915 = vpack.c.b16 %v4419, %v4411
    %v4916 = vpack.c.b16 %v4420, %v4412
    %v4917 = vpack.c.b16 %v4421, %v4413
    %v4918 = vpack.c.b16 %v4422, %v4414
    %v4919 = vpack.c.b16 %v4431, %v4423
    %v4920 = vpack.c.b16 %v4432, %v4424
    %v4921 = vpack.c.b16 %v4433, %v4425
    %v4922 = vpack.c.b16 %v4434, %v4426
    %v4923 = vpack.c.b16 %v4435, %v4427
    %v4924 = vpack.c.b16 %v4436, %v4428
    %v4925 = vpack.c.b16 %v4437, %v4429
    %v4926 = vpack.c.b16 %v4438, %v4430
    %v4927 = vpack.c.b16 %v4447, %v4439
    %v4928 = vpack.c.b16 %v4448, %v4440
    %v4929 = vpack.c.b16 %v4449, %v4441
    %v4930 = vpack.c.b16 %v4450, %v4442
    %v4931 = vpack.c.b16 %v4451, %v4443
    %v4932 = vpack.c.b16 %v4452, %v4444
    %v4933 = vpack.c.b16 %v4453, %v4445
    %v4934 = vpack.c.b16 %v4454, %v4446
    %v4935 = vpack.c.b16 %v4463, %v4455
    %v4936 = vpack.c.b16 %v4464, %v4456
    %v4937 = vpack.c.b16 %v4465, %v4457
    %v4938 = vpack.c.b16 %v4466, %v4458
    %v4939 = vpack.c.b16 %v4467, %v4459
    %v4940 = vpack.c.b16 %v4468, %v4460
    %v4941 = vpack.c.b16 %v4469, %v4461
    %v4942 = vpack.c.b16 %v4470, %v4462
    %v4943 = vpack.c.b16 %v4479, %v4471
    %v4944 = vpack.c.b16 %v4480, %v4472
    %v4945 = vpack.c.b16 %v4481, %v4473
    %v4946 = vpack.c.b16 %v4482, %v4474
    %v4947 = vpack.c.b16 %v4483, %v4475
    %v4948 = vpack.c.b16 %v4484, %v4476
    %v4949 = vpack.c.b16 %v4485, %v4477
    %v4950 = vpack.c.b16 %v4486, %v4478
    %v4951 = vpack.c.b16 %v4495, %v4487
    %v4952 = vpack.c.b16 %v4496, %v4488
    %v4953 = vpack.c.b16 %v4497, %v4489
    %v4954 = vpack.c.b16 %v4498, %v4490
    %v4955 = vpack.c.b16 %v4499, %v4491
    %v4956 = vpack.c.b16 %v4500, %v4492
    %v4957 = vpack.c.b16 %v4501, %v4493
    %v4958 = vpack.c.b16 %v4502, %v4494
    %v4959 = vpack.c.b16 %v4511, %v4503
    %v4960 = vpack.c.b16 %v4512, %v4504
    %v4961 = vpack.c.b16 %v4513, %v4505
    %v4962 = vpack.c.b16 %v4514, %v4506
    %v4963 = vpack.c.b16 %v4515, %v4507
    %v4964 = vpack.c.b16 %v4516, %v4508
    %v4965 = vpack.c.b16 %v4517, %v4509
    %v4966 = vpack.c.b16 %v4518, %v4510
    %v4967 = vpack.c.b16 %v4527, %v4519
    %v4968 = vpack.c.b16 %v4528, %v4520
    %v4969 = vpack.c.b16 %v4529, %v4521
    %v4970 = vpack.c.b16 %v4530, %v4522
    %v4971 = vpack.c.b16 %v4531, %v4523
    %v4972 = vpack.c.b16 %v4532, %v4524
    %v4973 = vpack.c.b16 %v4533, %v4525
    %v4974 = vpack.c.b16 %v4534, %v4526
    %v4975 = vpack.c.b16 %v4543, %v4535
    %v4976 = vpack.c.b16 %v4544, %v4536
    %v4977 = vpack.c.b16 %v4545, %v4537
    %v4978 = vpack.c.b16 %v4546, %v4538
    %v4979 = vpack.c.b16 %v4547, %v4539
    %v4980 = vpack.c.b16 %v4548, %v4540
    %v4981 = vpack.c.b16 %v4549, %v4541
    %v4982 = vpack.c.b16 %v4550, %v4542
    %v4983 = vpack.c.b16 %v4559, %v4551
    %v4984 = vpack.c.b16 %v4560, %v4552
    %v4985 = vpack.c.b16 %v4561, %v4553
    %v4986 = vpack.c.b16 %v4562, %v4554
    %v4987 = vpack.c.b16 %v4563, %v4555
    %v4988 = vpack.c.b16 %v4564, %v4556
    %v4989 = vpack.c.b16 %v4565, %v4557
    %v4990 = vpack.c.b16 %v4566, %v4558
    %v4991 = vpack.c.b16 %v4575, %v4567
    %v4992 = vpack.c.b16 %v4576, %v4568
    %v4993 = vpack.c.b16 %v4577, %v4569
    %v4994 = vpack.c.b16 %v4578, %v4570
    %v4995 = vpack.c.b16 %v4579, %v4571
    %v4996 = vpack.c.b16 %v4580, %v4572
    %v4997 = vpack.c.b16 %v4581, %v4573
    %v4998 = vpack.c.b16 %v4582, %v4574
    %v4999 = vpack.c.b16 %v4591, %v4583
    %v5000 = vpack.c.b16 %v4592, %v4584
    %v5001 = vpack.c.b16 %v4593, %v4585
    %v5002 = vpack.c.b16 %v4594, %v4586
    %v5003 = vpack.c.b16 %v4595, %v4587
    %v5004 = vpack.c.b16 %v4596, %v4588
    %v5005 = vpack.c.b16 %v4597, %v4589
    %v5006 = vpack.c.b16 %v4598, %v4590
    %v5007 = vpack.c.b16 %v4607, %v4599
    %v5008 = vpack.c.b16 %v4608, %v4600
    %v5009 = vpack.c.b16 %v4609, %v4601
    %v5010 = vpack.c.b16 %v4610, %v4602
    %v5011 = vpack.c.b16 %v4611, %v4603
    %v5012 = vpack.c.b16 %v4612, %v4604
    %v5013 = vpack.c.b16 %v4613, %v4605
    %v5014 = vpack.c.b16 %v4614, %v4606
    %v5015 = vpack.c.b16 %v4623, %v4615
    %v5016 = vpack.c.b16 %v4624, %v4616
    %v5017 = vpack.c.b16 %v4625, %v4617
    %v5018 = vpack.c.b16 %v4626, %v4618
    %v5019 = vpack.c.b16 %v4627, %v4619
    %v5020 = vpack.c.b16 %v4628, %v4620
    %v5021 = vpack.c.b16 %v4629, %v4621
    %v5022 = vpack.c.b16 %v4630, %v4622
    %v5023 = vpack.c.b16 %v4639, %v4631
    %v5024 = vpack.c.b16 %v4640, %v4632
    %v5025 = vpack.c.b16 %v4641, %v4633
    %v5026 = vpack.c.b16 %v4642, %v4634
    %v5027 = vpack.c.b16 %v4643, %v4635
    %v5028 = vpack.c.b16 %v4644, %v4636
    %v5029 = vpack.c.b16 %v4645, %v4637
    %v5030 = vpack.c.b16 %v4646, %v4638
    %v5031 = vpack.c.b16 %v4655, %v4647
    %v5032 = vpack.c.b16 %v4656, %v4648
    %v5033 = vpack.c.b16 %v4657, %v4649
    %v5034 = vpack.c.b16 %v4658, %v4650
    %v5035 = vpack.c.b16 %v4659, %v4651
    %v5036 = vpack.c.b16 %v4660, %v4652
    %v5037 = vpack.c.b16 %v4661, %v4653
    %v5038 = vpack.c.b16 %v4662, %v4654
    %v5039 = vpack.c.b16 %v4671, %v4663
    %v5040 = vpack.c.b16 %v4672, %v4664
    %v5041 = vpack.c.b16 %v4673, %v4665
    %v5042 = vpack.c.b16 %v4674, %v4666
    %v5043 = vpack.c.b16 %v4675, %v4667
    %v5044 = vpack.c.b16 %v4676, %v4668
    %v5045 = vpack.c.b16 %v4677, %v4669
    %v5046 = vpack.c.b16 %v4678, %v4670
    %v5047 = vpack.c.b16 %v4687, %v4679
    %v5048 = vpack.c.b16 %v4688, %v4680
    %v5049 = vpack.c.b16 %v4689, %v4681
    %v5050 = vpack.c.b16 %v4690, %v4682
    %v5051 = vpack.c.b16 %v4691, %v4683
    %v5052 = vpack.c.b16 %v4692, %v4684
    %v5053 = vpack.c.b16 %v4693, %v4685
    %v5054 = vpack.c.b16 %v4694, %v4686
    %v5055 = vpack.c.b16 %v4703, %v4695
    %v5056 = vpack.c.b16 %v4704, %v4696
    %v5057 = vpack.c.b16 %v4705, %v4697
    %v5058 = vpack.c.b16 %v4706, %v4698
    %v5059 = vpack.c.b16 %v4707, %v4699
    %v5060 = vpack.c.b16 %v4708, %v4700
    %v5061 = vpack.c.b16 %v4709, %v4701
    %v5062 = vpack.c.b16 %v4710, %v4702
    %v5063 = vpack.c.b16 %v4719, %v4711
    %v5064 = vpack.c.b16 %v4720, %v4712
    %v5065 = vpack.c.b16 %v4721, %v4713
    %v5066 = vpack.c.b16 %v4722, %v4714
    %v5067 = vpack.c.b16 %v4723, %v4715
    %v5068 = vpack.c.b16 %v4724, %v4716
    %v5069 = vpack.c.b16 %v4725, %v4717
    %v5070 = vpack.c.b16 %v4726, %v4718
    %v5071 = vpack.c.b16 %v4735, %v4727
    %v5072 = vpack.c.b16 %v4736, %v4728
    %v5073 = vpack.c.b16 %v4737, %v4729
    %v5074 = vpack.c.b16 %v4738, %v4730
    %v5075 = vpack.c.b16 %v4739, %v4731
    %v5076 = vpack.c.b16 %v4740, %v4732
    %v5077 = vpack.c.b16 %v4741, %v4733
    %v5078 = vpack.c.b16 %v4742, %v4734
    %v5079 = vpack.c.b16 %v4751, %v4743
    %v5080 = vpack.c.b16 %v4752, %v4744
    %v5081 = vpack.c.b16 %v4753, %v4745
    %v5082 = vpack.c.b16 %v4754, %v4746
    %v5083 = vpack.c.b16 %v4755, %v4747
    %v5084 = vpack.c.b16 %v4756, %v4748
    %v5085 = vpack.c.b16 %v4757, %v4749
    %v5086 = vpack.c.b16 %v4758, %v4750
    %v5087 = vpack.c.b16 %v4767, %v4759
    %v5088 = vpack.c.b16 %v4768, %v4760
    %v5089 = vpack.c.b16 %v4769, %v4761
    %v5090 = vpack.c.b16 %v4770, %v4762
    %v5091 = vpack.c.b16 %v4771, %v4763
    %v5092 = vpack.c.b16 %v4772, %v4764
    %v5093 = vpack.c.b16 %v4773, %v4765
    %v5094 = vpack.c.b16 %v4774, %v4766
    %v5095 = vpack.c.b16 %v4783, %v4775
    %v5096 = vpack.c.b16 %v4784, %v4776
    %v5097 = vpack.c.b16 %v4785, %v4777
    %v5098 = vpack.c.b16 %v4786, %v4778
    %v5099 = vpack.c.b16 %v4787, %v4779
    %v5100 = vpack.c.b16 %v4788, %v4780
    %v5101 = vpack.c.b16 %v4789, %v4781
    %v5102 = vpack.c.b16 %v4790, %v4782
    %v5103 = vpack.c.b16 %v4799, %v4791
    %v5104 = vpack.c.b16 %v4800, %v4792
    %v5105 = vpack.c.b16 %v4801, %v4793
    %v5106 = vpack.c.b16 %v4802, %v4794
    %v5107 = vpack.c.b16 %v4803, %v4795
    %v5108 = vpack.c.b16 %v4804, %v4796
    %v5109 = vpack.c.b16 %v4805, %v4797
    %v5110 = vpack.c.b16 %v4806, %v4798
    %v5111 = vpack.c.b16 %v4815, %v4807
    %v5112 = vpack.c.b16 %v4816, %v4808
    %v5113 = vpack.c.b16 %v4817, %v4809
    %v5114 = vpack.c.b16 %v4818, %v4810
    %v5115 = vpack.c.b16 %v4819, %v4811
    %v5116 = vpack.c.b16 %v4820, %v4812
    %v5117 = vpack.c.b16 %v4821, %v4813
    %v5118 = vpack.c.b16 %v4822, %v4814
    %v5119 = vpack.c.b16 %v4831, %v4823
    %v5120 = vpack.c.b16 %v4832, %v4824
    %v5121 = vpack.c.b16 %v4833, %v4825
    %v5122 = vpack.c.b16 %v4834, %v4826
    %v5123 = vpack.c.b16 %v4835, %v4827
    %v5124 = vpack.c.b16 %v4836, %v4828
    %v5125 = vpack.c.b16 %v4837, %v4829
    %v5126 = vpack.c.b16 %v4838, %v4830
    %v5127 = vpack.c.b16 %v4847, %v4839
    %v5128 = vpack.c.b16 %v4848, %v4840
    %v5129 = vpack.c.b16 %v4849, %v4841
    %v5130 = vpack.c.b16 %v4850, %v4842
    %v5131 = vpack.c.b16 %v4851, %v4843
    %v5132 = vpack.c.b16 %v4852, %v4844
    %v5133 = vpack.c.b16 %v4853, %v4845
    %v5134 = vpack.c.b16 %v4854, %v4846
    %v5135 = vpack.c.b16 %v4863, %v4855
    %v5136 = vpack.c.b16 %v4864, %v4856
    %v5137 = vpack.c.b16 %v4865, %v4857
    %v5138 = vpack.c.b16 %v4866, %v4858
    %v5139 = vpack.c.b16 %v4867, %v4859
    %v5140 = vpack.c.b16 %v4868, %v4860
    %v5141 = vpack.c.b16 %v4869, %v4861
    %v5142 = vpack.c.b16 %v4870, %v4862
    %v5143 = vpack.c.b16 %v4879, %v4871
    %v5144 = vpack.c.b16 %v4880, %v4872
    %v5145 = vpack.c.b16 %v4881, %v4873
    %v5146 = vpack.c.b16 %v4882, %v4874
    %v5147 = vpack.c.b16 %v4883, %v4875
    %v5148 = vpack.c.b16 %v4884, %v4876
    %v5149 = vpack.c.b16 %v4885, %v4877
    %v5150 = vpack.c.b16 %v4886, %v4878
    %v5151 = vpack.c.b16 %v4895, %v4887
    %v5152 = vpack.c.b16 %v4896, %v4888
    %v5153 = vpack.c.b16 %v4897, %v4889
    %v5154 = vpack.c.b16 %v4898, %v4890
    %v5155 = vpack.c.b16 %v4899, %v4891
    %v5156 = vpack.c.b16 %v4900, %v4892
    %v5157 = vpack.c.b16 %v4901, %v4893
    %v5158 = vpack.c.b16 %v4902, %v4894
    %5415 = vmatpush.bf16.msra.mxu0 %v4959
    %5416 = vmatpush.bf16.msra.mxu0 %v4951
    %5417 = vmatpush.bf16.msra.mxu0 %v4943
    %5418 = vmatpush.bf16.msra.mxu0 %v4935
    %5419 = vmatpush.bf16.msra.mxu0 %v4927
    %5420 = vmatpush.bf16.msra.mxu0 %v4919
    %5421 = vmatpush.bf16.msra.mxu0 %v4911
    %5422 = vmatpush.bf16.msra.mxu0 %v4903
    %5423 = vmatmul.bf16.gmra.mxu0 %v1871
    %v5424 = vpop.f32.mrf.mxu0
    %v5425 = vadd.f32 0.0, %v5424
    %v5426 = vpop.f32.mrf.mxu0
    %5427 = vdwg.mxu0
    %5428 = vmatpush.bf16.msra.mxu0 %v5023
    %5429 = vmatpush.bf16.msra.mxu0 %v5015
    %5430 = vmatpush.bf16.msra.mxu0 %v5007
    %5431 = vmatpush.bf16.msra.mxu0 %v4999
    %5432 = vmatpush.bf16.msra.mxu0 %v4991
    %5433 = vmatpush.bf16.msra.mxu0 %v4983
    %5434 = vmatpush.bf16.msra.mxu0 %v4975
    %5435 = vmatpush.bf16.msra.mxu0 %v4967
    %5436 = vmatmul.bf16.gmra.mxu0 %v1872
    %v5437 = vpop.f32.mrf.mxu0
    %v5438 = vadd.f32 %v5425, %v5437
    %v5439 = vpop.f32.mrf.mxu0
    %5440 = vdwg.mxu0
    %5441 = vmatpush.bf16.msra.mxu0 %v5087
    %5442 = vmatpush.bf16.msra.mxu0 %v5079
    %5443 = vmatpush.bf16.msra.mxu0 %v5071
    %5444 = vmatpush.bf16.msra.mxu0 %v5063
    %5445 = vmatpush.bf16.msra.mxu0 %v5055
    %5446 = vmatpush.bf16.msra.mxu0 %v5047
    %5447 = vmatpush.bf16.msra.mxu0 %v5039
    %5448 = vmatpush.bf16.msra.mxu0 %v5031
    %5449 = vmatmul.bf16.gmra.mxu0 %v1873
    %v5450 = vpop.f32.mrf.mxu0
    %v5451 = vadd.f32 %v5438, %v5450
    %v5452 = vpop.f32.mrf.mxu0
    %5453 = vdwg.mxu0
    %5454 = vmatpush.bf16.msra.mxu0 %v5151
    %5455 = vmatpush.bf16.msra.mxu0 %v5143
    %5456 = vmatpush.bf16.msra.mxu0 %v5135
    %5457 = vmatpush.bf16.msra.mxu0 %v5127
    %5458 = vmatpush.bf16.msra.mxu0 %v5119
    %5459 = vmatpush.bf16.msra.mxu0 %v5111
    %5460 = vmatpush.bf16.msra.mxu0 %v5103
    %5461 = vmatpush.bf16.msra.mxu0 %v5095
    %5462 = vmatmul.bf16.gmra.mxu0 %v1874
    %v5463 = vpop.f32.mrf.mxu0
    %v5464 = vadd.f32 %v5451, %v5463
    %v5465 = vpop.f32.mrf.mxu0
    %5466 = vdwg.mxu0
    %5467 = vmatpush.bf16.msra.mxu0 %v4960
    %5468 = vmatpush.bf16.msra.mxu0 %v4952
    %5469 = vmatpush.bf16.msra.mxu0 %v4944
    %5470 = vmatpush.bf16.msra.mxu0 %v4936
    %5471 = vmatpush.bf16.msra.mxu0 %v4928
    %5472 = vmatpush.bf16.msra.mxu0 %v4920
    %5473 = vmatpush.bf16.msra.mxu0 %v4912
    %5474 = vmatpush.bf16.msra.mxu0 %v4904
    %5475 = vmatmul.bf16.gmra.mxu0 %v1871
    %v5476 = vpop.f32.mrf.mxu0
    %v5477 = vadd.f32 0.0, %v5476
    %v5478 = vpop.f32.mrf.mxu0
    %5479 = vdwg.mxu0
    %5480 = vmatpush.bf16.msra.mxu0 %v5024
    %5481 = vmatpush.bf16.msra.mxu0 %v5016
    %5482 = vmatpush.bf16.msra.mxu0 %v5008
    %5483 = vmatpush.bf16.msra.mxu0 %v5000
    %5484 = vmatpush.bf16.msra.mxu0 %v4992
    %5485 = vmatpush.bf16.msra.mxu0 %v4984
    %5486 = vmatpush.bf16.msra.mxu0 %v4976
    %5487 = vmatpush.bf16.msra.mxu0 %v4968
    %5488 = vmatmul.bf16.gmra.mxu0 %v1872
    %v5489 = vpop.f32.mrf.mxu0
    %v5490 = vadd.f32 %v5477, %v5489
    %v5491 = vpop.f32.mrf.mxu0
    %5492 = vdwg.mxu0
    %5493 = vmatpush.bf16.msra.mxu0 %v5088
    %5494 = vmatpush.bf16.msra.mxu0 %v5080
    %5495 = vmatpush.bf16.msra.mxu0 %v5072
    %5496 = vmatpush.bf16.msra.mxu0 %v5064
    %5497 = vmatpush.bf16.msra.mxu0 %v5056
    %5498 = vmatpush.bf16.msra.mxu0 %v5048
    %5499 = vmatpush.bf16.msra.mxu0 %v5040
    %5500 = vmatpush.bf16.msra.mxu0 %v5032
    %5501 = vmatmul.bf16.gmra.mxu0 %v1873
    %v5502 = vpop.f32.mrf.mxu0
    %v5503 = vadd.f32 %v5490, %v5502
    %v5504 = vpop.f32.mrf.mxu0
    %5505 = vdwg.mxu0
    %5506 = vmatpush.bf16.msra.mxu0 %v5152
    %5507 = vmatpush.bf16.msra.mxu0 %v5144
    %5508 = vmatpush.bf16.msra.mxu0 %v5136
    %5509 = vmatpush.bf16.msra.mxu0 %v5128
    %5510 = vmatpush.bf16.msra.mxu0 %v5120
    %5511 = vmatpush.bf16.msra.mxu0 %v5112
    %5512 = vmatpush.bf16.msra.mxu0 %v5104
    %5513 = vmatpush.bf16.msra.mxu0 %v5096
    %5514 = vmatmul.bf16.gmra.mxu0 %v1874
    %v5515 = vpop.f32.mrf.mxu0
    %v5516 = vadd.f32 %v5503, %v5515
    %v5517 = vpop.f32.mrf.mxu0
    %5518 = vdwg.mxu0
    %5519 = vmatpush.bf16.msra.mxu0 %v4961
    %5520 = vmatpush.bf16.msra.mxu0 %v4953
    %5521 = vmatpush.bf16.msra.mxu0 %v4945
    %5522 = vmatpush.bf16.msra.mxu0 %v4937
    %5523 = vmatpush.bf16.msra.mxu0 %v4929
    %5524 = vmatpush.bf16.msra.mxu0 %v4921
    %5525 = vmatpush.bf16.msra.mxu0 %v4913
    %5526 = vmatpush.bf16.msra.mxu0 %v4905
    %5527 = vmatmul.bf16.gmra.mxu0 %v1871
    %v5528 = vpop.f32.mrf.mxu0
    %v5529 = vadd.f32 0.0, %v5528
    %v5530 = vpop.f32.mrf.mxu0
    %5531 = vdwg.mxu0
    %5532 = vmatpush.bf16.msra.mxu0 %v5025
    %5533 = vmatpush.bf16.msra.mxu0 %v5017
    %5534 = vmatpush.bf16.msra.mxu0 %v5009
    %5535 = vmatpush.bf16.msra.mxu0 %v5001
    %5536 = vmatpush.bf16.msra.mxu0 %v4993
    %5537 = vmatpush.bf16.msra.mxu0 %v4985
    %5538 = vmatpush.bf16.msra.mxu0 %v4977
    %5539 = vmatpush.bf16.msra.mxu0 %v4969
    %5540 = vmatmul.bf16.gmra.mxu0 %v1872
    %v5541 = vpop.f32.mrf.mxu0
    %v5542 = vadd.f32 %v5529, %v5541
    %v5543 = vpop.f32.mrf.mxu0
    %5544 = vdwg.mxu0
    %5545 = vmatpush.bf16.msra.mxu0 %v5089
    %5546 = vmatpush.bf16.msra.mxu0 %v5081
    %5547 = vmatpush.bf16.msra.mxu0 %v5073
    %5548 = vmatpush.bf16.msra.mxu0 %v5065
    %5549 = vmatpush.bf16.msra.mxu0 %v5057
    %5550 = vmatpush.bf16.msra.mxu0 %v5049
    %5551 = vmatpush.bf16.msra.mxu0 %v5041
    %5552 = vmatpush.bf16.msra.mxu0 %v5033
    %5553 = vmatmul.bf16.gmra.mxu0 %v1873
    %v5554 = vpop.f32.mrf.mxu0
    %v5555 = vadd.f32 %v5542, %v5554
    %v5556 = vpop.f32.mrf.mxu0
    %5557 = vdwg.mxu0
    %5558 = vmatpush.bf16.msra.mxu0 %v5153
    %5559 = vmatpush.bf16.msra.mxu0 %v5145
    %5560 = vmatpush.bf16.msra.mxu0 %v5137
    %5561 = vmatpush.bf16.msra.mxu0 %v5129
    %5562 = vmatpush.bf16.msra.mxu0 %v5121
    %5563 = vmatpush.bf16.msra.mxu0 %v5113
    %5564 = vmatpush.bf16.msra.mxu0 %v5105
    %5565 = vmatpush.bf16.msra.mxu0 %v5097
    %5566 = vmatmul.bf16.gmra.mxu0 %v1874
    %v5567 = vpop.f32.mrf.mxu0
    %v5568 = vadd.f32 %v5555, %v5567
    %v5569 = vpop.f32.mrf.mxu0
    %5570 = vdwg.mxu0
    %5571 = vmatpush.bf16.msra.mxu0 %v4962
    %5572 = vmatpush.bf16.msra.mxu0 %v4954
    %5573 = vmatpush.bf16.msra.mxu0 %v4946
    %5574 = vmatpush.bf16.msra.mxu0 %v4938
    %5575 = vmatpush.bf16.msra.mxu0 %v4930
    %5576 = vmatpush.bf16.msra.mxu0 %v4922
    %5577 = vmatpush.bf16.msra.mxu0 %v4914
    %5578 = vmatpush.bf16.msra.mxu0 %v4906
    %5579 = vmatmul.bf16.gmra.mxu0 %v1871
    %v5580 = vpop.f32.mrf.mxu0
    %v5581 = vadd.f32 0.0, %v5580
    %v5582 = vpop.f32.mrf.mxu0
    %5583 = vdwg.mxu0
    %5584 = vmatpush.bf16.msra.mxu0 %v5026
    %5585 = vmatpush.bf16.msra.mxu0 %v5018
    %5586 = vmatpush.bf16.msra.mxu0 %v5010
    %5587 = vmatpush.bf16.msra.mxu0 %v5002
    %5588 = vmatpush.bf16.msra.mxu0 %v4994
    %5589 = vmatpush.bf16.msra.mxu0 %v4986
    %5590 = vmatpush.bf16.msra.mxu0 %v4978
    %5591 = vmatpush.bf16.msra.mxu0 %v4970
    %5592 = vmatmul.bf16.gmra.mxu0 %v1872
    %v5593 = vpop.f32.mrf.mxu0
    %v5594 = vadd.f32 %v5581, %v5593
    %v5595 = vpop.f32.mrf.mxu0
    %5596 = vdwg.mxu0
    %5597 = vmatpush.bf16.msra.mxu0 %v5090
    %5598 = vmatpush.bf16.msra.mxu0 %v5082
    %5599 = vmatpush.bf16.msra.mxu0 %v5074
    %5600 = vmatpush.bf16.msra.mxu0 %v5066
    %5601 = vmatpush.bf16.msra.mxu0 %v5058
    %5602 = vmatpush.bf16.msra.mxu0 %v5050
    %5603 = vmatpush.bf16.msra.mxu0 %v5042
    %5604 = vmatpush.bf16.msra.mxu0 %v5034
    %5605 = vmatmul.bf16.gmra.mxu0 %v1873
    %v5606 = vpop.f32.mrf.mxu0
    %v5607 = vadd.f32 %v5594, %v5606
    %v5608 = vpop.f32.mrf.mxu0
    %5609 = vdwg.mxu0
    %5610 = vmatpush.bf16.msra.mxu0 %v5154
    %5611 = vmatpush.bf16.msra.mxu0 %v5146
    %5612 = vmatpush.bf16.msra.mxu0 %v5138
    %5613 = vmatpush.bf16.msra.mxu0 %v5130
    %5614 = vmatpush.bf16.msra.mxu0 %v5122
    %5615 = vmatpush.bf16.msra.mxu0 %v5114
    %5616 = vmatpush.bf16.msra.mxu0 %v5106
    %5617 = vmatpush.bf16.msra.mxu0 %v5098
    %5618 = vmatmul.bf16.gmra.mxu0 %v1874
    %v5619 = vpop.f32.mrf.mxu0
    %v5620 = vadd.f32 %v5607, %v5619
    %v5621 = vpop.f32.mrf.mxu0
    %5622 = vdwg.mxu0
    %5623 = vmatpush.bf16.msra.mxu0 %v4963
    %5624 = vmatpush.bf16.msra.mxu0 %v4955
    %5625 = vmatpush.bf16.msra.mxu0 %v4947
    %5626 = vmatpush.bf16.msra.mxu0 %v4939
    %5627 = vmatpush.bf16.msra.mxu0 %v4931
    %5628 = vmatpush.bf16.msra.mxu0 %v4923
    %5629 = vmatpush.bf16.msra.mxu0 %v4915
    %5630 = vmatpush.bf16.msra.mxu0 %v4907
    %5631 = vmatmul.bf16.gmra.mxu0 %v1871
    %v5632 = vpop.f32.mrf.mxu0
    %v5633 = vadd.f32 0.0, %v5632
    %v5634 = vpop.f32.mrf.mxu0
    %5635 = vdwg.mxu0
    %5636 = vmatpush.bf16.msra.mxu0 %v5027
    %5637 = vmatpush.bf16.msra.mxu0 %v5019
    %5638 = vmatpush.bf16.msra.mxu0 %v5011
    %5639 = vmatpush.bf16.msra.mxu0 %v5003
    %5640 = vmatpush.bf16.msra.mxu0 %v4995
    %5641 = vmatpush.bf16.msra.mxu0 %v4987
    %5642 = vmatpush.bf16.msra.mxu0 %v4979
    %5643 = vmatpush.bf16.msra.mxu0 %v4971
    %5644 = vmatmul.bf16.gmra.mxu0 %v1872
    %v5645 = vpop.f32.mrf.mxu0
    %v5646 = vadd.f32 %v5633, %v5645
    %v5647 = vpop.f32.mrf.mxu0
    %5648 = vdwg.mxu0
    %5649 = vmatpush.bf16.msra.mxu0 %v5091
    %5650 = vmatpush.bf16.msra.mxu0 %v5083
    %5651 = vmatpush.bf16.msra.mxu0 %v5075
    %5652 = vmatpush.bf16.msra.mxu0 %v5067
    %5653 = vmatpush.bf16.msra.mxu0 %v5059
    %5654 = vmatpush.bf16.msra.mxu0 %v5051
    %5655 = vmatpush.bf16.msra.mxu0 %v5043
    %5656 = vmatpush.bf16.msra.mxu0 %v5035
    %5657 = vmatmul.bf16.gmra.mxu0 %v1873
    %v5658 = vpop.f32.mrf.mxu0
    %v5659 = vadd.f32 %v5646, %v5658
    %v5660 = vpop.f32.mrf.mxu0
    %5661 = vdwg.mxu0
    %5662 = vmatpush.bf16.msra.mxu0 %v5155
    %5663 = vmatpush.bf16.msra.mxu0 %v5147
    %5664 = vmatpush.bf16.msra.mxu0 %v5139
    %5665 = vmatpush.bf16.msra.mxu0 %v5131
    %5666 = vmatpush.bf16.msra.mxu0 %v5123
    %5667 = vmatpush.bf16.msra.mxu0 %v5115
    %5668 = vmatpush.bf16.msra.mxu0 %v5107
    %5669 = vmatpush.bf16.msra.mxu0 %v5099
    %5670 = vmatmul.bf16.gmra.mxu0 %v1874
    %v5671 = vpop.f32.mrf.mxu0
    %v5672 = vadd.f32 %v5659, %v5671
    %v5673 = vpop.f32.mrf.mxu0
    %5674 = vdwg.mxu0
    %5675 = vmatpush.bf16.msra.mxu0 %v4964
    %5676 = vmatpush.bf16.msra.mxu0 %v4956
    %5677 = vmatpush.bf16.msra.mxu0 %v4948
    %5678 = vmatpush.bf16.msra.mxu0 %v4940
    %5679 = vmatpush.bf16.msra.mxu0 %v4932
    %5680 = vmatpush.bf16.msra.mxu0 %v4924
    %5681 = vmatpush.bf16.msra.mxu0 %v4916
    %5682 = vmatpush.bf16.msra.mxu0 %v4908
    %5683 = vmatmul.bf16.gmra.mxu0 %v1871
    %v5684 = vpop.f32.mrf.mxu0
    %v5685 = vadd.f32 0.0, %v5684
    %v5686 = vpop.f32.mrf.mxu0
    %5687 = vdwg.mxu0
    %5688 = vmatpush.bf16.msra.mxu0 %v5028
    %5689 = vmatpush.bf16.msra.mxu0 %v5020
    %5690 = vmatpush.bf16.msra.mxu0 %v5012
    %5691 = vmatpush.bf16.msra.mxu0 %v5004
    %5692 = vmatpush.bf16.msra.mxu0 %v4996
    %5693 = vmatpush.bf16.msra.mxu0 %v4988
    %5694 = vmatpush.bf16.msra.mxu0 %v4980
    %5695 = vmatpush.bf16.msra.mxu0 %v4972
    %5696 = vmatmul.bf16.gmra.mxu0 %v1872
    %v5697 = vpop.f32.mrf.mxu0
    %v5698 = vadd.f32 %v5685, %v5697
    %v5699 = vpop.f32.mrf.mxu0
    %5700 = vdwg.mxu0
    %5701 = vmatpush.bf16.msra.mxu0 %v5092
    %5702 = vmatpush.bf16.msra.mxu0 %v5084
    %5703 = vmatpush.bf16.msra.mxu0 %v5076
    %5704 = vmatpush.bf16.msra.mxu0 %v5068
    %5705 = vmatpush.bf16.msra.mxu0 %v5060
    %5706 = vmatpush.bf16.msra.mxu0 %v5052
    %5707 = vmatpush.bf16.msra.mxu0 %v5044
    %5708 = vmatpush.bf16.msra.mxu0 %v5036
    %5709 = vmatmul.bf16.gmra.mxu0 %v1873
    %v5710 = vpop.f32.mrf.mxu0
    %v5711 = vadd.f32 %v5698, %v5710
    %v5712 = vpop.f32.mrf.mxu0
    %5713 = vdwg.mxu0
    %5714 = vmatpush.bf16.msra.mxu0 %v5156
    %5715 = vmatpush.bf16.msra.mxu0 %v5148
    %5716 = vmatpush.bf16.msra.mxu0 %v5140
    %5717 = vmatpush.bf16.msra.mxu0 %v5132
    %5718 = vmatpush.bf16.msra.mxu0 %v5124
    %5719 = vmatpush.bf16.msra.mxu0 %v5116
    %5720 = vmatpush.bf16.msra.mxu0 %v5108
    %5721 = vmatpush.bf16.msra.mxu0 %v5100
    %5722 = vmatmul.bf16.gmra.mxu0 %v1874
    %v5723 = vpop.f32.mrf.mxu0
    %v5724 = vadd.f32 %v5711, %v5723
    %v5725 = vpop.f32.mrf.mxu0
    %5726 = vdwg.mxu0
    %5727 = vmatpush.bf16.msra.mxu0 %v4965
    %5728 = vmatpush.bf16.msra.mxu0 %v4957
    %5729 = vmatpush.bf16.msra.mxu0 %v4949
    %5730 = vmatpush.bf16.msra.mxu0 %v4941
    %5731 = vmatpush.bf16.msra.mxu0 %v4933
    %5732 = vmatpush.bf16.msra.mxu0 %v4925
    %5733 = vmatpush.bf16.msra.mxu0 %v4917
    %5734 = vmatpush.bf16.msra.mxu0 %v4909
    %5735 = vmatmul.bf16.gmra.mxu0 %v1871
    %v5736 = vpop.f32.mrf.mxu0
    %v5737 = vadd.f32 0.0, %v5736
    %v5738 = vpop.f32.mrf.mxu0
    %5739 = vdwg.mxu0
    %5740 = vmatpush.bf16.msra.mxu0 %v5029
    %5741 = vmatpush.bf16.msra.mxu0 %v5021
    %5742 = vmatpush.bf16.msra.mxu0 %v5013
    %5743 = vmatpush.bf16.msra.mxu0 %v5005
    %5744 = vmatpush.bf16.msra.mxu0 %v4997
    %5745 = vmatpush.bf16.msra.mxu0 %v4989
    %5746 = vmatpush.bf16.msra.mxu0 %v4981
    %5747 = vmatpush.bf16.msra.mxu0 %v4973
    %5748 = vmatmul.bf16.gmra.mxu0 %v1872
    %v5749 = vpop.f32.mrf.mxu0
    %v5750 = vadd.f32 %v5737, %v5749
    %v5751 = vpop.f32.mrf.mxu0
    %5752 = vdwg.mxu0
    %5753 = vmatpush.bf16.msra.mxu0 %v5093
    %5754 = vmatpush.bf16.msra.mxu0 %v5085
    %5755 = vmatpush.bf16.msra.mxu0 %v5077
    %5756 = vmatpush.bf16.msra.mxu0 %v5069
    %5757 = vmatpush.bf16.msra.mxu0 %v5061
    %5758 = vmatpush.bf16.msra.mxu0 %v5053
    %5759 = vmatpush.bf16.msra.mxu0 %v5045
    %5760 = vmatpush.bf16.msra.mxu0 %v5037
    %5761 = vmatmul.bf16.gmra.mxu0 %v1873
    %v5762 = vpop.f32.mrf.mxu0
    %v5763 = vadd.f32 %v5750, %v5762
    %v5764 = vpop.f32.mrf.mxu0
    %5765 = vdwg.mxu0
    %5766 = vmatpush.bf16.msra.mxu0 %v5157
    %5767 = vmatpush.bf16.msra.mxu0 %v5149
    %5768 = vmatpush.bf16.msra.mxu0 %v5141
    %5769 = vmatpush.bf16.msra.mxu0 %v5133
    %5770 = vmatpush.bf16.msra.mxu0 %v5125
    %5771 = vmatpush.bf16.msra.mxu0 %v5117
    %5772 = vmatpush.bf16.msra.mxu0 %v5109
    %5773 = vmatpush.bf16.msra.mxu0 %v5101
    %5774 = vmatmul.bf16.gmra.mxu0 %v1874
    %v5775 = vpop.f32.mrf.mxu0
    %v5776 = vadd.f32 %v5763, %v5775
    %v5777 = vpop.f32.mrf.mxu0
    %5778 = vdwg.mxu0
    %5779 = vmatpush.bf16.msra.mxu0 %v4966
    %5780 = vmatpush.bf16.msra.mxu0 %v4958
    %5781 = vmatpush.bf16.msra.mxu0 %v4950
    %5782 = vmatpush.bf16.msra.mxu0 %v4942
    %5783 = vmatpush.bf16.msra.mxu0 %v4934
    %5784 = vmatpush.bf16.msra.mxu0 %v4926
    %5785 = vmatpush.bf16.msra.mxu0 %v4918
    %5786 = vmatpush.bf16.msra.mxu0 %v4910
    %5787 = vmatmul.bf16.gmra.mxu0 %v1871
    %v5788 = vpop.f32.mrf.mxu0
    %v5789 = vadd.f32 0.0, %v5788
    %v5790 = vpop.f32.mrf.mxu0
    %5791 = vdwg.mxu0
    %5792 = vmatpush.bf16.msra.mxu0 %v5030
    %5793 = vmatpush.bf16.msra.mxu0 %v5022
    %5794 = vmatpush.bf16.msra.mxu0 %v5014
    %5795 = vmatpush.bf16.msra.mxu0 %v5006
    %5796 = vmatpush.bf16.msra.mxu0 %v4998
    %5797 = vmatpush.bf16.msra.mxu0 %v4990
    %5798 = vmatpush.bf16.msra.mxu0 %v4982
    %5799 = vmatpush.bf16.msra.mxu0 %v4974
    %5800 = vmatmul.bf16.gmra.mxu0 %v1872
    %v5801 = vpop.f32.mrf.mxu0
    %v5802 = vadd.f32 %v5789, %v5801
    %v5803 = vpop.f32.mrf.mxu0
    %5804 = vdwg.mxu0
    %5805 = vmatpush.bf16.msra.mxu0 %v5094
    %5806 = vmatpush.bf16.msra.mxu0 %v5086
    %5807 = vmatpush.bf16.msra.mxu0 %v5078
    %5808 = vmatpush.bf16.msra.mxu0 %v5070
    %5809 = vmatpush.bf16.msra.mxu0 %v5062
    %5810 = vmatpush.bf16.msra.mxu0 %v5054
    %5811 = vmatpush.bf16.msra.mxu0 %v5046
    %5812 = vmatpush.bf16.msra.mxu0 %v5038
    %5813 = vmatmul.bf16.gmra.mxu0 %v1873
    %v5814 = vpop.f32.mrf.mxu0
    %v5815 = vadd.f32 %v5802, %v5814
    %v5816 = vpop.f32.mrf.mxu0
    %5817 = vdwg.mxu0
    %5818 = vmatpush.bf16.msra.mxu0 %v5158
    %5819 = vmatpush.bf16.msra.mxu0 %v5150
    %5820 = vmatpush.bf16.msra.mxu0 %v5142
    %5821 = vmatpush.bf16.msra.mxu0 %v5134
    %5822 = vmatpush.bf16.msra.mxu0 %v5126
    %5823 = vmatpush.bf16.msra.mxu0 %v5118
    %5824 = vmatpush.bf16.msra.mxu0 %v5110
    %5825 = vmatpush.bf16.msra.mxu0 %v5102
    %5826 = vmatmul.bf16.gmra.mxu0 %v1874
    %v5827 = vpop.f32.mrf.mxu0
    %v5828 = vadd.f32 %v5815, %v5827
    %v5829 = vpop.f32.mrf.mxu0
    %5830 = vdwg.mxu0
    %v5831 = vld [vmem:[#allocation16 + $0x8] sm:$0xff]
    %v5832 = vld [vmem:[#allocation17 + $0x8] sm:$0xff]
    %v5833 = vrot.slane %v5464, 4
    %v5834 = vadd.f32 %v5464, %v5833
    %v5835 = vrot.slane %v5834, 2
    %v5836 = vadd.f32 %v5834, %v5835
    %v5837 = vrot.slane %v5836, 1
    %v5838 = vadd.f32 %v5836, %v5837
    %v5839 = vrot.slane %v5516, 4
    %v5840 = vadd.f32 %v5516, %v5839
    %v5841 = vrot.slane %v5840, 2
    %v5842 = vadd.f32 %v5840, %v5841
    %v5843 = vrot.slane %v5842, 1
    %v5844 = vadd.f32 %v5842, %v5843
    %v5845 = vrot.slane %v5568, 4
    %v5846 = vadd.f32 %v5568, %v5845
    %v5847 = vrot.slane %v5846, 2
    %v5848 = vadd.f32 %v5846, %v5847
    %v5849 = vrot.slane %v5848, 1
    %v5850 = vadd.f32 %v5848, %v5849
    %v5851 = vrot.slane %v5620, 4
    %v5852 = vadd.f32 %v5620, %v5851
    %v5853 = vrot.slane %v5852, 2
    %v5854 = vadd.f32 %v5852, %v5853
    %v5855 = vrot.slane %v5854, 1
    %v5856 = vadd.f32 %v5854, %v5855
    %v5857 = vrot.slane %v5672, 4
    %v5858 = vadd.f32 %v5672, %v5857
    %v5859 = vrot.slane %v5858, 2
    %v5860 = vadd.f32 %v5858, %v5859
    %v5861 = vrot.slane %v5860, 1
    %v5862 = vadd.f32 %v5860, %v5861
    %v5863 = vrot.slane %v5724, 4
    %v5864 = vadd.f32 %v5724, %v5863
    %v5865 = vrot.slane %v5864, 2
    %v5866 = vadd.f32 %v5864, %v5865
    %v5867 = vrot.slane %v5866, 1
    %v5868 = vadd.f32 %v5866, %v5867
    %v5869 = vrot.slane %v5776, 4
    %v5870 = vadd.f32 %v5776, %v5869
    %v5871 = vrot.slane %v5870, 2
    %v5872 = vadd.f32 %v5870, %v5871
    %v5873 = vrot.slane %v5872, 1
    %v5874 = vadd.f32 %v5872, %v5873
    %v5875 = vrot.slane %v5828, 4
    %v5876 = vadd.f32 %v5828, %v5875
    %v5877 = vrot.slane %v5876, 2
    %v5878 = vadd.f32 %v5876, %v5877
    %v5879 = vrot.slane %v5878, 1
    %v5880 = vadd.f32 %v5878, %v5879
    %v5881 = vmul.f32 %v5838, %v356
    %v5882 = vmul.f32 %v5844, %v356
    %v5883 = vmul.f32 %v5850, %v356
    %v5884 = vmul.f32 %v5856, %v356
    %v5885 = vmul.f32 %v5862, %v356
    %v5886 = vmul.f32 %v5868, %v356
    %v5887 = vmul.f32 %v5874, %v356
    %v5888 = vmul.f32 %v5880, %v356
    %v5889 = vmul.f32 %v5464, %v5464
    %v5890 = vmul.f32 %v5516, %v5516
    %v5891 = vmul.f32 %v5568, %v5568
    %v5892 = vmul.f32 %v5620, %v5620
    %v5893 = vmul.f32 %v5672, %v5672
    %v5894 = vmul.f32 %v5724, %v5724
    %v5895 = vmul.f32 %v5776, %v5776
    %v5896 = vmul.f32 %v5828, %v5828
    %v5897 = vrot.slane %v5889, 4
    %v5898 = vadd.f32 %v5889, %v5897
    %v5899 = vrot.slane %v5898, 2
    %v5900 = vadd.f32 %v5898, %v5899
    %v5901 = vrot.slane %v5900, 1
    %v5902 = vadd.f32 %v5900, %v5901
    %v5903 = vrot.slane %v5890, 4
    %v5904 = vadd.f32 %v5890, %v5903
    %v5905 = vrot.slane %v5904, 2
    %v5906 = vadd.f32 %v5904, %v5905
    %v5907 = vrot.slane %v5906, 1
    %v5908 = vadd.f32 %v5906, %v5907
    %v5909 = vrot.slane %v5891, 4
    %v5910 = vadd.f32 %v5891, %v5909
    %v5911 = vrot.slane %v5910, 2
    %v5912 = vadd.f32 %v5910, %v5911
    %v5913 = vrot.slane %v5912, 1
    %v5914 = vadd.f32 %v5912, %v5913
    %v5915 = vrot.slane %v5892, 4
    %v5916 = vadd.f32 %v5892, %v5915
    %v5917 = vrot.slane %v5916, 2
    %v5918 = vadd.f32 %v5916, %v5917
    %v5919 = vrot.slane %v5918, 1
    %v5920 = vadd.f32 %v5918, %v5919
    %v5921 = vrot.slane %v5893, 4
    %v5922 = vadd.f32 %v5893, %v5921
    %v5923 = vrot.slane %v5922, 2
    %v5924 = vadd.f32 %v5922, %v5923
    %v5925 = vrot.slane %v5924, 1
    %v5926 = vadd.f32 %v5924, %v5925
    %v5927 = vrot.slane %v5894, 4
    %v5928 = vadd.f32 %v5894, %v5927
    %v5929 = vrot.slane %v5928, 2
    %v5930 = vadd.f32 %v5928, %v5929
    %v5931 = vrot.slane %v5930, 1
    %v5932 = vadd.f32 %v5930, %v5931
    %v5933 = vrot.slane %v5895, 4
    %v5934 = vadd.f32 %v5895, %v5933
    %v5935 = vrot.slane %v5934, 2
    %v5936 = vadd.f32 %v5934, %v5935
    %v5937 = vrot.slane %v5936, 1
    %v5938 = vadd.f32 %v5936, %v5937
    %v5939 = vrot.slane %v5896, 4
    %v5940 = vadd.f32 %v5896, %v5939
    %v5941 = vrot.slane %v5940, 2
    %v5942 = vadd.f32 %v5940, %v5941
    %v5943 = vrot.slane %v5942, 1
    %v5944 = vadd.f32 %v5942, %v5943
    %v5945 = vmul.f32 %v5902, %v356
    %v5946 = vmul.f32 %v5908, %v356
    %v5947 = vmul.f32 %v5914, %v356
    %v5948 = vmul.f32 %v5920, %v356
    %v5949 = vmul.f32 %v5926, %v356
    %v5950 = vmul.f32 %v5932, %v356
    %v5951 = vmul.f32 %v5938, %v356
    %v5952 = vmul.f32 %v5944, %v356
    %v5953 = vmul.f32 %v5881, %v5881
    %v5954 = vmul.f32 %v5882, %v5882
    %v5955 = vmul.f32 %v5883, %v5883
    %v5956 = vmul.f32 %v5884, %v5884
    %v5957 = vmul.f32 %v5885, %v5885
    %v5958 = vmul.f32 %v5886, %v5886
    %v5959 = vmul.f32 %v5887, %v5887
    %v5960 = vmul.f32 %v5888, %v5888
    %v5961 = vsub.f32 %v5945, %v5953
    %v5962 = vsub.f32 %v5946, %v5954
    %v5963 = vsub.f32 %v5947, %v5955
    %v5964 = vsub.f32 %v5948, %v5956
    %v5965 = vsub.f32 %v5949, %v5957
    %v5966 = vsub.f32 %v5950, %v5958
    %v5967 = vsub.f32 %v5951, %v5959
    %v5968 = vsub.f32 %v5952, %v5960
    %v5969 = vsub.f32 %v5464, %v5881
    %v5970 = vsub.f32 %v5516, %v5882
    %v5971 = vsub.f32 %v5568, %v5883
    %v5972 = vsub.f32 %v5620, %v5884
    %v5973 = vsub.f32 %v5672, %v5885
    %v5974 = vsub.f32 %v5724, %v5886
    %v5975 = vsub.f32 %v5776, %v5887
    %v5976 = vsub.f32 %v5828, %v5888
    %v5977 = vadd.f32 %v5961, 1e-05
    %v5978 = vadd.f32 %v5962, 1e-05
    %v5979 = vadd.f32 %v5963, 1e-05
    %v5980 = vadd.f32 %v5964, 1e-05
    %v5981 = vadd.f32 %v5965, 1e-05
    %v5982 = vadd.f32 %v5966, 1e-05
    %v5983 = vadd.f32 %v5967, 1e-05
    %v5984 = vadd.f32 %v5968, 1e-05
    %v5985 = vrsqrt.pop %v5977
    %v5986 = vmul.f32 %v5985, %v5977
    %v5987 = vmul.f32 %v5986, %v5985
    %v5988 = vmul.f32 0.5, %v5987
    %v5989 = vsub.f32 1.5, %v5988
    %v5990 = vmul.f32 %v5985, %v5989
    %vm5991 = vweird.f32 %v5977
    %vm5992 = vweird.f32 %v5985
    %vm5993 = vmor %vm5991, %vm5992
    %v5994 = vsel %vm5993, %v5985, %v5990
    %v5995 = vrsqrt.pop %v5978
    %v5996 = vmul.f32 %v5995, %v5978
    %v5997 = vmul.f32 %v5996, %v5995
    %v5998 = vmul.f32 0.5, %v5997
    %v5999 = vsub.f32 1.5, %v5998
    %v6000 = vmul.f32 %v5995, %v5999
    %vm6001 = vweird.f32 %v5978
    %vm6002 = vweird.f32 %v5995
    %vm6003 = vmor %vm6001, %vm6002
    %v6004 = vsel %vm6003, %v5995, %v6000
    %v6005 = vrsqrt.pop %v5979
    %v6006 = vmul.f32 %v6005, %v5979
    %v6007 = vmul.f32 %v6006, %v6005
    %v6008 = vmul.f32 0.5, %v6007
    %v6009 = vsub.f32 1.5, %v6008
    %v6010 = vmul.f32 %v6005, %v6009
    %vm6011 = vweird.f32 %v5979
    %vm6012 = vweird.f32 %v6005
    %vm6013 = vmor %vm6011, %vm6012
    %v6014 = vsel %vm6013, %v6005, %v6010
    %v6015 = vrsqrt.pop %v5980
    %v6016 = vmul.f32 %v6015, %v5980
    %v6017 = vmul.f32 %v6016, %v6015
    %v6018 = vmul.f32 0.5, %v6017
    %v6019 = vsub.f32 1.5, %v6018
    %v6020 = vmul.f32 %v6015, %v6019
    %vm6021 = vweird.f32 %v5980
    %vm6022 = vweird.f32 %v6015
    %vm6023 = vmor %vm6021, %vm6022
    %v6024 = vsel %vm6023, %v6015, %v6020
    %v6025 = vrsqrt.pop %v5981
    %v6026 = vmul.f32 %v6025, %v5981
    %v6027 = vmul.f32 %v6026, %v6025
    %v6028 = vmul.f32 0.5, %v6027
    %v6029 = vsub.f32 1.5, %v6028
    %v6030 = vmul.f32 %v6025, %v6029
    %vm6031 = vweird.f32 %v5981
    %vm6032 = vweird.f32 %v6025
    %vm6033 = vmor %vm6031, %vm6032
    %v6034 = vsel %vm6033, %v6025, %v6030
    %v6035 = vrsqrt.pop %v5982
    %v6036 = vmul.f32 %v6035, %v5982
    %v6037 = vmul.f32 %v6036, %v6035
    %v6038 = vmul.f32 0.5, %v6037
    %v6039 = vsub.f32 1.5, %v6038
    %v6040 = vmul.f32 %v6035, %v6039
    %vm6041 = vweird.f32 %v5982
    %vm6042 = vweird.f32 %v6035
    %vm6043 = vmor %vm6041, %vm6042
    %v6044 = vsel %vm6043, %v6035, %v6040
    %v6045 = vrsqrt.pop %v5983
    %v6046 = vmul.f32 %v6045, %v5983
    %v6047 = vmul.f32 %v6046, %v6045
    %v6048 = vmul.f32 0.5, %v6047
    %v6049 = vsub.f32 1.5, %v6048
    %v6050 = vmul.f32 %v6045, %v6049
    %vm6051 = vweird.f32 %v5983
    %vm6052 = vweird.f32 %v6045
    %vm6053 = vmor %vm6051, %vm6052
    %v6054 = vsel %vm6053, %v6045, %v6050
    %v6055 = vrsqrt.pop %v5984
    %v6056 = vmul.f32 %v6055, %v5984
    %v6057 = vmul.f32 %v6056, %v6055
    %v6058 = vmul.f32 0.5, %v6057
    %v6059 = vsub.f32 1.5, %v6058
    %v6060 = vmul.f32 %v6055, %v6059
    %vm6061 = vweird.f32 %v5984
    %vm6062 = vweird.f32 %v6055
    %vm6063 = vmor %vm6061, %vm6062
    %v6064 = vsel %vm6063, %v6055, %v6060
    %v6065 = vmul.f32 %v5969, %v5994
    %v6066 = vmul.f32 %v5970, %v6004
    %v6067 = vmul.f32 %v5971, %v6014
    %v6068 = vmul.f32 %v5972, %v6024
    %v6069 = vmul.f32 %v5973, %v6034
    %v6070 = vmul.f32 %v5974, %v6044
    %v6071 = vmul.f32 %v5975, %v6054
    %v6072 = vmul.f32 %v5976, %v6064
    %v6074 = vperm.slane %v5831, 0
    %v6075 = vperm.slane %v5831, 1
    %v6076 = vperm.slane %v5831, 2
    %v6077 = vperm.slane %v5831, 3
    %v6078 = vperm.slane %v5831, 4
    %v6079 = vperm.slane %v5831, 5
    %v6080 = vperm.slane %v5831, 6
    %v6081 = vperm.slane %v5831, 7
    %v6090 = vmul.f32 %v6065, %v6074
    %v6091 = vmul.f32 %v6066, %v6075
    %v6092 = vmul.f32 %v6067, %v6076
    %v6093 = vmul.f32 %v6068, %v6077
    %v6094 = vmul.f32 %v6069, %v6078
    %v6095 = vmul.f32 %v6070, %v6079
    %v6096 = vmul.f32 %v6071, %v6080
    %v6097 = vmul.f32 %v6072, %v6081
    %v6099 = vperm.slane %v5832, 0
    %v6100 = vperm.slane %v5832, 1
    %v6101 = vperm.slane %v5832, 2
    %v6102 = vperm.slane %v5832, 3
    %v6103 = vperm.slane %v5832, 4
    %v6104 = vperm.slane %v5832, 5
    %v6105 = vperm.slane %v5832, 6
    %v6106 = vperm.slane %v5832, 7
    %v6115 = vadd.f32 %v6090, %v6099
    %v6116 = vadd.f32 %v6091, %v6100
    %v6117 = vadd.f32 %v6092, %v6101
    %v6118 = vadd.f32 %v6093, %v6102
    %v6119 = vadd.f32 %v6094, %v6103
    %v6120 = vadd.f32 %v6095, %v6104
    %v6121 = vadd.f32 %v6096, %v6105
    %v6122 = vadd.f32 %v6097, %v6106
    %v6123 = vmax.f32 %v6115, 0.0
    %v6124 = vmax.f32 %v6116, 0.0
    %v6125 = vmax.f32 %v6117, 0.0
    %v6126 = vmax.f32 %v6118, 0.0
    %v6127 = vmax.f32 %v6119, 0.0
    %v6128 = vmax.f32 %v6120, 0.0
    %v6129 = vmax.f32 %v6121, 0.0
    %v6130 = vmax.f32 %v6122, 0.0
    %6131 = vst [vmem:[#allocation22 + $0x40] sm:$0xff] %v6123
    %6132 = vst [vmem:[#allocation22 + $0x48] sm:$0xff] %v6124
    %6133 = vst [vmem:[#allocation22 + $0x50] sm:$0xff] %v6125
    %6134 = vst [vmem:[#allocation22 + $0x58] sm:$0xff] %v6126
    %6135 = vst [vmem:[#allocation22 + $0x60] sm:$0xff] %v6127
    %6136 = vst [vmem:[#allocation22 + $0x68] sm:$0xff] %v6128
    %6137 = vst [vmem:[#allocation22 + $0x70] sm:$0xff] %v6129
    %6138 = vst [vmem:[#allocation22 + $0x78] sm:$0xff] %v6130
    %v6139 = vld [vmem:[#allocation14 + $0x40] sm:$0xff]
    %v6140 = vld [vmem:[#allocation14 + $0x48] sm:$0xff]
    %v6141 = vld [vmem:[#allocation14 + $0x50] sm:$0xff]
    %v6142 = vld [vmem:[#allocation14 + $0x58] sm:$0xff]
    %v6143 = vld [vmem:[#allocation14 + $0xc0] sm:$0xff]
    %v6144 = vld [vmem:[#allocation14 + $0xc8] sm:$0xff]
    %v6145 = vld [vmem:[#allocation14 + $0xd0] sm:$0xff]
    %v6146 = vld [vmem:[#allocation14 + $0xd8] sm:$0xff]
    %v6147 = vld [vmem:[#allocation14 + $0x140] sm:$0xff]
    %v6148 = vld [vmem:[#allocation14 + $0x148] sm:$0xff]
    %v6149 = vld [vmem:[#allocation14 + $0x150] sm:$0xff]
    %v6150 = vld [vmem:[#allocation14 + $0x158] sm:$0xff]
    %v6151 = vld [vmem:[#allocation14 + $0x1c0] sm:$0xff]
    %v6152 = vld [vmem:[#allocation14 + $0x1c8] sm:$0xff]
    %v6153 = vld [vmem:[#allocation14 + $0x1d0] sm:$0xff]
    %v6154 = vld [vmem:[#allocation14 + $0x1d8] sm:$0xff]
    %v6155 = vld [vmem:[#allocation14 + $0x240] sm:$0xff]
    %v6156 = vld [vmem:[#allocation14 + $0x248] sm:$0xff]
    %v6157 = vld [vmem:[#allocation14 + $0x250] sm:$0xff]
    %v6158 = vld [vmem:[#allocation14 + $0x258] sm:$0xff]
    %v6159 = vld [vmem:[#allocation14 + $0x2c0] sm:$0xff]
    %v6160 = vld [vmem:[#allocation14 + $0x2c8] sm:$0xff]
    %v6161 = vld [vmem:[#allocation14 + $0x2d0] sm:$0xff]
    %v6162 = vld [vmem:[#allocation14 + $0x2d8] sm:$0xff]
    %v6163 = vld [vmem:[#allocation14 + $0x340] sm:$0xff]
    %v6164 = vld [vmem:[#allocation14 + $0x348] sm:$0xff]
    %v6165 = vld [vmem:[#allocation14 + $0x350] sm:$0xff]
    %v6166 = vld [vmem:[#allocation14 + $0x358] sm:$0xff]
    %v6167 = vld [vmem:[#allocation14 + $0x3c0] sm:$0xff]
    %v6168 = vld [vmem:[#allocation14 + $0x3c8] sm:$0xff]
    %v6169 = vld [vmem:[#allocation14 + $0x3d0] sm:$0xff]
    %v6170 = vld [vmem:[#allocation14 + $0x3d8] sm:$0xff]
    %v6171 = vld [vmem:[#allocation14 + $0x440] sm:$0xff]
    %v6172 = vld [vmem:[#allocation14 + $0x448] sm:$0xff]
    %v6173 = vld [vmem:[#allocation14 + $0x450] sm:$0xff]
    %v6174 = vld [vmem:[#allocation14 + $0x458] sm:$0xff]
    %v6175 = vld [vmem:[#allocation14 + $0x4c0] sm:$0xff]
    %v6176 = vld [vmem:[#allocation14 + $0x4c8] sm:$0xff]
    %v6177 = vld [vmem:[#allocation14 + $0x4d0] sm:$0xff]
    %v6178 = vld [vmem:[#allocation14 + $0x4d8] sm:$0xff]
    %v6179 = vld [vmem:[#allocation14 + $0x540] sm:$0xff]
    %v6180 = vld [vmem:[#allocation14 + $0x548] sm:$0xff]
    %v6181 = vld [vmem:[#allocation14 + $0x550] sm:$0xff]
    %v6182 = vld [vmem:[#allocation14 + $0x558] sm:$0xff]
    %v6183 = vld [vmem:[#allocation14 + $0x5c0] sm:$0xff]
    %v6184 = vld [vmem:[#allocation14 + $0x5c8] sm:$0xff]
    %v6185 = vld [vmem:[#allocation14 + $0x5d0] sm:$0xff]
    %v6186 = vld [vmem:[#allocation14 + $0x5d8] sm:$0xff]
    %v6187 = vld [vmem:[#allocation14 + $0x640] sm:$0xff]
    %v6188 = vld [vmem:[#allocation14 + $0x648] sm:$0xff]
    %v6189 = vld [vmem:[#allocation14 + $0x650] sm:$0xff]
    %v6190 = vld [vmem:[#allocation14 + $0x658] sm:$0xff]
    %v6191 = vld [vmem:[#allocation14 + $0x6c0] sm:$0xff]
    %v6192 = vld [vmem:[#allocation14 + $0x6c8] sm:$0xff]
    %v6193 = vld [vmem:[#allocation14 + $0x6d0] sm:$0xff]
    %v6194 = vld [vmem:[#allocation14 + $0x6d8] sm:$0xff]
    %v6195 = vld [vmem:[#allocation14 + $0x740] sm:$0xff]
    %v6196 = vld [vmem:[#allocation14 + $0x748] sm:$0xff]
    %v6197 = vld [vmem:[#allocation14 + $0x750] sm:$0xff]
    %v6198 = vld [vmem:[#allocation14 + $0x758] sm:$0xff]
    %v6199 = vld [vmem:[#allocation14 + $0x7c0] sm:$0xff]
    %v6200 = vld [vmem:[#allocation14 + $0x7c8] sm:$0xff]
    %v6201 = vld [vmem:[#allocation14 + $0x7d0] sm:$0xff]
    %v6202 = vld [vmem:[#allocation14 + $0x7d8] sm:$0xff]
    %v6203 = vld [vmem:[#allocation14 + $0x840] sm:$0xff]
    %v6204 = vld [vmem:[#allocation14 + $0x848] sm:$0xff]
    %v6205 = vld [vmem:[#allocation14 + $0x850] sm:$0xff]
    %v6206 = vld [vmem:[#allocation14 + $0x858] sm:$0xff]
    %v6207 = vld [vmem:[#allocation14 + $0x8c0] sm:$0xff]
    %v6208 = vld [vmem:[#allocation14 + $0x8c8] sm:$0xff]
    %v6209 = vld [vmem:[#allocation14 + $0x8d0] sm:$0xff]
    %v6210 = vld [vmem:[#allocation14 + $0x8d8] sm:$0xff]
    %v6211 = vld [vmem:[#allocation14 + $0x940] sm:$0xff]
    %v6212 = vld [vmem:[#allocation14 + $0x948] sm:$0xff]
    %v6213 = vld [vmem:[#allocation14 + $0x950] sm:$0xff]
    %v6214 = vld [vmem:[#allocation14 + $0x958] sm:$0xff]
    %v6215 = vld [vmem:[#allocation14 + $0x9c0] sm:$0xff]
    %v6216 = vld [vmem:[#allocation14 + $0x9c8] sm:$0xff]
    %v6217 = vld [vmem:[#allocation14 + $0x9d0] sm:$0xff]
    %v6218 = vld [vmem:[#allocation14 + $0x9d8] sm:$0xff]
    %v6219 = vld [vmem:[#allocation14 + $0xa40] sm:$0xff]
    %v6220 = vld [vmem:[#allocation14 + $0xa48] sm:$0xff]
    %v6221 = vld [vmem:[#allocation14 + $0xa50] sm:$0xff]
    %v6222 = vld [vmem:[#allocation14 + $0xa58] sm:$0xff]
    %v6223 = vld [vmem:[#allocation14 + $0xac0] sm:$0xff]
    %v6224 = vld [vmem:[#allocation14 + $0xac8] sm:$0xff]
    %v6225 = vld [vmem:[#allocation14 + $0xad0] sm:$0xff]
    %v6226 = vld [vmem:[#allocation14 + $0xad8] sm:$0xff]
    %v6227 = vld [vmem:[#allocation14 + $0xb40] sm:$0xff]
    %v6228 = vld [vmem:[#allocation14 + $0xb48] sm:$0xff]
    %v6229 = vld [vmem:[#allocation14 + $0xb50] sm:$0xff]
    %v6230 = vld [vmem:[#allocation14 + $0xb58] sm:$0xff]
    %v6231 = vld [vmem:[#allocation14 + $0xbc0] sm:$0xff]
    %v6232 = vld [vmem:[#allocation14 + $0xbc8] sm:$0xff]
    %v6233 = vld [vmem:[#allocation14 + $0xbd0] sm:$0xff]
    %v6234 = vld [vmem:[#allocation14 + $0xbd8] sm:$0xff]
    %v6235 = vld [vmem:[#allocation14 + $0xc40] sm:$0xff]
    %v6236 = vld [vmem:[#allocation14 + $0xc48] sm:$0xff]
    %v6237 = vld [vmem:[#allocation14 + $0xc50] sm:$0xff]
    %v6238 = vld [vmem:[#allocation14 + $0xc58] sm:$0xff]
    %v6239 = vld [vmem:[#allocation14 + $0xcc0] sm:$0xff]
    %v6240 = vld [vmem:[#allocation14 + $0xcc8] sm:$0xff]
    %v6241 = vld [vmem:[#allocation14 + $0xcd0] sm:$0xff]
    %v6242 = vld [vmem:[#allocation14 + $0xcd8] sm:$0xff]
    %v6243 = vld [vmem:[#allocation14 + $0xd40] sm:$0xff]
    %v6244 = vld [vmem:[#allocation14 + $0xd48] sm:$0xff]
    %v6245 = vld [vmem:[#allocation14 + $0xd50] sm:$0xff]
    %v6246 = vld [vmem:[#allocation14 + $0xd58] sm:$0xff]
    %v6247 = vld [vmem:[#allocation14 + $0xdc0] sm:$0xff]
    %v6248 = vld [vmem:[#allocation14 + $0xdc8] sm:$0xff]
    %v6249 = vld [vmem:[#allocation14 + $0xdd0] sm:$0xff]
    %v6250 = vld [vmem:[#allocation14 + $0xdd8] sm:$0xff]
    %v6251 = vld [vmem:[#allocation14 + $0xe40] sm:$0xff]
    %v6252 = vld [vmem:[#allocation14 + $0xe48] sm:$0xff]
    %v6253 = vld [vmem:[#allocation14 + $0xe50] sm:$0xff]
    %v6254 = vld [vmem:[#allocation14 + $0xe58] sm:$0xff]
    %v6255 = vld [vmem:[#allocation14 + $0xec0] sm:$0xff]
    %v6256 = vld [vmem:[#allocation14 + $0xec8] sm:$0xff]
    %v6257 = vld [vmem:[#allocation14 + $0xed0] sm:$0xff]
    %v6258 = vld [vmem:[#allocation14 + $0xed8] sm:$0xff]
    %v6259 = vld [vmem:[#allocation14 + $0xf40] sm:$0xff]
    %v6260 = vld [vmem:[#allocation14 + $0xf48] sm:$0xff]
    %v6261 = vld [vmem:[#allocation14 + $0xf50] sm:$0xff]
    %v6262 = vld [vmem:[#allocation14 + $0xf58] sm:$0xff]
    %v6263 = vld [vmem:[#allocation14 + $0xfc0] sm:$0xff]
    %v6264 = vld [vmem:[#allocation14 + $0xfc8] sm:$0xff]
    %v6265 = vld [vmem:[#allocation14 + $0xfd0] sm:$0xff]
    %v6266 = vld [vmem:[#allocation14 + $0xfd8] sm:$0xff]
    %v6267 = vld [vmem:[#allocation14 + $0x1040] sm:$0xff]
    %v6268 = vld [vmem:[#allocation14 + $0x1048] sm:$0xff]
    %v6269 = vld [vmem:[#allocation14 + $0x1050] sm:$0xff]
    %v6270 = vld [vmem:[#allocation14 + $0x1058] sm:$0xff]
    %v6271 = vld [vmem:[#allocation14 + $0x10c0] sm:$0xff]
    %v6272 = vld [vmem:[#allocation14 + $0x10c8] sm:$0xff]
    %v6273 = vld [vmem:[#allocation14 + $0x10d0] sm:$0xff]
    %v6274 = vld [vmem:[#allocation14 + $0x10d8] sm:$0xff]
    %v6275 = vld [vmem:[#allocation14 + $0x1140] sm:$0xff]
    %v6276 = vld [vmem:[#allocation14 + $0x1148] sm:$0xff]
    %v6277 = vld [vmem:[#allocation14 + $0x1150] sm:$0xff]
    %v6278 = vld [vmem:[#allocation14 + $0x1158] sm:$0xff]
    %v6279 = vld [vmem:[#allocation14 + $0x11c0] sm:$0xff]
    %v6280 = vld [vmem:[#allocation14 + $0x11c8] sm:$0xff]
    %v6281 = vld [vmem:[#allocation14 + $0x11d0] sm:$0xff]
    %v6282 = vld [vmem:[#allocation14 + $0x11d8] sm:$0xff]
    %v6283 = vld [vmem:[#allocation14 + $0x1240] sm:$0xff]
    %v6284 = vld [vmem:[#allocation14 + $0x1248] sm:$0xff]
    %v6285 = vld [vmem:[#allocation14 + $0x1250] sm:$0xff]
    %v6286 = vld [vmem:[#allocation14 + $0x1258] sm:$0xff]
    %v6287 = vld [vmem:[#allocation14 + $0x12c0] sm:$0xff]
    %v6288 = vld [vmem:[#allocation14 + $0x12c8] sm:$0xff]
    %v6289 = vld [vmem:[#allocation14 + $0x12d0] sm:$0xff]
    %v6290 = vld [vmem:[#allocation14 + $0x12d8] sm:$0xff]
    %v6291 = vld [vmem:[#allocation14 + $0x1340] sm:$0xff]
    %v6292 = vld [vmem:[#allocation14 + $0x1348] sm:$0xff]
    %v6293 = vld [vmem:[#allocation14 + $0x1350] sm:$0xff]
    %v6294 = vld [vmem:[#allocation14 + $0x1358] sm:$0xff]
    %v6295 = vld [vmem:[#allocation14 + $0x13c0] sm:$0xff]
    %v6296 = vld [vmem:[#allocation14 + $0x13c8] sm:$0xff]
    %v6297 = vld [vmem:[#allocation14 + $0x13d0] sm:$0xff]
    %v6298 = vld [vmem:[#allocation14 + $0x13d8] sm:$0xff]
    %v6299 = vld [vmem:[#allocation14 + $0x1440] sm:$0xff]
    %v6300 = vld [vmem:[#allocation14 + $0x1448] sm:$0xff]
    %v6301 = vld [vmem:[#allocation14 + $0x1450] sm:$0xff]
    %v6302 = vld [vmem:[#allocation14 + $0x1458] sm:$0xff]
    %v6303 = vld [vmem:[#allocation14 + $0x14c0] sm:$0xff]
    %v6304 = vld [vmem:[#allocation14 + $0x14c8] sm:$0xff]
    %v6305 = vld [vmem:[#allocation14 + $0x14d0] sm:$0xff]
    %v6306 = vld [vmem:[#allocation14 + $0x14d8] sm:$0xff]
    %v6307 = vld [vmem:[#allocation14 + $0x1540] sm:$0xff]
    %v6308 = vld [vmem:[#allocation14 + $0x1548] sm:$0xff]
    %v6309 = vld [vmem:[#allocation14 + $0x1550] sm:$0xff]
    %v6310 = vld [vmem:[#allocation14 + $0x1558] sm:$0xff]
    %v6311 = vld [vmem:[#allocation14 + $0x15c0] sm:$0xff]
    %v6312 = vld [vmem:[#allocation14 + $0x15c8] sm:$0xff]
    %v6313 = vld [vmem:[#allocation14 + $0x15d0] sm:$0xff]
    %v6314 = vld [vmem:[#allocation14 + $0x15d8] sm:$0xff]
    %v6315 = vld [vmem:[#allocation14 + $0x1640] sm:$0xff]
    %v6316 = vld [vmem:[#allocation14 + $0x1648] sm:$0xff]
    %v6317 = vld [vmem:[#allocation14 + $0x1650] sm:$0xff]
    %v6318 = vld [vmem:[#allocation14 + $0x1658] sm:$0xff]
    %v6319 = vld [vmem:[#allocation14 + $0x16c0] sm:$0xff]
    %v6320 = vld [vmem:[#allocation14 + $0x16c8] sm:$0xff]
    %v6321 = vld [vmem:[#allocation14 + $0x16d0] sm:$0xff]
    %v6322 = vld [vmem:[#allocation14 + $0x16d8] sm:$0xff]
    %v6323 = vld [vmem:[#allocation14 + $0x1740] sm:$0xff]
    %v6324 = vld [vmem:[#allocation14 + $0x1748] sm:$0xff]
    %v6325 = vld [vmem:[#allocation14 + $0x1750] sm:$0xff]
    %v6326 = vld [vmem:[#allocation14 + $0x1758] sm:$0xff]
    %v6327 = vld [vmem:[#allocation14 + $0x17c0] sm:$0xff]
    %v6328 = vld [vmem:[#allocation14 + $0x17c8] sm:$0xff]
    %v6329 = vld [vmem:[#allocation14 + $0x17d0] sm:$0xff]
    %v6330 = vld [vmem:[#allocation14 + $0x17d8] sm:$0xff]
    %v6331 = vld [vmem:[#allocation14 + $0x1840] sm:$0xff]
    %v6332 = vld [vmem:[#allocation14 + $0x1848] sm:$0xff]
    %v6333 = vld [vmem:[#allocation14 + $0x1850] sm:$0xff]
    %v6334 = vld [vmem:[#allocation14 + $0x1858] sm:$0xff]
    %v6335 = vld [vmem:[#allocation14 + $0x18c0] sm:$0xff]
    %v6336 = vld [vmem:[#allocation14 + $0x18c8] sm:$0xff]
    %v6337 = vld [vmem:[#allocation14 + $0x18d0] sm:$0xff]
    %v6338 = vld [vmem:[#allocation14 + $0x18d8] sm:$0xff]
    %v6339 = vld [vmem:[#allocation14 + $0x1940] sm:$0xff]
    %v6340 = vld [vmem:[#allocation14 + $0x1948] sm:$0xff]
    %v6341 = vld [vmem:[#allocation14 + $0x1950] sm:$0xff]
    %v6342 = vld [vmem:[#allocation14 + $0x1958] sm:$0xff]
    %v6343 = vld [vmem:[#allocation14 + $0x19c0] sm:$0xff]
    %v6344 = vld [vmem:[#allocation14 + $0x19c8] sm:$0xff]
    %v6345 = vld [vmem:[#allocation14 + $0x19d0] sm:$0xff]
    %v6346 = vld [vmem:[#allocation14 + $0x19d8] sm:$0xff]
    %v6347 = vld [vmem:[#allocation14 + $0x1a40] sm:$0xff]
    %v6348 = vld [vmem:[#allocation14 + $0x1a48] sm:$0xff]
    %v6349 = vld [vmem:[#allocation14 + $0x1a50] sm:$0xff]
    %v6350 = vld [vmem:[#allocation14 + $0x1a58] sm:$0xff]
    %v6351 = vld [vmem:[#allocation14 + $0x1ac0] sm:$0xff]
    %v6352 = vld [vmem:[#allocation14 + $0x1ac8] sm:$0xff]
    %v6353 = vld [vmem:[#allocation14 + $0x1ad0] sm:$0xff]
    %v6354 = vld [vmem:[#allocation14 + $0x1ad8] sm:$0xff]
    %v6355 = vld [vmem:[#allocation14 + $0x1b40] sm:$0xff]
    %v6356 = vld [vmem:[#allocation14 + $0x1b48] sm:$0xff]
    %v6357 = vld [vmem:[#allocation14 + $0x1b50] sm:$0xff]
    %v6358 = vld [vmem:[#allocation14 + $0x1b58] sm:$0xff]
    %v6359 = vld [vmem:[#allocation14 + $0x1bc0] sm:$0xff]
    %v6360 = vld [vmem:[#allocation14 + $0x1bc8] sm:$0xff]
    %v6361 = vld [vmem:[#allocation14 + $0x1bd0] sm:$0xff]
    %v6362 = vld [vmem:[#allocation14 + $0x1bd8] sm:$0xff]
    %v6363 = vld [vmem:[#allocation14 + $0x1c40] sm:$0xff]
    %v6364 = vld [vmem:[#allocation14 + $0x1c48] sm:$0xff]
    %v6365 = vld [vmem:[#allocation14 + $0x1c50] sm:$0xff]
    %v6366 = vld [vmem:[#allocation14 + $0x1c58] sm:$0xff]
    %v6367 = vld [vmem:[#allocation14 + $0x1cc0] sm:$0xff]
    %v6368 = vld [vmem:[#allocation14 + $0x1cc8] sm:$0xff]
    %v6369 = vld [vmem:[#allocation14 + $0x1cd0] sm:$0xff]
    %v6370 = vld [vmem:[#allocation14 + $0x1cd8] sm:$0xff]
    %v6371 = vld [vmem:[#allocation14 + $0x1d40] sm:$0xff]
    %v6372 = vld [vmem:[#allocation14 + $0x1d48] sm:$0xff]
    %v6373 = vld [vmem:[#allocation14 + $0x1d50] sm:$0xff]
    %v6374 = vld [vmem:[#allocation14 + $0x1d58] sm:$0xff]
    %v6375 = vld [vmem:[#allocation14 + $0x1dc0] sm:$0xff]
    %v6376 = vld [vmem:[#allocation14 + $0x1dc8] sm:$0xff]
    %v6377 = vld [vmem:[#allocation14 + $0x1dd0] sm:$0xff]
    %v6378 = vld [vmem:[#allocation14 + $0x1dd8] sm:$0xff]
    %v6379 = vld [vmem:[#allocation14 + $0x1e40] sm:$0xff]
    %v6380 = vld [vmem:[#allocation14 + $0x1e48] sm:$0xff]
    %v6381 = vld [vmem:[#allocation14 + $0x1e50] sm:$0xff]
    %v6382 = vld [vmem:[#allocation14 + $0x1e58] sm:$0xff]
    %v6383 = vld [vmem:[#allocation14 + $0x1ec0] sm:$0xff]
    %v6384 = vld [vmem:[#allocation14 + $0x1ec8] sm:$0xff]
    %v6385 = vld [vmem:[#allocation14 + $0x1ed0] sm:$0xff]
    %v6386 = vld [vmem:[#allocation14 + $0x1ed8] sm:$0xff]
    %v6387 = vld [vmem:[#allocation14 + $0x1f40] sm:$0xff]
    %v6388 = vld [vmem:[#allocation14 + $0x1f48] sm:$0xff]
    %v6389 = vld [vmem:[#allocation14 + $0x1f50] sm:$0xff]
    %v6390 = vld [vmem:[#allocation14 + $0x1f58] sm:$0xff]
    %v6391 = vld [vmem:[#allocation14 + $0x1fc0] sm:$0xff]
    %v6392 = vld [vmem:[#allocation14 + $0x1fc8] sm:$0xff]
    %v6393 = vld [vmem:[#allocation14 + $0x1fd0] sm:$0xff]
    %v6394 = vld [vmem:[#allocation14 + $0x1fd8] sm:$0xff]
    %v6651 = vunpack.c.l.b16 %v6139
    %v6652 = vunpack.c.h.b16 %v6139
    %v6653 = vunpack.c.l.b16 %v6140
    %v6654 = vunpack.c.h.b16 %v6140
    %v6655 = vunpack.c.l.b16 %v6141
    %v6656 = vunpack.c.h.b16 %v6141
    %v6657 = vunpack.c.l.b16 %v6142
    %v6658 = vunpack.c.h.b16 %v6142
    %v6659 = vunpack.c.l.b16 %v6143
    %v6660 = vunpack.c.h.b16 %v6143
    %v6661 = vunpack.c.l.b16 %v6144
    %v6662 = vunpack.c.h.b16 %v6144
    %v6663 = vunpack.c.l.b16 %v6145
    %v6664 = vunpack.c.h.b16 %v6145
    %v6665 = vunpack.c.l.b16 %v6146
    %v6666 = vunpack.c.h.b16 %v6146
    %v6667 = vunpack.c.l.b16 %v6147
    %v6668 = vunpack.c.h.b16 %v6147
    %v6669 = vunpack.c.l.b16 %v6148
    %v6670 = vunpack.c.h.b16 %v6148
    %v6671 = vunpack.c.l.b16 %v6149
    %v6672 = vunpack.c.h.b16 %v6149
    %v6673 = vunpack.c.l.b16 %v6150
    %v6674 = vunpack.c.h.b16 %v6150
    %v6675 = vunpack.c.l.b16 %v6151
    %v6676 = vunpack.c.h.b16 %v6151
    %v6677 = vunpack.c.l.b16 %v6152
    %v6678 = vunpack.c.h.b16 %v6152
    %v6679 = vunpack.c.l.b16 %v6153
    %v6680 = vunpack.c.h.b16 %v6153
    %v6681 = vunpack.c.l.b16 %v6154
    %v6682 = vunpack.c.h.b16 %v6154
    %v6683 = vunpack.c.l.b16 %v6155
    %v6684 = vunpack.c.h.b16 %v6155
    %v6685 = vunpack.c.l.b16 %v6156
    %v6686 = vunpack.c.h.b16 %v6156
    %v6687 = vunpack.c.l.b16 %v6157
    %v6688 = vunpack.c.h.b16 %v6157
    %v6689 = vunpack.c.l.b16 %v6158
    %v6690 = vunpack.c.h.b16 %v6158
    %v6691 = vunpack.c.l.b16 %v6159
    %v6692 = vunpack.c.h.b16 %v6159
    %v6693 = vunpack.c.l.b16 %v6160
    %v6694 = vunpack.c.h.b16 %v6160
    %v6695 = vunpack.c.l.b16 %v6161
    %v6696 = vunpack.c.h.b16 %v6161
    %v6697 = vunpack.c.l.b16 %v6162
    %v6698 = vunpack.c.h.b16 %v6162
    %v6699 = vunpack.c.l.b16 %v6163
    %v6700 = vunpack.c.h.b16 %v6163
    %v6701 = vunpack.c.l.b16 %v6164
    %v6702 = vunpack.c.h.b16 %v6164
    %v6703 = vunpack.c.l.b16 %v6165
    %v6704 = vunpack.c.h.b16 %v6165
    %v6705 = vunpack.c.l.b16 %v6166
    %v6706 = vunpack.c.h.b16 %v6166
    %v6707 = vunpack.c.l.b16 %v6167
    %v6708 = vunpack.c.h.b16 %v6167
    %v6709 = vunpack.c.l.b16 %v6168
    %v6710 = vunpack.c.h.b16 %v6168
    %v6711 = vunpack.c.l.b16 %v6169
    %v6712 = vunpack.c.h.b16 %v6169
    %v6713 = vunpack.c.l.b16 %v6170
    %v6714 = vunpack.c.h.b16 %v6170
    %v6715 = vunpack.c.l.b16 %v6171
    %v6716 = vunpack.c.h.b16 %v6171
    %v6717 = vunpack.c.l.b16 %v6172
    %v6718 = vunpack.c.h.b16 %v6172
    %v6719 = vunpack.c.l.b16 %v6173
    %v6720 = vunpack.c.h.b16 %v6173
    %v6721 = vunpack.c.l.b16 %v6174
    %v6722 = vunpack.c.h.b16 %v6174
    %v6723 = vunpack.c.l.b16 %v6175
    %v6724 = vunpack.c.h.b16 %v6175
    %v6725 = vunpack.c.l.b16 %v6176
    %v6726 = vunpack.c.h.b16 %v6176
    %v6727 = vunpack.c.l.b16 %v6177
    %v6728 = vunpack.c.h.b16 %v6177
    %v6729 = vunpack.c.l.b16 %v6178
    %v6730 = vunpack.c.h.b16 %v6178
    %v6731 = vunpack.c.l.b16 %v6179
    %v6732 = vunpack.c.h.b16 %v6179
    %v6733 = vunpack.c.l.b16 %v6180
    %v6734 = vunpack.c.h.b16 %v6180
    %v6735 = vunpack.c.l.b16 %v6181
    %v6736 = vunpack.c.h.b16 %v6181
    %v6737 = vunpack.c.l.b16 %v6182
    %v6738 = vunpack.c.h.b16 %v6182
    %v6739 = vunpack.c.l.b16 %v6183
    %v6740 = vunpack.c.h.b16 %v6183
    %v6741 = vunpack.c.l.b16 %v6184
    %v6742 = vunpack.c.h.b16 %v6184
    %v6743 = vunpack.c.l.b16 %v6185
    %v6744 = vunpack.c.h.b16 %v6185
    %v6745 = vunpack.c.l.b16 %v6186
    %v6746 = vunpack.c.h.b16 %v6186
    %v6747 = vunpack.c.l.b16 %v6187
    %v6748 = vunpack.c.h.b16 %v6187
    %v6749 = vunpack.c.l.b16 %v6188
    %v6750 = vunpack.c.h.b16 %v6188
    %v6751 = vunpack.c.l.b16 %v6189
    %v6752 = vunpack.c.h.b16 %v6189
    %v6753 = vunpack.c.l.b16 %v6190
    %v6754 = vunpack.c.h.b16 %v6190
    %v6755 = vunpack.c.l.b16 %v6191
    %v6756 = vunpack.c.h.b16 %v6191
    %v6757 = vunpack.c.l.b16 %v6192
    %v6758 = vunpack.c.h.b16 %v6192
    %v6759 = vunpack.c.l.b16 %v6193
    %v6760 = vunpack.c.h.b16 %v6193
    %v6761 = vunpack.c.l.b16 %v6194
    %v6762 = vunpack.c.h.b16 %v6194
    %v6763 = vunpack.c.l.b16 %v6195
    %v6764 = vunpack.c.h.b16 %v6195
    %v6765 = vunpack.c.l.b16 %v6196
    %v6766 = vunpack.c.h.b16 %v6196
    %v6767 = vunpack.c.l.b16 %v6197
    %v6768 = vunpack.c.h.b16 %v6197
    %v6769 = vunpack.c.l.b16 %v6198
    %v6770 = vunpack.c.h.b16 %v6198
    %v6771 = vunpack.c.l.b16 %v6199
    %v6772 = vunpack.c.h.b16 %v6199
    %v6773 = vunpack.c.l.b16 %v6200
    %v6774 = vunpack.c.h.b16 %v6200
    %v6775 = vunpack.c.l.b16 %v6201
    %v6776 = vunpack.c.h.b16 %v6201
    %v6777 = vunpack.c.l.b16 %v6202
    %v6778 = vunpack.c.h.b16 %v6202
    %v6779 = vunpack.c.l.b16 %v6203
    %v6780 = vunpack.c.h.b16 %v6203
    %v6781 = vunpack.c.l.b16 %v6204
    %v6782 = vunpack.c.h.b16 %v6204
    %v6783 = vunpack.c.l.b16 %v6205
    %v6784 = vunpack.c.h.b16 %v6205
    %v6785 = vunpack.c.l.b16 %v6206
    %v6786 = vunpack.c.h.b16 %v6206
    %v6787 = vunpack.c.l.b16 %v6207
    %v6788 = vunpack.c.h.b16 %v6207
    %v6789 = vunpack.c.l.b16 %v6208
    %v6790 = vunpack.c.h.b16 %v6208
    %v6791 = vunpack.c.l.b16 %v6209
    %v6792 = vunpack.c.h.b16 %v6209
    %v6793 = vunpack.c.l.b16 %v6210
    %v6794 = vunpack.c.h.b16 %v6210
    %v6795 = vunpack.c.l.b16 %v6211
    %v6796 = vunpack.c.h.b16 %v6211
    %v6797 = vunpack.c.l.b16 %v6212
    %v6798 = vunpack.c.h.b16 %v6212
    %v6799 = vunpack.c.l.b16 %v6213
    %v6800 = vunpack.c.h.b16 %v6213
    %v6801 = vunpack.c.l.b16 %v6214
    %v6802 = vunpack.c.h.b16 %v6214
    %v6803 = vunpack.c.l.b16 %v6215
    %v6804 = vunpack.c.h.b16 %v6215
    %v6805 = vunpack.c.l.b16 %v6216
    %v6806 = vunpack.c.h.b16 %v6216
    %v6807 = vunpack.c.l.b16 %v6217
    %v6808 = vunpack.c.h.b16 %v6217
    %v6809 = vunpack.c.l.b16 %v6218
    %v6810 = vunpack.c.h.b16 %v6218
    %v6811 = vunpack.c.l.b16 %v6219
    %v6812 = vunpack.c.h.b16 %v6219
    %v6813 = vunpack.c.l.b16 %v6220
    %v6814 = vunpack.c.h.b16 %v6220
    %v6815 = vunpack.c.l.b16 %v6221
    %v6816 = vunpack.c.h.b16 %v6221
    %v6817 = vunpack.c.l.b16 %v6222
    %v6818 = vunpack.c.h.b16 %v6222
    %v6819 = vunpack.c.l.b16 %v6223
    %v6820 = vunpack.c.h.b16 %v6223
    %v6821 = vunpack.c.l.b16 %v6224
    %v6822 = vunpack.c.h.b16 %v6224
    %v6823 = vunpack.c.l.b16 %v6225
    %v6824 = vunpack.c.h.b16 %v6225
    %v6825 = vunpack.c.l.b16 %v6226
    %v6826 = vunpack.c.h.b16 %v6226
    %v6827 = vunpack.c.l.b16 %v6227
    %v6828 = vunpack.c.h.b16 %v6227
    %v6829 = vunpack.c.l.b16 %v6228
    %v6830 = vunpack.c.h.b16 %v6228
    %v6831 = vunpack.c.l.b16 %v6229
    %v6832 = vunpack.c.h.b16 %v6229
    %v6833 = vunpack.c.l.b16 %v6230
    %v6834 = vunpack.c.h.b16 %v6230
    %v6835 = vunpack.c.l.b16 %v6231
    %v6836 = vunpack.c.h.b16 %v6231
    %v6837 = vunpack.c.l.b16 %v6232
    %v6838 = vunpack.c.h.b16 %v6232
    %v6839 = vunpack.c.l.b16 %v6233
    %v6840 = vunpack.c.h.b16 %v6233
    %v6841 = vunpack.c.l.b16 %v6234
    %v6842 = vunpack.c.h.b16 %v6234
    %v6843 = vunpack.c.l.b16 %v6235
    %v6844 = vunpack.c.h.b16 %v6235
    %v6845 = vunpack.c.l.b16 %v6236
    %v6846 = vunpack.c.h.b16 %v6236
    %v6847 = vunpack.c.l.b16 %v6237
    %v6848 = vunpack.c.h.b16 %v6237
    %v6849 = vunpack.c.l.b16 %v6238
    %v6850 = vunpack.c.h.b16 %v6238
    %v6851 = vunpack.c.l.b16 %v6239
    %v6852 = vunpack.c.h.b16 %v6239
    %v6853 = vunpack.c.l.b16 %v6240
    %v6854 = vunpack.c.h.b16 %v6240
    %v6855 = vunpack.c.l.b16 %v6241
    %v6856 = vunpack.c.h.b16 %v6241
    %v6857 = vunpack.c.l.b16 %v6242
    %v6858 = vunpack.c.h.b16 %v6242
    %v6859 = vunpack.c.l.b16 %v6243
    %v6860 = vunpack.c.h.b16 %v6243
    %v6861 = vunpack.c.l.b16 %v6244
    %v6862 = vunpack.c.h.b16 %v6244
    %v6863 = vunpack.c.l.b16 %v6245
    %v6864 = vunpack.c.h.b16 %v6245
    %v6865 = vunpack.c.l.b16 %v6246
    %v6866 = vunpack.c.h.b16 %v6246
    %v6867 = vunpack.c.l.b16 %v6247
    %v6868 = vunpack.c.h.b16 %v6247
    %v6869 = vunpack.c.l.b16 %v6248
    %v6870 = vunpack.c.h.b16 %v6248
    %v6871 = vunpack.c.l.b16 %v6249
    %v6872 = vunpack.c.h.b16 %v6249
    %v6873 = vunpack.c.l.b16 %v6250
    %v6874 = vunpack.c.h.b16 %v6250
    %v6875 = vunpack.c.l.b16 %v6251
    %v6876 = vunpack.c.h.b16 %v6251
    %v6877 = vunpack.c.l.b16 %v6252
    %v6878 = vunpack.c.h.b16 %v6252
    %v6879 = vunpack.c.l.b16 %v6253
    %v6880 = vunpack.c.h.b16 %v6253
    %v6881 = vunpack.c.l.b16 %v6254
    %v6882 = vunpack.c.h.b16 %v6254
    %v6883 = vunpack.c.l.b16 %v6255
    %v6884 = vunpack.c.h.b16 %v6255
    %v6885 = vunpack.c.l.b16 %v6256
    %v6886 = vunpack.c.h.b16 %v6256
    %v6887 = vunpack.c.l.b16 %v6257
    %v6888 = vunpack.c.h.b16 %v6257
    %v6889 = vunpack.c.l.b16 %v6258
    %v6890 = vunpack.c.h.b16 %v6258
    %v6891 = vunpack.c.l.b16 %v6259
    %v6892 = vunpack.c.h.b16 %v6259
    %v6893 = vunpack.c.l.b16 %v6260
    %v6894 = vunpack.c.h.b16 %v6260
    %v6895 = vunpack.c.l.b16 %v6261
    %v6896 = vunpack.c.h.b16 %v6261
    %v6897 = vunpack.c.l.b16 %v6262
    %v6898 = vunpack.c.h.b16 %v6262
    %v6899 = vunpack.c.l.b16 %v6263
    %v6900 = vunpack.c.h.b16 %v6263
    %v6901 = vunpack.c.l.b16 %v6264
    %v6902 = vunpack.c.h.b16 %v6264
    %v6903 = vunpack.c.l.b16 %v6265
    %v6904 = vunpack.c.h.b16 %v6265
    %v6905 = vunpack.c.l.b16 %v6266
    %v6906 = vunpack.c.h.b16 %v6266
    %v6907 = vunpack.c.l.b16 %v6267
    %v6908 = vunpack.c.h.b16 %v6267
    %v6909 = vunpack.c.l.b16 %v6268
    %v6910 = vunpack.c.h.b16 %v6268
    %v6911 = vunpack.c.l.b16 %v6269
    %v6912 = vunpack.c.h.b16 %v6269
    %v6913 = vunpack.c.l.b16 %v6270
    %v6914 = vunpack.c.h.b16 %v6270
    %v6915 = vunpack.c.l.b16 %v6271
    %v6916 = vunpack.c.h.b16 %v6271
    %v6917 = vunpack.c.l.b16 %v6272
    %v6918 = vunpack.c.h.b16 %v6272
    %v6919 = vunpack.c.l.b16 %v6273
    %v6920 = vunpack.c.h.b16 %v6273
    %v6921 = vunpack.c.l.b16 %v6274
    %v6922 = vunpack.c.h.b16 %v6274
    %v6923 = vunpack.c.l.b16 %v6275
    %v6924 = vunpack.c.h.b16 %v6275
    %v6925 = vunpack.c.l.b16 %v6276
    %v6926 = vunpack.c.h.b16 %v6276
    %v6927 = vunpack.c.l.b16 %v6277
    %v6928 = vunpack.c.h.b16 %v6277
    %v6929 = vunpack.c.l.b16 %v6278
    %v6930 = vunpack.c.h.b16 %v6278
    %v6931 = vunpack.c.l.b16 %v6279
    %v6932 = vunpack.c.h.b16 %v6279
    %v6933 = vunpack.c.l.b16 %v6280
    %v6934 = vunpack.c.h.b16 %v6280
    %v6935 = vunpack.c.l.b16 %v6281
    %v6936 = vunpack.c.h.b16 %v6281
    %v6937 = vunpack.c.l.b16 %v6282
    %v6938 = vunpack.c.h.b16 %v6282
    %v6939 = vunpack.c.l.b16 %v6283
    %v6940 = vunpack.c.h.b16 %v6283
    %v6941 = vunpack.c.l.b16 %v6284
    %v6942 = vunpack.c.h.b16 %v6284
    %v6943 = vunpack.c.l.b16 %v6285
    %v6944 = vunpack.c.h.b16 %v6285
    %v6945 = vunpack.c.l.b16 %v6286
    %v6946 = vunpack.c.h.b16 %v6286
    %v6947 = vunpack.c.l.b16 %v6287
    %v6948 = vunpack.c.h.b16 %v6287
    %v6949 = vunpack.c.l.b16 %v6288
    %v6950 = vunpack.c.h.b16 %v6288
    %v6951 = vunpack.c.l.b16 %v6289
    %v6952 = vunpack.c.h.b16 %v6289
    %v6953 = vunpack.c.l.b16 %v6290
    %v6954 = vunpack.c.h.b16 %v6290
    %v6955 = vunpack.c.l.b16 %v6291
    %v6956 = vunpack.c.h.b16 %v6291
    %v6957 = vunpack.c.l.b16 %v6292
    %v6958 = vunpack.c.h.b16 %v6292
    %v6959 = vunpack.c.l.b16 %v6293
    %v6960 = vunpack.c.h.b16 %v6293
    %v6961 = vunpack.c.l.b16 %v6294
    %v6962 = vunpack.c.h.b16 %v6294
    %v6963 = vunpack.c.l.b16 %v6295
    %v6964 = vunpack.c.h.b16 %v6295
    %v6965 = vunpack.c.l.b16 %v6296
    %v6966 = vunpack.c.h.b16 %v6296
    %v6967 = vunpack.c.l.b16 %v6297
    %v6968 = vunpack.c.h.b16 %v6297
    %v6969 = vunpack.c.l.b16 %v6298
    %v6970 = vunpack.c.h.b16 %v6298
    %v6971 = vunpack.c.l.b16 %v6299
    %v6972 = vunpack.c.h.b16 %v6299
    %v6973 = vunpack.c.l.b16 %v6300
    %v6974 = vunpack.c.h.b16 %v6300
    %v6975 = vunpack.c.l.b16 %v6301
    %v6976 = vunpack.c.h.b16 %v6301
    %v6977 = vunpack.c.l.b16 %v6302
    %v6978 = vunpack.c.h.b16 %v6302
    %v6979 = vunpack.c.l.b16 %v6303
    %v6980 = vunpack.c.h.b16 %v6303
    %v6981 = vunpack.c.l.b16 %v6304
    %v6982 = vunpack.c.h.b16 %v6304
    %v6983 = vunpack.c.l.b16 %v6305
    %v6984 = vunpack.c.h.b16 %v6305
    %v6985 = vunpack.c.l.b16 %v6306
    %v6986 = vunpack.c.h.b16 %v6306
    %v6987 = vunpack.c.l.b16 %v6307
    %v6988 = vunpack.c.h.b16 %v6307
    %v6989 = vunpack.c.l.b16 %v6308
    %v6990 = vunpack.c.h.b16 %v6308
    %v6991 = vunpack.c.l.b16 %v6309
    %v6992 = vunpack.c.h.b16 %v6309
    %v6993 = vunpack.c.l.b16 %v6310
    %v6994 = vunpack.c.h.b16 %v6310
    %v6995 = vunpack.c.l.b16 %v6311
    %v6996 = vunpack.c.h.b16 %v6311
    %v6997 = vunpack.c.l.b16 %v6312
    %v6998 = vunpack.c.h.b16 %v6312
    %v6999 = vunpack.c.l.b16 %v6313
    %v7000 = vunpack.c.h.b16 %v6313
    %v7001 = vunpack.c.l.b16 %v6314
    %v7002 = vunpack.c.h.b16 %v6314
    %v7003 = vunpack.c.l.b16 %v6315
    %v7004 = vunpack.c.h.b16 %v6315
    %v7005 = vunpack.c.l.b16 %v6316
    %v7006 = vunpack.c.h.b16 %v6316
    %v7007 = vunpack.c.l.b16 %v6317
    %v7008 = vunpack.c.h.b16 %v6317
    %v7009 = vunpack.c.l.b16 %v6318
    %v7010 = vunpack.c.h.b16 %v6318
    %v7011 = vunpack.c.l.b16 %v6319
    %v7012 = vunpack.c.h.b16 %v6319
    %v7013 = vunpack.c.l.b16 %v6320
    %v7014 = vunpack.c.h.b16 %v6320
    %v7015 = vunpack.c.l.b16 %v6321
    %v7016 = vunpack.c.h.b16 %v6321
    %v7017 = vunpack.c.l.b16 %v6322
    %v7018 = vunpack.c.h.b16 %v6322
    %v7019 = vunpack.c.l.b16 %v6323
    %v7020 = vunpack.c.h.b16 %v6323
    %v7021 = vunpack.c.l.b16 %v6324
    %v7022 = vunpack.c.h.b16 %v6324
    %v7023 = vunpack.c.l.b16 %v6325
    %v7024 = vunpack.c.h.b16 %v6325
    %v7025 = vunpack.c.l.b16 %v6326
    %v7026 = vunpack.c.h.b16 %v6326
    %v7027 = vunpack.c.l.b16 %v6327
    %v7028 = vunpack.c.h.b16 %v6327
    %v7029 = vunpack.c.l.b16 %v6328
    %v7030 = vunpack.c.h.b16 %v6328
    %v7031 = vunpack.c.l.b16 %v6329
    %v7032 = vunpack.c.h.b16 %v6329
    %v7033 = vunpack.c.l.b16 %v6330
    %v7034 = vunpack.c.h.b16 %v6330
    %v7035 = vunpack.c.l.b16 %v6331
    %v7036 = vunpack.c.h.b16 %v6331
    %v7037 = vunpack.c.l.b16 %v6332
    %v7038 = vunpack.c.h.b16 %v6332
    %v7039 = vunpack.c.l.b16 %v6333
    %v7040 = vunpack.c.h.b16 %v6333
    %v7041 = vunpack.c.l.b16 %v6334
    %v7042 = vunpack.c.h.b16 %v6334
    %v7043 = vunpack.c.l.b16 %v6335
    %v7044 = vunpack.c.h.b16 %v6335
    %v7045 = vunpack.c.l.b16 %v6336
    %v7046 = vunpack.c.h.b16 %v6336
    %v7047 = vunpack.c.l.b16 %v6337
    %v7048 = vunpack.c.h.b16 %v6337
    %v7049 = vunpack.c.l.b16 %v6338
    %v7050 = vunpack.c.h.b16 %v6338
    %v7051 = vunpack.c.l.b16 %v6339
    %v7052 = vunpack.c.h.b16 %v6339
    %v7053 = vunpack.c.l.b16 %v6340
    %v7054 = vunpack.c.h.b16 %v6340
    %v7055 = vunpack.c.l.b16 %v6341
    %v7056 = vunpack.c.h.b16 %v6341
    %v7057 = vunpack.c.l.b16 %v6342
    %v7058 = vunpack.c.h.b16 %v6342
    %v7059 = vunpack.c.l.b16 %v6343
    %v7060 = vunpack.c.h.b16 %v6343
    %v7061 = vunpack.c.l.b16 %v6344
    %v7062 = vunpack.c.h.b16 %v6344
    %v7063 = vunpack.c.l.b16 %v6345
    %v7064 = vunpack.c.h.b16 %v6345
    %v7065 = vunpack.c.l.b16 %v6346
    %v7066 = vunpack.c.h.b16 %v6346
    %v7067 = vunpack.c.l.b16 %v6347
    %v7068 = vunpack.c.h.b16 %v6347
    %v7069 = vunpack.c.l.b16 %v6348
    %v7070 = vunpack.c.h.b16 %v6348
    %v7071 = vunpack.c.l.b16 %v6349
    %v7072 = vunpack.c.h.b16 %v6349
    %v7073 = vunpack.c.l.b16 %v6350
    %v7074 = vunpack.c.h.b16 %v6350
    %v7075 = vunpack.c.l.b16 %v6351
    %v7076 = vunpack.c.h.b16 %v6351
    %v7077 = vunpack.c.l.b16 %v6352
    %v7078 = vunpack.c.h.b16 %v6352
    %v7079 = vunpack.c.l.b16 %v6353
    %v7080 = vunpack.c.h.b16 %v6353
    %v7081 = vunpack.c.l.b16 %v6354
    %v7082 = vunpack.c.h.b16 %v6354
    %v7083 = vunpack.c.l.b16 %v6355
    %v7084 = vunpack.c.h.b16 %v6355
    %v7085 = vunpack.c.l.b16 %v6356
    %v7086 = vunpack.c.h.b16 %v6356
    %v7087 = vunpack.c.l.b16 %v6357
    %v7088 = vunpack.c.h.b16 %v6357
    %v7089 = vunpack.c.l.b16 %v6358
    %v7090 = vunpack.c.h.b16 %v6358
    %v7091 = vunpack.c.l.b16 %v6359
    %v7092 = vunpack.c.h.b16 %v6359
    %v7093 = vunpack.c.l.b16 %v6360
    %v7094 = vunpack.c.h.b16 %v6360
    %v7095 = vunpack.c.l.b16 %v6361
    %v7096 = vunpack.c.h.b16 %v6361
    %v7097 = vunpack.c.l.b16 %v6362
    %v7098 = vunpack.c.h.b16 %v6362
    %v7099 = vunpack.c.l.b16 %v6363
    %v7100 = vunpack.c.h.b16 %v6363
    %v7101 = vunpack.c.l.b16 %v6364
    %v7102 = vunpack.c.h.b16 %v6364
    %v7103 = vunpack.c.l.b16 %v6365
    %v7104 = vunpack.c.h.b16 %v6365
    %v7105 = vunpack.c.l.b16 %v6366
    %v7106 = vunpack.c.h.b16 %v6366
    %v7107 = vunpack.c.l.b16 %v6367
    %v7108 = vunpack.c.h.b16 %v6367
    %v7109 = vunpack.c.l.b16 %v6368
    %v7110 = vunpack.c.h.b16 %v6368
    %v7111 = vunpack.c.l.b16 %v6369
    %v7112 = vunpack.c.h.b16 %v6369
    %v7113 = vunpack.c.l.b16 %v6370
    %v7114 = vunpack.c.h.b16 %v6370
    %v7115 = vunpack.c.l.b16 %v6371
    %v7116 = vunpack.c.h.b16 %v6371
    %v7117 = vunpack.c.l.b16 %v6372
    %v7118 = vunpack.c.h.b16 %v6372
    %v7119 = vunpack.c.l.b16 %v6373
    %v7120 = vunpack.c.h.b16 %v6373
    %v7121 = vunpack.c.l.b16 %v6374
    %v7122 = vunpack.c.h.b16 %v6374
    %v7123 = vunpack.c.l.b16 %v6375
    %v7124 = vunpack.c.h.b16 %v6375
    %v7125 = vunpack.c.l.b16 %v6376
    %v7126 = vunpack.c.h.b16 %v6376
    %v7127 = vunpack.c.l.b16 %v6377
    %v7128 = vunpack.c.h.b16 %v6377
    %v7129 = vunpack.c.l.b16 %v6378
    %v7130 = vunpack.c.h.b16 %v6378
    %v7131 = vunpack.c.l.b16 %v6379
    %v7132 = vunpack.c.h.b16 %v6379
    %v7133 = vunpack.c.l.b16 %v6380
    %v7134 = vunpack.c.h.b16 %v6380
    %v7135 = vunpack.c.l.b16 %v6381
    %v7136 = vunpack.c.h.b16 %v6381
    %v7137 = vunpack.c.l.b16 %v6382
    %v7138 = vunpack.c.h.b16 %v6382
    %v7139 = vunpack.c.l.b16 %v6383
    %v7140 = vunpack.c.h.b16 %v6383
    %v7141 = vunpack.c.l.b16 %v6384
    %v7142 = vunpack.c.h.b16 %v6384
    %v7143 = vunpack.c.l.b16 %v6385
    %v7144 = vunpack.c.h.b16 %v6385
    %v7145 = vunpack.c.l.b16 %v6386
    %v7146 = vunpack.c.h.b16 %v6386
    %v7147 = vunpack.c.l.b16 %v6387
    %v7148 = vunpack.c.h.b16 %v6387
    %v7149 = vunpack.c.l.b16 %v6388
    %v7150 = vunpack.c.h.b16 %v6388
    %v7151 = vunpack.c.l.b16 %v6389
    %v7152 = vunpack.c.h.b16 %v6389
    %v7153 = vunpack.c.l.b16 %v6390
    %v7154 = vunpack.c.h.b16 %v6390
    %v7155 = vunpack.c.l.b16 %v6391
    %v7156 = vunpack.c.h.b16 %v6391
    %v7157 = vunpack.c.l.b16 %v6392
    %v7158 = vunpack.c.h.b16 %v6392
    %v7159 = vunpack.c.l.b16 %v6393
    %v7160 = vunpack.c.h.b16 %v6393
    %v7161 = vunpack.c.l.b16 %v6394
    %v7162 = vunpack.c.h.b16 %v6394
    %v7163 = vpack.c.b16 %v6659, %v6651
    %v7164 = vpack.c.b16 %v6660, %v6652
    %v7165 = vpack.c.b16 %v6661, %v6653
    %v7166 = vpack.c.b16 %v6662, %v6654
    %v7167 = vpack.c.b16 %v6663, %v6655
    %v7168 = vpack.c.b16 %v6664, %v6656
    %v7169 = vpack.c.b16 %v6665, %v6657
    %v7170 = vpack.c.b16 %v6666, %v6658
    %v7171 = vpack.c.b16 %v6675, %v6667
    %v7172 = vpack.c.b16 %v6676, %v6668
    %v7173 = vpack.c.b16 %v6677, %v6669
    %v7174 = vpack.c.b16 %v6678, %v6670
    %v7175 = vpack.c.b16 %v6679, %v6671
    %v7176 = vpack.c.b16 %v6680, %v6672
    %v7177 = vpack.c.b16 %v6681, %v6673
    %v7178 = vpack.c.b16 %v6682, %v6674
    %v7179 = vpack.c.b16 %v6691, %v6683
    %v7180 = vpack.c.b16 %v6692, %v6684
    %v7181 = vpack.c.b16 %v6693, %v6685
    %v7182 = vpack.c.b16 %v6694, %v6686
    %v7183 = vpack.c.b16 %v6695, %v6687
    %v7184 = vpack.c.b16 %v6696, %v6688
    %v7185 = vpack.c.b16 %v6697, %v6689
    %v7186 = vpack.c.b16 %v6698, %v6690
    %v7187 = vpack.c.b16 %v6707, %v6699
    %v7188 = vpack.c.b16 %v6708, %v6700
    %v7189 = vpack.c.b16 %v6709, %v6701
    %v7190 = vpack.c.b16 %v6710, %v6702
    %v7191 = vpack.c.b16 %v6711, %v6703
    %v7192 = vpack.c.b16 %v6712, %v6704
    %v7193 = vpack.c.b16 %v6713, %v6705
    %v7194 = vpack.c.b16 %v6714, %v6706
    %v7195 = vpack.c.b16 %v6723, %v6715
    %v7196 = vpack.c.b16 %v6724, %v6716
    %v7197 = vpack.c.b16 %v6725, %v6717
    %v7198 = vpack.c.b16 %v6726, %v6718
    %v7199 = vpack.c.b16 %v6727, %v6719
    %v7200 = vpack.c.b16 %v6728, %v6720
    %v7201 = vpack.c.b16 %v6729, %v6721
    %v7202 = vpack.c.b16 %v6730, %v6722
    %v7203 = vpack.c.b16 %v6739, %v6731
    %v7204 = vpack.c.b16 %v6740, %v6732
    %v7205 = vpack.c.b16 %v6741, %v6733
    %v7206 = vpack.c.b16 %v6742, %v6734
    %v7207 = vpack.c.b16 %v6743, %v6735
    %v7208 = vpack.c.b16 %v6744, %v6736
    %v7209 = vpack.c.b16 %v6745, %v6737
    %v7210 = vpack.c.b16 %v6746, %v6738
    %v7211 = vpack.c.b16 %v6755, %v6747
    %v7212 = vpack.c.b16 %v6756, %v6748
    %v7213 = vpack.c.b16 %v6757, %v6749
    %v7214 = vpack.c.b16 %v6758, %v6750
    %v7215 = vpack.c.b16 %v6759, %v6751
    %v7216 = vpack.c.b16 %v6760, %v6752
    %v7217 = vpack.c.b16 %v6761, %v6753
    %v7218 = vpack.c.b16 %v6762, %v6754
    %v7219 = vpack.c.b16 %v6771, %v6763
    %v7220 = vpack.c.b16 %v6772, %v6764
    %v7221 = vpack.c.b16 %v6773, %v6765
    %v7222 = vpack.c.b16 %v6774, %v6766
    %v7223 = vpack.c.b16 %v6775, %v6767
    %v7224 = vpack.c.b16 %v6776, %v6768
    %v7225 = vpack.c.b16 %v6777, %v6769
    %v7226 = vpack.c.b16 %v6778, %v6770
    %v7227 = vpack.c.b16 %v6787, %v6779
    %v7228 = vpack.c.b16 %v6788, %v6780
    %v7229 = vpack.c.b16 %v6789, %v6781
    %v7230 = vpack.c.b16 %v6790, %v6782
    %v7231 = vpack.c.b16 %v6791, %v6783
    %v7232 = vpack.c.b16 %v6792, %v6784
    %v7233 = vpack.c.b16 %v6793, %v6785
    %v7234 = vpack.c.b16 %v6794, %v6786
    %v7235 = vpack.c.b16 %v6803, %v6795
    %v7236 = vpack.c.b16 %v6804, %v6796
    %v7237 = vpack.c.b16 %v6805, %v6797
    %v7238 = vpack.c.b16 %v6806, %v6798
    %v7239 = vpack.c.b16 %v6807, %v6799
    %v7240 = vpack.c.b16 %v6808, %v6800
    %v7241 = vpack.c.b16 %v6809, %v6801
    %v7242 = vpack.c.b16 %v6810, %v6802
    %v7243 = vpack.c.b16 %v6819, %v6811
    %v7244 = vpack.c.b16 %v6820, %v6812
    %v7245 = vpack.c.b16 %v6821, %v6813
    %v7246 = vpack.c.b16 %v6822, %v6814
    %v7247 = vpack.c.b16 %v6823, %v6815
    %v7248 = vpack.c.b16 %v6824, %v6816
    %v7249 = vpack.c.b16 %v6825, %v6817
    %v7250 = vpack.c.b16 %v6826, %v6818
    %v7251 = vpack.c.b16 %v6835, %v6827
    %v7252 = vpack.c.b16 %v6836, %v6828
    %v7253 = vpack.c.b16 %v6837, %v6829
    %v7254 = vpack.c.b16 %v6838, %v6830
    %v7255 = vpack.c.b16 %v6839, %v6831
    %v7256 = vpack.c.b16 %v6840, %v6832
    %v7257 = vpack.c.b16 %v6841, %v6833
    %v7258 = vpack.c.b16 %v6842, %v6834
    %v7259 = vpack.c.b16 %v6851, %v6843
    %v7260 = vpack.c.b16 %v6852, %v6844
    %v7261 = vpack.c.b16 %v6853, %v6845
    %v7262 = vpack.c.b16 %v6854, %v6846
    %v7263 = vpack.c.b16 %v6855, %v6847
    %v7264 = vpack.c.b16 %v6856, %v6848
    %v7265 = vpack.c.b16 %v6857, %v6849
    %v7266 = vpack.c.b16 %v6858, %v6850
    %v7267 = vpack.c.b16 %v6867, %v6859
    %v7268 = vpack.c.b16 %v6868, %v6860
    %v7269 = vpack.c.b16 %v6869, %v6861
    %v7270 = vpack.c.b16 %v6870, %v6862
    %v7271 = vpack.c.b16 %v6871, %v6863
    %v7272 = vpack.c.b16 %v6872, %v6864
    %v7273 = vpack.c.b16 %v6873, %v6865
    %v7274 = vpack.c.b16 %v6874, %v6866
    %v7275 = vpack.c.b16 %v6883, %v6875
    %v7276 = vpack.c.b16 %v6884, %v6876
    %v7277 = vpack.c.b16 %v6885, %v6877
    %v7278 = vpack.c.b16 %v6886, %v6878
    %v7279 = vpack.c.b16 %v6887, %v6879
    %v7280 = vpack.c.b16 %v6888, %v6880
    %v7281 = vpack.c.b16 %v6889, %v6881
    %v7282 = vpack.c.b16 %v6890, %v6882
    %v7283 = vpack.c.b16 %v6899, %v6891
    %v7284 = vpack.c.b16 %v6900, %v6892
    %v7285 = vpack.c.b16 %v6901, %v6893
    %v7286 = vpack.c.b16 %v6902, %v6894
    %v7287 = vpack.c.b16 %v6903, %v6895
    %v7288 = vpack.c.b16 %v6904, %v6896
    %v7289 = vpack.c.b16 %v6905, %v6897
    %v7290 = vpack.c.b16 %v6906, %v6898
    %v7291 = vpack.c.b16 %v6915, %v6907
    %v7292 = vpack.c.b16 %v6916, %v6908
    %v7293 = vpack.c.b16 %v6917, %v6909
    %v7294 = vpack.c.b16 %v6918, %v6910
    %v7295 = vpack.c.b16 %v6919, %v6911
    %v7296 = vpack.c.b16 %v6920, %v6912
    %v7297 = vpack.c.b16 %v6921, %v6913
    %v7298 = vpack.c.b16 %v6922, %v6914
    %v7299 = vpack.c.b16 %v6931, %v6923
    %v7300 = vpack.c.b16 %v6932, %v6924
    %v7301 = vpack.c.b16 %v6933, %v6925
    %v7302 = vpack.c.b16 %v6934, %v6926
    %v7303 = vpack.c.b16 %v6935, %v6927
    %v7304 = vpack.c.b16 %v6936, %v6928
    %v7305 = vpack.c.b16 %v6937, %v6929
    %v7306 = vpack.c.b16 %v6938, %v6930
    %v7307 = vpack.c.b16 %v6947, %v6939
    %v7308 = vpack.c.b16 %v6948, %v6940
    %v7309 = vpack.c.b16 %v6949, %v6941
    %v7310 = vpack.c.b16 %v6950, %v6942
    %v7311 = vpack.c.b16 %v6951, %v6943
    %v7312 = vpack.c.b16 %v6952, %v6944
    %v7313 = vpack.c.b16 %v6953, %v6945
    %v7314 = vpack.c.b16 %v6954, %v6946
    %v7315 = vpack.c.b16 %v6963, %v6955
    %v7316 = vpack.c.b16 %v6964, %v6956
    %v7317 = vpack.c.b16 %v6965, %v6957
    %v7318 = vpack.c.b16 %v6966, %v6958
    %v7319 = vpack.c.b16 %v6967, %v6959
    %v7320 = vpack.c.b16 %v6968, %v6960
    %v7321 = vpack.c.b16 %v6969, %v6961
    %v7322 = vpack.c.b16 %v6970, %v6962
    %v7323 = vpack.c.b16 %v6979, %v6971
    %v7324 = vpack.c.b16 %v6980, %v6972
    %v7325 = vpack.c.b16 %v6981, %v6973
    %v7326 = vpack.c.b16 %v6982, %v6974
    %v7327 = vpack.c.b16 %v6983, %v6975
    %v7328 = vpack.c.b16 %v6984, %v6976
    %v7329 = vpack.c.b16 %v6985, %v6977
    %v7330 = vpack.c.b16 %v6986, %v6978
    %v7331 = vpack.c.b16 %v6995, %v6987
    %v7332 = vpack.c.b16 %v6996, %v6988
    %v7333 = vpack.c.b16 %v6997, %v6989
    %v7334 = vpack.c.b16 %v6998, %v6990
    %v7335 = vpack.c.b16 %v6999, %v6991
    %v7336 = vpack.c.b16 %v7000, %v6992
    %v7337 = vpack.c.b16 %v7001, %v6993
    %v7338 = vpack.c.b16 %v7002, %v6994
    %v7339 = vpack.c.b16 %v7011, %v7003
    %v7340 = vpack.c.b16 %v7012, %v7004
    %v7341 = vpack.c.b16 %v7013, %v7005
    %v7342 = vpack.c.b16 %v7014, %v7006
    %v7343 = vpack.c.b16 %v7015, %v7007
    %v7344 = vpack.c.b16 %v7016, %v7008
    %v7345 = vpack.c.b16 %v7017, %v7009
    %v7346 = vpack.c.b16 %v7018, %v7010
    %v7347 = vpack.c.b16 %v7027, %v7019
    %v7348 = vpack.c.b16 %v7028, %v7020
    %v7349 = vpack.c.b16 %v7029, %v7021
    %v7350 = vpack.c.b16 %v7030, %v7022
    %v7351 = vpack.c.b16 %v7031, %v7023
    %v7352 = vpack.c.b16 %v7032, %v7024
    %v7353 = vpack.c.b16 %v7033, %v7025
    %v7354 = vpack.c.b16 %v7034, %v7026
    %v7355 = vpack.c.b16 %v7043, %v7035
    %v7356 = vpack.c.b16 %v7044, %v7036
    %v7357 = vpack.c.b16 %v7045, %v7037
    %v7358 = vpack.c.b16 %v7046, %v7038
    %v7359 = vpack.c.b16 %v7047, %v7039
    %v7360 = vpack.c.b16 %v7048, %v7040
    %v7361 = vpack.c.b16 %v7049, %v7041
    %v7362 = vpack.c.b16 %v7050, %v7042
    %v7363 = vpack.c.b16 %v7059, %v7051
    %v7364 = vpack.c.b16 %v7060, %v7052
    %v7365 = vpack.c.b16 %v7061, %v7053
    %v7366 = vpack.c.b16 %v7062, %v7054
    %v7367 = vpack.c.b16 %v7063, %v7055
    %v7368 = vpack.c.b16 %v7064, %v7056
    %v7369 = vpack.c.b16 %v7065, %v7057
    %v7370 = vpack.c.b16 %v7066, %v7058
    %v7371 = vpack.c.b16 %v7075, %v7067
    %v7372 = vpack.c.b16 %v7076, %v7068
    %v7373 = vpack.c.b16 %v7077, %v7069
    %v7374 = vpack.c.b16 %v7078, %v7070
    %v7375 = vpack.c.b16 %v7079, %v7071
    %v7376 = vpack.c.b16 %v7080, %v7072
    %v7377 = vpack.c.b16 %v7081, %v7073
    %v7378 = vpack.c.b16 %v7082, %v7074
    %v7379 = vpack.c.b16 %v7091, %v7083
    %v7380 = vpack.c.b16 %v7092, %v7084
    %v7381 = vpack.c.b16 %v7093, %v7085
    %v7382 = vpack.c.b16 %v7094, %v7086
    %v7383 = vpack.c.b16 %v7095, %v7087
    %v7384 = vpack.c.b16 %v7096, %v7088
    %v7385 = vpack.c.b16 %v7097, %v7089
    %v7386 = vpack.c.b16 %v7098, %v7090
    %v7387 = vpack.c.b16 %v7107, %v7099
    %v7388 = vpack.c.b16 %v7108, %v7100
    %v7389 = vpack.c.b16 %v7109, %v7101
    %v7390 = vpack.c.b16 %v7110, %v7102
    %v7391 = vpack.c.b16 %v7111, %v7103
    %v7392 = vpack.c.b16 %v7112, %v7104
    %v7393 = vpack.c.b16 %v7113, %v7105
    %v7394 = vpack.c.b16 %v7114, %v7106
    %v7395 = vpack.c.b16 %v7123, %v7115
    %v7396 = vpack.c.b16 %v7124, %v7116
    %v7397 = vpack.c.b16 %v7125, %v7117
    %v7398 = vpack.c.b16 %v7126, %v7118
    %v7399 = vpack.c.b16 %v7127, %v7119
    %v7400 = vpack.c.b16 %v7128, %v7120
    %v7401 = vpack.c.b16 %v7129, %v7121
    %v7402 = vpack.c.b16 %v7130, %v7122
    %v7403 = vpack.c.b16 %v7139, %v7131
    %v7404 = vpack.c.b16 %v7140, %v7132
    %v7405 = vpack.c.b16 %v7141, %v7133
    %v7406 = vpack.c.b16 %v7142, %v7134
    %v7407 = vpack.c.b16 %v7143, %v7135
    %v7408 = vpack.c.b16 %v7144, %v7136
    %v7409 = vpack.c.b16 %v7145, %v7137
    %v7410 = vpack.c.b16 %v7146, %v7138
    %v7411 = vpack.c.b16 %v7155, %v7147
    %v7412 = vpack.c.b16 %v7156, %v7148
    %v7413 = vpack.c.b16 %v7157, %v7149
    %v7414 = vpack.c.b16 %v7158, %v7150
    %v7415 = vpack.c.b16 %v7159, %v7151
    %v7416 = vpack.c.b16 %v7160, %v7152
    %v7417 = vpack.c.b16 %v7161, %v7153
    %v7418 = vpack.c.b16 %v7162, %v7154
    %7675 = vmatpush.bf16.msra.mxu0 %v7219
    %7676 = vmatpush.bf16.msra.mxu0 %v7211
    %7677 = vmatpush.bf16.msra.mxu0 %v7203
    %7678 = vmatpush.bf16.msra.mxu0 %v7195
    %7679 = vmatpush.bf16.msra.mxu0 %v7187
    %7680 = vmatpush.bf16.msra.mxu0 %v7179
    %7681 = vmatpush.bf16.msra.mxu0 %v7171
    %7682 = vmatpush.bf16.msra.mxu0 %v7163
    %7683 = vmatmul.bf16.gmra.mxu0 %v1871
    %v7684 = vpop.f32.mrf.mxu0
    %v7685 = vadd.f32 0.0, %v7684
    %v7686 = vpop.f32.mrf.mxu0
    %7687 = vdwg.mxu0
    %7688 = vmatpush.bf16.msra.mxu0 %v7283
    %7689 = vmatpush.bf16.msra.mxu0 %v7275
    %7690 = vmatpush.bf16.msra.mxu0 %v7267
    %7691 = vmatpush.bf16.msra.mxu0 %v7259
    %7692 = vmatpush.bf16.msra.mxu0 %v7251
    %7693 = vmatpush.bf16.msra.mxu0 %v7243
    %7694 = vmatpush.bf16.msra.mxu0 %v7235
    %7695 = vmatpush.bf16.msra.mxu0 %v7227
    %7696 = vmatmul.bf16.gmra.mxu0 %v1872
    %v7697 = vpop.f32.mrf.mxu0
    %v7698 = vadd.f32 %v7685, %v7697
    %v7699 = vpop.f32.mrf.mxu0
    %7700 = vdwg.mxu0
    %7701 = vmatpush.bf16.msra.mxu0 %v7347
    %7702 = vmatpush.bf16.msra.mxu0 %v7339
    %7703 = vmatpush.bf16.msra.mxu0 %v7331
    %7704 = vmatpush.bf16.msra.mxu0 %v7323
    %7705 = vmatpush.bf16.msra.mxu0 %v7315
    %7706 = vmatpush.bf16.msra.mxu0 %v7307
    %7707 = vmatpush.bf16.msra.mxu0 %v7299
    %7708 = vmatpush.bf16.msra.mxu0 %v7291
    %7709 = vmatmul.bf16.gmra.mxu0 %v1873
    %v7710 = vpop.f32.mrf.mxu0
    %v7711 = vadd.f32 %v7698, %v7710
    %v7712 = vpop.f32.mrf.mxu0
    %7713 = vdwg.mxu0
    %7714 = vmatpush.bf16.msra.mxu0 %v7411
    %7715 = vmatpush.bf16.msra.mxu0 %v7403
    %7716 = vmatpush.bf16.msra.mxu0 %v7395
    %7717 = vmatpush.bf16.msra.mxu0 %v7387
    %7718 = vmatpush.bf16.msra.mxu0 %v7379
    %7719 = vmatpush.bf16.msra.mxu0 %v7371
    %7720 = vmatpush.bf16.msra.mxu0 %v7363
    %7721 = vmatpush.bf16.msra.mxu0 %v7355
    %7722 = vmatmul.bf16.gmra.mxu0 %v1874
    %v7723 = vpop.f32.mrf.mxu0
    %v7724 = vadd.f32 %v7711, %v7723
    %v7725 = vpop.f32.mrf.mxu0
    %7726 = vdwg.mxu0
    %7727 = vmatpush.bf16.msra.mxu0 %v7220
    %7728 = vmatpush.bf16.msra.mxu0 %v7212
    %7729 = vmatpush.bf16.msra.mxu0 %v7204
    %7730 = vmatpush.bf16.msra.mxu0 %v7196
    %7731 = vmatpush.bf16.msra.mxu0 %v7188
    %7732 = vmatpush.bf16.msra.mxu0 %v7180
    %7733 = vmatpush.bf16.msra.mxu0 %v7172
    %7734 = vmatpush.bf16.msra.mxu0 %v7164
    %7735 = vmatmul.bf16.gmra.mxu0 %v1871
    %v7736 = vpop.f32.mrf.mxu0
    %v7737 = vadd.f32 0.0, %v7736
    %v7738 = vpop.f32.mrf.mxu0
    %7739 = vdwg.mxu0
    %7740 = vmatpush.bf16.msra.mxu0 %v7284
    %7741 = vmatpush.bf16.msra.mxu0 %v7276
    %7742 = vmatpush.bf16.msra.mxu0 %v7268
    %7743 = vmatpush.bf16.msra.mxu0 %v7260
    %7744 = vmatpush.bf16.msra.mxu0 %v7252
    %7745 = vmatpush.bf16.msra.mxu0 %v7244
    %7746 = vmatpush.bf16.msra.mxu0 %v7236
    %7747 = vmatpush.bf16.msra.mxu0 %v7228
    %7748 = vmatmul.bf16.gmra.mxu0 %v1872
    %v7749 = vpop.f32.mrf.mxu0
    %v7750 = vadd.f32 %v7737, %v7749
    %v7751 = vpop.f32.mrf.mxu0
    %7752 = vdwg.mxu0
    %7753 = vmatpush.bf16.msra.mxu0 %v7348
    %7754 = vmatpush.bf16.msra.mxu0 %v7340
    %7755 = vmatpush.bf16.msra.mxu0 %v7332
    %7756 = vmatpush.bf16.msra.mxu0 %v7324
    %7757 = vmatpush.bf16.msra.mxu0 %v7316
    %7758 = vmatpush.bf16.msra.mxu0 %v7308
    %7759 = vmatpush.bf16.msra.mxu0 %v7300
    %7760 = vmatpush.bf16.msra.mxu0 %v7292
    %7761 = vmatmul.bf16.gmra.mxu0 %v1873
    %v7762 = vpop.f32.mrf.mxu0
    %v7763 = vadd.f32 %v7750, %v7762
    %v7764 = vpop.f32.mrf.mxu0
    %7765 = vdwg.mxu0
    %7766 = vmatpush.bf16.msra.mxu0 %v7412
    %7767 = vmatpush.bf16.msra.mxu0 %v7404
    %7768 = vmatpush.bf16.msra.mxu0 %v7396
    %7769 = vmatpush.bf16.msra.mxu0 %v7388
    %7770 = vmatpush.bf16.msra.mxu0 %v7380
    %7771 = vmatpush.bf16.msra.mxu0 %v7372
    %7772 = vmatpush.bf16.msra.mxu0 %v7364
    %7773 = vmatpush.bf16.msra.mxu0 %v7356
    %7774 = vmatmul.bf16.gmra.mxu0 %v1874
    %v7775 = vpop.f32.mrf.mxu0
    %v7776 = vadd.f32 %v7763, %v7775
    %v7777 = vpop.f32.mrf.mxu0
    %7778 = vdwg.mxu0
    %7779 = vmatpush.bf16.msra.mxu0 %v7221
    %7780 = vmatpush.bf16.msra.mxu0 %v7213
    %7781 = vmatpush.bf16.msra.mxu0 %v7205
    %7782 = vmatpush.bf16.msra.mxu0 %v7197
    %7783 = vmatpush.bf16.msra.mxu0 %v7189
    %7784 = vmatpush.bf16.msra.mxu0 %v7181
    %7785 = vmatpush.bf16.msra.mxu0 %v7173
    %7786 = vmatpush.bf16.msra.mxu0 %v7165
    %7787 = vmatmul.bf16.gmra.mxu0 %v1871
    %v7788 = vpop.f32.mrf.mxu0
    %v7789 = vadd.f32 0.0, %v7788
    %v7790 = vpop.f32.mrf.mxu0
    %7791 = vdwg.mxu0
    %7792 = vmatpush.bf16.msra.mxu0 %v7285
    %7793 = vmatpush.bf16.msra.mxu0 %v7277
    %7794 = vmatpush.bf16.msra.mxu0 %v7269
    %7795 = vmatpush.bf16.msra.mxu0 %v7261
    %7796 = vmatpush.bf16.msra.mxu0 %v7253
    %7797 = vmatpush.bf16.msra.mxu0 %v7245
    %7798 = vmatpush.bf16.msra.mxu0 %v7237
    %7799 = vmatpush.bf16.msra.mxu0 %v7229
    %7800 = vmatmul.bf16.gmra.mxu0 %v1872
    %v7801 = vpop.f32.mrf.mxu0
    %v7802 = vadd.f32 %v7789, %v7801
    %v7803 = vpop.f32.mrf.mxu0
    %7804 = vdwg.mxu0
    %7805 = vmatpush.bf16.msra.mxu0 %v7349
    %7806 = vmatpush.bf16.msra.mxu0 %v7341
    %7807 = vmatpush.bf16.msra.mxu0 %v7333
    %7808 = vmatpush.bf16.msra.mxu0 %v7325
    %7809 = vmatpush.bf16.msra.mxu0 %v7317
    %7810 = vmatpush.bf16.msra.mxu0 %v7309
    %7811 = vmatpush.bf16.msra.mxu0 %v7301
    %7812 = vmatpush.bf16.msra.mxu0 %v7293
    %7813 = vmatmul.bf16.gmra.mxu0 %v1873
    %v7814 = vpop.f32.mrf.mxu0
    %v7815 = vadd.f32 %v7802, %v7814
    %v7816 = vpop.f32.mrf.mxu0
    %7817 = vdwg.mxu0
    %7818 = vmatpush.bf16.msra.mxu0 %v7413
    %7819 = vmatpush.bf16.msra.mxu0 %v7405
    %7820 = vmatpush.bf16.msra.mxu0 %v7397
    %7821 = vmatpush.bf16.msra.mxu0 %v7389
    %7822 = vmatpush.bf16.msra.mxu0 %v7381
    %7823 = vmatpush.bf16.msra.mxu0 %v7373
    %7824 = vmatpush.bf16.msra.mxu0 %v7365
    %7825 = vmatpush.bf16.msra.mxu0 %v7357
    %7826 = vmatmul.bf16.gmra.mxu0 %v1874
    %v7827 = vpop.f32.mrf.mxu0
    %v7828 = vadd.f32 %v7815, %v7827
    %v7829 = vpop.f32.mrf.mxu0
    %7830 = vdwg.mxu0
    %7831 = vmatpush.bf16.msra.mxu0 %v7222
    %7832 = vmatpush.bf16.msra.mxu0 %v7214
    %7833 = vmatpush.bf16.msra.mxu0 %v7206
    %7834 = vmatpush.bf16.msra.mxu0 %v7198
    %7835 = vmatpush.bf16.msra.mxu0 %v7190
    %7836 = vmatpush.bf16.msra.mxu0 %v7182
    %7837 = vmatpush.bf16.msra.mxu0 %v7174
    %7838 = vmatpush.bf16.msra.mxu0 %v7166
    %7839 = vmatmul.bf16.gmra.mxu0 %v1871
    %v7840 = vpop.f32.mrf.mxu0
    %v7841 = vadd.f32 0.0, %v7840
    %v7842 = vpop.f32.mrf.mxu0
    %7843 = vdwg.mxu0
    %7844 = vmatpush.bf16.msra.mxu0 %v7286
    %7845 = vmatpush.bf16.msra.mxu0 %v7278
    %7846 = vmatpush.bf16.msra.mxu0 %v7270
    %7847 = vmatpush.bf16.msra.mxu0 %v7262
    %7848 = vmatpush.bf16.msra.mxu0 %v7254
    %7849 = vmatpush.bf16.msra.mxu0 %v7246
    %7850 = vmatpush.bf16.msra.mxu0 %v7238
    %7851 = vmatpush.bf16.msra.mxu0 %v7230
    %7852 = vmatmul.bf16.gmra.mxu0 %v1872
    %v7853 = vpop.f32.mrf.mxu0
    %v7854 = vadd.f32 %v7841, %v7853
    %v7855 = vpop.f32.mrf.mxu0
    %7856 = vdwg.mxu0
    %7857 = vmatpush.bf16.msra.mxu0 %v7350
    %7858 = vmatpush.bf16.msra.mxu0 %v7342
    %7859 = vmatpush.bf16.msra.mxu0 %v7334
    %7860 = vmatpush.bf16.msra.mxu0 %v7326
    %7861 = vmatpush.bf16.msra.mxu0 %v7318
    %7862 = vmatpush.bf16.msra.mxu0 %v7310
    %7863 = vmatpush.bf16.msra.mxu0 %v7302
    %7864 = vmatpush.bf16.msra.mxu0 %v7294
    %7865 = vmatmul.bf16.gmra.mxu0 %v1873
    %v7866 = vpop.f32.mrf.mxu0
    %v7867 = vadd.f32 %v7854, %v7866
    %v7868 = vpop.f32.mrf.mxu0
    %7869 = vdwg.mxu0
    %7870 = vmatpush.bf16.msra.mxu0 %v7414
    %7871 = vmatpush.bf16.msra.mxu0 %v7406
    %7872 = vmatpush.bf16.msra.mxu0 %v7398
    %7873 = vmatpush.bf16.msra.mxu0 %v7390
    %7874 = vmatpush.bf16.msra.mxu0 %v7382
    %7875 = vmatpush.bf16.msra.mxu0 %v7374
    %7876 = vmatpush.bf16.msra.mxu0 %v7366
    %7877 = vmatpush.bf16.msra.mxu0 %v7358
    %7878 = vmatmul.bf16.gmra.mxu0 %v1874
    %v7879 = vpop.f32.mrf.mxu0
    %v7880 = vadd.f32 %v7867, %v7879
    %v7881 = vpop.f32.mrf.mxu0
    %7882 = vdwg.mxu0
    %7883 = vmatpush.bf16.msra.mxu0 %v7223
    %7884 = vmatpush.bf16.msra.mxu0 %v7215
    %7885 = vmatpush.bf16.msra.mxu0 %v7207
    %7886 = vmatpush.bf16.msra.mxu0 %v7199
    %7887 = vmatpush.bf16.msra.mxu0 %v7191
    %7888 = vmatpush.bf16.msra.mxu0 %v7183
    %7889 = vmatpush.bf16.msra.mxu0 %v7175
    %7890 = vmatpush.bf16.msra.mxu0 %v7167
    %7891 = vmatmul.bf16.gmra.mxu0 %v1871
    %v7892 = vpop.f32.mrf.mxu0
    %v7893 = vadd.f32 0.0, %v7892
    %v7894 = vpop.f32.mrf.mxu0
    %7895 = vdwg.mxu0
    %7896 = vmatpush.bf16.msra.mxu0 %v7287
    %7897 = vmatpush.bf16.msra.mxu0 %v7279
    %7898 = vmatpush.bf16.msra.mxu0 %v7271
    %7899 = vmatpush.bf16.msra.mxu0 %v7263
    %7900 = vmatpush.bf16.msra.mxu0 %v7255
    %7901 = vmatpush.bf16.msra.mxu0 %v7247
    %7902 = vmatpush.bf16.msra.mxu0 %v7239
    %7903 = vmatpush.bf16.msra.mxu0 %v7231
    %7904 = vmatmul.bf16.gmra.mxu0 %v1872
    %v7905 = vpop.f32.mrf.mxu0
    %v7906 = vadd.f32 %v7893, %v7905
    %v7907 = vpop.f32.mrf.mxu0
    %7908 = vdwg.mxu0
    %7909 = vmatpush.bf16.msra.mxu0 %v7351
    %7910 = vmatpush.bf16.msra.mxu0 %v7343
    %7911 = vmatpush.bf16.msra.mxu0 %v7335
    %7912 = vmatpush.bf16.msra.mxu0 %v7327
    %7913 = vmatpush.bf16.msra.mxu0 %v7319
    %7914 = vmatpush.bf16.msra.mxu0 %v7311
    %7915 = vmatpush.bf16.msra.mxu0 %v7303
    %7916 = vmatpush.bf16.msra.mxu0 %v7295
    %7917 = vmatmul.bf16.gmra.mxu0 %v1873
    %v7918 = vpop.f32.mrf.mxu0
    %v7919 = vadd.f32 %v7906, %v7918
    %v7920 = vpop.f32.mrf.mxu0
    %7921 = vdwg.mxu0
    %7922 = vmatpush.bf16.msra.mxu0 %v7415
    %7923 = vmatpush.bf16.msra.mxu0 %v7407
    %7924 = vmatpush.bf16.msra.mxu0 %v7399
    %7925 = vmatpush.bf16.msra.mxu0 %v7391
    %7926 = vmatpush.bf16.msra.mxu0 %v7383
    %7927 = vmatpush.bf16.msra.mxu0 %v7375
    %7928 = vmatpush.bf16.msra.mxu0 %v7367
    %7929 = vmatpush.bf16.msra.mxu0 %v7359
    %7930 = vmatmul.bf16.gmra.mxu0 %v1874
    %v7931 = vpop.f32.mrf.mxu0
    %v7932 = vadd.f32 %v7919, %v7931
    %v7933 = vpop.f32.mrf.mxu0
    %7934 = vdwg.mxu0
    %7935 = vmatpush.bf16.msra.mxu0 %v7224
    %7936 = vmatpush.bf16.msra.mxu0 %v7216
    %7937 = vmatpush.bf16.msra.mxu0 %v7208
    %7938 = vmatpush.bf16.msra.mxu0 %v7200
    %7939 = vmatpush.bf16.msra.mxu0 %v7192
    %7940 = vmatpush.bf16.msra.mxu0 %v7184
    %7941 = vmatpush.bf16.msra.mxu0 %v7176
    %7942 = vmatpush.bf16.msra.mxu0 %v7168
    %7943 = vmatmul.bf16.gmra.mxu0 %v1871
    %v7944 = vpop.f32.mrf.mxu0
    %v7945 = vadd.f32 0.0, %v7944
    %v7946 = vpop.f32.mrf.mxu0
    %7947 = vdwg.mxu0
    %7948 = vmatpush.bf16.msra.mxu0 %v7288
    %7949 = vmatpush.bf16.msra.mxu0 %v7280
    %7950 = vmatpush.bf16.msra.mxu0 %v7272
    %7951 = vmatpush.bf16.msra.mxu0 %v7264
    %7952 = vmatpush.bf16.msra.mxu0 %v7256
    %7953 = vmatpush.bf16.msra.mxu0 %v7248
    %7954 = vmatpush.bf16.msra.mxu0 %v7240
    %7955 = vmatpush.bf16.msra.mxu0 %v7232
    %7956 = vmatmul.bf16.gmra.mxu0 %v1872
    %v7957 = vpop.f32.mrf.mxu0
    %v7958 = vadd.f32 %v7945, %v7957
    %v7959 = vpop.f32.mrf.mxu0
    %7960 = vdwg.mxu0
    %7961 = vmatpush.bf16.msra.mxu0 %v7352
    %7962 = vmatpush.bf16.msra.mxu0 %v7344
    %7963 = vmatpush.bf16.msra.mxu0 %v7336
    %7964 = vmatpush.bf16.msra.mxu0 %v7328
    %7965 = vmatpush.bf16.msra.mxu0 %v7320
    %7966 = vmatpush.bf16.msra.mxu0 %v7312
    %7967 = vmatpush.bf16.msra.mxu0 %v7304
    %7968 = vmatpush.bf16.msra.mxu0 %v7296
    %7969 = vmatmul.bf16.gmra.mxu0 %v1873
    %v7970 = vpop.f32.mrf.mxu0
    %v7971 = vadd.f32 %v7958, %v7970
    %v7972 = vpop.f32.mrf.mxu0
    %7973 = vdwg.mxu0
    %7974 = vmatpush.bf16.msra.mxu0 %v7416
    %7975 = vmatpush.bf16.msra.mxu0 %v7408
    %7976 = vmatpush.bf16.msra.mxu0 %v7400
    %7977 = vmatpush.bf16.msra.mxu0 %v7392
    %7978 = vmatpush.bf16.msra.mxu0 %v7384
    %7979 = vmatpush.bf16.msra.mxu0 %v7376
    %7980 = vmatpush.bf16.msra.mxu0 %v7368
    %7981 = vmatpush.bf16.msra.mxu0 %v7360
    %7982 = vmatmul.bf16.gmra.mxu0 %v1874
    %v7983 = vpop.f32.mrf.mxu0
    %v7984 = vadd.f32 %v7971, %v7983
    %v7985 = vpop.f32.mrf.mxu0
    %7986 = vdwg.mxu0
    %7987 = vmatpush.bf16.msra.mxu0 %v7225
    %7988 = vmatpush.bf16.msra.mxu0 %v7217
    %7989 = vmatpush.bf16.msra.mxu0 %v7209
    %7990 = vmatpush.bf16.msra.mxu0 %v7201
    %7991 = vmatpush.bf16.msra.mxu0 %v7193
    %7992 = vmatpush.bf16.msra.mxu0 %v7185
    %7993 = vmatpush.bf16.msra.mxu0 %v7177
    %7994 = vmatpush.bf16.msra.mxu0 %v7169
    %7995 = vmatmul.bf16.gmra.mxu0 %v1871
    %v7996 = vpop.f32.mrf.mxu0
    %v7997 = vadd.f32 0.0, %v7996
    %v7998 = vpop.f32.mrf.mxu0
    %7999 = vdwg.mxu0
    %8000 = vmatpush.bf16.msra.mxu0 %v7289
    %8001 = vmatpush.bf16.msra.mxu0 %v7281
    %8002 = vmatpush.bf16.msra.mxu0 %v7273
    %8003 = vmatpush.bf16.msra.mxu0 %v7265
    %8004 = vmatpush.bf16.msra.mxu0 %v7257
    %8005 = vmatpush.bf16.msra.mxu0 %v7249
    %8006 = vmatpush.bf16.msra.mxu0 %v7241
    %8007 = vmatpush.bf16.msra.mxu0 %v7233
    %8008 = vmatmul.bf16.gmra.mxu0 %v1872
    %v8009 = vpop.f32.mrf.mxu0
    %v8010 = vadd.f32 %v7997, %v8009
    %v8011 = vpop.f32.mrf.mxu0
    %8012 = vdwg.mxu0
    %8013 = vmatpush.bf16.msra.mxu0 %v7353
    %8014 = vmatpush.bf16.msra.mxu0 %v7345
    %8015 = vmatpush.bf16.msra.mxu0 %v7337
    %8016 = vmatpush.bf16.msra.mxu0 %v7329
    %8017 = vmatpush.bf16.msra.mxu0 %v7321
    %8018 = vmatpush.bf16.msra.mxu0 %v7313
    %8019 = vmatpush.bf16.msra.mxu0 %v7305
    %8020 = vmatpush.bf16.msra.mxu0 %v7297
    %8021 = vmatmul.bf16.gmra.mxu0 %v1873
    %v8022 = vpop.f32.mrf.mxu0
    %v8023 = vadd.f32 %v8010, %v8022
    %v8024 = vpop.f32.mrf.mxu0
    %8025 = vdwg.mxu0
    %8026 = vmatpush.bf16.msra.mxu0 %v7417
    %8027 = vmatpush.bf16.msra.mxu0 %v7409
    %8028 = vmatpush.bf16.msra.mxu0 %v7401
    %8029 = vmatpush.bf16.msra.mxu0 %v7393
    %8030 = vmatpush.bf16.msra.mxu0 %v7385
    %8031 = vmatpush.bf16.msra.mxu0 %v7377
    %8032 = vmatpush.bf16.msra.mxu0 %v7369
    %8033 = vmatpush.bf16.msra.mxu0 %v7361
    %8034 = vmatmul.bf16.gmra.mxu0 %v1874
    %v8035 = vpop.f32.mrf.mxu0
    %v8036 = vadd.f32 %v8023, %v8035
    %v8037 = vpop.f32.mrf.mxu0
    %8038 = vdwg.mxu0
    %8039 = vmatpush.bf16.msra.mxu0 %v7226
    %8040 = vmatpush.bf16.msra.mxu0 %v7218
    %8041 = vmatpush.bf16.msra.mxu0 %v7210
    %8042 = vmatpush.bf16.msra.mxu0 %v7202
    %8043 = vmatpush.bf16.msra.mxu0 %v7194
    %8044 = vmatpush.bf16.msra.mxu0 %v7186
    %8045 = vmatpush.bf16.msra.mxu0 %v7178
    %8046 = vmatpush.bf16.msra.mxu0 %v7170
    %8047 = vmatmul.bf16.gmra.mxu0 %v1871
    %v8048 = vpop.f32.mrf.mxu0
    %v8049 = vadd.f32 0.0, %v8048
    %v8050 = vpop.f32.mrf.mxu0
    %8051 = vdwg.mxu0
    %8052 = vmatpush.bf16.msra.mxu0 %v7290
    %8053 = vmatpush.bf16.msra.mxu0 %v7282
    %8054 = vmatpush.bf16.msra.mxu0 %v7274
    %8055 = vmatpush.bf16.msra.mxu0 %v7266
    %8056 = vmatpush.bf16.msra.mxu0 %v7258
    %8057 = vmatpush.bf16.msra.mxu0 %v7250
    %8058 = vmatpush.bf16.msra.mxu0 %v7242
    %8059 = vmatpush.bf16.msra.mxu0 %v7234
    %8060 = vmatmul.bf16.gmra.mxu0 %v1872
    %v8061 = vpop.f32.mrf.mxu0
    %v8062 = vadd.f32 %v8049, %v8061
    %v8063 = vpop.f32.mrf.mxu0
    %8064 = vdwg.mxu0
    %8065 = vmatpush.bf16.msra.mxu0 %v7354
    %8066 = vmatpush.bf16.msra.mxu0 %v7346
    %8067 = vmatpush.bf16.msra.mxu0 %v7338
    %8068 = vmatpush.bf16.msra.mxu0 %v7330
    %8069 = vmatpush.bf16.msra.mxu0 %v7322
    %8070 = vmatpush.bf16.msra.mxu0 %v7314
    %8071 = vmatpush.bf16.msra.mxu0 %v7306
    %8072 = vmatpush.bf16.msra.mxu0 %v7298
    %8073 = vmatmul.bf16.gmra.mxu0 %v1873
    %v8074 = vpop.f32.mrf.mxu0
    %v8075 = vadd.f32 %v8062, %v8074
    %v8076 = vpop.f32.mrf.mxu0
    %8077 = vdwg.mxu0
    %8078 = vmatpush.bf16.msra.mxu0 %v7418
    %8079 = vmatpush.bf16.msra.mxu0 %v7410
    %8080 = vmatpush.bf16.msra.mxu0 %v7402
    %8081 = vmatpush.bf16.msra.mxu0 %v7394
    %8082 = vmatpush.bf16.msra.mxu0 %v7386
    %8083 = vmatpush.bf16.msra.mxu0 %v7378
    %8084 = vmatpush.bf16.msra.mxu0 %v7370
    %8085 = vmatpush.bf16.msra.mxu0 %v7362
    %8086 = vmatmul.bf16.gmra.mxu0 %v1874
    %v8087 = vpop.f32.mrf.mxu0
    %v8088 = vadd.f32 %v8075, %v8087
    %v8089 = vpop.f32.mrf.mxu0
    %8090 = vdwg.mxu0
    %v8091 = vld [vmem:[#allocation16 + $0x10] sm:$0xff]
    %v8092 = vld [vmem:[#allocation17 + $0x10] sm:$0xff]
    %v8093 = vrot.slane %v7724, 4
    %v8094 = vadd.f32 %v7724, %v8093
    %v8095 = vrot.slane %v8094, 2
    %v8096 = vadd.f32 %v8094, %v8095
    %v8097 = vrot.slane %v8096, 1
    %v8098 = vadd.f32 %v8096, %v8097
    %v8099 = vrot.slane %v7776, 4
    %v8100 = vadd.f32 %v7776, %v8099
    %v8101 = vrot.slane %v8100, 2
    %v8102 = vadd.f32 %v8100, %v8101
    %v8103 = vrot.slane %v8102, 1
    %v8104 = vadd.f32 %v8102, %v8103
    %v8105 = vrot.slane %v7828, 4
    %v8106 = vadd.f32 %v7828, %v8105
    %v8107 = vrot.slane %v8106, 2
    %v8108 = vadd.f32 %v8106, %v8107
    %v8109 = vrot.slane %v8108, 1
    %v8110 = vadd.f32 %v8108, %v8109
    %v8111 = vrot.slane %v7880, 4
    %v8112 = vadd.f32 %v7880, %v8111
    %v8113 = vrot.slane %v8112, 2
    %v8114 = vadd.f32 %v8112, %v8113
    %v8115 = vrot.slane %v8114, 1
    %v8116 = vadd.f32 %v8114, %v8115
    %v8117 = vrot.slane %v7932, 4
    %v8118 = vadd.f32 %v7932, %v8117
    %v8119 = vrot.slane %v8118, 2
    %v8120 = vadd.f32 %v8118, %v8119
    %v8121 = vrot.slane %v8120, 1
    %v8122 = vadd.f32 %v8120, %v8121
    %v8123 = vrot.slane %v7984, 4
    %v8124 = vadd.f32 %v7984, %v8123
    %v8125 = vrot.slane %v8124, 2
    %v8126 = vadd.f32 %v8124, %v8125
    %v8127 = vrot.slane %v8126, 1
    %v8128 = vadd.f32 %v8126, %v8127
    %v8129 = vrot.slane %v8036, 4
    %v8130 = vadd.f32 %v8036, %v8129
    %v8131 = vrot.slane %v8130, 2
    %v8132 = vadd.f32 %v8130, %v8131
    %v8133 = vrot.slane %v8132, 1
    %v8134 = vadd.f32 %v8132, %v8133
    %v8135 = vrot.slane %v8088, 4
    %v8136 = vadd.f32 %v8088, %v8135
    %v8137 = vrot.slane %v8136, 2
    %v8138 = vadd.f32 %v8136, %v8137
    %v8139 = vrot.slane %v8138, 1
    %v8140 = vadd.f32 %v8138, %v8139
    %v8141 = vmul.f32 %v8098, %v356
    %v8142 = vmul.f32 %v8104, %v356
    %v8143 = vmul.f32 %v8110, %v356
    %v8144 = vmul.f32 %v8116, %v356
    %v8145 = vmul.f32 %v8122, %v356
    %v8146 = vmul.f32 %v8128, %v356
    %v8147 = vmul.f32 %v8134, %v356
    %v8148 = vmul.f32 %v8140, %v356
    %v8149 = vmul.f32 %v7724, %v7724
    %v8150 = vmul.f32 %v7776, %v7776
    %v8151 = vmul.f32 %v7828, %v7828
    %v8152 = vmul.f32 %v7880, %v7880
    %v8153 = vmul.f32 %v7932, %v7932
    %v8154 = vmul.f32 %v7984, %v7984
    %v8155 = vmul.f32 %v8036, %v8036
    %v8156 = vmul.f32 %v8088, %v8088
    %v8157 = vrot.slane %v8149, 4
    %v8158 = vadd.f32 %v8149, %v8157
    %v8159 = vrot.slane %v8158, 2
    %v8160 = vadd.f32 %v8158, %v8159
    %v8161 = vrot.slane %v8160, 1
    %v8162 = vadd.f32 %v8160, %v8161
    %v8163 = vrot.slane %v8150, 4
    %v8164 = vadd.f32 %v8150, %v8163
    %v8165 = vrot.slane %v8164, 2
    %v8166 = vadd.f32 %v8164, %v8165
    %v8167 = vrot.slane %v8166, 1
    %v8168 = vadd.f32 %v8166, %v8167
    %v8169 = vrot.slane %v8151, 4
    %v8170 = vadd.f32 %v8151, %v8169
    %v8171 = vrot.slane %v8170, 2
    %v8172 = vadd.f32 %v8170, %v8171
    %v8173 = vrot.slane %v8172, 1
    %v8174 = vadd.f32 %v8172, %v8173
    %v8175 = vrot.slane %v8152, 4
    %v8176 = vadd.f32 %v8152, %v8175
    %v8177 = vrot.slane %v8176, 2
    %v8178 = vadd.f32 %v8176, %v8177
    %v8179 = vrot.slane %v8178, 1
    %v8180 = vadd.f32 %v8178, %v8179
    %v8181 = vrot.slane %v8153, 4
    %v8182 = vadd.f32 %v8153, %v8181
    %v8183 = vrot.slane %v8182, 2
    %v8184 = vadd.f32 %v8182, %v8183
    %v8185 = vrot.slane %v8184, 1
    %v8186 = vadd.f32 %v8184, %v8185
    %v8187 = vrot.slane %v8154, 4
    %v8188 = vadd.f32 %v8154, %v8187
    %v8189 = vrot.slane %v8188, 2
    %v8190 = vadd.f32 %v8188, %v8189
    %v8191 = vrot.slane %v8190, 1
    %v8192 = vadd.f32 %v8190, %v8191
    %v8193 = vrot.slane %v8155, 4
    %v8194 = vadd.f32 %v8155, %v8193
    %v8195 = vrot.slane %v8194, 2
    %v8196 = vadd.f32 %v8194, %v8195
    %v8197 = vrot.slane %v8196, 1
    %v8198 = vadd.f32 %v8196, %v8197
    %v8199 = vrot.slane %v8156, 4
    %v8200 = vadd.f32 %v8156, %v8199
    %v8201 = vrot.slane %v8200, 2
    %v8202 = vadd.f32 %v8200, %v8201
    %v8203 = vrot.slane %v8202, 1
    %v8204 = vadd.f32 %v8202, %v8203
    %v8205 = vmul.f32 %v8162, %v356
    %v8206 = vmul.f32 %v8168, %v356
    %v8207 = vmul.f32 %v8174, %v356
    %v8208 = vmul.f32 %v8180, %v356
    %v8209 = vmul.f32 %v8186, %v356
    %v8210 = vmul.f32 %v8192, %v356
    %v8211 = vmul.f32 %v8198, %v356
    %v8212 = vmul.f32 %v8204, %v356
    %v8213 = vmul.f32 %v8141, %v8141
    %v8214 = vmul.f32 %v8142, %v8142
    %v8215 = vmul.f32 %v8143, %v8143
    %v8216 = vmul.f32 %v8144, %v8144
    %v8217 = vmul.f32 %v8145, %v8145
    %v8218 = vmul.f32 %v8146, %v8146
    %v8219 = vmul.f32 %v8147, %v8147
    %v8220 = vmul.f32 %v8148, %v8148
    %v8221 = vsub.f32 %v8205, %v8213
    %v8222 = vsub.f32 %v8206, %v8214
    %v8223 = vsub.f32 %v8207, %v8215
    %v8224 = vsub.f32 %v8208, %v8216
    %v8225 = vsub.f32 %v8209, %v8217
    %v8226 = vsub.f32 %v8210, %v8218
    %v8227 = vsub.f32 %v8211, %v8219
    %v8228 = vsub.f32 %v8212, %v8220
    %v8229 = vsub.f32 %v7724, %v8141
    %v8230 = vsub.f32 %v7776, %v8142
    %v8231 = vsub.f32 %v7828, %v8143
    %v8232 = vsub.f32 %v7880, %v8144
    %v8233 = vsub.f32 %v7932, %v8145
    %v8234 = vsub.f32 %v7984, %v8146
    %v8235 = vsub.f32 %v8036, %v8147
    %v8236 = vsub.f32 %v8088, %v8148
    %v8237 = vadd.f32 %v8221, 1e-05
    %v8238 = vadd.f32 %v8222, 1e-05
    %v8239 = vadd.f32 %v8223, 1e-05
    %v8240 = vadd.f32 %v8224, 1e-05
    %v8241 = vadd.f32 %v8225, 1e-05
    %v8242 = vadd.f32 %v8226, 1e-05
    %v8243 = vadd.f32 %v8227, 1e-05
    %v8244 = vadd.f32 %v8228, 1e-05
    %v8245 = vrsqrt.pop %v8237
    %v8246 = vmul.f32 %v8245, %v8237
    %v8247 = vmul.f32 %v8246, %v8245
    %v8248 = vmul.f32 0.5, %v8247
    %v8249 = vsub.f32 1.5, %v8248
    %v8250 = vmul.f32 %v8245, %v8249
    %vm8251 = vweird.f32 %v8237
    %vm8252 = vweird.f32 %v8245
    %vm8253 = vmor %vm8251, %vm8252
    %v8254 = vsel %vm8253, %v8245, %v8250
    %v8255 = vrsqrt.pop %v8238
    %v8256 = vmul.f32 %v8255, %v8238
    %v8257 = vmul.f32 %v8256, %v8255
    %v8258 = vmul.f32 0.5, %v8257
    %v8259 = vsub.f32 1.5, %v8258
    %v8260 = vmul.f32 %v8255, %v8259
    %vm8261 = vweird.f32 %v8238
    %vm8262 = vweird.f32 %v8255
    %vm8263 = vmor %vm8261, %vm8262
    %v8264 = vsel %vm8263, %v8255, %v8260
    %v8265 = vrsqrt.pop %v8239
    %v8266 = vmul.f32 %v8265, %v8239
    %v8267 = vmul.f32 %v8266, %v8265
    %v8268 = vmul.f32 0.5, %v8267
    %v8269 = vsub.f32 1.5, %v8268
    %v8270 = vmul.f32 %v8265, %v8269
    %vm8271 = vweird.f32 %v8239
    %vm8272 = vweird.f32 %v8265
    %vm8273 = vmor %vm8271, %vm8272
    %v8274 = vsel %vm8273, %v8265, %v8270
    %v8275 = vrsqrt.pop %v8240
    %v8276 = vmul.f32 %v8275, %v8240
    %v8277 = vmul.f32 %v8276, %v8275
    %v8278 = vmul.f32 0.5, %v8277
    %v8279 = vsub.f32 1.5, %v8278
    %v8280 = vmul.f32 %v8275, %v8279
    %vm8281 = vweird.f32 %v8240
    %vm8282 = vweird.f32 %v8275
    %vm8283 = vmor %vm8281, %vm8282
    %v8284 = vsel %vm8283, %v8275, %v8280
    %v8285 = vrsqrt.pop %v8241
    %v8286 = vmul.f32 %v8285, %v8241
    %v8287 = vmul.f32 %v8286, %v8285
    %v8288 = vmul.f32 0.5, %v8287
    %v8289 = vsub.f32 1.5, %v8288
    %v8290 = vmul.f32 %v8285, %v8289
    %vm8291 = vweird.f32 %v8241
    %vm8292 = vweird.f32 %v8285
    %vm8293 = vmor %vm8291, %vm8292
    %v8294 = vsel %vm8293, %v8285, %v8290
    %v8295 = vrsqrt.pop %v8242
    %v8296 = vmul.f32 %v8295, %v8242
    %v8297 = vmul.f32 %v8296, %v8295
    %v8298 = vmul.f32 0.5, %v8297
    %v8299 = vsub.f32 1.5, %v8298
    %v8300 = vmul.f32 %v8295, %v8299
    %vm8301 = vweird.f32 %v8242
    %vm8302 = vweird.f32 %v8295
    %vm8303 = vmor %vm8301, %vm8302
    %v8304 = vsel %vm8303, %v8295, %v8300
    %v8305 = vrsqrt.pop %v8243
    %v8306 = vmul.f32 %v8305, %v8243
    %v8307 = vmul.f32 %v8306, %v8305
    %v8308 = vmul.f32 0.5, %v8307
    %v8309 = vsub.f32 1.5, %v8308
    %v8310 = vmul.f32 %v8305, %v8309
    %vm8311 = vweird.f32 %v8243
    %vm8312 = vweird.f32 %v8305
    %vm8313 = vmor %vm8311, %vm8312
    %v8314 = vsel %vm8313, %v8305, %v8310
    %v8315 = vrsqrt.pop %v8244
    %v8316 = vmul.f32 %v8315, %v8244
    %v8317 = vmul.f32 %v8316, %v8315
    %v8318 = vmul.f32 0.5, %v8317
    %v8319 = vsub.f32 1.5, %v8318
    %v8320 = vmul.f32 %v8315, %v8319
    %vm8321 = vweird.f32 %v8244
    %vm8322 = vweird.f32 %v8315
    %vm8323 = vmor %vm8321, %vm8322
    %v8324 = vsel %vm8323, %v8315, %v8320
    %v8325 = vmul.f32 %v8229, %v8254
    %v8326 = vmul.f32 %v8230, %v8264
    %v8327 = vmul.f32 %v8231, %v8274
    %v8328 = vmul.f32 %v8232, %v8284
    %v8329 = vmul.f32 %v8233, %v8294
    %v8330 = vmul.f32 %v8234, %v8304
    %v8331 = vmul.f32 %v8235, %v8314
    %v8332 = vmul.f32 %v8236, %v8324
    %v8334 = vperm.slane %v8091, 0
    %v8335 = vperm.slane %v8091, 1
    %v8336 = vperm.slane %v8091, 2
    %v8337 = vperm.slane %v8091, 3
    %v8338 = vperm.slane %v8091, 4
    %v8339 = vperm.slane %v8091, 5
    %v8340 = vperm.slane %v8091, 6
    %v8341 = vperm.slane %v8091, 7
    %v8350 = vmul.f32 %v8325, %v8334
    %v8351 = vmul.f32 %v8326, %v8335
    %v8352 = vmul.f32 %v8327, %v8336
    %v8353 = vmul.f32 %v8328, %v8337
    %v8354 = vmul.f32 %v8329, %v8338
    %v8355 = vmul.f32 %v8330, %v8339
    %v8356 = vmul.f32 %v8331, %v8340
    %v8357 = vmul.f32 %v8332, %v8341
    %v8359 = vperm.slane %v8092, 0
    %v8360 = vperm.slane %v8092, 1
    %v8361 = vperm.slane %v8092, 2
    %v8362 = vperm.slane %v8092, 3
    %v8363 = vperm.slane %v8092, 4
    %v8364 = vperm.slane %v8092, 5
    %v8365 = vperm.slane %v8092, 6
    %v8366 = vperm.slane %v8092, 7
    %v8375 = vadd.f32 %v8350, %v8359
    %v8376 = vadd.f32 %v8351, %v8360
    %v8377 = vadd.f32 %v8352, %v8361
    %v8378 = vadd.f32 %v8353, %v8362
    %v8379 = vadd.f32 %v8354, %v8363
    %v8380 = vadd.f32 %v8355, %v8364
    %v8381 = vadd.f32 %v8356, %v8365
    %v8382 = vadd.f32 %v8357, %v8366
    %v8383 = vmax.f32 %v8375, 0.0
    %v8384 = vmax.f32 %v8376, 0.0
    %v8385 = vmax.f32 %v8377, 0.0
    %v8386 = vmax.f32 %v8378, 0.0
    %v8387 = vmax.f32 %v8379, 0.0
    %v8388 = vmax.f32 %v8380, 0.0
    %v8389 = vmax.f32 %v8381, 0.0
    %v8390 = vmax.f32 %v8382, 0.0
    %8391 = vst [vmem:[#allocation22 + $0x80] sm:$0xff] %v8383
    %8392 = vst [vmem:[#allocation22 + $0x88] sm:$0xff] %v8384
    %8393 = vst [vmem:[#allocation22 + $0x90] sm:$0xff] %v8385
    %8394 = vst [vmem:[#allocation22 + $0x98] sm:$0xff] %v8386
    %8395 = vst [vmem:[#allocation22 + $0xa0] sm:$0xff] %v8387
    %8396 = vst [vmem:[#allocation22 + $0xa8] sm:$0xff] %v8388
    %8397 = vst [vmem:[#allocation22 + $0xb0] sm:$0xff] %v8389
    %8398 = vst [vmem:[#allocation22 + $0xb8] sm:$0xff] %v8390
    %v8399 = vld [vmem:[#allocation14 + $0x60] sm:$0xff]
    %v8400 = vld [vmem:[#allocation14 + $0x68] sm:$0xff]
    %v8401 = vld [vmem:[#allocation14 + $0x70] sm:$0xff]
    %v8402 = vld [vmem:[#allocation14 + $0x78] sm:$0xff]
    %v8403 = vld [vmem:[#allocation14 + $0xe0] sm:$0xff]
    %v8404 = vld [vmem:[#allocation14 + $0xe8] sm:$0xff]
    %v8405 = vld [vmem:[#allocation14 + $0xf0] sm:$0xff]
    %v8406 = vld [vmem:[#allocation14 + $0xf8] sm:$0xff]
    %v8407 = vld [vmem:[#allocation14 + $0x160] sm:$0xff]
    %v8408 = vld [vmem:[#allocation14 + $0x168] sm:$0xff]
    %v8409 = vld [vmem:[#allocation14 + $0x170] sm:$0xff]
    %v8410 = vld [vmem:[#allocation14 + $0x178] sm:$0xff]
    %v8411 = vld [vmem:[#allocation14 + $0x1e0] sm:$0xff]
    %v8412 = vld [vmem:[#allocation14 + $0x1e8] sm:$0xff]
    %v8413 = vld [vmem:[#allocation14 + $0x1f0] sm:$0xff]
    %v8414 = vld [vmem:[#allocation14 + $0x1f8] sm:$0xff]
    %v8415 = vld [vmem:[#allocation14 + $0x260] sm:$0xff]
    %v8416 = vld [vmem:[#allocation14 + $0x268] sm:$0xff]
    %v8417 = vld [vmem:[#allocation14 + $0x270] sm:$0xff]
    %v8418 = vld [vmem:[#allocation14 + $0x278] sm:$0xff]
    %v8419 = vld [vmem:[#allocation14 + $0x2e0] sm:$0xff]
    %v8420 = vld [vmem:[#allocation14 + $0x2e8] sm:$0xff]
    %v8421 = vld [vmem:[#allocation14 + $0x2f0] sm:$0xff]
    %v8422 = vld [vmem:[#allocation14 + $0x2f8] sm:$0xff]
    %v8423 = vld [vmem:[#allocation14 + $0x360] sm:$0xff]
    %v8424 = vld [vmem:[#allocation14 + $0x368] sm:$0xff]
    %v8425 = vld [vmem:[#allocation14 + $0x370] sm:$0xff]
    %v8426 = vld [vmem:[#allocation14 + $0x378] sm:$0xff]
    %v8427 = vld [vmem:[#allocation14 + $0x3e0] sm:$0xff]
    %v8428 = vld [vmem:[#allocation14 + $0x3e8] sm:$0xff]
    %v8429 = vld [vmem:[#allocation14 + $0x3f0] sm:$0xff]
    %v8430 = vld [vmem:[#allocation14 + $0x3f8] sm:$0xff]
    %v8431 = vld [vmem:[#allocation14 + $0x460] sm:$0xff]
    %v8432 = vld [vmem:[#allocation14 + $0x468] sm:$0xff]
    %v8433 = vld [vmem:[#allocation14 + $0x470] sm:$0xff]
    %v8434 = vld [vmem:[#allocation14 + $0x478] sm:$0xff]
    %v8435 = vld [vmem:[#allocation14 + $0x4e0] sm:$0xff]
    %v8436 = vld [vmem:[#allocation14 + $0x4e8] sm:$0xff]
    %v8437 = vld [vmem:[#allocation14 + $0x4f0] sm:$0xff]
    %v8438 = vld [vmem:[#allocation14 + $0x4f8] sm:$0xff]
    %v8439 = vld [vmem:[#allocation14 + $0x560] sm:$0xff]
    %v8440 = vld [vmem:[#allocation14 + $0x568] sm:$0xff]
    %v8441 = vld [vmem:[#allocation14 + $0x570] sm:$0xff]
    %v8442 = vld [vmem:[#allocation14 + $0x578] sm:$0xff]
    %v8443 = vld [vmem:[#allocation14 + $0x5e0] sm:$0xff]
    %v8444 = vld [vmem:[#allocation14 + $0x5e8] sm:$0xff]
    %v8445 = vld [vmem:[#allocation14 + $0x5f0] sm:$0xff]
    %v8446 = vld [vmem:[#allocation14 + $0x5f8] sm:$0xff]
    %v8447 = vld [vmem:[#allocation14 + $0x660] sm:$0xff]
    %v8448 = vld [vmem:[#allocation14 + $0x668] sm:$0xff]
    %v8449 = vld [vmem:[#allocation14 + $0x670] sm:$0xff]
    %v8450 = vld [vmem:[#allocation14 + $0x678] sm:$0xff]
    %v8451 = vld [vmem:[#allocation14 + $0x6e0] sm:$0xff]
    %v8452 = vld [vmem:[#allocation14 + $0x6e8] sm:$0xff]
    %v8453 = vld [vmem:[#allocation14 + $0x6f0] sm:$0xff]
    %v8454 = vld [vmem:[#allocation14 + $0x6f8] sm:$0xff]
    %v8455 = vld [vmem:[#allocation14 + $0x760] sm:$0xff]
    %v8456 = vld [vmem:[#allocation14 + $0x768] sm:$0xff]
    %v8457 = vld [vmem:[#allocation14 + $0x770] sm:$0xff]
    %v8458 = vld [vmem:[#allocation14 + $0x778] sm:$0xff]
    %v8459 = vld [vmem:[#allocation14 + $0x7e0] sm:$0xff]
    %v8460 = vld [vmem:[#allocation14 + $0x7e8] sm:$0xff]
    %v8461 = vld [vmem:[#allocation14 + $0x7f0] sm:$0xff]
    %v8462 = vld [vmem:[#allocation14 + $0x7f8] sm:$0xff]
    %v8463 = vld [vmem:[#allocation14 + $0x860] sm:$0xff]
    %v8464 = vld [vmem:[#allocation14 + $0x868] sm:$0xff]
    %v8465 = vld [vmem:[#allocation14 + $0x870] sm:$0xff]
    %v8466 = vld [vmem:[#allocation14 + $0x878] sm:$0xff]
    %v8467 = vld [vmem:[#allocation14 + $0x8e0] sm:$0xff]
    %v8468 = vld [vmem:[#allocation14 + $0x8e8] sm:$0xff]
    %v8469 = vld [vmem:[#allocation14 + $0x8f0] sm:$0xff]
    %v8470 = vld [vmem:[#allocation14 + $0x8f8] sm:$0xff]
    %v8471 = vld [vmem:[#allocation14 + $0x960] sm:$0xff]
    %v8472 = vld [vmem:[#allocation14 + $0x968] sm:$0xff]
    %v8473 = vld [vmem:[#allocation14 + $0x970] sm:$0xff]
    %v8474 = vld [vmem:[#allocation14 + $0x978] sm:$0xff]
    %v8475 = vld [vmem:[#allocation14 + $0x9e0] sm:$0xff]
    %v8476 = vld [vmem:[#allocation14 + $0x9e8] sm:$0xff]
    %v8477 = vld [vmem:[#allocation14 + $0x9f0] sm:$0xff]
    %v8478 = vld [vmem:[#allocation14 + $0x9f8] sm:$0xff]
    %v8479 = vld [vmem:[#allocation14 + $0xa60] sm:$0xff]
    %v8480 = vld [vmem:[#allocation14 + $0xa68] sm:$0xff]
    %v8481 = vld [vmem:[#allocation14 + $0xa70] sm:$0xff]
    %v8482 = vld [vmem:[#allocation14 + $0xa78] sm:$0xff]
    %v8483 = vld [vmem:[#allocation14 + $0xae0] sm:$0xff]
    %v8484 = vld [vmem:[#allocation14 + $0xae8] sm:$0xff]
    %v8485 = vld [vmem:[#allocation14 + $0xaf0] sm:$0xff]
    %v8486 = vld [vmem:[#allocation14 + $0xaf8] sm:$0xff]
    %v8487 = vld [vmem:[#allocation14 + $0xb60] sm:$0xff]
    %v8488 = vld [vmem:[#allocation14 + $0xb68] sm:$0xff]
    %v8489 = vld [vmem:[#allocation14 + $0xb70] sm:$0xff]
    %v8490 = vld [vmem:[#allocation14 + $0xb78] sm:$0xff]
    %v8491 = vld [vmem:[#allocation14 + $0xbe0] sm:$0xff]
    %v8492 = vld [vmem:[#allocation14 + $0xbe8] sm:$0xff]
    %v8493 = vld [vmem:[#allocation14 + $0xbf0] sm:$0xff]
    %v8494 = vld [vmem:[#allocation14 + $0xbf8] sm:$0xff]
    %v8495 = vld [vmem:[#allocation14 + $0xc60] sm:$0xff]
    %v8496 = vld [vmem:[#allocation14 + $0xc68] sm:$0xff]
    %v8497 = vld [vmem:[#allocation14 + $0xc70] sm:$0xff]
    %v8498 = vld [vmem:[#allocation14 + $0xc78] sm:$0xff]
    %v8499 = vld [vmem:[#allocation14 + $0xce0] sm:$0xff]
    %v8500 = vld [vmem:[#allocation14 + $0xce8] sm:$0xff]
    %v8501 = vld [vmem:[#allocation14 + $0xcf0] sm:$0xff]
    %v8502 = vld [vmem:[#allocation14 + $0xcf8] sm:$0xff]
    %v8503 = vld [vmem:[#allocation14 + $0xd60] sm:$0xff]
    %v8504 = vld [vmem:[#allocation14 + $0xd68] sm:$0xff]
    %v8505 = vld [vmem:[#allocation14 + $0xd70] sm:$0xff]
    %v8506 = vld [vmem:[#allocation14 + $0xd78] sm:$0xff]
    %v8507 = vld [vmem:[#allocation14 + $0xde0] sm:$0xff]
    %v8508 = vld [vmem:[#allocation14 + $0xde8] sm:$0xff]
    %v8509 = vld [vmem:[#allocation14 + $0xdf0] sm:$0xff]
    %v8510 = vld [vmem:[#allocation14 + $0xdf8] sm:$0xff]
    %v8511 = vld [vmem:[#allocation14 + $0xe60] sm:$0xff]
    %v8512 = vld [vmem:[#allocation14 + $0xe68] sm:$0xff]
    %v8513 = vld [vmem:[#allocation14 + $0xe70] sm:$0xff]
    %v8514 = vld [vmem:[#allocation14 + $0xe78] sm:$0xff]
    %v8515 = vld [vmem:[#allocation14 + $0xee0] sm:$0xff]
    %v8516 = vld [vmem:[#allocation14 + $0xee8] sm:$0xff]
    %v8517 = vld [vmem:[#allocation14 + $0xef0] sm:$0xff]
    %v8518 = vld [vmem:[#allocation14 + $0xef8] sm:$0xff]
    %v8519 = vld [vmem:[#allocation14 + $0xf60] sm:$0xff]
    %v8520 = vld [vmem:[#allocation14 + $0xf68] sm:$0xff]
    %v8521 = vld [vmem:[#allocation14 + $0xf70] sm:$0xff]
    %v8522 = vld [vmem:[#allocation14 + $0xf78] sm:$0xff]
    %v8523 = vld [vmem:[#allocation14 + $0xfe0] sm:$0xff]
    %v8524 = vld [vmem:[#allocation14 + $0xfe8] sm:$0xff]
    %v8525 = vld [vmem:[#allocation14 + $0xff0] sm:$0xff]
    %v8526 = vld [vmem:[#allocation14 + $0xff8] sm:$0xff]
    %v8527 = vld [vmem:[#allocation14 + $0x1060] sm:$0xff]
    %v8528 = vld [vmem:[#allocation14 + $0x1068] sm:$0xff]
    %v8529 = vld [vmem:[#allocation14 + $0x1070] sm:$0xff]
    %v8530 = vld [vmem:[#allocation14 + $0x1078] sm:$0xff]
    %v8531 = vld [vmem:[#allocation14 + $0x10e0] sm:$0xff]
    %v8532 = vld [vmem:[#allocation14 + $0x10e8] sm:$0xff]
    %v8533 = vld [vmem:[#allocation14 + $0x10f0] sm:$0xff]
    %v8534 = vld [vmem:[#allocation14 + $0x10f8] sm:$0xff]
    %v8535 = vld [vmem:[#allocation14 + $0x1160] sm:$0xff]
    %v8536 = vld [vmem:[#allocation14 + $0x1168] sm:$0xff]
    %v8537 = vld [vmem:[#allocation14 + $0x1170] sm:$0xff]
    %v8538 = vld [vmem:[#allocation14 + $0x1178] sm:$0xff]
    %v8539 = vld [vmem:[#allocation14 + $0x11e0] sm:$0xff]
    %v8540 = vld [vmem:[#allocation14 + $0x11e8] sm:$0xff]
    %v8541 = vld [vmem:[#allocation14 + $0x11f0] sm:$0xff]
    %v8542 = vld [vmem:[#allocation14 + $0x11f8] sm:$0xff]
    %v8543 = vld [vmem:[#allocation14 + $0x1260] sm:$0xff]
    %v8544 = vld [vmem:[#allocation14 + $0x1268] sm:$0xff]
    %v8545 = vld [vmem:[#allocation14 + $0x1270] sm:$0xff]
    %v8546 = vld [vmem:[#allocation14 + $0x1278] sm:$0xff]
    %v8547 = vld [vmem:[#allocation14 + $0x12e0] sm:$0xff]
    %v8548 = vld [vmem:[#allocation14 + $0x12e8] sm:$0xff]
    %v8549 = vld [vmem:[#allocation14 + $0x12f0] sm:$0xff]
    %v8550 = vld [vmem:[#allocation14 + $0x12f8] sm:$0xff]
    %v8551 = vld [vmem:[#allocation14 + $0x1360] sm:$0xff]
    %v8552 = vld [vmem:[#allocation14 + $0x1368] sm:$0xff]
    %v8553 = vld [vmem:[#allocation14 + $0x1370] sm:$0xff]
    %v8554 = vld [vmem:[#allocation14 + $0x1378] sm:$0xff]
    %v8555 = vld [vmem:[#allocation14 + $0x13e0] sm:$0xff]
    %v8556 = vld [vmem:[#allocation14 + $0x13e8] sm:$0xff]
    %v8557 = vld [vmem:[#allocation14 + $0x13f0] sm:$0xff]
    %v8558 = vld [vmem:[#allocation14 + $0x13f8] sm:$0xff]
    %v8559 = vld [vmem:[#allocation14 + $0x1460] sm:$0xff]
    %v8560 = vld [vmem:[#allocation14 + $0x1468] sm:$0xff]
    %v8561 = vld [vmem:[#allocation14 + $0x1470] sm:$0xff]
    %v8562 = vld [vmem:[#allocation14 + $0x1478] sm:$0xff]
    %v8563 = vld [vmem:[#allocation14 + $0x14e0] sm:$0xff]
    %v8564 = vld [vmem:[#allocation14 + $0x14e8] sm:$0xff]
    %v8565 = vld [vmem:[#allocation14 + $0x14f0] sm:$0xff]
    %v8566 = vld [vmem:[#allocation14 + $0x14f8] sm:$0xff]
    %v8567 = vld [vmem:[#allocation14 + $0x1560] sm:$0xff]
    %v8568 = vld [vmem:[#allocation14 + $0x1568] sm:$0xff]
    %v8569 = vld [vmem:[#allocation14 + $0x1570] sm:$0xff]
    %v8570 = vld [vmem:[#allocation14 + $0x1578] sm:$0xff]
    %v8571 = vld [vmem:[#allocation14 + $0x15e0] sm:$0xff]
    %v8572 = vld [vmem:[#allocation14 + $0x15e8] sm:$0xff]
    %v8573 = vld [vmem:[#allocation14 + $0x15f0] sm:$0xff]
    %v8574 = vld [vmem:[#allocation14 + $0x15f8] sm:$0xff]
    %v8575 = vld [vmem:[#allocation14 + $0x1660] sm:$0xff]
    %v8576 = vld [vmem:[#allocation14 + $0x1668] sm:$0xff]
    %v8577 = vld [vmem:[#allocation14 + $0x1670] sm:$0xff]
    %v8578 = vld [vmem:[#allocation14 + $0x1678] sm:$0xff]
    %v8579 = vld [vmem:[#allocation14 + $0x16e0] sm:$0xff]
    %v8580 = vld [vmem:[#allocation14 + $0x16e8] sm:$0xff]
    %v8581 = vld [vmem:[#allocation14 + $0x16f0] sm:$0xff]
    %v8582 = vld [vmem:[#allocation14 + $0x16f8] sm:$0xff]
    %v8583 = vld [vmem:[#allocation14 + $0x1760] sm:$0xff]
    %v8584 = vld [vmem:[#allocation14 + $0x1768] sm:$0xff]
    %v8585 = vld [vmem:[#allocation14 + $0x1770] sm:$0xff]
    %v8586 = vld [vmem:[#allocation14 + $0x1778] sm:$0xff]
    %v8587 = vld [vmem:[#allocation14 + $0x17e0] sm:$0xff]
    %v8588 = vld [vmem:[#allocation14 + $0x17e8] sm:$0xff]
    %v8589 = vld [vmem:[#allocation14 + $0x17f0] sm:$0xff]
    %v8590 = vld [vmem:[#allocation14 + $0x17f8] sm:$0xff]
    %v8591 = vld [vmem:[#allocation14 + $0x1860] sm:$0xff]
    %v8592 = vld [vmem:[#allocation14 + $0x1868] sm:$0xff]
    %v8593 = vld [vmem:[#allocation14 + $0x1870] sm:$0xff]
    %v8594 = vld [vmem:[#allocation14 + $0x1878] sm:$0xff]
    %v8595 = vld [vmem:[#allocation14 + $0x18e0] sm:$0xff]
    %v8596 = vld [vmem:[#allocation14 + $0x18e8] sm:$0xff]
    %v8597 = vld [vmem:[#allocation14 + $0x18f0] sm:$0xff]
    %v8598 = vld [vmem:[#allocation14 + $0x18f8] sm:$0xff]
    %v8599 = vld [vmem:[#allocation14 + $0x1960] sm:$0xff]
    %v8600 = vld [vmem:[#allocation14 + $0x1968] sm:$0xff]
    %v8601 = vld [vmem:[#allocation14 + $0x1970] sm:$0xff]
    %v8602 = vld [vmem:[#allocation14 + $0x1978] sm:$0xff]
    %v8603 = vld [vmem:[#allocation14 + $0x19e0] sm:$0xff]
    %v8604 = vld [vmem:[#allocation14 + $0x19e8] sm:$0xff]
    %v8605 = vld [vmem:[#allocation14 + $0x19f0] sm:$0xff]
    %v8606 = vld [vmem:[#allocation14 + $0x19f8] sm:$0xff]
    %v8607 = vld [vmem:[#allocation14 + $0x1a60] sm:$0xff]
    %v8608 = vld [vmem:[#allocation14 + $0x1a68] sm:$0xff]
    %v8609 = vld [vmem:[#allocation14 + $0x1a70] sm:$0xff]
    %v8610 = vld [vmem:[#allocation14 + $0x1a78] sm:$0xff]
    %v8611 = vld [vmem:[#allocation14 + $0x1ae0] sm:$0xff]
    %v8612 = vld [vmem:[#allocation14 + $0x1ae8] sm:$0xff]
    %v8613 = vld [vmem:[#allocation14 + $0x1af0] sm:$0xff]
    %v8614 = vld [vmem:[#allocation14 + $0x1af8] sm:$0xff]
    %v8615 = vld [vmem:[#allocation14 + $0x1b60] sm:$0xff]
    %v8616 = vld [vmem:[#allocation14 + $0x1b68] sm:$0xff]
    %v8617 = vld [vmem:[#allocation14 + $0x1b70] sm:$0xff]
    %v8618 = vld [vmem:[#allocation14 + $0x1b78] sm:$0xff]
    %v8619 = vld [vmem:[#allocation14 + $0x1be0] sm:$0xff]
    %v8620 = vld [vmem:[#allocation14 + $0x1be8] sm:$0xff]
    %v8621 = vld [vmem:[#allocation14 + $0x1bf0] sm:$0xff]
    %v8622 = vld [vmem:[#allocation14 + $0x1bf8] sm:$0xff]
    %v8623 = vld [vmem:[#allocation14 + $0x1c60] sm:$0xff]
    %v8624 = vld [vmem:[#allocation14 + $0x1c68] sm:$0xff]
    %v8625 = vld [vmem:[#allocation14 + $0x1c70] sm:$0xff]
    %v8626 = vld [vmem:[#allocation14 + $0x1c78] sm:$0xff]
    %v8627 = vld [vmem:[#allocation14 + $0x1ce0] sm:$0xff]
    %v8628 = vld [vmem:[#allocation14 + $0x1ce8] sm:$0xff]
    %v8629 = vld [vmem:[#allocation14 + $0x1cf0] sm:$0xff]
    %v8630 = vld [vmem:[#allocation14 + $0x1cf8] sm:$0xff]
    %v8631 = vld [vmem:[#allocation14 + $0x1d60] sm:$0xff]
    %v8632 = vld [vmem:[#allocation14 + $0x1d68] sm:$0xff]
    %v8633 = vld [vmem:[#allocation14 + $0x1d70] sm:$0xff]
    %v8634 = vld [vmem:[#allocation14 + $0x1d78] sm:$0xff]
    %v8635 = vld [vmem:[#allocation14 + $0x1de0] sm:$0xff]
    %v8636 = vld [vmem:[#allocation14 + $0x1de8] sm:$0xff]
    %v8637 = vld [vmem:[#allocation14 + $0x1df0] sm:$0xff]
    %v8638 = vld [vmem:[#allocation14 + $0x1df8] sm:$0xff]
    %v8639 = vld [vmem:[#allocation14 + $0x1e60] sm:$0xff]
    %v8640 = vld [vmem:[#allocation14 + $0x1e68] sm:$0xff]
    %v8641 = vld [vmem:[#allocation14 + $0x1e70] sm:$0xff]
    %v8642 = vld [vmem:[#allocation14 + $0x1e78] sm:$0xff]
    %v8643 = vld [vmem:[#allocation14 + $0x1ee0] sm:$0xff]
    %v8644 = vld [vmem:[#allocation14 + $0x1ee8] sm:$0xff]
    %v8645 = vld [vmem:[#allocation14 + $0x1ef0] sm:$0xff]
    %v8646 = vld [vmem:[#allocation14 + $0x1ef8] sm:$0xff]
    %v8647 = vld [vmem:[#allocation14 + $0x1f60] sm:$0xff]
    %v8648 = vld [vmem:[#allocation14 + $0x1f68] sm:$0xff]
    %v8649 = vld [vmem:[#allocation14 + $0x1f70] sm:$0xff]
    %v8650 = vld [vmem:[#allocation14 + $0x1f78] sm:$0xff]
    %v8651 = vld [vmem:[#allocation14 + $0x1fe0] sm:$0xff]
    %v8652 = vld [vmem:[#allocation14 + $0x1fe8] sm:$0xff]
    %v8653 = vld [vmem:[#allocation14 + $0x1ff0] sm:$0xff]
    %v8654 = vld [vmem:[#allocation14 + $0x1ff8] sm:$0xff]
    %v8911 = vunpack.c.l.b16 %v8399
    %v8912 = vunpack.c.h.b16 %v8399
    %v8913 = vunpack.c.l.b16 %v8400
    %v8914 = vunpack.c.h.b16 %v8400
    %v8915 = vunpack.c.l.b16 %v8401
    %v8916 = vunpack.c.h.b16 %v8401
    %v8917 = vunpack.c.l.b16 %v8402
    %v8918 = vunpack.c.h.b16 %v8402
    %v8919 = vunpack.c.l.b16 %v8403
    %v8920 = vunpack.c.h.b16 %v8403
    %v8921 = vunpack.c.l.b16 %v8404
    %v8922 = vunpack.c.h.b16 %v8404
    %v8923 = vunpack.c.l.b16 %v8405
    %v8924 = vunpack.c.h.b16 %v8405
    %v8925 = vunpack.c.l.b16 %v8406
    %v8926 = vunpack.c.h.b16 %v8406
    %v8927 = vunpack.c.l.b16 %v8407
    %v8928 = vunpack.c.h.b16 %v8407
    %v8929 = vunpack.c.l.b16 %v8408
    %v8930 = vunpack.c.h.b16 %v8408
    %v8931 = vunpack.c.l.b16 %v8409
    %v8932 = vunpack.c.h.b16 %v8409
    %v8933 = vunpack.c.l.b16 %v8410
    %v8934 = vunpack.c.h.b16 %v8410
    %v8935 = vunpack.c.l.b16 %v8411
    %v8936 = vunpack.c.h.b16 %v8411
    %v8937 = vunpack.c.l.b16 %v8412
    %v8938 = vunpack.c.h.b16 %v8412
    %v8939 = vunpack.c.l.b16 %v8413
    %v8940 = vunpack.c.h.b16 %v8413
    %v8941 = vunpack.c.l.b16 %v8414
    %v8942 = vunpack.c.h.b16 %v8414
    %v8943 = vunpack.c.l.b16 %v8415
    %v8944 = vunpack.c.h.b16 %v8415
    %v8945 = vunpack.c.l.b16 %v8416
    %v8946 = vunpack.c.h.b16 %v8416
    %v8947 = vunpack.c.l.b16 %v8417
    %v8948 = vunpack.c.h.b16 %v8417
    %v8949 = vunpack.c.l.b16 %v8418
    %v8950 = vunpack.c.h.b16 %v8418
    %v8951 = vunpack.c.l.b16 %v8419
    %v8952 = vunpack.c.h.b16 %v8419
    %v8953 = vunpack.c.l.b16 %v8420
    %v8954 = vunpack.c.h.b16 %v8420
    %v8955 = vunpack.c.l.b16 %v8421
    %v8956 = vunpack.c.h.b16 %v8421
    %v8957 = vunpack.c.l.b16 %v8422
    %v8958 = vunpack.c.h.b16 %v8422
    %v8959 = vunpack.c.l.b16 %v8423
    %v8960 = vunpack.c.h.b16 %v8423
    %v8961 = vunpack.c.l.b16 %v8424
    %v8962 = vunpack.c.h.b16 %v8424
    %v8963 = vunpack.c.l.b16 %v8425
    %v8964 = vunpack.c.h.b16 %v8425
    %v8965 = vunpack.c.l.b16 %v8426
    %v8966 = vunpack.c.h.b16 %v8426
    %v8967 = vunpack.c.l.b16 %v8427
    %v8968 = vunpack.c.h.b16 %v8427
    %v8969 = vunpack.c.l.b16 %v8428
    %v8970 = vunpack.c.h.b16 %v8428
    %v8971 = vunpack.c.l.b16 %v8429
    %v8972 = vunpack.c.h.b16 %v8429
    %v8973 = vunpack.c.l.b16 %v8430
    %v8974 = vunpack.c.h.b16 %v8430
    %v8975 = vunpack.c.l.b16 %v8431
    %v8976 = vunpack.c.h.b16 %v8431
    %v8977 = vunpack.c.l.b16 %v8432
    %v8978 = vunpack.c.h.b16 %v8432
    %v8979 = vunpack.c.l.b16 %v8433
    %v8980 = vunpack.c.h.b16 %v8433
    %v8981 = vunpack.c.l.b16 %v8434
    %v8982 = vunpack.c.h.b16 %v8434
    %v8983 = vunpack.c.l.b16 %v8435
    %v8984 = vunpack.c.h.b16 %v8435
    %v8985 = vunpack.c.l.b16 %v8436
    %v8986 = vunpack.c.h.b16 %v8436
    %v8987 = vunpack.c.l.b16 %v8437
    %v8988 = vunpack.c.h.b16 %v8437
    %v8989 = vunpack.c.l.b16 %v8438
    %v8990 = vunpack.c.h.b16 %v8438
    %v8991 = vunpack.c.l.b16 %v8439
    %v8992 = vunpack.c.h.b16 %v8439
    %v8993 = vunpack.c.l.b16 %v8440
    %v8994 = vunpack.c.h.b16 %v8440
    %v8995 = vunpack.c.l.b16 %v8441
    %v8996 = vunpack.c.h.b16 %v8441
    %v8997 = vunpack.c.l.b16 %v8442
    %v8998 = vunpack.c.h.b16 %v8442
    %v8999 = vunpack.c.l.b16 %v8443
    %v9000 = vunpack.c.h.b16 %v8443
    %v9001 = vunpack.c.l.b16 %v8444
    %v9002 = vunpack.c.h.b16 %v8444
    %v9003 = vunpack.c.l.b16 %v8445
    %v9004 = vunpack.c.h.b16 %v8445
    %v9005 = vunpack.c.l.b16 %v8446
    %v9006 = vunpack.c.h.b16 %v8446
    %v9007 = vunpack.c.l.b16 %v8447
    %v9008 = vunpack.c.h.b16 %v8447
    %v9009 = vunpack.c.l.b16 %v8448
    %v9010 = vunpack.c.h.b16 %v8448
    %v9011 = vunpack.c.l.b16 %v8449
    %v9012 = vunpack.c.h.b16 %v8449
    %v9013 = vunpack.c.l.b16 %v8450
    %v9014 = vunpack.c.h.b16 %v8450
    %v9015 = vunpack.c.l.b16 %v8451
    %v9016 = vunpack.c.h.b16 %v8451
    %v9017 = vunpack.c.l.b16 %v8452
    %v9018 = vunpack.c.h.b16 %v8452
    %v9019 = vunpack.c.l.b16 %v8453
    %v9020 = vunpack.c.h.b16 %v8453
    %v9021 = vunpack.c.l.b16 %v8454
    %v9022 = vunpack.c.h.b16 %v8454
    %v9023 = vunpack.c.l.b16 %v8455
    %v9024 = vunpack.c.h.b16 %v8455
    %v9025 = vunpack.c.l.b16 %v8456
    %v9026 = vunpack.c.h.b16 %v8456
    %v9027 = vunpack.c.l.b16 %v8457
    %v9028 = vunpack.c.h.b16 %v8457
    %v9029 = vunpack.c.l.b16 %v8458
    %v9030 = vunpack.c.h.b16 %v8458
    %v9031 = vunpack.c.l.b16 %v8459
    %v9032 = vunpack.c.h.b16 %v8459
    %v9033 = vunpack.c.l.b16 %v8460
    %v9034 = vunpack.c.h.b16 %v8460
    %v9035 = vunpack.c.l.b16 %v8461
    %v9036 = vunpack.c.h.b16 %v8461
    %v9037 = vunpack.c.l.b16 %v8462
    %v9038 = vunpack.c.h.b16 %v8462
    %v9039 = vunpack.c.l.b16 %v8463
    %v9040 = vunpack.c.h.b16 %v8463
    %v9041 = vunpack.c.l.b16 %v8464
    %v9042 = vunpack.c.h.b16 %v8464
    %v9043 = vunpack.c.l.b16 %v8465
    %v9044 = vunpack.c.h.b16 %v8465
    %v9045 = vunpack.c.l.b16 %v8466
    %v9046 = vunpack.c.h.b16 %v8466
    %v9047 = vunpack.c.l.b16 %v8467
    %v9048 = vunpack.c.h.b16 %v8467
    %v9049 = vunpack.c.l.b16 %v8468
    %v9050 = vunpack.c.h.b16 %v8468
    %v9051 = vunpack.c.l.b16 %v8469
    %v9052 = vunpack.c.h.b16 %v8469
    %v9053 = vunpack.c.l.b16 %v8470
    %v9054 = vunpack.c.h.b16 %v8470
    %v9055 = vunpack.c.l.b16 %v8471
    %v9056 = vunpack.c.h.b16 %v8471
    %v9057 = vunpack.c.l.b16 %v8472
    %v9058 = vunpack.c.h.b16 %v8472
    %v9059 = vunpack.c.l.b16 %v8473
    %v9060 = vunpack.c.h.b16 %v8473
    %v9061 = vunpack.c.l.b16 %v8474
    %v9062 = vunpack.c.h.b16 %v8474
    %v9063 = vunpack.c.l.b16 %v8475
    %v9064 = vunpack.c.h.b16 %v8475
    %v9065 = vunpack.c.l.b16 %v8476
    %v9066 = vunpack.c.h.b16 %v8476
    %v9067 = vunpack.c.l.b16 %v8477
    %v9068 = vunpack.c.h.b16 %v8477
    %v9069 = vunpack.c.l.b16 %v8478
    %v9070 = vunpack.c.h.b16 %v8478
    %v9071 = vunpack.c.l.b16 %v8479
    %v9072 = vunpack.c.h.b16 %v8479
    %v9073 = vunpack.c.l.b16 %v8480
    %v9074 = vunpack.c.h.b16 %v8480
    %v9075 = vunpack.c.l.b16 %v8481
    %v9076 = vunpack.c.h.b16 %v8481
    %v9077 = vunpack.c.l.b16 %v8482
    %v9078 = vunpack.c.h.b16 %v8482
    %v9079 = vunpack.c.l.b16 %v8483
    %v9080 = vunpack.c.h.b16 %v8483
    %v9081 = vunpack.c.l.b16 %v8484
    %v9082 = vunpack.c.h.b16 %v8484
    %v9083 = vunpack.c.l.b16 %v8485
    %v9084 = vunpack.c.h.b16 %v8485
    %v9085 = vunpack.c.l.b16 %v8486
    %v9086 = vunpack.c.h.b16 %v8486
    %v9087 = vunpack.c.l.b16 %v8487
    %v9088 = vunpack.c.h.b16 %v8487
    %v9089 = vunpack.c.l.b16 %v8488
    %v9090 = vunpack.c.h.b16 %v8488
    %v9091 = vunpack.c.l.b16 %v8489
    %v9092 = vunpack.c.h.b16 %v8489
    %v9093 = vunpack.c.l.b16 %v8490
    %v9094 = vunpack.c.h.b16 %v8490
    %v9095 = vunpack.c.l.b16 %v8491
    %v9096 = vunpack.c.h.b16 %v8491
    %v9097 = vunpack.c.l.b16 %v8492
    %v9098 = vunpack.c.h.b16 %v8492
    %v9099 = vunpack.c.l.b16 %v8493
    %v9100 = vunpack.c.h.b16 %v8493
    %v9101 = vunpack.c.l.b16 %v8494
    %v9102 = vunpack.c.h.b16 %v8494
    %v9103 = vunpack.c.l.b16 %v8495
    %v9104 = vunpack.c.h.b16 %v8495
    %v9105 = vunpack.c.l.b16 %v8496
    %v9106 = vunpack.c.h.b16 %v8496
    %v9107 = vunpack.c.l.b16 %v8497
    %v9108 = vunpack.c.h.b16 %v8497
    %v9109 = vunpack.c.l.b16 %v8498
    %v9110 = vunpack.c.h.b16 %v8498
    %v9111 = vunpack.c.l.b16 %v8499
    %v9112 = vunpack.c.h.b16 %v8499
    %v9113 = vunpack.c.l.b16 %v8500
    %v9114 = vunpack.c.h.b16 %v8500
    %v9115 = vunpack.c.l.b16 %v8501
    %v9116 = vunpack.c.h.b16 %v8501
    %v9117 = vunpack.c.l.b16 %v8502
    %v9118 = vunpack.c.h.b16 %v8502
    %v9119 = vunpack.c.l.b16 %v8503
    %v9120 = vunpack.c.h.b16 %v8503
    %v9121 = vunpack.c.l.b16 %v8504
    %v9122 = vunpack.c.h.b16 %v8504
    %v9123 = vunpack.c.l.b16 %v8505
    %v9124 = vunpack.c.h.b16 %v8505
    %v9125 = vunpack.c.l.b16 %v8506
    %v9126 = vunpack.c.h.b16 %v8506
    %v9127 = vunpack.c.l.b16 %v8507
    %v9128 = vunpack.c.h.b16 %v8507
    %v9129 = vunpack.c.l.b16 %v8508
    %v9130 = vunpack.c.h.b16 %v8508
    %v9131 = vunpack.c.l.b16 %v8509
    %v9132 = vunpack.c.h.b16 %v8509
    %v9133 = vunpack.c.l.b16 %v8510
    %v9134 = vunpack.c.h.b16 %v8510
    %v9135 = vunpack.c.l.b16 %v8511
    %v9136 = vunpack.c.h.b16 %v8511
    %v9137 = vunpack.c.l.b16 %v8512
    %v9138 = vunpack.c.h.b16 %v8512
    %v9139 = vunpack.c.l.b16 %v8513
    %v9140 = vunpack.c.h.b16 %v8513
    %v9141 = vunpack.c.l.b16 %v8514
    %v9142 = vunpack.c.h.b16 %v8514
    %v9143 = vunpack.c.l.b16 %v8515
    %v9144 = vunpack.c.h.b16 %v8515
    %v9145 = vunpack.c.l.b16 %v8516
    %v9146 = vunpack.c.h.b16 %v8516
    %v9147 = vunpack.c.l.b16 %v8517
    %v9148 = vunpack.c.h.b16 %v8517
    %v9149 = vunpack.c.l.b16 %v8518
    %v9150 = vunpack.c.h.b16 %v8518
    %v9151 = vunpack.c.l.b16 %v8519
    %v9152 = vunpack.c.h.b16 %v8519
    %v9153 = vunpack.c.l.b16 %v8520
    %v9154 = vunpack.c.h.b16 %v8520
    %v9155 = vunpack.c.l.b16 %v8521
    %v9156 = vunpack.c.h.b16 %v8521
    %v9157 = vunpack.c.l.b16 %v8522
    %v9158 = vunpack.c.h.b16 %v8522
    %v9159 = vunpack.c.l.b16 %v8523
    %v9160 = vunpack.c.h.b16 %v8523
    %v9161 = vunpack.c.l.b16 %v8524
    %v9162 = vunpack.c.h.b16 %v8524
    %v9163 = vunpack.c.l.b16 %v8525
    %v9164 = vunpack.c.h.b16 %v8525
    %v9165 = vunpack.c.l.b16 %v8526
    %v9166 = vunpack.c.h.b16 %v8526
    %v9167 = vunpack.c.l.b16 %v8527
    %v9168 = vunpack.c.h.b16 %v8527
    %v9169 = vunpack.c.l.b16 %v8528
    %v9170 = vunpack.c.h.b16 %v8528
    %v9171 = vunpack.c.l.b16 %v8529
    %v9172 = vunpack.c.h.b16 %v8529
    %v9173 = vunpack.c.l.b16 %v8530
    %v9174 = vunpack.c.h.b16 %v8530
    %v9175 = vunpack.c.l.b16 %v8531
    %v9176 = vunpack.c.h.b16 %v8531
    %v9177 = vunpack.c.l.b16 %v8532
    %v9178 = vunpack.c.h.b16 %v8532
    %v9179 = vunpack.c.l.b16 %v8533
    %v9180 = vunpack.c.h.b16 %v8533
    %v9181 = vunpack.c.l.b16 %v8534
    %v9182 = vunpack.c.h.b16 %v8534
    %v9183 = vunpack.c.l.b16 %v8535
    %v9184 = vunpack.c.h.b16 %v8535
    %v9185 = vunpack.c.l.b16 %v8536
    %v9186 = vunpack.c.h.b16 %v8536
    %v9187 = vunpack.c.l.b16 %v8537
    %v9188 = vunpack.c.h.b16 %v8537
    %v9189 = vunpack.c.l.b16 %v8538
    %v9190 = vunpack.c.h.b16 %v8538
    %v9191 = vunpack.c.l.b16 %v8539
    %v9192 = vunpack.c.h.b16 %v8539
    %v9193 = vunpack.c.l.b16 %v8540
    %v9194 = vunpack.c.h.b16 %v8540
    %v9195 = vunpack.c.l.b16 %v8541
    %v9196 = vunpack.c.h.b16 %v8541
    %v9197 = vunpack.c.l.b16 %v8542
    %v9198 = vunpack.c.h.b16 %v8542
    %v9199 = vunpack.c.l.b16 %v8543
    %v9200 = vunpack.c.h.b16 %v8543
    %v9201 = vunpack.c.l.b16 %v8544
    %v9202 = vunpack.c.h.b16 %v8544
    %v9203 = vunpack.c.l.b16 %v8545
    %v9204 = vunpack.c.h.b16 %v8545
    %v9205 = vunpack.c.l.b16 %v8546
    %v9206 = vunpack.c.h.b16 %v8546
    %v9207 = vunpack.c.l.b16 %v8547
    %v9208 = vunpack.c.h.b16 %v8547
    %v9209 = vunpack.c.l.b16 %v8548
    %v9210 = vunpack.c.h.b16 %v8548
    %v9211 = vunpack.c.l.b16 %v8549
    %v9212 = vunpack.c.h.b16 %v8549
    %v9213 = vunpack.c.l.b16 %v8550
    %v9214 = vunpack.c.h.b16 %v8550
    %v9215 = vunpack.c.l.b16 %v8551
    %v9216 = vunpack.c.h.b16 %v8551
    %v9217 = vunpack.c.l.b16 %v8552
    %v9218 = vunpack.c.h.b16 %v8552
    %v9219 = vunpack.c.l.b16 %v8553
    %v9220 = vunpack.c.h.b16 %v8553
    %v9221 = vunpack.c.l.b16 %v8554
    %v9222 = vunpack.c.h.b16 %v8554
    %v9223 = vunpack.c.l.b16 %v8555
    %v9224 = vunpack.c.h.b16 %v8555
    %v9225 = vunpack.c.l.b16 %v8556
    %v9226 = vunpack.c.h.b16 %v8556
    %v9227 = vunpack.c.l.b16 %v8557
    %v9228 = vunpack.c.h.b16 %v8557
    %v9229 = vunpack.c.l.b16 %v8558
    %v9230 = vunpack.c.h.b16 %v8558
    %v9231 = vunpack.c.l.b16 %v8559
    %v9232 = vunpack.c.h.b16 %v8559
    %v9233 = vunpack.c.l.b16 %v8560
    %v9234 = vunpack.c.h.b16 %v8560
    %v9235 = vunpack.c.l.b16 %v8561
    %v9236 = vunpack.c.h.b16 %v8561
    %v9237 = vunpack.c.l.b16 %v8562
    %v9238 = vunpack.c.h.b16 %v8562
    %v9239 = vunpack.c.l.b16 %v8563
    %v9240 = vunpack.c.h.b16 %v8563
    %v9241 = vunpack.c.l.b16 %v8564
    %v9242 = vunpack.c.h.b16 %v8564
    %v9243 = vunpack.c.l.b16 %v8565
    %v9244 = vunpack.c.h.b16 %v8565
    %v9245 = vunpack.c.l.b16 %v8566
    %v9246 = vunpack.c.h.b16 %v8566
    %v9247 = vunpack.c.l.b16 %v8567
    %v9248 = vunpack.c.h.b16 %v8567
    %v9249 = vunpack.c.l.b16 %v8568
    %v9250 = vunpack.c.h.b16 %v8568
    %v9251 = vunpack.c.l.b16 %v8569
    %v9252 = vunpack.c.h.b16 %v8569
    %v9253 = vunpack.c.l.b16 %v8570
    %v9254 = vunpack.c.h.b16 %v8570
    %v9255 = vunpack.c.l.b16 %v8571
    %v9256 = vunpack.c.h.b16 %v8571
    %v9257 = vunpack.c.l.b16 %v8572
    %v9258 = vunpack.c.h.b16 %v8572
    %v9259 = vunpack.c.l.b16 %v8573
    %v9260 = vunpack.c.h.b16 %v8573
    %v9261 = vunpack.c.l.b16 %v8574
    %v9262 = vunpack.c.h.b16 %v8574
    %v9263 = vunpack.c.l.b16 %v8575
    %v9264 = vunpack.c.h.b16 %v8575
    %v9265 = vunpack.c.l.b16 %v8576
    %v9266 = vunpack.c.h.b16 %v8576
    %v9267 = vunpack.c.l.b16 %v8577
    %v9268 = vunpack.c.h.b16 %v8577
    %v9269 = vunpack.c.l.b16 %v8578
    %v9270 = vunpack.c.h.b16 %v8578
    %v9271 = vunpack.c.l.b16 %v8579
    %v9272 = vunpack.c.h.b16 %v8579
    %v9273 = vunpack.c.l.b16 %v8580
    %v9274 = vunpack.c.h.b16 %v8580
    %v9275 = vunpack.c.l.b16 %v8581
    %v9276 = vunpack.c.h.b16 %v8581
    %v9277 = vunpack.c.l.b16 %v8582
    %v9278 = vunpack.c.h.b16 %v8582
    %v9279 = vunpack.c.l.b16 %v8583
    %v9280 = vunpack.c.h.b16 %v8583
    %v9281 = vunpack.c.l.b16 %v8584
    %v9282 = vunpack.c.h.b16 %v8584
    %v9283 = vunpack.c.l.b16 %v8585
    %v9284 = vunpack.c.h.b16 %v8585
    %v9285 = vunpack.c.l.b16 %v8586
    %v9286 = vunpack.c.h.b16 %v8586
    %v9287 = vunpack.c.l.b16 %v8587
    %v9288 = vunpack.c.h.b16 %v8587
    %v9289 = vunpack.c.l.b16 %v8588
    %v9290 = vunpack.c.h.b16 %v8588
    %v9291 = vunpack.c.l.b16 %v8589
    %v9292 = vunpack.c.h.b16 %v8589
    %v9293 = vunpack.c.l.b16 %v8590
    %v9294 = vunpack.c.h.b16 %v8590
    %v9295 = vunpack.c.l.b16 %v8591
    %v9296 = vunpack.c.h.b16 %v8591
    %v9297 = vunpack.c.l.b16 %v8592
    %v9298 = vunpack.c.h.b16 %v8592
    %v9299 = vunpack.c.l.b16 %v8593
    %v9300 = vunpack.c.h.b16 %v8593
    %v9301 = vunpack.c.l.b16 %v8594
    %v9302 = vunpack.c.h.b16 %v8594
    %v9303 = vunpack.c.l.b16 %v8595
    %v9304 = vunpack.c.h.b16 %v8595
    %v9305 = vunpack.c.l.b16 %v8596
    %v9306 = vunpack.c.h.b16 %v8596
    %v9307 = vunpack.c.l.b16 %v8597
    %v9308 = vunpack.c.h.b16 %v8597
    %v9309 = vunpack.c.l.b16 %v8598
    %v9310 = vunpack.c.h.b16 %v8598
    %v9311 = vunpack.c.l.b16 %v8599
    %v9312 = vunpack.c.h.b16 %v8599
    %v9313 = vunpack.c.l.b16 %v8600
    %v9314 = vunpack.c.h.b16 %v8600
    %v9315 = vunpack.c.l.b16 %v8601
    %v9316 = vunpack.c.h.b16 %v8601
    %v9317 = vunpack.c.l.b16 %v8602
    %v9318 = vunpack.c.h.b16 %v8602
    %v9319 = vunpack.c.l.b16 %v8603
    %v9320 = vunpack.c.h.b16 %v8603
    %v9321 = vunpack.c.l.b16 %v8604
    %v9322 = vunpack.c.h.b16 %v8604
    %v9323 = vunpack.c.l.b16 %v8605
    %v9324 = vunpack.c.h.b16 %v8605
    %v9325 = vunpack.c.l.b16 %v8606
    %v9326 = vunpack.c.h.b16 %v8606
    %v9327 = vunpack.c.l.b16 %v8607
    %v9328 = vunpack.c.h.b16 %v8607
    %v9329 = vunpack.c.l.b16 %v8608
    %v9330 = vunpack.c.h.b16 %v8608
    %v9331 = vunpack.c.l.b16 %v8609
    %v9332 = vunpack.c.h.b16 %v8609
    %v9333 = vunpack.c.l.b16 %v8610
    %v9334 = vunpack.c.h.b16 %v8610
    %v9335 = vunpack.c.l.b16 %v8611
    %v9336 = vunpack.c.h.b16 %v8611
    %v9337 = vunpack.c.l.b16 %v8612
    %v9338 = vunpack.c.h.b16 %v8612
    %v9339 = vunpack.c.l.b16 %v8613
    %v9340 = vunpack.c.h.b16 %v8613
    %v9341 = vunpack.c.l.b16 %v8614
    %v9342 = vunpack.c.h.b16 %v8614
    %v9343 = vunpack.c.l.b16 %v8615
    %v9344 = vunpack.c.h.b16 %v8615
    %v9345 = vunpack.c.l.b16 %v8616
    %v9346 = vunpack.c.h.b16 %v8616
    %v9347 = vunpack.c.l.b16 %v8617
    %v9348 = vunpack.c.h.b16 %v8617
    %v9349 = vunpack.c.l.b16 %v8618
    %v9350 = vunpack.c.h.b16 %v8618
    %v9351 = vunpack.c.l.b16 %v8619
    %v9352 = vunpack.c.h.b16 %v8619
    %v9353 = vunpack.c.l.b16 %v8620
    %v9354 = vunpack.c.h.b16 %v8620
    %v9355 = vunpack.c.l.b16 %v8621
    %v9356 = vunpack.c.h.b16 %v8621
    %v9357 = vunpack.c.l.b16 %v8622
    %v9358 = vunpack.c.h.b16 %v8622
    %v9359 = vunpack.c.l.b16 %v8623
    %v9360 = vunpack.c.h.b16 %v8623
    %v9361 = vunpack.c.l.b16 %v8624
    %v9362 = vunpack.c.h.b16 %v8624
    %v9363 = vunpack.c.l.b16 %v8625
    %v9364 = vunpack.c.h.b16 %v8625
    %v9365 = vunpack.c.l.b16 %v8626
    %v9366 = vunpack.c.h.b16 %v8626
    %v9367 = vunpack.c.l.b16 %v8627
    %v9368 = vunpack.c.h.b16 %v8627
    %v9369 = vunpack.c.l.b16 %v8628
    %v9370 = vunpack.c.h.b16 %v8628
    %v9371 = vunpack.c.l.b16 %v8629
    %v9372 = vunpack.c.h.b16 %v8629
    %v9373 = vunpack.c.l.b16 %v8630
    %v9374 = vunpack.c.h.b16 %v8630
    %v9375 = vunpack.c.l.b16 %v8631
    %v9376 = vunpack.c.h.b16 %v8631
    %v9377 = vunpack.c.l.b16 %v8632
    %v9378 = vunpack.c.h.b16 %v8632
    %v9379 = vunpack.c.l.b16 %v8633
    %v9380 = vunpack.c.h.b16 %v8633
    %v9381 = vunpack.c.l.b16 %v8634
    %v9382 = vunpack.c.h.b16 %v8634
    %v9383 = vunpack.c.l.b16 %v8635
    %v9384 = vunpack.c.h.b16 %v8635
    %v9385 = vunpack.c.l.b16 %v8636
    %v9386 = vunpack.c.h.b16 %v8636
    %v9387 = vunpack.c.l.b16 %v8637
    %v9388 = vunpack.c.h.b16 %v8637
    %v9389 = vunpack.c.l.b16 %v8638
    %v9390 = vunpack.c.h.b16 %v8638
    %v9391 = vunpack.c.l.b16 %v8639
    %v9392 = vunpack.c.h.b16 %v8639
    %v9393 = vunpack.c.l.b16 %v8640
    %v9394 = vunpack.c.h.b16 %v8640
    %v9395 = vunpack.c.l.b16 %v8641
    %v9396 = vunpack.c.h.b16 %v8641
    %v9397 = vunpack.c.l.b16 %v8642
    %v9398 = vunpack.c.h.b16 %v8642
    %v9399 = vunpack.c.l.b16 %v8643
    %v9400 = vunpack.c.h.b16 %v8643
    %v9401 = vunpack.c.l.b16 %v8644
    %v9402 = vunpack.c.h.b16 %v8644
    %v9403 = vunpack.c.l.b16 %v8645
    %v9404 = vunpack.c.h.b16 %v8645
    %v9405 = vunpack.c.l.b16 %v8646
    %v9406 = vunpack.c.h.b16 %v8646
    %v9407 = vunpack.c.l.b16 %v8647
    %v9408 = vunpack.c.h.b16 %v8647
    %v9409 = vunpack.c.l.b16 %v8648
    %v9410 = vunpack.c.h.b16 %v8648
    %v9411 = vunpack.c.l.b16 %v8649
    %v9412 = vunpack.c.h.b16 %v8649
    %v9413 = vunpack.c.l.b16 %v8650
    %v9414 = vunpack.c.h.b16 %v8650
    %v9415 = vunpack.c.l.b16 %v8651
    %v9416 = vunpack.c.h.b16 %v8651
    %v9417 = vunpack.c.l.b16 %v8652
    %v9418 = vunpack.c.h.b16 %v8652
    %v9419 = vunpack.c.l.b16 %v8653
    %v9420 = vunpack.c.h.b16 %v8653
    %v9421 = vunpack.c.l.b16 %v8654
    %v9422 = vunpack.c.h.b16 %v8654
    %v9423 = vpack.c.b16 %v8919, %v8911
    %v9424 = vpack.c.b16 %v8920, %v8912
    %v9425 = vpack.c.b16 %v8921, %v8913
    %v9426 = vpack.c.b16 %v8922, %v8914
    %v9427 = vpack.c.b16 %v8923, %v8915
    %v9428 = vpack.c.b16 %v8924, %v8916
    %v9429 = vpack.c.b16 %v8925, %v8917
    %v9430 = vpack.c.b16 %v8926, %v8918
    %v9431 = vpack.c.b16 %v8935, %v8927
    %v9432 = vpack.c.b16 %v8936, %v8928
    %v9433 = vpack.c.b16 %v8937, %v8929
    %v9434 = vpack.c.b16 %v8938, %v8930
    %v9435 = vpack.c.b16 %v8939, %v8931
    %v9436 = vpack.c.b16 %v8940, %v8932
    %v9437 = vpack.c.b16 %v8941, %v8933
    %v9438 = vpack.c.b16 %v8942, %v8934
    %v9439 = vpack.c.b16 %v8951, %v8943
    %v9440 = vpack.c.b16 %v8952, %v8944
    %v9441 = vpack.c.b16 %v8953, %v8945
    %v9442 = vpack.c.b16 %v8954, %v8946
    %v9443 = vpack.c.b16 %v8955, %v8947
    %v9444 = vpack.c.b16 %v8956, %v8948
    %v9445 = vpack.c.b16 %v8957, %v8949
    %v9446 = vpack.c.b16 %v8958, %v8950
    %v9447 = vpack.c.b16 %v8967, %v8959
    %v9448 = vpack.c.b16 %v8968, %v8960
    %v9449 = vpack.c.b16 %v8969, %v8961
    %v9450 = vpack.c.b16 %v8970, %v8962
    %v9451 = vpack.c.b16 %v8971, %v8963
    %v9452 = vpack.c.b16 %v8972, %v8964
    %v9453 = vpack.c.b16 %v8973, %v8965
    %v9454 = vpack.c.b16 %v8974, %v8966
    %v9455 = vpack.c.b16 %v8983, %v8975
    %v9456 = vpack.c.b16 %v8984, %v8976
    %v9457 = vpack.c.b16 %v8985, %v8977
    %v9458 = vpack.c.b16 %v8986, %v8978
    %v9459 = vpack.c.b16 %v8987, %v8979
    %v9460 = vpack.c.b16 %v8988, %v8980
    %v9461 = vpack.c.b16 %v8989, %v8981
    %v9462 = vpack.c.b16 %v8990, %v8982
    %v9463 = vpack.c.b16 %v8999, %v8991
    %v9464 = vpack.c.b16 %v9000, %v8992
    %v9465 = vpack.c.b16 %v9001, %v8993
    %v9466 = vpack.c.b16 %v9002, %v8994
    %v9467 = vpack.c.b16 %v9003, %v8995
    %v9468 = vpack.c.b16 %v9004, %v8996
    %v9469 = vpack.c.b16 %v9005, %v8997
    %v9470 = vpack.c.b16 %v9006, %v8998
    %v9471 = vpack.c.b16 %v9015, %v9007
    %v9472 = vpack.c.b16 %v9016, %v9008
    %v9473 = vpack.c.b16 %v9017, %v9009
    %v9474 = vpack.c.b16 %v9018, %v9010
    %v9475 = vpack.c.b16 %v9019, %v9011
    %v9476 = vpack.c.b16 %v9020, %v9012
    %v9477 = vpack.c.b16 %v9021, %v9013
    %v9478 = vpack.c.b16 %v9022, %v9014
    %v9479 = vpack.c.b16 %v9031, %v9023
    %v9480 = vpack.c.b16 %v9032, %v9024
    %v9481 = vpack.c.b16 %v9033, %v9025
    %v9482 = vpack.c.b16 %v9034, %v9026
    %v9483 = vpack.c.b16 %v9035, %v9027
    %v9484 = vpack.c.b16 %v9036, %v9028
    %v9485 = vpack.c.b16 %v9037, %v9029
    %v9486 = vpack.c.b16 %v9038, %v9030
    %v9487 = vpack.c.b16 %v9047, %v9039
    %v9488 = vpack.c.b16 %v9048, %v9040
    %v9489 = vpack.c.b16 %v9049, %v9041
    %v9490 = vpack.c.b16 %v9050, %v9042
    %v9491 = vpack.c.b16 %v9051, %v9043
    %v9492 = vpack.c.b16 %v9052, %v9044
    %v9493 = vpack.c.b16 %v9053, %v9045
    %v9494 = vpack.c.b16 %v9054, %v9046
    %v9495 = vpack.c.b16 %v9063, %v9055
    %v9496 = vpack.c.b16 %v9064, %v9056
    %v9497 = vpack.c.b16 %v9065, %v9057
    %v9498 = vpack.c.b16 %v9066, %v9058
    %v9499 = vpack.c.b16 %v9067, %v9059
    %v9500 = vpack.c.b16 %v9068, %v9060
    %v9501 = vpack.c.b16 %v9069, %v9061
    %v9502 = vpack.c.b16 %v9070, %v9062
    %v9503 = vpack.c.b16 %v9079, %v9071
    %v9504 = vpack.c.b16 %v9080, %v9072
    %v9505 = vpack.c.b16 %v9081, %v9073
    %v9506 = vpack.c.b16 %v9082, %v9074
    %v9507 = vpack.c.b16 %v9083, %v9075
    %v9508 = vpack.c.b16 %v9084, %v9076
    %v9509 = vpack.c.b16 %v9085, %v9077
    %v9510 = vpack.c.b16 %v9086, %v9078
    %v9511 = vpack.c.b16 %v9095, %v9087
    %v9512 = vpack.c.b16 %v9096, %v9088
    %v9513 = vpack.c.b16 %v9097, %v9089
    %v9514 = vpack.c.b16 %v9098, %v9090
    %v9515 = vpack.c.b16 %v9099, %v9091
    %v9516 = vpack.c.b16 %v9100, %v9092
    %v9517 = vpack.c.b16 %v9101, %v9093
    %v9518 = vpack.c.b16 %v9102, %v9094
    %v9519 = vpack.c.b16 %v9111, %v9103
    %v9520 = vpack.c.b16 %v9112, %v9104
    %v9521 = vpack.c.b16 %v9113, %v9105
    %v9522 = vpack.c.b16 %v9114, %v9106
    %v9523 = vpack.c.b16 %v9115, %v9107
    %v9524 = vpack.c.b16 %v9116, %v9108
    %v9525 = vpack.c.b16 %v9117, %v9109
    %v9526 = vpack.c.b16 %v9118, %v9110
    %v9527 = vpack.c.b16 %v9127, %v9119
    %v9528 = vpack.c.b16 %v9128, %v9120
    %v9529 = vpack.c.b16 %v9129, %v9121
    %v9530 = vpack.c.b16 %v9130, %v9122
    %v9531 = vpack.c.b16 %v9131, %v9123
    %v9532 = vpack.c.b16 %v9132, %v9124
    %v9533 = vpack.c.b16 %v9133, %v9125
    %v9534 = vpack.c.b16 %v9134, %v9126
    %v9535 = vpack.c.b16 %v9143, %v9135
    %v9536 = vpack.c.b16 %v9144, %v9136
    %v9537 = vpack.c.b16 %v9145, %v9137
    %v9538 = vpack.c.b16 %v9146, %v9138
    %v9539 = vpack.c.b16 %v9147, %v9139
    %v9540 = vpack.c.b16 %v9148, %v9140
    %v9541 = vpack.c.b16 %v9149, %v9141
    %v9542 = vpack.c.b16 %v9150, %v9142
    %v9543 = vpack.c.b16 %v9159, %v9151
    %v9544 = vpack.c.b16 %v9160, %v9152
    %v9545 = vpack.c.b16 %v9161, %v9153
    %v9546 = vpack.c.b16 %v9162, %v9154
    %v9547 = vpack.c.b16 %v9163, %v9155
    %v9548 = vpack.c.b16 %v9164, %v9156
    %v9549 = vpack.c.b16 %v9165, %v9157
    %v9550 = vpack.c.b16 %v9166, %v9158
    %v9551 = vpack.c.b16 %v9175, %v9167
    %v9552 = vpack.c.b16 %v9176, %v9168
    %v9553 = vpack.c.b16 %v9177, %v9169
    %v9554 = vpack.c.b16 %v9178, %v9170
    %v9555 = vpack.c.b16 %v9179, %v9171
    %v9556 = vpack.c.b16 %v9180, %v9172
    %v9557 = vpack.c.b16 %v9181, %v9173
    %v9558 = vpack.c.b16 %v9182, %v9174
    %v9559 = vpack.c.b16 %v9191, %v9183
    %v9560 = vpack.c.b16 %v9192, %v9184
    %v9561 = vpack.c.b16 %v9193, %v9185
    %v9562 = vpack.c.b16 %v9194, %v9186
    %v9563 = vpack.c.b16 %v9195, %v9187
    %v9564 = vpack.c.b16 %v9196, %v9188
    %v9565 = vpack.c.b16 %v9197, %v9189
    %v9566 = vpack.c.b16 %v9198, %v9190
    %v9567 = vpack.c.b16 %v9207, %v9199
    %v9568 = vpack.c.b16 %v9208, %v9200
    %v9569 = vpack.c.b16 %v9209, %v9201
    %v9570 = vpack.c.b16 %v9210, %v9202
    %v9571 = vpack.c.b16 %v9211, %v9203
    %v9572 = vpack.c.b16 %v9212, %v9204
    %v9573 = vpack.c.b16 %v9213, %v9205
    %v9574 = vpack.c.b16 %v9214, %v9206
    %v9575 = vpack.c.b16 %v9223, %v9215
    %v9576 = vpack.c.b16 %v9224, %v9216
    %v9577 = vpack.c.b16 %v9225, %v9217
    %v9578 = vpack.c.b16 %v9226, %v9218
    %v9579 = vpack.c.b16 %v9227, %v9219
    %v9580 = vpack.c.b16 %v9228, %v9220
    %v9581 = vpack.c.b16 %v9229, %v9221
    %v9582 = vpack.c.b16 %v9230, %v9222
    %v9583 = vpack.c.b16 %v9239, %v9231
    %v9584 = vpack.c.b16 %v9240, %v9232
    %v9585 = vpack.c.b16 %v9241, %v9233
    %v9586 = vpack.c.b16 %v9242, %v9234
    %v9587 = vpack.c.b16 %v9243, %v9235
    %v9588 = vpack.c.b16 %v9244, %v9236
    %v9589 = vpack.c.b16 %v9245, %v9237
    %v9590 = vpack.c.b16 %v9246, %v9238
    %v9591 = vpack.c.b16 %v9255, %v9247
    %v9592 = vpack.c.b16 %v9256, %v9248
    %v9593 = vpack.c.b16 %v9257, %v9249
    %v9594 = vpack.c.b16 %v9258, %v9250
    %v9595 = vpack.c.b16 %v9259, %v9251
    %v9596 = vpack.c.b16 %v9260, %v9252
    %v9597 = vpack.c.b16 %v9261, %v9253
    %v9598 = vpack.c.b16 %v9262, %v9254
    %v9599 = vpack.c.b16 %v9271, %v9263
    %v9600 = vpack.c.b16 %v9272, %v9264
    %v9601 = vpack.c.b16 %v9273, %v9265
    %v9602 = vpack.c.b16 %v9274, %v9266
    %v9603 = vpack.c.b16 %v9275, %v9267
    %v9604 = vpack.c.b16 %v9276, %v9268
    %v9605 = vpack.c.b16 %v9277, %v9269
    %v9606 = vpack.c.b16 %v9278, %v9270
    %v9607 = vpack.c.b16 %v9287, %v9279
    %v9608 = vpack.c.b16 %v9288, %v9280
    %v9609 = vpack.c.b16 %v9289, %v9281
    %v9610 = vpack.c.b16 %v9290, %v9282
    %v9611 = vpack.c.b16 %v9291, %v9283
    %v9612 = vpack.c.b16 %v9292, %v9284
    %v9613 = vpack.c.b16 %v9293, %v9285
    %v9614 = vpack.c.b16 %v9294, %v9286
    %v9615 = vpack.c.b16 %v9303, %v9295
    %v9616 = vpack.c.b16 %v9304, %v9296
    %v9617 = vpack.c.b16 %v9305, %v9297
    %v9618 = vpack.c.b16 %v9306, %v9298
    %v9619 = vpack.c.b16 %v9307, %v9299
    %v9620 = vpack.c.b16 %v9308, %v9300
    %v9621 = vpack.c.b16 %v9309, %v9301
    %v9622 = vpack.c.b16 %v9310, %v9302
    %v9623 = vpack.c.b16 %v9319, %v9311
    %v9624 = vpack.c.b16 %v9320, %v9312
    %v9625 = vpack.c.b16 %v9321, %v9313
    %v9626 = vpack.c.b16 %v9322, %v9314
    %v9627 = vpack.c.b16 %v9323, %v9315
    %v9628 = vpack.c.b16 %v9324, %v9316
    %v9629 = vpack.c.b16 %v9325, %v9317
    %v9630 = vpack.c.b16 %v9326, %v9318
    %v9631 = vpack.c.b16 %v9335, %v9327
    %v9632 = vpack.c.b16 %v9336, %v9328
    %v9633 = vpack.c.b16 %v9337, %v9329
    %v9634 = vpack.c.b16 %v9338, %v9330
    %v9635 = vpack.c.b16 %v9339, %v9331
    %v9636 = vpack.c.b16 %v9340, %v9332
    %v9637 = vpack.c.b16 %v9341, %v9333
    %v9638 = vpack.c.b16 %v9342, %v9334
    %v9639 = vpack.c.b16 %v9351, %v9343
    %v9640 = vpack.c.b16 %v9352, %v9344
    %v9641 = vpack.c.b16 %v9353, %v9345
    %v9642 = vpack.c.b16 %v9354, %v9346
    %v9643 = vpack.c.b16 %v9355, %v9347
    %v9644 = vpack.c.b16 %v9356, %v9348
    %v9645 = vpack.c.b16 %v9357, %v9349
    %v9646 = vpack.c.b16 %v9358, %v9350
    %v9647 = vpack.c.b16 %v9367, %v9359
    %v9648 = vpack.c.b16 %v9368, %v9360
    %v9649 = vpack.c.b16 %v9369, %v9361
    %v9650 = vpack.c.b16 %v9370, %v9362
    %v9651 = vpack.c.b16 %v9371, %v9363
    %v9652 = vpack.c.b16 %v9372, %v9364
    %v9653 = vpack.c.b16 %v9373, %v9365
    %v9654 = vpack.c.b16 %v9374, %v9366
    %v9655 = vpack.c.b16 %v9383, %v9375
    %v9656 = vpack.c.b16 %v9384, %v9376
    %v9657 = vpack.c.b16 %v9385, %v9377
    %v9658 = vpack.c.b16 %v9386, %v9378
    %v9659 = vpack.c.b16 %v9387, %v9379
    %v9660 = vpack.c.b16 %v9388, %v9380
    %v9661 = vpack.c.b16 %v9389, %v9381
    %v9662 = vpack.c.b16 %v9390, %v9382
    %v9663 = vpack.c.b16 %v9399, %v9391
    %v9664 = vpack.c.b16 %v9400, %v9392
    %v9665 = vpack.c.b16 %v9401, %v9393
    %v9666 = vpack.c.b16 %v9402, %v9394
    %v9667 = vpack.c.b16 %v9403, %v9395
    %v9668 = vpack.c.b16 %v9404, %v9396
    %v9669 = vpack.c.b16 %v9405, %v9397
    %v9670 = vpack.c.b16 %v9406, %v9398
    %v9671 = vpack.c.b16 %v9415, %v9407
    %v9672 = vpack.c.b16 %v9416, %v9408
    %v9673 = vpack.c.b16 %v9417, %v9409
    %v9674 = vpack.c.b16 %v9418, %v9410
    %v9675 = vpack.c.b16 %v9419, %v9411
    %v9676 = vpack.c.b16 %v9420, %v9412
    %v9677 = vpack.c.b16 %v9421, %v9413
    %v9678 = vpack.c.b16 %v9422, %v9414
    %9935 = vmatpush.bf16.msra.mxu0 %v9479
    %9936 = vmatpush.bf16.msra.mxu0 %v9471
    %9937 = vmatpush.bf16.msra.mxu0 %v9463
    %9938 = vmatpush.bf16.msra.mxu0 %v9455
    %9939 = vmatpush.bf16.msra.mxu0 %v9447
    %9940 = vmatpush.bf16.msra.mxu0 %v9439
    %9941 = vmatpush.bf16.msra.mxu0 %v9431
    %9942 = vmatpush.bf16.msra.mxu0 %v9423
    %9943 = vmatmul.bf16.gmra.mxu0 %v1871
    %v9944 = vpop.f32.mrf.mxu0
    %v9945 = vadd.f32 0.0, %v9944
    %v9946 = vpop.f32.mrf.mxu0
    %9947 = vdwg.mxu0
    %9948 = vmatpush.bf16.msra.mxu0 %v9543
    %9949 = vmatpush.bf16.msra.mxu0 %v9535
    %9950 = vmatpush.bf16.msra.mxu0 %v9527
    %9951 = vmatpush.bf16.msra.mxu0 %v9519
    %9952 = vmatpush.bf16.msra.mxu0 %v9511
    %9953 = vmatpush.bf16.msra.mxu0 %v9503
    %9954 = vmatpush.bf16.msra.mxu0 %v9495
    %9955 = vmatpush.bf16.msra.mxu0 %v9487
    %9956 = vmatmul.bf16.gmra.mxu0 %v1872
    %v9957 = vpop.f32.mrf.mxu0
    %v9958 = vadd.f32 %v9945, %v9957
    %v9959 = vpop.f32.mrf.mxu0
    %9960 = vdwg.mxu0
    %9961 = vmatpush.bf16.msra.mxu0 %v9607
    %9962 = vmatpush.bf16.msra.mxu0 %v9599
    %9963 = vmatpush.bf16.msra.mxu0 %v9591
    %9964 = vmatpush.bf16.msra.mxu0 %v9583
    %9965 = vmatpush.bf16.msra.mxu0 %v9575
    %9966 = vmatpush.bf16.msra.mxu0 %v9567
    %9967 = vmatpush.bf16.msra.mxu0 %v9559
    %9968 = vmatpush.bf16.msra.mxu0 %v9551
    %9969 = vmatmul.bf16.gmra.mxu0 %v1873
    %v9970 = vpop.f32.mrf.mxu0
    %v9971 = vadd.f32 %v9958, %v9970
    %v9972 = vpop.f32.mrf.mxu0
    %9973 = vdwg.mxu0
    %9974 = vmatpush.bf16.msra.mxu0 %v9671
    %9975 = vmatpush.bf16.msra.mxu0 %v9663
    %9976 = vmatpush.bf16.msra.mxu0 %v9655
    %9977 = vmatpush.bf16.msra.mxu0 %v9647
    %9978 = vmatpush.bf16.msra.mxu0 %v9639
    %9979 = vmatpush.bf16.msra.mxu0 %v9631
    %9980 = vmatpush.bf16.msra.mxu0 %v9623
    %9981 = vmatpush.bf16.msra.mxu0 %v9615
    %9982 = vmatmul.bf16.gmra.mxu0 %v1874
    %v9983 = vpop.f32.mrf.mxu0
    %v9984 = vadd.f32 %v9971, %v9983
    %v9985 = vpop.f32.mrf.mxu0
    %9986 = vdwg.mxu0
    %9987 = vmatpush.bf16.msra.mxu0 %v9480
    %9988 = vmatpush.bf16.msra.mxu0 %v9472
    %9989 = vmatpush.bf16.msra.mxu0 %v9464
    %9990 = vmatpush.bf16.msra.mxu0 %v9456
    %9991 = vmatpush.bf16.msra.mxu0 %v9448
    %9992 = vmatpush.bf16.msra.mxu0 %v9440
    %9993 = vmatpush.bf16.msra.mxu0 %v9432
    %9994 = vmatpush.bf16.msra.mxu0 %v9424
    %9995 = vmatmul.bf16.gmra.mxu0 %v1871
    %v9996 = vpop.f32.mrf.mxu0
    %v9997 = vadd.f32 0.0, %v9996
    %v9998 = vpop.f32.mrf.mxu0
    %9999 = vdwg.mxu0
    %10000 = vmatpush.bf16.msra.mxu0 %v9544
    %10001 = vmatpush.bf16.msra.mxu0 %v9536
    %10002 = vmatpush.bf16.msra.mxu0 %v9528
    %10003 = vmatpush.bf16.msra.mxu0 %v9520
    %10004 = vmatpush.bf16.msra.mxu0 %v9512
    %10005 = vmatpush.bf16.msra.mxu0 %v9504
    %10006 = vmatpush.bf16.msra.mxu0 %v9496
    %10007 = vmatpush.bf16.msra.mxu0 %v9488
    %10008 = vmatmul.bf16.gmra.mxu0 %v1872
    %v10009 = vpop.f32.mrf.mxu0
    %v10010 = vadd.f32 %v9997, %v10009
    %v10011 = vpop.f32.mrf.mxu0
    %10012 = vdwg.mxu0
    %10013 = vmatpush.bf16.msra.mxu0 %v9608
    %10014 = vmatpush.bf16.msra.mxu0 %v9600
    %10015 = vmatpush.bf16.msra.mxu0 %v9592
    %10016 = vmatpush.bf16.msra.mxu0 %v9584
    %10017 = vmatpush.bf16.msra.mxu0 %v9576
    %10018 = vmatpush.bf16.msra.mxu0 %v9568
    %10019 = vmatpush.bf16.msra.mxu0 %v9560
    %10020 = vmatpush.bf16.msra.mxu0 %v9552
    %10021 = vmatmul.bf16.gmra.mxu0 %v1873
    %v10022 = vpop.f32.mrf.mxu0
    %v10023 = vadd.f32 %v10010, %v10022
    %v10024 = vpop.f32.mrf.mxu0
    %10025 = vdwg.mxu0
    %10026 = vmatpush.bf16.msra.mxu0 %v9672
    %10027 = vmatpush.bf16.msra.mxu0 %v9664
    %10028 = vmatpush.bf16.msra.mxu0 %v9656
    %10029 = vmatpush.bf16.msra.mxu0 %v9648
    %10030 = vmatpush.bf16.msra.mxu0 %v9640
    %10031 = vmatpush.bf16.msra.mxu0 %v9632
    %10032 = vmatpush.bf16.msra.mxu0 %v9624
    %10033 = vmatpush.bf16.msra.mxu0 %v9616
    %10034 = vmatmul.bf16.gmra.mxu0 %v1874
    %v10035 = vpop.f32.mrf.mxu0
    %v10036 = vadd.f32 %v10023, %v10035
    %v10037 = vpop.f32.mrf.mxu0
    %10038 = vdwg.mxu0
    %10039 = vmatpush.bf16.msra.mxu0 %v9481
    %10040 = vmatpush.bf16.msra.mxu0 %v9473
    %10041 = vmatpush.bf16.msra.mxu0 %v9465
    %10042 = vmatpush.bf16.msra.mxu0 %v9457
    %10043 = vmatpush.bf16.msra.mxu0 %v9449
    %10044 = vmatpush.bf16.msra.mxu0 %v9441
    %10045 = vmatpush.bf16.msra.mxu0 %v9433
    %10046 = vmatpush.bf16.msra.mxu0 %v9425
    %10047 = vmatmul.bf16.gmra.mxu0 %v1871
    %v10048 = vpop.f32.mrf.mxu0
    %v10049 = vadd.f32 0.0, %v10048
    %v10050 = vpop.f32.mrf.mxu0
    %10051 = vdwg.mxu0
    %10052 = vmatpush.bf16.msra.mxu0 %v9545
    %10053 = vmatpush.bf16.msra.mxu0 %v9537
    %10054 = vmatpush.bf16.msra.mxu0 %v9529
    %10055 = vmatpush.bf16.msra.mxu0 %v9521
    %10056 = vmatpush.bf16.msra.mxu0 %v9513
    %10057 = vmatpush.bf16.msra.mxu0 %v9505
    %10058 = vmatpush.bf16.msra.mxu0 %v9497
    %10059 = vmatpush.bf16.msra.mxu0 %v9489
    %10060 = vmatmul.bf16.gmra.mxu0 %v1872
    %v10061 = vpop.f32.mrf.mxu0
    %v10062 = vadd.f32 %v10049, %v10061
    %v10063 = vpop.f32.mrf.mxu0
    %10064 = vdwg.mxu0
    %10065 = vmatpush.bf16.msra.mxu0 %v9609
    %10066 = vmatpush.bf16.msra.mxu0 %v9601
    %10067 = vmatpush.bf16.msra.mxu0 %v9593
    %10068 = vmatpush.bf16.msra.mxu0 %v9585
    %10069 = vmatpush.bf16.msra.mxu0 %v9577
    %10070 = vmatpush.bf16.msra.mxu0 %v9569
    %10071 = vmatpush.bf16.msra.mxu0 %v9561
    %10072 = vmatpush.bf16.msra.mxu0 %v9553
    %10073 = vmatmul.bf16.gmra.mxu0 %v1873
    %v10074 = vpop.f32.mrf.mxu0
    %v10075 = vadd.f32 %v10062, %v10074
    %v10076 = vpop.f32.mrf.mxu0
    %10077 = vdwg.mxu0
    %10078 = vmatpush.bf16.msra.mxu0 %v9673
    %10079 = vmatpush.bf16.msra.mxu0 %v9665
    %10080 = vmatpush.bf16.msra.mxu0 %v9657
    %10081 = vmatpush.bf16.msra.mxu0 %v9649
    %10082 = vmatpush.bf16.msra.mxu0 %v9641
    %10083 = vmatpush.bf16.msra.mxu0 %v9633
    %10084 = vmatpush.bf16.msra.mxu0 %v9625
    %10085 = vmatpush.bf16.msra.mxu0 %v9617
    %10086 = vmatmul.bf16.gmra.mxu0 %v1874
    %v10087 = vpop.f32.mrf.mxu0
    %v10088 = vadd.f32 %v10075, %v10087
    %v10089 = vpop.f32.mrf.mxu0
    %10090 = vdwg.mxu0
    %10091 = vmatpush.bf16.msra.mxu0 %v9482
    %10092 = vmatpush.bf16.msra.mxu0 %v9474
    %10093 = vmatpush.bf16.msra.mxu0 %v9466
    %10094 = vmatpush.bf16.msra.mxu0 %v9458
    %10095 = vmatpush.bf16.msra.mxu0 %v9450
    %10096 = vmatpush.bf16.msra.mxu0 %v9442
    %10097 = vmatpush.bf16.msra.mxu0 %v9434
    %10098 = vmatpush.bf16.msra.mxu0 %v9426
    %10099 = vmatmul.bf16.gmra.mxu0 %v1871
    %v10100 = vpop.f32.mrf.mxu0
    %v10101 = vadd.f32 0.0, %v10100
    %v10102 = vpop.f32.mrf.mxu0
    %10103 = vdwg.mxu0
    %10104 = vmatpush.bf16.msra.mxu0 %v9546
    %10105 = vmatpush.bf16.msra.mxu0 %v9538
    %10106 = vmatpush.bf16.msra.mxu0 %v9530
    %10107 = vmatpush.bf16.msra.mxu0 %v9522
    %10108 = vmatpush.bf16.msra.mxu0 %v9514
    %10109 = vmatpush.bf16.msra.mxu0 %v9506
    %10110 = vmatpush.bf16.msra.mxu0 %v9498
    %10111 = vmatpush.bf16.msra.mxu0 %v9490
    %10112 = vmatmul.bf16.gmra.mxu0 %v1872
    %v10113 = vpop.f32.mrf.mxu0
    %v10114 = vadd.f32 %v10101, %v10113
    %v10115 = vpop.f32.mrf.mxu0
    %10116 = vdwg.mxu0
    %10117 = vmatpush.bf16.msra.mxu0 %v9610
    %10118 = vmatpush.bf16.msra.mxu0 %v9602
    %10119 = vmatpush.bf16.msra.mxu0 %v9594
    %10120 = vmatpush.bf16.msra.mxu0 %v9586
    %10121 = vmatpush.bf16.msra.mxu0 %v9578
    %10122 = vmatpush.bf16.msra.mxu0 %v9570
    %10123 = vmatpush.bf16.msra.mxu0 %v9562
    %10124 = vmatpush.bf16.msra.mxu0 %v9554
    %10125 = vmatmul.bf16.gmra.mxu0 %v1873
    %v10126 = vpop.f32.mrf.mxu0
    %v10127 = vadd.f32 %v10114, %v10126
    %v10128 = vpop.f32.mrf.mxu0
    %10129 = vdwg.mxu0
    %10130 = vmatpush.bf16.msra.mxu0 %v9674
    %10131 = vmatpush.bf16.msra.mxu0 %v9666
    %10132 = vmatpush.bf16.msra.mxu0 %v9658
    %10133 = vmatpush.bf16.msra.mxu0 %v9650
    %10134 = vmatpush.bf16.msra.mxu0 %v9642
    %10135 = vmatpush.bf16.msra.mxu0 %v9634
    %10136 = vmatpush.bf16.msra.mxu0 %v9626
    %10137 = vmatpush.bf16.msra.mxu0 %v9618
    %10138 = vmatmul.bf16.gmra.mxu0 %v1874
    %v10139 = vpop.f32.mrf.mxu0
    %v10140 = vadd.f32 %v10127, %v10139
    %v10141 = vpop.f32.mrf.mxu0
    %10142 = vdwg.mxu0
    %10143 = vmatpush.bf16.msra.mxu0 %v9483
    %10144 = vmatpush.bf16.msra.mxu0 %v9475
    %10145 = vmatpush.bf16.msra.mxu0 %v9467
    %10146 = vmatpush.bf16.msra.mxu0 %v9459
    %10147 = vmatpush.bf16.msra.mxu0 %v9451
    %10148 = vmatpush.bf16.msra.mxu0 %v9443
    %10149 = vmatpush.bf16.msra.mxu0 %v9435
    %10150 = vmatpush.bf16.msra.mxu0 %v9427
    %10151 = vmatmul.bf16.gmra.mxu0 %v1871
    %v10152 = vpop.f32.mrf.mxu0
    %v10153 = vadd.f32 0.0, %v10152
    %v10154 = vpop.f32.mrf.mxu0
    %10155 = vdwg.mxu0
    %10156 = vmatpush.bf16.msra.mxu0 %v9547
    %10157 = vmatpush.bf16.msra.mxu0 %v9539
    %10158 = vmatpush.bf16.msra.mxu0 %v9531
    %10159 = vmatpush.bf16.msra.mxu0 %v9523
    %10160 = vmatpush.bf16.msra.mxu0 %v9515
    %10161 = vmatpush.bf16.msra.mxu0 %v9507
    %10162 = vmatpush.bf16.msra.mxu0 %v9499
    %10163 = vmatpush.bf16.msra.mxu0 %v9491
    %10164 = vmatmul.bf16.gmra.mxu0 %v1872
    %v10165 = vpop.f32.mrf.mxu0
    %v10166 = vadd.f32 %v10153, %v10165
    %v10167 = vpop.f32.mrf.mxu0
    %10168 = vdwg.mxu0
    %10169 = vmatpush.bf16.msra.mxu0 %v9611
    %10170 = vmatpush.bf16.msra.mxu0 %v9603
    %10171 = vmatpush.bf16.msra.mxu0 %v9595
    %10172 = vmatpush.bf16.msra.mxu0 %v9587
    %10173 = vmatpush.bf16.msra.mxu0 %v9579
    %10174 = vmatpush.bf16.msra.mxu0 %v9571
    %10175 = vmatpush.bf16.msra.mxu0 %v9563
    %10176 = vmatpush.bf16.msra.mxu0 %v9555
    %10177 = vmatmul.bf16.gmra.mxu0 %v1873
    %v10178 = vpop.f32.mrf.mxu0
    %v10179 = vadd.f32 %v10166, %v10178
    %v10180 = vpop.f32.mrf.mxu0
    %10181 = vdwg.mxu0
    %10182 = vmatpush.bf16.msra.mxu0 %v9675
    %10183 = vmatpush.bf16.msra.mxu0 %v9667
    %10184 = vmatpush.bf16.msra.mxu0 %v9659
    %10185 = vmatpush.bf16.msra.mxu0 %v9651
    %10186 = vmatpush.bf16.msra.mxu0 %v9643
    %10187 = vmatpush.bf16.msra.mxu0 %v9635
    %10188 = vmatpush.bf16.msra.mxu0 %v9627
    %10189 = vmatpush.bf16.msra.mxu0 %v9619
    %10190 = vmatmul.bf16.gmra.mxu0 %v1874
    %v10191 = vpop.f32.mrf.mxu0
    %v10192 = vadd.f32 %v10179, %v10191
    %v10193 = vpop.f32.mrf.mxu0
    %10194 = vdwg.mxu0
    %10195 = vmatpush.bf16.msra.mxu0 %v9484
    %10196 = vmatpush.bf16.msra.mxu0 %v9476
    %10197 = vmatpush.bf16.msra.mxu0 %v9468
    %10198 = vmatpush.bf16.msra.mxu0 %v9460
    %10199 = vmatpush.bf16.msra.mxu0 %v9452
    %10200 = vmatpush.bf16.msra.mxu0 %v9444
    %10201 = vmatpush.bf16.msra.mxu0 %v9436
    %10202 = vmatpush.bf16.msra.mxu0 %v9428
    %10203 = vmatmul.bf16.gmra.mxu0 %v1871
    %v10204 = vpop.f32.mrf.mxu0
    %v10205 = vadd.f32 0.0, %v10204
    %v10206 = vpop.f32.mrf.mxu0
    %10207 = vdwg.mxu0
    %10208 = vmatpush.bf16.msra.mxu0 %v9548
    %10209 = vmatpush.bf16.msra.mxu0 %v9540
    %10210 = vmatpush.bf16.msra.mxu0 %v9532
    %10211 = vmatpush.bf16.msra.mxu0 %v9524
    %10212 = vmatpush.bf16.msra.mxu0 %v9516
    %10213 = vmatpush.bf16.msra.mxu0 %v9508
    %10214 = vmatpush.bf16.msra.mxu0 %v9500
    %10215 = vmatpush.bf16.msra.mxu0 %v9492
    %10216 = vmatmul.bf16.gmra.mxu0 %v1872
    %v10217 = vpop.f32.mrf.mxu0
    %v10218 = vadd.f32 %v10205, %v10217
    %v10219 = vpop.f32.mrf.mxu0
    %10220 = vdwg.mxu0
    %10221 = vmatpush.bf16.msra.mxu0 %v9612
    %10222 = vmatpush.bf16.msra.mxu0 %v9604
    %10223 = vmatpush.bf16.msra.mxu0 %v9596
    %10224 = vmatpush.bf16.msra.mxu0 %v9588
    %10225 = vmatpush.bf16.msra.mxu0 %v9580
    %10226 = vmatpush.bf16.msra.mxu0 %v9572
    %10227 = vmatpush.bf16.msra.mxu0 %v9564
    %10228 = vmatpush.bf16.msra.mxu0 %v9556
    %10229 = vmatmul.bf16.gmra.mxu0 %v1873
    %v10230 = vpop.f32.mrf.mxu0
    %v10231 = vadd.f32 %v10218, %v10230
    %v10232 = vpop.f32.mrf.mxu0
    %10233 = vdwg.mxu0
    %10234 = vmatpush.bf16.msra.mxu0 %v9676
    %10235 = vmatpush.bf16.msra.mxu0 %v9668
    %10236 = vmatpush.bf16.msra.mxu0 %v9660
    %10237 = vmatpush.bf16.msra.mxu0 %v9652
    %10238 = vmatpush.bf16.msra.mxu0 %v9644
    %10239 = vmatpush.bf16.msra.mxu0 %v9636
    %10240 = vmatpush.bf16.msra.mxu0 %v9628
    %10241 = vmatpush.bf16.msra.mxu0 %v9620
    %10242 = vmatmul.bf16.gmra.mxu0 %v1874
    %v10243 = vpop.f32.mrf.mxu0
    %v10244 = vadd.f32 %v10231, %v10243
    %v10245 = vpop.f32.mrf.mxu0
    %10246 = vdwg.mxu0
    %10247 = vmatpush.bf16.msra.mxu0 %v9485
    %10248 = vmatpush.bf16.msra.mxu0 %v9477
    %10249 = vmatpush.bf16.msra.mxu0 %v9469
    %10250 = vmatpush.bf16.msra.mxu0 %v9461
    %10251 = vmatpush.bf16.msra.mxu0 %v9453
    %10252 = vmatpush.bf16.msra.mxu0 %v9445
    %10253 = vmatpush.bf16.msra.mxu0 %v9437
    %10254 = vmatpush.bf16.msra.mxu0 %v9429
    %10255 = vmatmul.bf16.gmra.mxu0 %v1871
    %v10256 = vpop.f32.mrf.mxu0
    %v10257 = vadd.f32 0.0, %v10256
    %v10258 = vpop.f32.mrf.mxu0
    %10259 = vdwg.mxu0
    %10260 = vmatpush.bf16.msra.mxu0 %v9549
    %10261 = vmatpush.bf16.msra.mxu0 %v9541
    %10262 = vmatpush.bf16.msra.mxu0 %v9533
    %10263 = vmatpush.bf16.msra.mxu0 %v9525
    %10264 = vmatpush.bf16.msra.mxu0 %v9517
    %10265 = vmatpush.bf16.msra.mxu0 %v9509
    %10266 = vmatpush.bf16.msra.mxu0 %v9501
    %10267 = vmatpush.bf16.msra.mxu0 %v9493
    %10268 = vmatmul.bf16.gmra.mxu0 %v1872
    %v10269 = vpop.f32.mrf.mxu0
    %v10270 = vadd.f32 %v10257, %v10269
    %v10271 = vpop.f32.mrf.mxu0
    %10272 = vdwg.mxu0
    %10273 = vmatpush.bf16.msra.mxu0 %v9613
    %10274 = vmatpush.bf16.msra.mxu0 %v9605
    %10275 = vmatpush.bf16.msra.mxu0 %v9597
    %10276 = vmatpush.bf16.msra.mxu0 %v9589
    %10277 = vmatpush.bf16.msra.mxu0 %v9581
    %10278 = vmatpush.bf16.msra.mxu0 %v9573
    %10279 = vmatpush.bf16.msra.mxu0 %v9565
    %10280 = vmatpush.bf16.msra.mxu0 %v9557
    %10281 = vmatmul.bf16.gmra.mxu0 %v1873
    %v10282 = vpop.f32.mrf.mxu0
    %v10283 = vadd.f32 %v10270, %v10282
    %v10284 = vpop.f32.mrf.mxu0
    %10285 = vdwg.mxu0
    %10286 = vmatpush.bf16.msra.mxu0 %v9677
    %10287 = vmatpush.bf16.msra.mxu0 %v9669
    %10288 = vmatpush.bf16.msra.mxu0 %v9661
    %10289 = vmatpush.bf16.msra.mxu0 %v9653
    %10290 = vmatpush.bf16.msra.mxu0 %v9645
    %10291 = vmatpush.bf16.msra.mxu0 %v9637
    %10292 = vmatpush.bf16.msra.mxu0 %v9629
    %10293 = vmatpush.bf16.msra.mxu0 %v9621
    %10294 = vmatmul.bf16.gmra.mxu0 %v1874
    %v10295 = vpop.f32.mrf.mxu0
    %v10296 = vadd.f32 %v10283, %v10295
    %v10297 = vpop.f32.mrf.mxu0
    %10298 = vdwg.mxu0
    %10299 = vmatpush.bf16.msra.mxu0 %v9486
    %10300 = vmatpush.bf16.msra.mxu0 %v9478
    %10301 = vmatpush.bf16.msra.mxu0 %v9470
    %10302 = vmatpush.bf16.msra.mxu0 %v9462
    %10303 = vmatpush.bf16.msra.mxu0 %v9454
    %10304 = vmatpush.bf16.msra.mxu0 %v9446
    %10305 = vmatpush.bf16.msra.mxu0 %v9438
    %10306 = vmatpush.bf16.msra.mxu0 %v9430
    %10307 = vmatmul.bf16.gmra.mxu0 %v1871
    %v10308 = vpop.f32.mrf.mxu0
    %v10309 = vadd.f32 0.0, %v10308
    %v10310 = vpop.f32.mrf.mxu0
    %10311 = vdwg.mxu0
    %10312 = vmatpush.bf16.msra.mxu0 %v9550
    %10313 = vmatpush.bf16.msra.mxu0 %v9542
    %10314 = vmatpush.bf16.msra.mxu0 %v9534
    %10315 = vmatpush.bf16.msra.mxu0 %v9526
    %10316 = vmatpush.bf16.msra.mxu0 %v9518
    %10317 = vmatpush.bf16.msra.mxu0 %v9510
    %10318 = vmatpush.bf16.msra.mxu0 %v9502
    %10319 = vmatpush.bf16.msra.mxu0 %v9494
    %10320 = vmatmul.bf16.gmra.mxu0 %v1872
    %v10321 = vpop.f32.mrf.mxu0
    %v10322 = vadd.f32 %v10309, %v10321
    %v10323 = vpop.f32.mrf.mxu0
    %10324 = vdwg.mxu0
    %10325 = vmatpush.bf16.msra.mxu0 %v9614
    %10326 = vmatpush.bf16.msra.mxu0 %v9606
    %10327 = vmatpush.bf16.msra.mxu0 %v9598
    %10328 = vmatpush.bf16.msra.mxu0 %v9590
    %10329 = vmatpush.bf16.msra.mxu0 %v9582
    %10330 = vmatpush.bf16.msra.mxu0 %v9574
    %10331 = vmatpush.bf16.msra.mxu0 %v9566
    %10332 = vmatpush.bf16.msra.mxu0 %v9558
    %10333 = vmatmul.bf16.gmra.mxu0 %v1873
    %v10334 = vpop.f32.mrf.mxu0
    %v10335 = vadd.f32 %v10322, %v10334
    %v10336 = vpop.f32.mrf.mxu0
    %10337 = vdwg.mxu0
    %10338 = vmatpush.bf16.msra.mxu0 %v9678
    %10339 = vmatpush.bf16.msra.mxu0 %v9670
    %10340 = vmatpush.bf16.msra.mxu0 %v9662
    %10341 = vmatpush.bf16.msra.mxu0 %v9654
    %10342 = vmatpush.bf16.msra.mxu0 %v9646
    %10343 = vmatpush.bf16.msra.mxu0 %v9638
    %10344 = vmatpush.bf16.msra.mxu0 %v9630
    %10345 = vmatpush.bf16.msra.mxu0 %v9622
    %10346 = vmatmul.bf16.gmra.mxu0 %v1874
    %v10347 = vpop.f32.mrf.mxu0
    %v10348 = vadd.f32 %v10335, %v10347
    %v10349 = vpop.f32.mrf.mxu0
    %10350 = vdwg.mxu0
    %v10351 = vld [vmem:[#allocation16 + $0x18] sm:$0xff]
    %v10352 = vld [vmem:[#allocation17 + $0x18] sm:$0xff]
    %v10353 = vrot.slane %v9984, 4
    %v10354 = vadd.f32 %v9984, %v10353
    %v10355 = vrot.slane %v10354, 2
    %v10356 = vadd.f32 %v10354, %v10355
    %v10357 = vrot.slane %v10356, 1
    %v10358 = vadd.f32 %v10356, %v10357
    %v10359 = vrot.slane %v10036, 4
    %v10360 = vadd.f32 %v10036, %v10359
    %v10361 = vrot.slane %v10360, 2
    %v10362 = vadd.f32 %v10360, %v10361
    %v10363 = vrot.slane %v10362, 1
    %v10364 = vadd.f32 %v10362, %v10363
    %v10365 = vrot.slane %v10088, 4
    %v10366 = vadd.f32 %v10088, %v10365
    %v10367 = vrot.slane %v10366, 2
    %v10368 = vadd.f32 %v10366, %v10367
    %v10369 = vrot.slane %v10368, 1
    %v10370 = vadd.f32 %v10368, %v10369
    %v10371 = vrot.slane %v10140, 4
    %v10372 = vadd.f32 %v10140, %v10371
    %v10373 = vrot.slane %v10372, 2
    %v10374 = vadd.f32 %v10372, %v10373
    %v10375 = vrot.slane %v10374, 1
    %v10376 = vadd.f32 %v10374, %v10375
    %v10377 = vrot.slane %v10192, 4
    %v10378 = vadd.f32 %v10192, %v10377
    %v10379 = vrot.slane %v10378, 2
    %v10380 = vadd.f32 %v10378, %v10379
    %v10381 = vrot.slane %v10380, 1
    %v10382 = vadd.f32 %v10380, %v10381
    %v10383 = vrot.slane %v10244, 4
    %v10384 = vadd.f32 %v10244, %v10383
    %v10385 = vrot.slane %v10384, 2
    %v10386 = vadd.f32 %v10384, %v10385
    %v10387 = vrot.slane %v10386, 1
    %v10388 = vadd.f32 %v10386, %v10387
    %v10389 = vrot.slane %v10296, 4
    %v10390 = vadd.f32 %v10296, %v10389
    %v10391 = vrot.slane %v10390, 2
    %v10392 = vadd.f32 %v10390, %v10391
    %v10393 = vrot.slane %v10392, 1
    %v10394 = vadd.f32 %v10392, %v10393
    %v10395 = vrot.slane %v10348, 4
    %v10396 = vadd.f32 %v10348, %v10395
    %v10397 = vrot.slane %v10396, 2
    %v10398 = vadd.f32 %v10396, %v10397
    %v10399 = vrot.slane %v10398, 1
    %v10400 = vadd.f32 %v10398, %v10399
    %v10401 = vmul.f32 %v10358, %v356
    %v10402 = vmul.f32 %v10364, %v356
    %v10403 = vmul.f32 %v10370, %v356
    %v10404 = vmul.f32 %v10376, %v356
    %v10405 = vmul.f32 %v10382, %v356
    %v10406 = vmul.f32 %v10388, %v356
    %v10407 = vmul.f32 %v10394, %v356
    %v10408 = vmul.f32 %v10400, %v356
    %v10409 = vmul.f32 %v9984, %v9984
    %v10410 = vmul.f32 %v10036, %v10036
    %v10411 = vmul.f32 %v10088, %v10088
    %v10412 = vmul.f32 %v10140, %v10140
    %v10413 = vmul.f32 %v10192, %v10192
    %v10414 = vmul.f32 %v10244, %v10244
    %v10415 = vmul.f32 %v10296, %v10296
    %v10416 = vmul.f32 %v10348, %v10348
    %v10417 = vrot.slane %v10409, 4
    %v10418 = vadd.f32 %v10409, %v10417
    %v10419 = vrot.slane %v10418, 2
    %v10420 = vadd.f32 %v10418, %v10419
    %v10421 = vrot.slane %v10420, 1
    %v10422 = vadd.f32 %v10420, %v10421
    %v10423 = vrot.slane %v10410, 4
    %v10424 = vadd.f32 %v10410, %v10423
    %v10425 = vrot.slane %v10424, 2
    %v10426 = vadd.f32 %v10424, %v10425
    %v10427 = vrot.slane %v10426, 1
    %v10428 = vadd.f32 %v10426, %v10427
    %v10429 = vrot.slane %v10411, 4
    %v10430 = vadd.f32 %v10411, %v10429
    %v10431 = vrot.slane %v10430, 2
    %v10432 = vadd.f32 %v10430, %v10431
    %v10433 = vrot.slane %v10432, 1
    %v10434 = vadd.f32 %v10432, %v10433
    %v10435 = vrot.slane %v10412, 4
    %v10436 = vadd.f32 %v10412, %v10435
    %v10437 = vrot.slane %v10436, 2
    %v10438 = vadd.f32 %v10436, %v10437
    %v10439 = vrot.slane %v10438, 1
    %v10440 = vadd.f32 %v10438, %v10439
    %v10441 = vrot.slane %v10413, 4
    %v10442 = vadd.f32 %v10413, %v10441
    %v10443 = vrot.slane %v10442, 2
    %v10444 = vadd.f32 %v10442, %v10443
    %v10445 = vrot.slane %v10444, 1
    %v10446 = vadd.f32 %v10444, %v10445
    %v10447 = vrot.slane %v10414, 4
    %v10448 = vadd.f32 %v10414, %v10447
    %v10449 = vrot.slane %v10448, 2
    %v10450 = vadd.f32 %v10448, %v10449
    %v10451 = vrot.slane %v10450, 1
    %v10452 = vadd.f32 %v10450, %v10451
    %v10453 = vrot.slane %v10415, 4
    %v10454 = vadd.f32 %v10415, %v10453
    %v10455 = vrot.slane %v10454, 2
    %v10456 = vadd.f32 %v10454, %v10455
    %v10457 = vrot.slane %v10456, 1
    %v10458 = vadd.f32 %v10456, %v10457
    %v10459 = vrot.slane %v10416, 4
    %v10460 = vadd.f32 %v10416, %v10459
    %v10461 = vrot.slane %v10460, 2
    %v10462 = vadd.f32 %v10460, %v10461
    %v10463 = vrot.slane %v10462, 1
    %v10464 = vadd.f32 %v10462, %v10463
    %v10465 = vmul.f32 %v10422, %v356
    %v10466 = vmul.f32 %v10428, %v356
    %v10467 = vmul.f32 %v10434, %v356
    %v10468 = vmul.f32 %v10440, %v356
    %v10469 = vmul.f32 %v10446, %v356
    %v10470 = vmul.f32 %v10452, %v356
    %v10471 = vmul.f32 %v10458, %v356
    %v10472 = vmul.f32 %v10464, %v356
    %v10473 = vmul.f32 %v10401, %v10401
    %v10474 = vmul.f32 %v10402, %v10402
    %v10475 = vmul.f32 %v10403, %v10403
    %v10476 = vmul.f32 %v10404, %v10404
    %v10477 = vmul.f32 %v10405, %v10405
    %v10478 = vmul.f32 %v10406, %v10406
    %v10479 = vmul.f32 %v10407, %v10407
    %v10480 = vmul.f32 %v10408, %v10408
    %v10481 = vsub.f32 %v10465, %v10473
    %v10482 = vsub.f32 %v10466, %v10474
    %v10483 = vsub.f32 %v10467, %v10475
    %v10484 = vsub.f32 %v10468, %v10476
    %v10485 = vsub.f32 %v10469, %v10477
    %v10486 = vsub.f32 %v10470, %v10478
    %v10487 = vsub.f32 %v10471, %v10479
    %v10488 = vsub.f32 %v10472, %v10480
    %v10489 = vsub.f32 %v9984, %v10401
    %v10490 = vsub.f32 %v10036, %v10402
    %v10491 = vsub.f32 %v10088, %v10403
    %v10492 = vsub.f32 %v10140, %v10404
    %v10493 = vsub.f32 %v10192, %v10405
    %v10494 = vsub.f32 %v10244, %v10406
    %v10495 = vsub.f32 %v10296, %v10407
    %v10496 = vsub.f32 %v10348, %v10408
    %v10497 = vadd.f32 %v10481, 1e-05
    %v10498 = vadd.f32 %v10482, 1e-05
    %v10499 = vadd.f32 %v10483, 1e-05
    %v10500 = vadd.f32 %v10484, 1e-05
    %v10501 = vadd.f32 %v10485, 1e-05
    %v10502 = vadd.f32 %v10486, 1e-05
    %v10503 = vadd.f32 %v10487, 1e-05
    %v10504 = vadd.f32 %v10488, 1e-05
    %v10505 = vrsqrt.pop %v10497
    %v10506 = vmul.f32 %v10505, %v10497
    %v10507 = vmul.f32 %v10506, %v10505
    %v10508 = vmul.f32 0.5, %v10507
    %v10509 = vsub.f32 1.5, %v10508
    %v10510 = vmul.f32 %v10505, %v10509
    %vm10511 = vweird.f32 %v10497
    %vm10512 = vweird.f32 %v10505
    %vm10513 = vmor %vm10511, %vm10512
    %v10514 = vsel %vm10513, %v10505, %v10510
    %v10515 = vrsqrt.pop %v10498
    %v10516 = vmul.f32 %v10515, %v10498
    %v10517 = vmul.f32 %v10516, %v10515
    %v10518 = vmul.f32 0.5, %v10517
    %v10519 = vsub.f32 1.5, %v10518
    %v10520 = vmul.f32 %v10515, %v10519
    %vm10521 = vweird.f32 %v10498
    %vm10522 = vweird.f32 %v10515
    %vm10523 = vmor %vm10521, %vm10522
    %v10524 = vsel %vm10523, %v10515, %v10520
    %v10525 = vrsqrt.pop %v10499
    %v10526 = vmul.f32 %v10525, %v10499
    %v10527 = vmul.f32 %v10526, %v10525
    %v10528 = vmul.f32 0.5, %v10527
    %v10529 = vsub.f32 1.5, %v10528
    %v10530 = vmul.f32 %v10525, %v10529
    %vm10531 = vweird.f32 %v10499
    %vm10532 = vweird.f32 %v10525
    %vm10533 = vmor %vm10531, %vm10532
    %v10534 = vsel %vm10533, %v10525, %v10530
    %v10535 = vrsqrt.pop %v10500
    %v10536 = vmul.f32 %v10535, %v10500
    %v10537 = vmul.f32 %v10536, %v10535
    %v10538 = vmul.f32 0.5, %v10537
    %v10539 = vsub.f32 1.5, %v10538
    %v10540 = vmul.f32 %v10535, %v10539
    %vm10541 = vweird.f32 %v10500
    %vm10542 = vweird.f32 %v10535
    %vm10543 = vmor %vm10541, %vm10542
    %v10544 = vsel %vm10543, %v10535, %v10540
    %v10545 = vrsqrt.pop %v10501
    %v10546 = vmul.f32 %v10545, %v10501
    %v10547 = vmul.f32 %v10546, %v10545
    %v10548 = vmul.f32 0.5, %v10547
    %v10549 = vsub.f32 1.5, %v10548
    %v10550 = vmul.f32 %v10545, %v10549
    %vm10551 = vweird.f32 %v10501
    %vm10552 = vweird.f32 %v10545
    %vm10553 = vmor %vm10551, %vm10552
    %v10554 = vsel %vm10553, %v10545, %v10550
    %v10555 = vrsqrt.pop %v10502
    %v10556 = vmul.f32 %v10555, %v10502
    %v10557 = vmul.f32 %v10556, %v10555
    %v10558 = vmul.f32 0.5, %v10557
    %v10559 = vsub.f32 1.5, %v10558
    %v10560 = vmul.f32 %v10555, %v10559
    %vm10561 = vweird.f32 %v10502
    %vm10562 = vweird.f32 %v10555
    %vm10563 = vmor %vm10561, %vm10562
    %v10564 = vsel %vm10563, %v10555, %v10560
    %v10565 = vrsqrt.pop %v10503
    %v10566 = vmul.f32 %v10565, %v10503
    %v10567 = vmul.f32 %v10566, %v10565
    %v10568 = vmul.f32 0.5, %v10567
    %v10569 = vsub.f32 1.5, %v10568
    %v10570 = vmul.f32 %v10565, %v10569
    %vm10571 = vweird.f32 %v10503
    %vm10572 = vweird.f32 %v10565
    %vm10573 = vmor %vm10571, %vm10572
    %v10574 = vsel %vm10573, %v10565, %v10570
    %v10575 = vrsqrt.pop %v10504
    %v10576 = vmul.f32 %v10575, %v10504
    %v10577 = vmul.f32 %v10576, %v10575
    %v10578 = vmul.f32 0.5, %v10577
    %v10579 = vsub.f32 1.5, %v10578
    %v10580 = vmul.f32 %v10575, %v10579
    %vm10581 = vweird.f32 %v10504
    %vm10582 = vweird.f32 %v10575
    %vm10583 = vmor %vm10581, %vm10582
    %v10584 = vsel %vm10583, %v10575, %v10580
    %v10585 = vmul.f32 %v10489, %v10514
    %v10586 = vmul.f32 %v10490, %v10524
    %v10587 = vmul.f32 %v10491, %v10534
    %v10588 = vmul.f32 %v10492, %v10544
    %v10589 = vmul.f32 %v10493, %v10554
    %v10590 = vmul.f32 %v10494, %v10564
    %v10591 = vmul.f32 %v10495, %v10574
    %v10592 = vmul.f32 %v10496, %v10584
    %v10594 = vperm.slane %v10351, 0
    %v10595 = vperm.slane %v10351, 1
    %v10596 = vperm.slane %v10351, 2
    %v10597 = vperm.slane %v10351, 3
    %v10598 = vperm.slane %v10351, 4
    %v10599 = vperm.slane %v10351, 5
    %v10600 = vperm.slane %v10351, 6
    %v10601 = vperm.slane %v10351, 7
    %v10610 = vmul.f32 %v10585, %v10594
    %v10611 = vmul.f32 %v10586, %v10595
    %v10612 = vmul.f32 %v10587, %v10596
    %v10613 = vmul.f32 %v10588, %v10597
    %v10614 = vmul.f32 %v10589, %v10598
    %v10615 = vmul.f32 %v10590, %v10599
    %v10616 = vmul.f32 %v10591, %v10600
    %v10617 = vmul.f32 %v10592, %v10601
    %v10619 = vperm.slane %v10352, 0
    %v10620 = vperm.slane %v10352, 1
    %v10621 = vperm.slane %v10352, 2
    %v10622 = vperm.slane %v10352, 3
    %v10623 = vperm.slane %v10352, 4
    %v10624 = vperm.slane %v10352, 5
    %v10625 = vperm.slane %v10352, 6
    %v10626 = vperm.slane %v10352, 7
    %v10635 = vadd.f32 %v10610, %v10619
    %v10636 = vadd.f32 %v10611, %v10620
    %v10637 = vadd.f32 %v10612, %v10621
    %v10638 = vadd.f32 %v10613, %v10622
    %v10639 = vadd.f32 %v10614, %v10623
    %v10640 = vadd.f32 %v10615, %v10624
    %v10641 = vadd.f32 %v10616, %v10625
    %v10642 = vadd.f32 %v10617, %v10626
    %v10643 = vmax.f32 %v10635, 0.0
    %v10644 = vmax.f32 %v10636, 0.0
    %v10645 = vmax.f32 %v10637, 0.0
    %v10646 = vmax.f32 %v10638, 0.0
    %v10647 = vmax.f32 %v10639, 0.0
    %v10648 = vmax.f32 %v10640, 0.0
    %v10649 = vmax.f32 %v10641, 0.0
    %v10650 = vmax.f32 %v10642, 0.0
    %10651 = vst [vmem:[#allocation22 + $0xc0] sm:$0xff] %v10643
    %10652 = vst [vmem:[#allocation22 + $0xc8] sm:$0xff] %v10644
    %10653 = vst [vmem:[#allocation22 + $0xd0] sm:$0xff] %v10645
    %10654 = vst [vmem:[#allocation22 + $0xd8] sm:$0xff] %v10646
    %10655 = vst [vmem:[#allocation22 + $0xe0] sm:$0xff] %v10647
    %10656 = vst [vmem:[#allocation22 + $0xe8] sm:$0xff] %v10648
    %10657 = vst [vmem:[#allocation22 + $0xf0] sm:$0xff] %v10649
    %10658 = vst [vmem:[#allocation22 + $0xf8] sm:$0xff] %v10650
    %v10659 = vld [vmem:[%s10] sm:$0xff]
    %v10660 = vld [vmem:[%s10 + $0x8] sm:$0xff]
    %v10661 = vld [vmem:[%s10 + $0x10] sm:$0xff]
    %v10662 = vld [vmem:[%s10 + $0x18] sm:$0xff]
    %v10663 = vld [vmem:[%s10 + $0x20] sm:$0xff]
    %v10664 = vld [vmem:[%s10 + $0x28] sm:$0xff]
    %v10665 = vld [vmem:[%s10 + $0x30] sm:$0xff]
    %v10666 = vld [vmem:[%s10 + $0x38] sm:$0xff]
    %v10667 = vld [vmem:[%s10 + $0x40] sm:$0xff]
    %v10668 = vld [vmem:[%s10 + $0x48] sm:$0xff]
    %v10669 = vld [vmem:[%s10 + $0x50] sm:$0xff]
    %v10670 = vld [vmem:[%s10 + $0x58] sm:$0xff]
    %v10671 = vld [vmem:[%s10 + $0x60] sm:$0xff]
    %v10672 = vld [vmem:[%s10 + $0x68] sm:$0xff]
    %v10673 = vld [vmem:[%s10 + $0x70] sm:$0xff]
    %v10674 = vld [vmem:[%s10 + $0x78] sm:$0xff]
    %v10675 = vld [vmem:[%s10 + $0x80] sm:$0xff]
    %v10676 = vld [vmem:[%s10 + $0x88] sm:$0xff]
    %v10677 = vld [vmem:[%s10 + $0x90] sm:$0xff]
    %v10678 = vld [vmem:[%s10 + $0x98] sm:$0xff]
    %v10679 = vld [vmem:[%s10 + $0xa0] sm:$0xff]
    %v10680 = vld [vmem:[%s10 + $0xa8] sm:$0xff]
    %v10681 = vld [vmem:[%s10 + $0xb0] sm:$0xff]
    %v10682 = vld [vmem:[%s10 + $0xb8] sm:$0xff]
    %v10683 = vld [vmem:[%s10 + $0xc0] sm:$0xff]
    %v10684 = vld [vmem:[%s10 + $0xc8] sm:$0xff]
    %v10685 = vld [vmem:[%s10 + $0xd0] sm:$0xff]
    %v10686 = vld [vmem:[%s10 + $0xd8] sm:$0xff]
    %v10687 = vld [vmem:[%s10 + $0xe0] sm:$0xff]
    %v10688 = vld [vmem:[%s10 + $0xe8] sm:$0xff]
    %v10689 = vld [vmem:[%s10 + $0xf0] sm:$0xff]
    %v10690 = vld [vmem:[%s10 + $0xf8] sm:$0xff]
    %v10691 = vld [vmem:[%s10 + $0x100] sm:$0xff]
    %v10692 = vld [vmem:[%s10 + $0x108] sm:$0xff]
    %v10693 = vld [vmem:[%s10 + $0x110] sm:$0xff]
    %v10694 = vld [vmem:[%s10 + $0x118] sm:$0xff]
    %v10695 = vld [vmem:[%s10 + $0x120] sm:$0xff]
    %v10696 = vld [vmem:[%s10 + $0x128] sm:$0xff]
    %v10697 = vld [vmem:[%s10 + $0x130] sm:$0xff]
    %v10698 = vld [vmem:[%s10 + $0x138] sm:$0xff]
    %v10699 = vld [vmem:[%s10 + $0x140] sm:$0xff]
    %v10700 = vld [vmem:[%s10 + $0x148] sm:$0xff]
    %v10701 = vld [vmem:[%s10 + $0x150] sm:$0xff]
    %v10702 = vld [vmem:[%s10 + $0x158] sm:$0xff]
    %v10703 = vld [vmem:[%s10 + $0x160] sm:$0xff]
    %v10704 = vld [vmem:[%s10 + $0x168] sm:$0xff]
    %v10705 = vld [vmem:[%s10 + $0x170] sm:$0xff]
    %v10706 = vld [vmem:[%s10 + $0x178] sm:$0xff]
    %v10707 = vld [vmem:[%s10 + $0x180] sm:$0xff]
    %v10708 = vld [vmem:[%s10 + $0x188] sm:$0xff]
    %v10709 = vld [vmem:[%s10 + $0x190] sm:$0xff]
    %v10710 = vld [vmem:[%s10 + $0x198] sm:$0xff]
    %v10711 = vld [vmem:[%s10 + $0x1a0] sm:$0xff]
    %v10712 = vld [vmem:[%s10 + $0x1a8] sm:$0xff]
    %v10713 = vld [vmem:[%s10 + $0x1b0] sm:$0xff]
    %v10714 = vld [vmem:[%s10 + $0x1b8] sm:$0xff]
    %v10715 = vld [vmem:[%s10 + $0x1c0] sm:$0xff]
    %v10716 = vld [vmem:[%s10 + $0x1c8] sm:$0xff]
    %v10717 = vld [vmem:[%s10 + $0x1d0] sm:$0xff]
    %v10718 = vld [vmem:[%s10 + $0x1d8] sm:$0xff]
    %v10719 = vld [vmem:[%s10 + $0x1e0] sm:$0xff]
    %v10720 = vld [vmem:[%s10 + $0x1e8] sm:$0xff]
    %v10721 = vld [vmem:[%s10 + $0x1f0] sm:$0xff]
    %v10722 = vld [vmem:[%s10 + $0x1f8] sm:$0xff]
    %v10787 = vunpack.c.l.b16 %v10659
    %v10788 = vunpack.c.h.b16 %v10659
    %v10789 = vunpack.c.l.b16 %v10660
    %v10790 = vunpack.c.h.b16 %v10660
    %v10791 = vunpack.c.l.b16 %v10661
    %v10792 = vunpack.c.h.b16 %v10661
    %v10793 = vunpack.c.l.b16 %v10662
    %v10794 = vunpack.c.h.b16 %v10662
    %v10795 = vunpack.c.l.b16 %v10663
    %v10796 = vunpack.c.h.b16 %v10663
    %v10797 = vunpack.c.l.b16 %v10664
    %v10798 = vunpack.c.h.b16 %v10664
    %v10799 = vunpack.c.l.b16 %v10665
    %v10800 = vunpack.c.h.b16 %v10665
    %v10801 = vunpack.c.l.b16 %v10666
    %v10802 = vunpack.c.h.b16 %v10666
    %v10803 = vunpack.c.l.b16 %v10667
    %v10804 = vunpack.c.h.b16 %v10667
    %v10805 = vunpack.c.l.b16 %v10668
    %v10806 = vunpack.c.h.b16 %v10668
    %v10807 = vunpack.c.l.b16 %v10669
    %v10808 = vunpack.c.h.b16 %v10669
    %v10809 = vunpack.c.l.b16 %v10670
    %v10810 = vunpack.c.h.b16 %v10670
    %v10811 = vunpack.c.l.b16 %v10671
    %v10812 = vunpack.c.h.b16 %v10671
    %v10813 = vunpack.c.l.b16 %v10672
    %v10814 = vunpack.c.h.b16 %v10672
    %v10815 = vunpack.c.l.b16 %v10673
    %v10816 = vunpack.c.h.b16 %v10673
    %v10817 = vunpack.c.l.b16 %v10674
    %v10818 = vunpack.c.h.b16 %v10674
    %v10819 = vunpack.c.l.b16 %v10675
    %v10820 = vunpack.c.h.b16 %v10675
    %v10821 = vunpack.c.l.b16 %v10676
    %v10822 = vunpack.c.h.b16 %v10676
    %v10823 = vunpack.c.l.b16 %v10677
    %v10824 = vunpack.c.h.b16 %v10677
    %v10825 = vunpack.c.l.b16 %v10678
    %v10826 = vunpack.c.h.b16 %v10678
    %v10827 = vunpack.c.l.b16 %v10679
    %v10828 = vunpack.c.h.b16 %v10679
    %v10829 = vunpack.c.l.b16 %v10680
    %v10830 = vunpack.c.h.b16 %v10680
    %v10831 = vunpack.c.l.b16 %v10681
    %v10832 = vunpack.c.h.b16 %v10681
    %v10833 = vunpack.c.l.b16 %v10682
    %v10834 = vunpack.c.h.b16 %v10682
    %v10835 = vunpack.c.l.b16 %v10683
    %v10836 = vunpack.c.h.b16 %v10683
    %v10837 = vunpack.c.l.b16 %v10684
    %v10838 = vunpack.c.h.b16 %v10684
    %v10839 = vunpack.c.l.b16 %v10685
    %v10840 = vunpack.c.h.b16 %v10685
    %v10841 = vunpack.c.l.b16 %v10686
    %v10842 = vunpack.c.h.b16 %v10686
    %v10843 = vunpack.c.l.b16 %v10687
    %v10844 = vunpack.c.h.b16 %v10687
    %v10845 = vunpack.c.l.b16 %v10688
    %v10846 = vunpack.c.h.b16 %v10688
    %v10847 = vunpack.c.l.b16 %v10689
    %v10848 = vunpack.c.h.b16 %v10689
    %v10849 = vunpack.c.l.b16 %v10690
    %v10850 = vunpack.c.h.b16 %v10690
    %v10851 = vunpack.c.l.b16 %v10691
    %v10852 = vunpack.c.h.b16 %v10691
    %v10853 = vunpack.c.l.b16 %v10692
    %v10854 = vunpack.c.h.b16 %v10692
    %v10855 = vunpack.c.l.b16 %v10693
    %v10856 = vunpack.c.h.b16 %v10693
    %v10857 = vunpack.c.l.b16 %v10694
    %v10858 = vunpack.c.h.b16 %v10694
    %v10859 = vunpack.c.l.b16 %v10695
    %v10860 = vunpack.c.h.b16 %v10695
    %v10861 = vunpack.c.l.b16 %v10696
    %v10862 = vunpack.c.h.b16 %v10696
    %v10863 = vunpack.c.l.b16 %v10697
    %v10864 = vunpack.c.h.b16 %v10697
    %v10865 = vunpack.c.l.b16 %v10698
    %v10866 = vunpack.c.h.b16 %v10698
    %v10867 = vunpack.c.l.b16 %v10699
    %v10868 = vunpack.c.h.b16 %v10699
    %v10869 = vunpack.c.l.b16 %v10700
    %v10870 = vunpack.c.h.b16 %v10700
    %v10871 = vunpack.c.l.b16 %v10701
    %v10872 = vunpack.c.h.b16 %v10701
    %v10873 = vunpack.c.l.b16 %v10702
    %v10874 = vunpack.c.h.b16 %v10702
    %v10875 = vunpack.c.l.b16 %v10703
    %v10876 = vunpack.c.h.b16 %v10703
    %v10877 = vunpack.c.l.b16 %v10704
    %v10878 = vunpack.c.h.b16 %v10704
    %v10879 = vunpack.c.l.b16 %v10705
    %v10880 = vunpack.c.h.b16 %v10705
    %v10881 = vunpack.c.l.b16 %v10706
    %v10882 = vunpack.c.h.b16 %v10706
    %v10883 = vunpack.c.l.b16 %v10707
    %v10884 = vunpack.c.h.b16 %v10707
    %v10885 = vunpack.c.l.b16 %v10708
    %v10886 = vunpack.c.h.b16 %v10708
    %v10887 = vunpack.c.l.b16 %v10709
    %v10888 = vunpack.c.h.b16 %v10709
    %v10889 = vunpack.c.l.b16 %v10710
    %v10890 = vunpack.c.h.b16 %v10710
    %v10891 = vunpack.c.l.b16 %v10711
    %v10892 = vunpack.c.h.b16 %v10711
    %v10893 = vunpack.c.l.b16 %v10712
    %v10894 = vunpack.c.h.b16 %v10712
    %v10895 = vunpack.c.l.b16 %v10713
    %v10896 = vunpack.c.h.b16 %v10713
    %v10897 = vunpack.c.l.b16 %v10714
    %v10898 = vunpack.c.h.b16 %v10714
    %v10899 = vunpack.c.l.b16 %v10715
    %v10900 = vunpack.c.h.b16 %v10715
    %v10901 = vunpack.c.l.b16 %v10716
    %v10902 = vunpack.c.h.b16 %v10716
    %v10903 = vunpack.c.l.b16 %v10717
    %v10904 = vunpack.c.h.b16 %v10717
    %v10905 = vunpack.c.l.b16 %v10718
    %v10906 = vunpack.c.h.b16 %v10718
    %v10907 = vunpack.c.l.b16 %v10719
    %v10908 = vunpack.c.h.b16 %v10719
    %v10909 = vunpack.c.l.b16 %v10720
    %v10910 = vunpack.c.h.b16 %v10720
    %v10911 = vunpack.c.l.b16 %v10721
    %v10912 = vunpack.c.h.b16 %v10721
    %v10913 = vunpack.c.l.b16 %v10722
    %v10914 = vunpack.c.h.b16 %v10722
    %v10915 = vpack.c.b16 %v10789, %v10787
    %v10916 = vpack.c.b16 %v10790, %v10788
    %v10917 = vpack.c.b16 %v10793, %v10791
    %v10918 = vpack.c.b16 %v10794, %v10792
    %v10919 = vpack.c.b16 %v10797, %v10795
    %v10920 = vpack.c.b16 %v10798, %v10796
    %v10921 = vpack.c.b16 %v10801, %v10799
    %v10922 = vpack.c.b16 %v10802, %v10800
    %v10923 = vpack.c.b16 %v10805, %v10803
    %v10924 = vpack.c.b16 %v10806, %v10804
    %v10925 = vpack.c.b16 %v10809, %v10807
    %v10926 = vpack.c.b16 %v10810, %v10808
    %v10927 = vpack.c.b16 %v10813, %v10811
    %v10928 = vpack.c.b16 %v10814, %v10812
    %v10929 = vpack.c.b16 %v10817, %v10815
    %v10930 = vpack.c.b16 %v10818, %v10816
    %v10931 = vpack.c.b16 %v10821, %v10819
    %v10932 = vpack.c.b16 %v10822, %v10820
    %v10933 = vpack.c.b16 %v10825, %v10823
    %v10934 = vpack.c.b16 %v10826, %v10824
    %v10935 = vpack.c.b16 %v10829, %v10827
    %v10936 = vpack.c.b16 %v10830, %v10828
    %v10937 = vpack.c.b16 %v10833, %v10831
    %v10938 = vpack.c.b16 %v10834, %v10832
    %v10939 = vpack.c.b16 %v10837, %v10835
    %v10940 = vpack.c.b16 %v10838, %v10836
    %v10941 = vpack.c.b16 %v10841, %v10839
    %v10942 = vpack.c.b16 %v10842, %v10840
    %v10943 = vpack.c.b16 %v10845, %v10843
    %v10944 = vpack.c.b16 %v10846, %v10844
    %v10945 = vpack.c.b16 %v10849, %v10847
    %v10946 = vpack.c.b16 %v10850, %v10848
    %v10947 = vpack.c.b16 %v10853, %v10851
    %v10948 = vpack.c.b16 %v10854, %v10852
    %v10949 = vpack.c.b16 %v10857, %v10855
    %v10950 = vpack.c.b16 %v10858, %v10856
    %v10951 = vpack.c.b16 %v10861, %v10859
    %v10952 = vpack.c.b16 %v10862, %v10860
    %v10953 = vpack.c.b16 %v10865, %v10863
    %v10954 = vpack.c.b16 %v10866, %v10864
    %v10955 = vpack.c.b16 %v10869, %v10867
    %v10956 = vpack.c.b16 %v10870, %v10868
    %v10957 = vpack.c.b16 %v10873, %v10871
    %v10958 = vpack.c.b16 %v10874, %v10872
    %v10959 = vpack.c.b16 %v10877, %v10875
    %v10960 = vpack.c.b16 %v10878, %v10876
    %v10961 = vpack.c.b16 %v10881, %v10879
    %v10962 = vpack.c.b16 %v10882, %v10880
    %v10963 = vpack.c.b16 %v10885, %v10883
    %v10964 = vpack.c.b16 %v10886, %v10884
    %v10965 = vpack.c.b16 %v10889, %v10887
    %v10966 = vpack.c.b16 %v10890, %v10888
    %v10967 = vpack.c.b16 %v10893, %v10891
    %v10968 = vpack.c.b16 %v10894, %v10892
    %v10969 = vpack.c.b16 %v10897, %v10895
    %v10970 = vpack.c.b16 %v10898, %v10896
    %v10971 = vpack.c.b16 %v10901, %v10899
    %v10972 = vpack.c.b16 %v10902, %v10900
    %v10973 = vpack.c.b16 %v10905, %v10903
    %v10974 = vpack.c.b16 %v10906, %v10904
    %v10975 = vpack.c.b16 %v10909, %v10907
    %v10976 = vpack.c.b16 %v10910, %v10908
    %v10977 = vpack.c.b16 %v10913, %v10911
    %v10978 = vpack.c.b16 %v10914, %v10912
    %11043 = vmatpush.bf16.msra.mxu0 %v10929
    %11044 = vmatpush.bf16.msra.mxu0 %v10927
    %11045 = vmatpush.bf16.msra.mxu0 %v10925
    %11046 = vmatpush.bf16.msra.mxu0 %v10923
    %11047 = vmatpush.bf16.msra.mxu0 %v10921
    %11048 = vmatpush.bf16.msra.mxu0 %v10919
    %11049 = vmatpush.bf16.msra.mxu0 %v10917
    %11050 = vmatpush.bf16.msra.mxu0 %v10915
    %11051 = vmatmul.bf16.gmra.mxu0 %v1871
    %v11052 = vpop.f32.mrf.mxu0
    %v11053 = vadd.f32 0.0, %v11052
    %v11054 = vpop.f32.mrf.mxu0
    %11055 = vdwg.mxu0
    %11056 = vmatpush.bf16.msra.mxu0 %v10945
    %11057 = vmatpush.bf16.msra.mxu0 %v10943
    %11058 = vmatpush.bf16.msra.mxu0 %v10941
    %11059 = vmatpush.bf16.msra.mxu0 %v10939
    %11060 = vmatpush.bf16.msra.mxu0 %v10937
    %11061 = vmatpush.bf16.msra.mxu0 %v10935
    %11062 = vmatpush.bf16.msra.mxu0 %v10933
    %11063 = vmatpush.bf16.msra.mxu0 %v10931
    %11064 = vmatmul.bf16.gmra.mxu0 %v1872
    %v11065 = vpop.f32.mrf.mxu0
    %v11066 = vadd.f32 %v11053, %v11065
    %v11067 = vpop.f32.mrf.mxu0
    %11068 = vdwg.mxu0
    %11069 = vmatpush.bf16.msra.mxu0 %v10961
    %11070 = vmatpush.bf16.msra.mxu0 %v10959
    %11071 = vmatpush.bf16.msra.mxu0 %v10957
    %11072 = vmatpush.bf16.msra.mxu0 %v10955
    %11073 = vmatpush.bf16.msra.mxu0 %v10953
    %11074 = vmatpush.bf16.msra.mxu0 %v10951
    %11075 = vmatpush.bf16.msra.mxu0 %v10949
    %11076 = vmatpush.bf16.msra.mxu0 %v10947
    %11077 = vmatmul.bf16.gmra.mxu0 %v1873
    %v11078 = vpop.f32.mrf.mxu0
    %v11079 = vadd.f32 %v11066, %v11078
    %v11080 = vpop.f32.mrf.mxu0
    %11081 = vdwg.mxu0
    %11082 = vmatpush.bf16.msra.mxu0 %v10977
    %11083 = vmatpush.bf16.msra.mxu0 %v10975
    %11084 = vmatpush.bf16.msra.mxu0 %v10973
    %11085 = vmatpush.bf16.msra.mxu0 %v10971
    %11086 = vmatpush.bf16.msra.mxu0 %v10969
    %11087 = vmatpush.bf16.msra.mxu0 %v10967
    %11088 = vmatpush.bf16.msra.mxu0 %v10965
    %11089 = vmatpush.bf16.msra.mxu0 %v10963
    %11090 = vmatmul.bf16.gmra.mxu0 %v1874
    %v11091 = vpop.f32.mrf.mxu0
    %v11092 = vadd.f32 %v11079, %v11091
    %v11093 = vpop.f32.mrf.mxu0
    %11094 = vdwg.mxu0
    %11095 = vmatpush.bf16.msra.mxu0 %v10930
    %11096 = vmatpush.bf16.msra.mxu0 %v10928
    %11097 = vmatpush.bf16.msra.mxu0 %v10926
    %11098 = vmatpush.bf16.msra.mxu0 %v10924
    %11099 = vmatpush.bf16.msra.mxu0 %v10922
    %11100 = vmatpush.bf16.msra.mxu0 %v10920
    %11101 = vmatpush.bf16.msra.mxu0 %v10918
    %11102 = vmatpush.bf16.msra.mxu0 %v10916
    %11103 = vmatmul.bf16.gmra.mxu0 %v1871
    %v11104 = vpop.f32.mrf.mxu0
    %v11105 = vadd.f32 0.0, %v11104
    %v11106 = vpop.f32.mrf.mxu0
    %11107 = vdwg.mxu0
    %11108 = vmatpush.bf16.msra.mxu0 %v10946
    %11109 = vmatpush.bf16.msra.mxu0 %v10944
    %11110 = vmatpush.bf16.msra.mxu0 %v10942
    %11111 = vmatpush.bf16.msra.mxu0 %v10940
    %11112 = vmatpush.bf16.msra.mxu0 %v10938
    %11113 = vmatpush.bf16.msra.mxu0 %v10936
    %11114 = vmatpush.bf16.msra.mxu0 %v10934
    %11115 = vmatpush.bf16.msra.mxu0 %v10932
    %11116 = vmatmul.bf16.gmra.mxu0 %v1872
    %v11117 = vpop.f32.mrf.mxu0
    %v11118 = vadd.f32 %v11105, %v11117
    %v11119 = vpop.f32.mrf.mxu0
    %11120 = vdwg.mxu0
    %11121 = vmatpush.bf16.msra.mxu0 %v10962
    %11122 = vmatpush.bf16.msra.mxu0 %v10960
    %11123 = vmatpush.bf16.msra.mxu0 %v10958
    %11124 = vmatpush.bf16.msra.mxu0 %v10956
    %11125 = vmatpush.bf16.msra.mxu0 %v10954
    %11126 = vmatpush.bf16.msra.mxu0 %v10952
    %11127 = vmatpush.bf16.msra.mxu0 %v10950
    %11128 = vmatpush.bf16.msra.mxu0 %v10948
    %11129 = vmatmul.bf16.gmra.mxu0 %v1873
    %v11130 = vpop.f32.mrf.mxu0
    %v11131 = vadd.f32 %v11118, %v11130
    %v11132 = vpop.f32.mrf.mxu0
    %11133 = vdwg.mxu0
    %11134 = vmatpush.bf16.msra.mxu0 %v10978
    %11135 = vmatpush.bf16.msra.mxu0 %v10976
    %11136 = vmatpush.bf16.msra.mxu0 %v10974
    %11137 = vmatpush.bf16.msra.mxu0 %v10972
    %11138 = vmatpush.bf16.msra.mxu0 %v10970
    %11139 = vmatpush.bf16.msra.mxu0 %v10968
    %11140 = vmatpush.bf16.msra.mxu0 %v10966
    %11141 = vmatpush.bf16.msra.mxu0 %v10964
    %11142 = vmatmul.bf16.gmra.mxu0 %v1874
    %v11143 = vpop.f32.mrf.mxu0
    %v11144 = vadd.f32 %v11131, %v11143
    %v11145 = vpop.f32.mrf.mxu0
    %11146 = vdwg.mxu0
    %v11147 = vld [vmem:[#allocation19] sm:$0x3]
    %v11148 = vld [vmem:[#allocation20] sm:$0x3]
    %v11149 = vrot.slane %v11092, 4
    %v11150 = vadd.f32 %v11092, %v11149
    %v11151 = vrot.slane %v11150, 2
    %v11152 = vadd.f32 %v11150, %v11151
    %v11153 = vrot.slane %v11152, 1
    %v11154 = vadd.f32 %v11152, %v11153
    %vm11155 = vcmask 523264
    %v11156 = vsel %vm11155, %v11144, 0.0
    %v11157 = vrot.slane %v11156, 4
    %v11158 = vadd.f32 %v11156, %v11157
    %v11159 = vrot.slane %v11158, 2
    %v11160 = vadd.f32 %v11158, %v11159
    %v11161 = vrot.slane %v11160, 1
    %v11162 = vadd.f32 %v11160, %v11161
    %v11163 = vmul.f32 %v11154, %v356
    %v11164 = vmul.f32 %v11162, %v356
    %v11165 = vmul.f32 %v11092, %v11092
    %v11166 = vmul.f32 %v11144, %v11144
    %v11167 = vrot.slane %v11165, 4
    %v11168 = vadd.f32 %v11165, %v11167
    %v11169 = vrot.slane %v11168, 2
    %v11170 = vadd.f32 %v11168, %v11169
    %v11171 = vrot.slane %v11170, 1
    %v11172 = vadd.f32 %v11170, %v11171
    %v11173 = vsel %vm11155, %v11166, 0.0
    %v11174 = vrot.slane %v11173, 4
    %v11175 = vadd.f32 %v11173, %v11174
    %v11176 = vrot.slane %v11175, 2
    %v11177 = vadd.f32 %v11175, %v11176
    %v11178 = vrot.slane %v11177, 1
    %v11179 = vadd.f32 %v11177, %v11178
    %v11180 = vmul.f32 %v11172, %v356
    %v11181 = vmul.f32 %v11179, %v356
    %v11182 = vmul.f32 %v11163, %v11163
    %v11183 = vmul.f32 %v11164, %v11164
    %v11184 = vsub.f32 %v11180, %v11182
    %v11185 = vsub.f32 %v11181, %v11183
    %v11186 = vsub.f32 %v11092, %v11163
    %v11187 = vsub.f32 %v11144, %v11164
    %v11188 = vadd.f32 %v11184, 1e-05
    %v11189 = vadd.f32 %v11185, 1e-05
    %v11190 = vrsqrt.pop %v11188
    %v11191 = vmul.f32 %v11190, %v11188
    %v11192 = vmul.f32 %v11191, %v11190
    %v11193 = vmul.f32 0.5, %v11192
    %v11194 = vsub.f32 1.5, %v11193
    %v11195 = vmul.f32 %v11190, %v11194
    %vm11196 = vweird.f32 %v11188
    %vm11197 = vweird.f32 %v11190
    %vm11198 = vmor %vm11196, %vm11197
    %v11199 = vsel %vm11198, %v11190, %v11195
    %v11200 = vrsqrt.pop %v11189
    %v11201 = vmul.f32 %v11200, %v11189
    %v11202 = vmul.f32 %v11201, %v11200
    %v11203 = vmul.f32 0.5, %v11202
    %v11204 = vsub.f32 1.5, %v11203
    %v11205 = vmul.f32 %v11200, %v11204
    %vm11206 = vweird.f32 %v11189
    %vm11207 = vweird.f32 %v11200
    %vm11208 = vmor %vm11206, %vm11207
    %v11209 = vsel %vm11208, %v11200, %v11205
    %v11210 = vmul.f32 %v11186, %v11199
    %v11211 = vmul.f32 %v11187, %v11209
    %v11213 = vperm.slane %v11147, 0
    %v11214 = vperm.slane %v11147, 1
    %v11217 = vmul.f32 %v11210, %v11213
    %v11218 = vmul.f32 %v11211, %v11214
    %v11220 = vperm.slane %v11148, 0
    %v11221 = vperm.slane %v11148, 1
    %v11224 = vadd.f32 %v11217, %v11220
    %v11225 = vadd.f32 %v11218, %v11221
    %v11226 = vmax.f32 %v11224, 0.0
    %v11227 = vmax.f32 %v11225, 0.0
    %11228 = vst [vmem:[#allocation23] sm:$0xff] %v11226
    %11229 = vst.msk [vmem:[#allocation23 + $0x8] sm:$0xff] %vm11155, %v11227
    // Predicated region
    $region102: #{tpu_custom_call.1} parent=1 // pred_check
      _
    $region103: #{tpu_custom_call.1} parent=1 // pred_check_branch
      %11231 = sbr.rel (0) target = $region105
    $region104: #{tpu_custom_call.1} parent=1 // pred_region
      %11233 = vsyncadd [#allocation4], 0
      %s11235 = sshll.u32 [#allocation22], 4
      %s11236 = int_to_ptr.vmem [resolvable:$true] %s11235
      %s11237 = sshll.u32 %s13, 4
      %s11238 = int_to_ptr.hbm [resolvable:$true] %s11237
      %11240 = dma.vmem_to_hbm [thread:$0]  %s11236, 4096, %s11238, [#allocation4]
    $region105: #{tpu_custom_call.1} parent=1 // pred_fallthru
      _
    // Predicated region
    $region106: #{tpu_custom_call.1} parent=1 // pred_check
      _
    $region107: #{tpu_custom_call.1} parent=1 // pred_check_branch
      %11242 = sbr.rel (0) target = $region109
    $region108: #{tpu_custom_call.1} parent=1 // pred_region
      %11244 = vsyncadd [#allocation24], 0
      %s11246 = sshll.u32 [#allocation23], 4
      %s11247 = int_to_ptr.vmem [resolvable:$true] %s11246
      %s11248 = sshll.u32 %s14, 4
      %s11249 = int_to_ptr.hbm [resolvable:$true] %s11248
      %11251 = dma.vmem_to_hbm [thread:$0]  %s11247, 256, %s11249, [#allocation24]
    $region109: #{tpu_custom_call.1} parent=1 // pred_fallthru
      _
    // Predicated region
    $region110: #{tpu_custom_call.1} parent=1 // pred_check
      _
    $region111: #{tpu_custom_call.1} parent=1 // pred_check_branch
      %11253 = sbr.rel (0) target = $region113
    $region112: #{tpu_custom_call.1} parent=1 // pred_region
      %11255 = dma.done [#allocation4], 4096
    $region113: #{tpu_custom_call.1} parent=1 // pred_fallthru
      _
    // Predicated region
    $region114: #{tpu_custom_call.1} parent=1 // pred_check
      _
    $region115: #{tpu_custom_call.1} parent=1 // pred_check_branch
      %11257 = sbr.rel (0) target = $region117
    $region116: #{tpu_custom_call.1} parent=1 // pred_region
      %11259 = dma.done [#allocation24], 256
    $region117: #{tpu_custom_call.1} parent=1 // pred_fallthru
      _
    %11260 = vsyncpa [#allocation3], 1
    %11261 = vsyncpa [#allocation6], 1
    %11262 = vsyncpa [#allocation9], 1
    %11263 = vsyncpa [#allocation12], 1
    %11264 = vsyncpa [#allocation15], 1
    %11265 = vsyncpa [#allocation18], 1
    %11266 = vsyncpa [#allocation21], 1
    %11267 = vsyncpa [#allocation4], 1
    %11268 = vsyncpa [#allocation24], 1

</llo_original>
